<compile_context>
chip_gen: v6e
topology: v6e:2x2x1
jax: 0.10.0
libtpu: 0.0.40
codegen_flags: <defaults>
</compile_context>

<pallas_src>
import functools

import jax
import jax.numpy as jnp
from jax.experimental import pallas as pl
from jax.experimental.pallas import tpu as pltpu

_HIGHEST = jax.lax.Precision.HIGHEST
_NT = (((1,), (1,)), ((), ()))          # contract the lane (last) axes of both operands

# Double-buffered VMEM budget for the *streamed* x-in + out blocks of one grid step.
# Pooled maps / weights / 0-1 expansion matrices are small and live in the headroom
# below the 32 MiB scoped-VMEM request (valid on v5e / v6e / v7x).
_STREAM_VMEM_BUDGET = 16 * 1024 * 1024
_VMEM_LIMIT_BYTES = 32 * 1024 * 1024


def _round_up(x, m):
    return ((x + m - 1) // m) * m


def _pick_batch_tile(N, slab_bytes, budget_bytes, cap=4):
    """Largest divisor Nb of N (<= cap) whose double-buffered in+out footprint fits the
    budget while keeping >= 2 grid steps (v7x megacore sharding) whenever N > 1."""
    best = 1
    for nb in range(1, min(N, cap) + 1):
        if N % nb:
            continue
        if 4 * nb * slab_bytes > budget_bytes:      # x-in + out, each double-buffered
            continue
        if N > 1 and N // nb < 2:
            continue
        best = nb
    return best


def _pick_channel_tile(C, row_bytes, budget_bytes):
    """Largest channel tile Tc (divisor of C, multiple of 8 or == C) whose
    double-buffered x-in + out footprint stays under budget_bytes."""
    max_c = max(1, budget_bytes // (4 * row_bytes))
    if C <= max_c:
        return C
    for tc in range(min(max_c, C), 7, -1):
        if tc % 8 == 0 and C % tc == 0:
            return tc
    # No aligned divisor fits: block dims must be a multiple of 8 or the full extent, so
    # fall back to the whole channel axis (may exceed the budget for exotic C values).
    return C


# --------------------------------------------------------------------------- kernel bodies


def _mlp_attention(ph, pw, w1, b1, w2, b2, w3, b3):
    """conv1(+folded inference BN) + h_swish shared trunk, then conv2/conv3 + sigmoid."""
    def trunk(p):
        y = jnp.dot(w1, p, preferred_element_type=jnp.float32, precision=_HIGHEST) + b1
        return y * (jnp.clip(y + 3.0, 0.0, 6.0) * (1.0 / 6.0))       # h_swish
    y_h = trunk(ph)                                                    # (T, H)
    y_w = trunk(pw)                                                    # (T, W)
    z_h = jnp.dot(w2, y_h, preferred_element_type=jnp.float32, precision=_HIGHEST) + b2
    z_w = jnp.dot(w3, y_w, preferred_element_type=jnp.float32, precision=_HIGHEST) + b3
    a_h = 1.0 / (1.0 + jnp.exp(-z_h))                                  # (Co, H)
    a_w = 1.0 / (1.0 + jnp.exp(-z_w))                                  # (Co, W)
    return a_h, a_w


def _expand(a_h, a_w, e_h, e_w):
    """(Co,H),(Co,W) -> lane-dense (Co,HW) attention map via 0/1 expansion matmuls."""
    f_h = jnp.dot(a_h, e_h, preferred_element_type=jnp.float32, precision=_HIGHEST)
    f_w = jnp.dot(a_w, e_w, preferred_element_type=jnp.float32, precision=_HIGHEST)
    return f_h * f_w


def _fused_kernel(x_ref, eh_ref, ew_ref, w1_ref, b1_ref, w2_ref, b2_ref,
                  w3_ref, b3_ref, o_ref, *, inv_w, inv_h):
    """Pool + shared MLP + apply in one pass: x read once, out written once."""
    e_h, e_w = eh_ref[...], ew_ref[...]
    w1, b1 = w1_ref[...], b1_ref[...]
    w2, b2 = w2_ref[...], b2_ref[...]
    w3, b3 = w3_ref[...], b3_ref[...]
    for n in range(x_ref.shape[0]):               # small static batch tile, unrolled
        x = x_ref[n]                                                           # (C, HW)
        ph = jax.lax.dot_general(x, e_h, _NT, precision=_HIGHEST,
                                 preferred_element_type=jnp.float32) * inv_w   # (C, H)
        pw = jax.lax.dot_general(x, e_w, _NT, precision=_HIGHEST,
                                 preferred_element_type=jnp.float32) * inv_h   # (C, W)
        a_h, a_w = _mlp_attention(ph, pw, w1, b1, w2, b2, w3, b3)
        o_ref[n] = x * _expand(a_h, a_w, e_h, e_w)


def _pool_kernel(x_ref, eh_ref, ew_ref, ph_ref, pw_ref, *, inv_w, inv_h):
    """(1,Tc,HW) -> W-mean (1,Tc,H) and H-mean (1,Tc,W) via exact 0/1 matmuls."""
    x = x_ref[0]
    ph_ref[0] = jax.lax.dot_general(x, eh_ref[...], _NT, precision=_HIGHEST,
                                    preferred_element_type=jnp.float32) * inv_w
    pw_ref[0] = jax.lax.dot_general(x, ew_ref[...], _NT, precision=_HIGHEST,
                                    preferred_element_type=jnp.float32) * inv_h


def _apply_kernel(x_ref, ph_ref, pw_ref, eh_ref, ew_ref, w1_ref, b1_ref,
                  w2_ref, b2_ref, w3_ref, b3_ref, o_ref):
    """Recompute the tiny MLP for this channel tile (hidden under the x DMA) and apply."""
    a_h, a_w = _mlp_attention(ph_ref[0], pw_ref[0], w1_ref[...], b1_ref[...],
                              w2_ref[...], b2_ref[...], w3_ref[...], b3_ref[...])
    o_ref[0] = x_ref[0] * _expand(a_h, a_w, eh_ref[...], ew_ref[...])


# --------------------------------------------------------------------------- forward


def coord_attention_forward(x, params, *, stream_budget_bytes=_STREAM_VMEM_BUDGET,
                            force_multi_pass=False):
    x = jnp.asarray(x, jnp.float32)
    N, C, H, W = x.shape
    HW = H * W
    row_bytes = _round_up(HW, 128) * 4             # padded lane width of one (.., HW) row

    w1 = params["conv1_w"].astype(jnp.float32)
    b1 = params["conv1_b"].astype(jnp.float32)
    gamma, beta = params["bn1_gamma"], params["bn1_beta"]
    mean, var, eps = params["bn1_mean"], params["bn1_var"], params["bn1_eps"]
    w2 = params["conv2_w"].astype(jnp.float32)
    b2 = params["conv2_b"].astype(jnp.float32)
    w3 = params["conv3_w"].astype(jnp.float32)
    b3 = params["conv3_b"].astype(jnp.float32)
    T = w1.shape[0]
    Co = w2.shape[0]
    assert Co == C and w3.shape[0] == C, \
        "the broadcast in `short * out_w * out_h` requires out_channels == in_channels"

    # Fold inference-mode BatchNorm (+ conv1 bias) into the conv1 weight/bias on the host.
    # TODO(synk): training-mode BatchNorm (batch statistics over the pooled concat) is not
    #             implemented; inference (running-stats) semantics are used.
    s = (gamma / jnp.sqrt(var + eps)).astype(jnp.float32)
    w1f = w1 * s[:, None]                                   # (T, C)
    b1f = (s * (b1 - mean) + beta).reshape(T, 1)            # (T, 1)
    b2c = b2.reshape(Co, 1)
    b3c = b3.reshape(Co, 1)

    # 0/1 expansion matrices: e_h[h, h*W+w] = 1 and e_w[w, h*W+w] = 1.  They implement the
    # W-/H- average pools (contraction over the HW axis) and the (C,H)x(C,W) -> (C,HW)
    # attention broadcast as MXU matmuls, keeping every streamed block lane-dense.
    hw = jnp.arange(HW)
    e_h = (jnp.arange(H)[:, None] == (hw // W)[None, :]).astype(jnp.float32)   # (H, HW)
    e_w = (jnp.arange(W)[:, None] == (hw % W)[None, :]).astype(jnp.float32)    # (W, HW)

    x_flat = x.reshape(N, C, HW)                   # free metadata reshape, lane-dense

    fused_fits = 4 * C * row_bytes <= stream_budget_bytes   # Nb=1, in+out, double-buffered
    if fused_fits and not force_multi_pass:
        nb = _pick_batch_tile(N, C * row_bytes, stream_budget_bytes)
        out_flat = pl.pallas_call(
            functools.partial(_fused_kernel, inv_w=1.0 / W, inv_h=1.0 / H),
            out_shape=jax.ShapeDtypeStruct((N, C, HW), jnp.float32),
            grid=(N // nb,),
            in_specs=[
                pl.BlockSpec((nb, C, HW), lambda i: (i, 0, 0)),
                pl.BlockSpec((H, HW), lambda i: (0, 0)),
                pl.BlockSpec((W, HW), lambda i: (0, 0)),
                pl.BlockSpec((T, C), lambda i: (0, 0)),
                pl.BlockSpec((T, 1), lambda i: (0, 0)),
                pl.BlockSpec((Co, T), lambda i: (0, 0)),
                pl.BlockSpec((Co, 1), lambda i: (0, 0)),
                pl.BlockSpec((Co, T), lambda i: (0, 0)),
                pl.BlockSpec((Co, 1), lambda i: (0, 0)),
            ],
            out_specs=pl.BlockSpec((nb, C, HW), lambda i: (i, 0, 0)),
            compiler_params=pltpu.CompilerParams(
                dimension_semantics=("parallel",),
                vmem_limit_bytes=_VMEM_LIMIT_BYTES),
        )(x_flat, e_h, e_w, w1f, b1f, w2, b2c, w3, b3c)
        return out_flat.reshape(N, C, H, W)

    # ---- multi-pass fallback (very large C*H*W) ---------------------------------------
    # TODO(synk): for extreme spatial sizes (H*W >~ 112*112) the (H,HW)/(W,HW) expansion
    #             matrices themselves get large; a spatially-tiled variant would be needed.
    tc = _pick_channel_tile(C, row_bytes, stream_budget_bytes)
    n_ct = C // tc

    pooled_h, pooled_w = pl.pallas_call(
        functools.partial(_pool_kernel, inv_w=1.0 / W, inv_h=1.0 / H),
        out_shape=(jax.ShapeDtypeStruct((N, C, H), jnp.float32),
                   jax.ShapeDtypeStruct((N, C, W), jnp.float32)),
        grid=(N, n_ct),
        in_specs=[
            pl.BlockSpec((1, tc, HW), lambda n, ci: (n, ci, 0)),
            pl.BlockSpec((H, HW), lambda n, ci: (0, 0)),
            pl.BlockSpec((W, HW), lambda n, ci: (0, 0)),
        ],
        out_specs=(pl.BlockSpec((1, tc, H), lambda n, ci: (n, ci, 0)),
                   pl.BlockSpec((1, tc, W), lambda n, ci: (n, ci, 0))),
        compiler_params=pltpu.CompilerParams(
            dimension_semantics=("parallel", "parallel"),
            vmem_limit_bytes=_VMEM_LIMIT_BYTES),
    )(x_flat, e_h, e_w)

    out_flat = pl.pallas_call(
        _apply_kernel,
        out_shape=jax.ShapeDtypeStruct((N, C, HW), jnp.float32),
        grid=(N, n_ct),
        in_specs=[
            pl.BlockSpec((1, tc, HW), lambda n, ci: (n, ci, 0)),
            pl.BlockSpec((1, C, H), lambda n, ci: (n, 0, 0)),
            pl.BlockSpec((1, C, W), lambda n, ci: (n, 0, 0)),
            pl.BlockSpec((H, HW), lambda n, ci: (0, 0)),
            pl.BlockSpec((W, HW), lambda n, ci: (0, 0)),
            pl.BlockSpec((T, C), lambda n, ci: (0, 0)),
            pl.BlockSpec((T, 1), lambda n, ci: (0, 0)),
            pl.BlockSpec((tc, T), lambda n, ci: (ci, 0)),
            pl.BlockSpec((tc, 1), lambda n, ci: (ci, 0)),
            pl.BlockSpec((tc, T), lambda n, ci: (ci, 0)),
            pl.BlockSpec((tc, 1), lambda n, ci: (ci, 0)),
        ],
        out_specs=pl.BlockSpec((1, tc, HW), lambda n, ci: (n, ci, 0)),
        compiler_params=pltpu.CompilerParams(
            dimension_semantics=("parallel", "parallel"),
            vmem_limit_bytes=_VMEM_LIMIT_BYTES),
    )(x_flat, pooled_h, pooled_w, e_h, e_w, w1f, b1f, w2, b2c, w3, b3c)
    return out_flat.reshape(N, C, H, W)


# --------------------------------------------------------------------------- reference


def coord_attention_reference(x, params):
    """Pure-JAX reference mirroring the PyTorch forward (inference-mode BatchNorm)."""
    x = x.astype(jnp.float32)
    N, C, H, W = x.shape
    hp = jax.lax.Precision.HIGHEST
    ph = jnp.mean(x, axis=3)                      # pool over W -> (N, C, H)
    pw = jnp.mean(x, axis=2)                      # pool over H -> (N, C, W)
    cat = jnp.concatenate([ph, pw], axis=2)       # (N, C, H+W)
    y = jnp.einsum("tc,ncs->nts", params["conv1_w"], cat, precision=hp) \
        + params["conv1_b"][None, :, None]
    s = params["bn1_gamma"] / jnp.sqrt(params["bn1_var"] + params["bn1_eps"])
    y = (y - params["bn1_mean"][None, :, None]) * s[None, :, None] \
        + params["bn1_beta"][None, :, None]
    y = y * jnp.clip(y + 3.0, 0.0, 6.0) / 6.0     # h_swish
    y_h, y_w = y[:, :, :H], y[:, :, H:]
    a_h = jax.nn.sigmoid(jnp.einsum("ot,nth->noh", params["conv2_w"], y_h, precision=hp)
                         + params["conv2_b"][None, :, None])
    a_w = jax.nn.sigmoid(jnp.einsum("ot,ntw->now", params["conv3_w"], y_w, precision=hp)
                         + params["conv3_b"][None, :, None])
    return x * a_w[:, :, None, :] * a_h[:, :, :, None]


# --------------------------------------------------------------------------- params


def init_params(key, in_channels, out_channels, reduction=32):
    temp_c = max(8, in_channels // reduction)
    ks = jax.random.split(key, 8)

    def uni(k, shape, fan_in):
        bound = 1.0 / (fan_in ** 0.5)
        return jax.random.uniform(k, shape, jnp.float32, -bound, bound)

    return {
        "conv1_w": uni(ks[0], (temp_c, in_channels), in_channels),
        "conv1_b": uni(ks[1], (temp_c,), in_channels),
        "bn1_gamma": 1.0 + 0.1 * jax.random.normal(ks[2], (temp_c,), jnp.float32),
        "bn1_beta": 0.1 * jax.random.normal(ks[3], (temp_c,), jnp.float32),
        "bn1_mean": jnp.zeros((temp_c,), jnp.float32),
        "bn1_var": jnp.ones((temp_c,), jnp.float32),
        "bn1_eps": 1e-5,
        "conv2_w": uni(ks[4], (out_channels, temp_c), temp_c),
        "conv2_b": uni(ks[5], (out_channels,), temp_c),
        "conv3_w": uni(ks[6], (out_channels, temp_c), temp_c),
        "conv3_b": uni(ks[7], (out_channels,), temp_c),
    }


if __name__ == "__main__":
    key = jax.random.PRNGKey(0)
    k_x, k_p = jax.random.split(key)

    # Small deterministic test.  C=128, reduction=32 -> temp_c = 8 (the max(8, C//r) floor).
    N, C, H, W = 2, 128, 16, 16
    x = jax.random.normal(k_x, (N, C, H, W), jnp.float32)
    params = init_params(k_p, in_channels=C, out_channels=C, reduction=32)

    ref = jax.block_until_ready(coord_attention_reference(x, params))

    # Fused single-pass path (the default for these shapes).
    out = jax.block_until_ready(coord_attention_forward(x, params))
    assert out.shape == (N, C, H, W), out.shape
    assert bool(jnp.all(jnp.isfinite(out)))
    err_fused = float(jnp.max(jnp.abs(out - ref)))
    assert err_fused < 5e-3, f"fused path max abs error vs reference: {err_fused}"

    # Multi-pass fallback, exercised explicitly so both code paths are validated.
    out_mp = jax.block_until_ready(
        coord_attention_forward(x, params, force_multi_pass=True))
    err_mp = float(jnp.max(jnp.abs(out_mp - ref)))
    assert err_mp < 5e-3, f"multi-pass path max abs error vs reference: {err_mp}"

    print("KERNEL_OK")
</pallas_src>

<mosaic_0001>
module attributes {stable_mosaic.version = 11 : i64} {
  func.func @_fused_kernel(%arg0: i32, %arg1: memref<1x128x256xf32, #tpu.memory_space<vmem>>, %arg2: memref<16x256xf32, #tpu.memory_space<vmem>>, %arg3: memref<16x256xf32, #tpu.memory_space<vmem>>, %arg4: memref<8x128xf32, #tpu.memory_space<vmem>>, %arg5: memref<8x1xf32, #tpu.memory_space<vmem>>, %arg6: memref<128x8xf32, #tpu.memory_space<vmem>>, %arg7: memref<128x1xf32, #tpu.memory_space<vmem>>, %arg8: memref<128x8xf32, #tpu.memory_space<vmem>>, %arg9: memref<128x1xf32, #tpu.memory_space<vmem>>, %arg10: memref<1x128x256xf32, #tpu.memory_space<vmem>>) attributes {dimension_semantics = [#tpu.dimension_semantics<parallel>], iteration_bounds = array<i64: 2>, scalar_prefetch = 0 : i64, scratch_operands = 0 : i64, tpu.core_type = #tpu.core_type<tc>, window_params = [{transform_indices = @transform_0, window_bounds = array<i64: 1, 128, 256>}, {pipeline_mode = #tpu.pipeline_mode<synchronous>, transform_indices = @transform_1, window_bounds = array<i64: 16, 256>}, {pipeline_mode = #tpu.pipeline_mode<synchronous>, transform_indices = @transform_2, window_bounds = array<i64: 16, 256>}, {pipeline_mode = #tpu.pipeline_mode<synchronous>, transform_indices = @transform_3, window_bounds = array<i64: 8, 128>}, {pipeline_mode = #tpu.pipeline_mode<synchronous>, transform_indices = @transform_4, window_bounds = array<i64: 8, 1>}, {pipeline_mode = #tpu.pipeline_mode<synchronous>, transform_indices = @transform_5, window_bounds = array<i64: 128, 8>}, {pipeline_mode = #tpu.pipeline_mode<synchronous>, transform_indices = @transform_6, window_bounds = array<i64: 128, 1>}, {pipeline_mode = #tpu.pipeline_mode<synchronous>, transform_indices = @transform_7, window_bounds = array<i64: 128, 8>}, {pipeline_mode = #tpu.pipeline_mode<synchronous>, transform_indices = @transform_8, window_bounds = array<i64: 128, 1>}, {transform_indices = @transform_9, window_bounds = array<i64: 1, 128, 256>}]} {
    %c0 = arith.constant 0 : index
    %c0_0 = arith.constant 0 : index
    %0 = vector.load %arg2[%c0, %c0_0] : memref<16x256xf32, #tpu.memory_space<vmem>>, vector<16x256xf32>
    %c0_1 = arith.constant 0 : index
    %c0_2 = arith.constant 0 : index
    %1 = vector.load %arg3[%c0_1, %c0_2] : memref<16x256xf32, #tpu.memory_space<vmem>>, vector<16x256xf32>
    %c0_3 = arith.constant 0 : index
    %c0_4 = arith.constant 0 : index
    %2 = vector.load %arg4[%c0_3, %c0_4] : memref<8x128xf32, #tpu.memory_space<vmem>>, vector<8x128xf32>
    %c0_5 = arith.constant 0 : index
    %c0_6 = arith.constant 0 : index
    %3 = vector.load %arg5[%c0_5, %c0_6] : memref<8x1xf32, #tpu.memory_space<vmem>>, vector<8x1xf32>
    %c0_7 = arith.constant 0 : index
    %c0_8 = arith.constant 0 : index
    %4 = vector.load %arg6[%c0_7, %c0_8] : memref<128x8xf32, #tpu.memory_space<vmem>>, vector<128x8xf32>
    %c0_9 = arith.constant 0 : index
    %c0_10 = arith.constant 0 : index
    %5 = vector.load %arg7[%c0_9, %c0_10] : memref<128x1xf32, #tpu.memory_space<vmem>>, vector<128x1xf32>
    %c0_11 = arith.constant 0 : index
    %c0_12 = arith.constant 0 : index
    %6 = vector.load %arg8[%c0_11, %c0_12] : memref<128x8xf32, #tpu.memory_space<vmem>>, vector<128x8xf32>
    %c0_13 = arith.constant 0 : index
    %c0_14 = arith.constant 0 : index
    %7 = vector.load %arg9[%c0_13, %c0_14] : memref<128x1xf32, #tpu.memory_space<vmem>>, vector<128x1xf32>
    %c0_15 = arith.constant 0 : index
    %c0_16 = arith.constant 0 : index
    %c0_17 = arith.constant 0 : index
    %8 = vector.load %arg1[%c0_15, %c0_16, %c0_17] : memref<1x128x256xf32, #tpu.memory_space<vmem>>, vector<1x128x256xf32>
    %9 = vector.shape_cast %8 : vector<1x128x256xf32> to vector<128x256xf32>
    %cst = arith.constant dense<0.000000e+00> : vector<128x16xf32>
    %10 = tpu.matmul %9, %0, %cst {dimension_numbers = #tpu.dot_dimension_numbers<[1], [1], [0], [0], [0, 0, 1, 0], [], []>, precision = #tpu.contract_precision<fp32>} : vector<128x256xf32>, vector<16x256xf32>, vector<128x16xf32> -> vector<128x16xf32>
    %cst_18 = arith.constant 6.250000e-02 : f32
    %11 = vector.broadcast %cst_18 : f32 to vector<128x16xf32>
    %12 = arith.mulf %10, %11 : vector<128x16xf32>
    %cst_19 = arith.constant dense<0.000000e+00> : vector<128x16xf32>
    %13 = tpu.matmul %9, %1, %cst_19 {dimension_numbers = #tpu.dot_dimension_numbers<[1], [1], [0], [0], [0, 0, 1, 0], [], []>, precision = #tpu.contract_precision<fp32>} : vector<128x256xf32>, vector<16x256xf32>, vector<128x16xf32> -> vector<128x16xf32>
    %cst_20 = arith.constant 6.250000e-02 : f32
    %14 = vector.broadcast %cst_20 : f32 to vector<128x16xf32>
    %15 = arith.mulf %13, %14 : vector<128x16xf32>
    %cst_21 = arith.constant dense<0.000000e+00> : vector<8x16xf32>
    %16 = tpu.matmul %2, %12, %cst_21 {dimension_numbers = #tpu.dot_dimension_numbers<[1], [0], [0], [1], [0, 0, 1, 1], [], []>, precision = #tpu.contract_precision<fp32>} : vector<8x128xf32>, vector<128x16xf32>, vector<8x16xf32> -> vector<8x16xf32>
    %17 = vector.broadcast %3 : vector<8x1xf32> to vector<8x16xf32>
    %18 = arith.addf %16, %17 : vector<8x16xf32>
    %cst_22 = arith.constant 3.000000e+00 : f32
    %19 = vector.broadcast %cst_22 : f32 to vector<8x16xf32>
    %20 = arith.addf %18, %19 : vector<8x16xf32>
    %cst_23 = arith.constant 0.000000e+00 : f32
    %cst_24 = arith.constant 6.000000e+00 : f32
    %21 = vector.broadcast %cst_23 : f32 to vector<8x16xf32>
    %22 = arith.maximumf %21, %20 : vector<8x16xf32>
    %23 = vector.broadcast %cst_24 : f32 to vector<8x16xf32>
    %24 = arith.minimumf %23, %22 : vector<8x16xf32>
    %cst_25 = arith.constant 0.166666672 : f32
    %25 = vector.broadcast %cst_25 : f32 to vector<8x16xf32>
    %26 = arith.mulf %24, %25 : vector<8x16xf32>
    %27 = arith.mulf %18, %26 : vector<8x16xf32>
    %cst_26 = arith.constant dense<0.000000e+00> : vector<8x16xf32>
    %28 = tpu.matmul %2, %15, %cst_26 {dimension_numbers = #tpu.dot_dimension_numbers<[1], [0], [0], [1], [0, 0, 1, 1], [], []>, precision = #tpu.contract_precision<fp32>} : vector<8x128xf32>, vector<128x16xf32>, vector<8x16xf32> -> vector<8x16xf32>
    %29 = vector.broadcast %3 : vector<8x1xf32> to vector<8x16xf32>
    %30 = arith.addf %28, %29 : vector<8x16xf32>
    %cst_27 = arith.constant 3.000000e+00 : f32
    %31 = vector.broadcast %cst_27 : f32 to vector<8x16xf32>
    %32 = arith.addf %30, %31 : vector<8x16xf32>
    %cst_28 = arith.constant 0.000000e+00 : f32
    %cst_29 = arith.constant 6.000000e+00 : f32
    %33 = vector.broadcast %cst_28 : f32 to vector<8x16xf32>
    %34 = arith.maximumf %33, %32 : vector<8x16xf32>
    %35 = vector.broadcast %cst_29 : f32 to vector<8x16xf32>
    %36 = arith.minimumf %35, %34 : vector<8x16xf32>
    %cst_30 = arith.constant 0.166666672 : f32
    %37 = vector.broadcast %cst_30 : f32 to vector<8x16xf32>
    %38 = arith.mulf %36, %37 : vector<8x16xf32>
    %39 = arith.mulf %30, %38 : vector<8x16xf32>
    %cst_31 = arith.constant dense<0.000000e+00> : vector<128x16xf32>
    %40 = tpu.matmul %4, %27, %cst_31 {dimension_numbers = #tpu.dot_dimension_numbers<[1], [0], [0], [1], [0, 0, 1, 1], [], []>, precision = #tpu.contract_precision<fp32>} : vector<128x8xf32>, vector<8x16xf32>, vector<128x16xf32> -> vector<128x16xf32>
    %41 = vector.broadcast %5 : vector<128x1xf32> to vector<128x16xf32>
    %42 = arith.addf %40, %41 : vector<128x16xf32>
    %cst_32 = arith.constant dense<0.000000e+00> : vector<128x16xf32>
    %43 = tpu.matmul %6, %39, %cst_32 {dimension_numbers = #tpu.dot_dimension_numbers<[1], [0], [0], [1], [0, 0, 1, 1], [], []>, precision = #tpu.contract_precision<fp32>} : vector<128x8xf32>, vector<8x16xf32>, vector<128x16xf32> -> vector<128x16xf32>
    %44 = vector.broadcast %7 : vector<128x1xf32> to vector<128x16xf32>
    %45 = arith.addf %43, %44 : vector<128x16xf32>
    %cst_33 = arith.constant 0.000000e+00 : f32
    %46 = vector.broadcast %cst_33 : f32 to vector<128x16xf32>
    %47 = arith.subf %46, %42 : vector<128x16xf32>
    %48 = math.exp %47 : vector<128x16xf32>
    %cst_34 = arith.constant 1.000000e+00 : f32
    %49 = vector.broadcast %cst_34 : f32 to vector<128x16xf32>
    %50 = arith.addf %49, %48 : vector<128x16xf32>
    %cst_35 = arith.constant 1.000000e+00 : f32
    %51 = vector.broadcast %cst_35 : f32 to vector<128x16xf32>
    %52 = arith.divf %51, %50 : vector<128x16xf32>
    %cst_36 = arith.constant 0.000000e+00 : f32
    %53 = vector.broadcast %cst_36 : f32 to vector<128x16xf32>
    %54 = arith.subf %53, %45 : vector<128x16xf32>
    %55 = math.exp %54 : vector<128x16xf32>
    %cst_37 = arith.constant 1.000000e+00 : f32
    %56 = vector.broadcast %cst_37 : f32 to vector<128x16xf32>
    %57 = arith.addf %56, %55 : vector<128x16xf32>
    %cst_38 = arith.constant 1.000000e+00 : f32
    %58 = vector.broadcast %cst_38 : f32 to vector<128x16xf32>
    %59 = arith.divf %58, %57 : vector<128x16xf32>
    %cst_39 = arith.constant dense<0.000000e+00> : vector<128x256xf32>
    %60 = tpu.matmul %52, %0, %cst_39 {dimension_numbers = #tpu.dot_dimension_numbers<[1], [0], [0], [1], [0, 0, 1, 1], [], []>, precision = #tpu.contract_precision<fp32>} : vector<128x16xf32>, vector<16x256xf32>, vector<128x256xf32> -> vector<128x256xf32>
    %cst_40 = arith.constant dense<0.000000e+00> : vector<128x256xf32>
    %61 = tpu.matmul %59, %1, %cst_40 {dimension_numbers = #tpu.dot_dimension_numbers<[1], [0], [0], [1], [0, 0, 1, 1], [], []>, precision = #tpu.contract_precision<fp32>} : vector<128x16xf32>, vector<16x256xf32>, vector<128x256xf32> -> vector<128x256xf32>
    %62 = arith.mulf %60, %61 : vector<128x256xf32>
    %63 = arith.mulf %9, %62 : vector<128x256xf32>
    %c0_41 = arith.constant 0 : index
    %c0_42 = arith.constant 0 : index
    %c0_43 = arith.constant 0 : index
    %64 = vector.load %arg10[%c0_41, %c0_42, %c0_43] : memref<1x128x256xf32, #tpu.memory_space<vmem>>, vector<1x128x256xf32>
    %65 = vector.shape_cast %64 : vector<1x128x256xf32> to vector<128x256xf32>
    %66 = vector.shape_cast %63 : vector<128x256xf32> to vector<1x128x256xf32>
    tpu.vector_store %arg10[%c0_41, %c0_42, %c0_43], %66 {strides = array<i32>} : memref<1x128x256xf32, #tpu.memory_space<vmem>>, vector<1x128x256xf32>,
    return
  }
  func.func @transform_0(%arg0: i32) -> (i32, i32, i32) {
    %c0_i32 = arith.constant 0 : i32
    %c0_i32_0 = arith.constant 0 : i32
    %c0_i32_1 = arith.constant 0 : i32
    return %arg0, %c0_i32, %c0_i32_0 : i32, i32, i32
  }
  func.func @transform_1(%arg0: i32) -> (i32, i32) {
    %c0_i32 = arith.constant 0 : i32
    %c0_i32_0 = arith.constant 0 : i32
    %c0_i32_1 = arith.constant 0 : i32
    return %c0_i32, %c0_i32_0 : i32, i32
  }
  func.func @transform_2(%arg0: i32) -> (i32, i32) {
    %c0_i32 = arith.constant 0 : i32
    %c0_i32_0 = arith.constant 0 : i32
    %c0_i32_1 = arith.constant 0 : i32
    return %c0_i32, %c0_i32_0 : i32, i32
  }
  func.func @transform_3(%arg0: i32) -> (i32, i32) {
    %c0_i32 = arith.constant 0 : i32
    %c0_i32_0 = arith.constant 0 : i32
    %c0_i32_1 = arith.constant 0 : i32
    return %c0_i32, %c0_i32_0 : i32, i32
  }
  func.func @transform_4(%arg0: i32) -> (i32, i32) {
    %c0_i32 = arith.constant 0 : i32
    %c0_i32_0 = arith.constant 0 : i32
    %c0_i32_1 = arith.constant 0 : i32
    return %c0_i32, %c0_i32_0 : i32, i32
  }
  func.func @transform_5(%arg0: i32) -> (i32, i32) {
    %c0_i32 = arith.constant 0 : i32
    %c0_i32_0 = arith.constant 0 : i32
    %c0_i32_1 = arith.constant 0 : i32
    return %c0_i32, %c0_i32_0 : i32, i32
  }
  func.func @transform_6(%arg0: i32) -> (i32, i32) {
    %c0_i32 = arith.constant 0 : i32
    %c0_i32_0 = arith.constant 0 : i32
    %c0_i32_1 = arith.constant 0 : i32
    return %c0_i32, %c0_i32_0 : i32, i32
  }
  func.func @transform_7(%arg0: i32) -> (i32, i32) {
    %c0_i32 = arith.constant 0 : i32
    %c0_i32_0 = arith.constant 0 : i32
    %c0_i32_1 = arith.constant 0 : i32
    return %c0_i32, %c0_i32_0 : i32, i32
  }
  func.func @transform_8(%arg0: i32) -> (i32, i32) {
    %c0_i32 = arith.constant 0 : i32
    %c0_i32_0 = arith.constant 0 : i32
    %c0_i32_1 = arith.constant 0 : i32
    return %c0_i32, %c0_i32_0 : i32, i32
  }
  func.func @transform_9(%arg0: i32) -> (i32, i32, i32) {
    %c0_i32 = arith.constant 0 : i32
    %c0_i32_0 = arith.constant 0 : i32
    %c0_i32_1 = arith.constant 0 : i32
    return %arg0, %c0_i32, %c0_i32_0 : i32, i32, i32
  }
}

</mosaic_0001>

<llo_original>
// kernel: tpu_custom_call.1
$region0: #{tpu_custom_call.1}
  #allocation0 [shape = 'u32[]', space=smem, size = 0x4, offset = 0x4, fixed_abs, tag = 'smem constant byte address 0x4 - core index']
  #allocation1 [shape = 'u32[144,128]{1,0:T(1,128)}', space=vmem, size = 0x12000, scoped, tag = 'internal scratch']
  %s0 = inlined_call_operand.vmem [shape: f32[2,128,256], index: 0, kind: input, shape index: {}]
  %s1 = inlined_call_operand.hbm [shape: f32[16,256], index: 1, kind: input, shape index: {}]
  %s2 = inlined_call_operand.hbm [shape: f32[16,256], index: 2, kind: input, shape index: {}]
  %s3 = inlined_call_operand.vmem [shape: f32[8,128], index: 3, kind: input, shape index: {}]
  %s4 = inlined_call_operand.vmem [shape: f32[8,1], index: 4, kind: input, shape index: {}]
  %s5 = inlined_call_operand.vmem [shape: f32[128,8], index: 5, kind: input, shape index: {}]
  %s6 = inlined_call_operand.vmem [shape: f32[128,1], index: 6, kind: input, shape index: {}]
  %s7 = inlined_call_operand.vmem [shape: f32[128,8], index: 7, kind: input, shape index: {}]
  %s8 = inlined_call_operand.vmem [shape: f32[128,1], index: 8, kind: input, shape index: {}]
  %s9 = inlined_call_operand.hbm [shape: f32[2,128,256], index: 9, kind: output, shape index: {}]
  %s10 = sld [smem:[#allocation0]]
  $region77: #{tpu_custom_call.1} parent=0
    _
  %s12 = ssub.s32 1, %s10
  %s13 = scalar_select 0, %s12, %s10
  $region1: #{tpu_custom_call.1} parent=0
    #allocation2 [shape = 'u8[16384]{0}', space=vmem, size = 0x4000, scoped, tag = 'input window, operand 1, single buffered']
    #allocation3 [shape = 's32[2]{0}', space=sflag, size = 0x8, scoped, tag = 'scoped memory for tpu_custom_call.1']
    #allocation4 [shape = 's32[2]{0}', space=sflag, size = 0x8, scoped, tag = 'scoped memory for tpu_custom_call.1']
    #allocation5 [shape = 'u8[16384]{0}', space=vmem, size = 0x4000, scoped, tag = 'input window, operand 2, single buffered']
    #allocation6 [shape = 's32[1]{0}', space=sflag, size = 0x4, scoped, tag = 'scoped memory for tpu_custom_call.1']
    #allocation7 [shape = 'u8[262144]{0}', space=vmem, size = 0x40000, scoped, tag = 'output window, operand 0']
    %14 = vsyncpa [#allocation3], 0
    %15 = vsyncpa [#allocation6], 0
    %16 = vsyncpa [#allocation4], 0
    %s17 = scalar_lea.sflag [#allocation4], 1
    %18 = vsyncpa %s17, 0
    loop: start=0, step=1, limit=4
    $region2: #{tpu_custom_call.1} parent=1 // loop_pre_header
      _
    $region3: #{tpu_custom_call.1} parent=1 // loop_header
      %s20 = sphi 0, %s24
      %p21 = scmp.ge.s32.totalorder %s20, 4
      %s30 = sphi 0, %s32
      %s33 = sphi 0, %s30
      %s34 = sphi 0, %s33
      %s50 = sphi 0, %s34
      %s54 = sphi 0, %s54
      %s56 = sphi 0, %s54
      %s57 = sphi 0, %s56
      %s71 = sphi 0, %s57
      %s75 = sphi 0, %s75
      %s77 = sphi 0, %s75
      %s78 = sphi 0, %s77
      %s92 = sphi 0, %s78
      %s96 = sphi 0, %s96
      %s98 = sphi 0, %s96
      %s99 = sphi 0, %s98
      %s113 = sphi 0, %s99
      %s117 = sphi 0, %s117
      %s119 = sphi 0, %s117
      %s120 = sphi 0, %s119
      %s134 = sphi 0, %s120
      %s138 = sphi 0, %s138
      %s140 = sphi 0, %s138
      %s141 = sphi 0, %s140
      %s155 = sphi 0, %s141
      %s159 = sphi 0, %s159
      %s161 = sphi 0, %s159
      %s162 = sphi 0, %s161
      %s176 = sphi 0, %s162
      %s180 = sphi 0, %s180
      %s182 = sphi 0, %s180
      %s183 = sphi 0, %s182
      %s197 = sphi 0, %s183
      %s201 = sphi 0, %s201
      %s203 = sphi 0, %s201
      %s204 = sphi 0, %s203
      %s218 = sphi 0, %s204
      %s224 = sphi 0, %s226
      %s227 = sphi 0, %s224
      %s228 = sphi 0, %s227
      %s244 = sphi 0, %s228
    $region4: #{tpu_custom_call.1} parent=1 // loop_header_branch
      %23 = sbr.rel (%p21) target = $region8
    $region5: #{tpu_custom_call.1} parent=1 // loop_body
      %s25 = ssub.s32 %s20, 1
      %s26 = ssub.s32 %s20, 2
      %s27 = sadd.s32 %s20, 1
      %s28 = ssub.s32 %s20, %s27
      %p29 = scmp.eq.s32.totalorder %s28, 0
      %s31 = sadd.s32 %s30, 1
      %s32 = scalar_select %p29, %s30, %s31
      %p35 = pneg %p29
      %p36 = scmp.eq.s32.totalorder %s20, 1
      %p37 = por %p35, %p36
      %p38 = scmp.ne.s32.totalorder %s30, %s33
      %p39 = scmp.eq.s32.totalorder %s20, 0
      %p40 = por %p38, %p39
      %p41 = scmp.ne.s32.totalorder %s30, %s33
      %p42 = scmp.eq.s32.totalorder %s25, 1
      %p43 = por %p41, %p42
      %p44 = scmp.ne.s32.totalorder %s33, %s34
      %p45 = scmp.eq.s32.totalorder %s25, 0
      %p46 = por %p44, %p45
      %p47 = scmp.ne.s32.totalorder %s33, %s34
      %p48 = scmp.eq.s32.totalorder %s26, 1
      %p49 = por %p47, %p48
      %p51 = scmp.ne.s32.totalorder %s34, %s50
      %p52 = scmp.eq.s32.totalorder %s26, 0
      %p53 = por %p51, %p52
      %s55 = sadd.s32 %s54, 1
      %p58 = scmp.eq.s32.totalorder %s20, 1
      %p59 = scmp.ne.s32.totalorder %s54, %s56
      %p60 = scmp.eq.s32.totalorder %s20, 0
      %p61 = por %p59, %p60
      %p62 = scmp.ne.s32.totalorder %s54, %s56
      %p63 = scmp.eq.s32.totalorder %s25, 1
      %p64 = por %p62, %p63
      %p65 = scmp.ne.s32.totalorder %s56, %s57
      %p66 = scmp.eq.s32.totalorder %s25, 0
      %p67 = por %p65, %p66
      %p68 = scmp.ne.s32.totalorder %s56, %s57
      %p69 = scmp.eq.s32.totalorder %s26, 1
      %p70 = por %p68, %p69
      %p72 = scmp.ne.s32.totalorder %s57, %s71
      %p73 = scmp.eq.s32.totalorder %s26, 0
      %p74 = por %p72, %p73
      %s76 = sadd.s32 %s75, 1
      %p79 = scmp.eq.s32.totalorder %s20, 1
      %p80 = scmp.ne.s32.totalorder %s75, %s77
      %p81 = scmp.eq.s32.totalorder %s20, 0
      %p82 = por %p80, %p81
      %p83 = scmp.ne.s32.totalorder %s75, %s77
      %p84 = scmp.eq.s32.totalorder %s25, 1
      %p85 = por %p83, %p84
      %p86 = scmp.ne.s32.totalorder %s77, %s78
      %p87 = scmp.eq.s32.totalorder %s25, 0
      %p88 = por %p86, %p87
      %p89 = scmp.ne.s32.totalorder %s77, %s78
      %p90 = scmp.eq.s32.totalorder %s26, 1
      %p91 = por %p89, %p90
      %p93 = scmp.ne.s32.totalorder %s78, %s92
      %p94 = scmp.eq.s32.totalorder %s26, 0
      %p95 = por %p93, %p94
      %s97 = sadd.s32 %s96, 1
      %p100 = scmp.eq.s32.totalorder %s20, 1
      %p101 = scmp.ne.s32.totalorder %s96, %s98
      %p102 = scmp.eq.s32.totalorder %s20, 0
      %p103 = por %p101, %p102
      %p104 = scmp.ne.s32.totalorder %s96, %s98
      %p105 = scmp.eq.s32.totalorder %s25, 1
      %p106 = por %p104, %p105
      %p107 = scmp.ne.s32.totalorder %s98, %s99
      %p108 = scmp.eq.s32.totalorder %s25, 0
      %p109 = por %p107, %p108
      %p110 = scmp.ne.s32.totalorder %s98, %s99
      %p111 = scmp.eq.s32.totalorder %s26, 1
      %p112 = por %p110, %p111
      %p114 = scmp.ne.s32.totalorder %s99, %s113
      %p115 = scmp.eq.s32.totalorder %s26, 0
      %p116 = por %p114, %p115
      %s118 = sadd.s32 %s117, 1
      %p121 = scmp.eq.s32.totalorder %s20, 1
      %p122 = scmp.ne.s32.totalorder %s117, %s119
      %p123 = scmp.eq.s32.totalorder %s20, 0
      %p124 = por %p122, %p123
      %p125 = scmp.ne.s32.totalorder %s117, %s119
      %p126 = scmp.eq.s32.totalorder %s25, 1
      %p127 = por %p125, %p126
      %p128 = scmp.ne.s32.totalorder %s119, %s120
      %p129 = scmp.eq.s32.totalorder %s25, 0
      %p130 = por %p128, %p129
      %p131 = scmp.ne.s32.totalorder %s119, %s120
      %p132 = scmp.eq.s32.totalorder %s26, 1
      %p133 = por %p131, %p132
      %p135 = scmp.ne.s32.totalorder %s120, %s134
      %p136 = scmp.eq.s32.totalorder %s26, 0
      %p137 = por %p135, %p136
      %s139 = sadd.s32 %s138, 1
      %p142 = scmp.eq.s32.totalorder %s20, 1
      %p143 = scmp.ne.s32.totalorder %s138, %s140
      %p144 = scmp.eq.s32.totalorder %s20, 0
      %p145 = por %p143, %p144
      %p146 = scmp.ne.s32.totalorder %s138, %s140
      %p147 = scmp.eq.s32.totalorder %s25, 1
      %p148 = por %p146, %p147
      %p149 = scmp.ne.s32.totalorder %s140, %s141
      %p150 = scmp.eq.s32.totalorder %s25, 0
      %p151 = por %p149, %p150
      %p152 = scmp.ne.s32.totalorder %s140, %s141
      %p153 = scmp.eq.s32.totalorder %s26, 1
      %p154 = por %p152, %p153
      %p156 = scmp.ne.s32.totalorder %s141, %s155
      %p157 = scmp.eq.s32.totalorder %s26, 0
      %p158 = por %p156, %p157
      %s160 = sadd.s32 %s159, 1
      %p163 = scmp.eq.s32.totalorder %s20, 1
      %p164 = scmp.ne.s32.totalorder %s159, %s161
      %p165 = scmp.eq.s32.totalorder %s20, 0
      %p166 = por %p164, %p165
      %p167 = scmp.ne.s32.totalorder %s159, %s161
      %p168 = scmp.eq.s32.totalorder %s25, 1
      %p169 = por %p167, %p168
      %p170 = scmp.ne.s32.totalorder %s161, %s162
      %p171 = scmp.eq.s32.totalorder %s25, 0
      %p172 = por %p170, %p171
      %p173 = scmp.ne.s32.totalorder %s161, %s162
      %p174 = scmp.eq.s32.totalorder %s26, 1
      %p175 = por %p173, %p174
      %p177 = scmp.ne.s32.totalorder %s162, %s176
      %p178 = scmp.eq.s32.totalorder %s26, 0
      %p179 = por %p177, %p178
      %s181 = sadd.s32 %s180, 1
      %p184 = scmp.eq.s32.totalorder %s20, 1
      %p185 = scmp.ne.s32.totalorder %s180, %s182
      %p186 = scmp.eq.s32.totalorder %s20, 0
      %p187 = por %p185, %p186
      %p188 = scmp.ne.s32.totalorder %s180, %s182
      %p189 = scmp.eq.s32.totalorder %s25, 1
      %p190 = por %p188, %p189
      %p191 = scmp.ne.s32.totalorder %s182, %s183
      %p192 = scmp.eq.s32.totalorder %s25, 0
      %p193 = por %p191, %p192
      %p194 = scmp.ne.s32.totalorder %s182, %s183
      %p195 = scmp.eq.s32.totalorder %s26, 1
      %p196 = por %p194, %p195
      %p198 = scmp.ne.s32.totalorder %s183, %s197
      %p199 = scmp.eq.s32.totalorder %s26, 0
      %p200 = por %p198, %p199
      %s202 = sadd.s32 %s201, 1
      %p205 = scmp.eq.s32.totalorder %s20, 1
      %p206 = scmp.ne.s32.totalorder %s201, %s203
      %p207 = scmp.eq.s32.totalorder %s20, 0
      %p208 = por %p206, %p207
      %p209 = scmp.ne.s32.totalorder %s201, %s203
      %p210 = scmp.eq.s32.totalorder %s25, 1
      %p211 = por %p209, %p210
      %p212 = scmp.ne.s32.totalorder %s203, %s204
      %p213 = scmp.eq.s32.totalorder %s25, 0
      %p214 = por %p212, %p213
      %p215 = scmp.ne.s32.totalorder %s203, %s204
      %p216 = scmp.eq.s32.totalorder %s26, 1
      %p217 = por %p215, %p216
      %p219 = scmp.ne.s32.totalorder %s204, %s218
      %p220 = scmp.eq.s32.totalorder %s26, 0
      %p221 = por %p219, %p220
      %s222 = ssub.s32 %s20, %s27
      %p223 = scmp.eq.s32.totalorder %s222, 0
      %s225 = sadd.s32 %s224, 1
      %s226 = scalar_select %p223, %s224, %s225
      %p229 = pneg %p223
      %p230 = scmp.eq.s32.totalorder %s20, 1
      %p231 = por %p229, %p230
      %p232 = scmp.ne.s32.totalorder %s224, %s227
      %p233 = scmp.eq.s32.totalorder %s20, 0
      %p234 = por %p232, %p233
      %p235 = scmp.ne.s32.totalorder %s224, %s227
      %p236 = scmp.eq.s32.totalorder %s25, 1
      %p237 = por %p235, %p236
      %p238 = scmp.ne.s32.totalorder %s227, %s228
      %p239 = scmp.eq.s32.totalorder %s25, 0
      %p240 = por %p238, %p239
      %p241 = scmp.ne.s32.totalorder %s227, %s228
      %p242 = scmp.eq.s32.totalorder %s26, 1
      %p243 = por %p241, %p242
      %p245 = scmp.ne.s32.totalorder %s228, %s244
      %p246 = scmp.eq.s32.totalorder %s26, 0
      %p247 = por %p245, %p246
      %p248 = scmp.le.s32.totalorder 1, %s20
      %p249 = scmp.lt.s32.totalorder %s20, 3
      %p250 = pnand %p248, %p249
      %p251 = pneg %p250
      // Predicated region
      $region9: #{tpu_custom_call.1} parent=5 // pred_check
        _
      $region10: #{tpu_custom_call.1} parent=5 // pred_check_branch
        %253 = sbr.rel (%p250) target = $region12
      $region11: #{tpu_custom_call.1} parent=5 // pred_region
        %s254 = ssub.s32 %s20, 1
        // Predicated region
        $region13: #{tpu_custom_call.1} parent=11 // pred_check
          %p255 = pneg %p67
        $region14: #{tpu_custom_call.1} parent=11 // pred_check_branch
          %257 = sbr.rel (%p255) target = $region16
        $region15: #{tpu_custom_call.1} parent=11 // pred_region
          %s259 = ssub.s32 512, 512
          %260 = vsyncadd [#allocation3], %s259
          %s261 = sshll.u32 [#allocation2], 4
          %s262 = int_to_ptr.vmem [resolvable:$true] %s261
          %267 = dma.hbm_to_vmem [thread:$0]  %s1, 512, %s262, [#allocation3], 256, 256, 16
        $region16: #{tpu_custom_call.1} parent=11 // pred_fallthru
          _
        // Predicated region
        $region17: #{tpu_custom_call.1} parent=11 // pred_check
          %p268 = pneg %p88
        $region18: #{tpu_custom_call.1} parent=11 // pred_check_branch
          %270 = sbr.rel (%p268) target = $region20
        $region19: #{tpu_custom_call.1} parent=11 // pred_region
          %s272 = ssub.s32 512, 512
          %273 = vsyncadd [#allocation6], %s272
          %s274 = sshll.u32 [#allocation5], 4
          %s275 = int_to_ptr.vmem [resolvable:$true] %s274
          %280 = dma.hbm_to_vmem [thread:$0]  %s2, 512, %s275, [#allocation6], 256, 256, 16
        $region20: #{tpu_custom_call.1} parent=11 // pred_fallthru
          _
        // Predicated region
        $region21: #{tpu_custom_call.1} parent=11 // pred_check
          %p281 = pneg %p109
        $region22: #{tpu_custom_call.1} parent=11 // pred_check_branch
          %283 = sbr.rel (%p281) target = $region24
        $region23: #{tpu_custom_call.1} parent=11 // pred_region
          _
        $region24: #{tpu_custom_call.1} parent=11 // pred_fallthru
          _
        // Predicated region
        $region25: #{tpu_custom_call.1} parent=11 // pred_check
          %p284 = pneg %p130
        $region26: #{tpu_custom_call.1} parent=11 // pred_check_branch
          %286 = sbr.rel (%p284) target = $region28
        $region27: #{tpu_custom_call.1} parent=11 // pred_region
          _
        $region28: #{tpu_custom_call.1} parent=11 // pred_fallthru
          _
        // Predicated region
        $region29: #{tpu_custom_call.1} parent=11 // pred_check
          %p287 = pneg %p151
        $region30: #{tpu_custom_call.1} parent=11 // pred_check_branch
          %289 = sbr.rel (%p287) target = $region32
        $region31: #{tpu_custom_call.1} parent=11 // pred_region
          _
        $region32: #{tpu_custom_call.1} parent=11 // pred_fallthru
          _
        // Predicated region
        $region33: #{tpu_custom_call.1} parent=11 // pred_check
          %p290 = pneg %p172
        $region34: #{tpu_custom_call.1} parent=11 // pred_check_branch
          %292 = sbr.rel (%p290) target = $region36
        $region35: #{tpu_custom_call.1} parent=11 // pred_region
          _
        $region36: #{tpu_custom_call.1} parent=11 // pred_fallthru
          _
        // Predicated region
        $region37: #{tpu_custom_call.1} parent=11 // pred_check
          %p293 = pneg %p193
        $region38: #{tpu_custom_call.1} parent=11 // pred_check_branch
          %295 = sbr.rel (%p293) target = $region40
        $region39: #{tpu_custom_call.1} parent=11 // pred_region
          _
        $region40: #{tpu_custom_call.1} parent=11 // pred_fallthru
          _
        // Predicated region
        $region41: #{tpu_custom_call.1} parent=11 // pred_check
          %p296 = pneg %p214
        $region42: #{tpu_custom_call.1} parent=11 // pred_check_branch
          %298 = sbr.rel (%p296) target = $region44
        $region43: #{tpu_custom_call.1} parent=11 // pred_region
          _
        $region44: #{tpu_custom_call.1} parent=11 // pred_fallthru
          _
      $region12: #{tpu_custom_call.1} parent=5 // pred_fallthru
        _
      %p299 = scmp.lt.s32.totalorder %s20, 2
      // Predicated region
      $region45: #{tpu_custom_call.1} parent=5 // pred_check
        %p300 = pneg %p299
      $region46: #{tpu_custom_call.1} parent=5 // pred_check_branch
        %302 = sbr.rel (%p300) target = $region48
      $region47: #{tpu_custom_call.1} parent=5 // pred_region
        // Predicated region
        $region49: #{tpu_custom_call.1} parent=47 // pred_check
          %p303 = pneg %p40
        $region50: #{tpu_custom_call.1} parent=47 // pred_check_branch
          %305 = sbr.rel (%p303) target = $region52
        $region51: #{tpu_custom_call.1} parent=47 // pred_region
          %p306 = scmp.lt.s32.totalorder %s20, 1
          %s307 = scalar_select %p306, %s20, 1
          %s308 = smul.addr %s307, 32
          %s309 = smul.addr %s308, 8
          %s310 = scalar_lea.vmem %s0, %s309
        $region52: #{tpu_custom_call.1} parent=47 // pred_fallthru
          _
      $region48: #{tpu_custom_call.1} parent=5 // pred_fallthru
        _
      %p311 = scmp.le.s32.totalorder 1, %s20
      %p312 = scmp.lt.s32.totalorder %s20, 3
      %p313 = pnand %p311, %p312
      %p314 = pneg %p313
      // Predicated region
      $region53: #{tpu_custom_call.1} parent=5 // pred_check
        _
      $region54: #{tpu_custom_call.1} parent=5 // pred_check_branch
        %316 = sbr.rel (%p313) target = $region56
      $region55: #{tpu_custom_call.1} parent=5 // pred_region
        %s317 = ssub.s32 %s20, 1
        // Predicated region
        $region57: #{tpu_custom_call.1} parent=55 // pred_check
          %p318 = pneg %p67
        $region58: #{tpu_custom_call.1} parent=55 // pred_check_branch
          %320 = sbr.rel (%p318) target = $region60
        $region59: #{tpu_custom_call.1} parent=55 // pred_region
          %321 = dma.done [#allocation3], 512
        $region60: #{tpu_custom_call.1} parent=55 // pred_fallthru
          _
        // Predicated region
        $region61: #{tpu_custom_call.1} parent=55 // pred_check
          %p322 = pneg %p88
        $region62: #{tpu_custom_call.1} parent=55 // pred_check_branch
          %324 = sbr.rel (%p322) target = $region64
        $region63: #{tpu_custom_call.1} parent=55 // pred_region
          %325 = dma.done [#allocation6], 512
        $region64: #{tpu_custom_call.1} parent=55 // pred_fallthru
          _
        %p326 = scmp.lt.s32.totalorder %s25, 1
        %s327 = scalar_select %p326, %s25, 1
        %s328 = smul.addr %s327, 32
        %s329 = smul.addr %s328, 8
        %s330 = scalar_lea.vmem %s0, %s329
        %p331 = pneg %p46
        %p332 = pneg %p43
        %p333 = pneg %p67
        %p334 = pneg %p64
        %p335 = pneg %p88
        %p336 = pneg %p85
        %p337 = pneg %p109
        %p338 = pneg %p106
        %p339 = pneg %p130
        %p340 = pneg %p127
        %p341 = pneg %p151
        %p342 = pneg %p148
        %p343 = pneg %p172
        %p344 = pneg %p169
        %p345 = pneg %p193
        %p346 = pneg %p190
        %p347 = pneg %p214
        %p348 = pneg %p211
        %p349 = pneg %p240
        %p350 = pneg %p237
        %s351 = sand.u32 %s227, 1
        %s352 = scalar_lea.sflag [#allocation4], %s351
        %s353 = sand.u32 %s227, 1
        %s354 = smul.addr %s353, 256
        %s355 = scalar_lea.vmem [#allocation7], %s354
        %p356 = scmp.lt.s32.totalorder %s25, 1
        %s357 = scalar_select %p356, %s25, 1
        %s358 = smul.addr %s357, 32
        %s359 = smul.addr %s358, 8
        %s360 = scalar_lea.vmem %s0, %s359
        %v361 = vld [vmem:[#allocation2] sm:$0xff]
        %v362 = vld [vmem:[#allocation2 + $0x8] sm:$0xff]
        %v363 = vld [vmem:[#allocation2 + $0x10] sm:$0xff]
        %v364 = vld [vmem:[#allocation2 + $0x18] sm:$0xff]
        %v365 = vld [vmem:[#allocation5] sm:$0xff]
        %v366 = vld [vmem:[#allocation5 + $0x8] sm:$0xff]
        %v367 = vld [vmem:[#allocation5 + $0x10] sm:$0xff]
        %v368 = vld [vmem:[#allocation5 + $0x18] sm:$0xff]
        %v369 = vld [vmem:[%s3] sm:$0xff]
        %v370 = vld [vmem:[%s4] sm:$0xff]
        %v371 = vld [vmem:[%s5] sm:$0xff]
        %v372 = vld [vmem:[%s5 + $0x8] sm:$0xff]
        %v373 = vld [vmem:[%s5 + $0x10] sm:$0xff]
        %v374 = vld [vmem:[%s5 + $0x18] sm:$0xff]
        %v375 = vld [vmem:[%s5 + $0x20] sm:$0xff]
        %v376 = vld [vmem:[%s5 + $0x28] sm:$0xff]
        %v377 = vld [vmem:[%s5 + $0x30] sm:$0xff]
        %v378 = vld [vmem:[%s5 + $0x38] sm:$0xff]
        %v379 = vld [vmem:[%s5 + $0x40] sm:$0xff]
        %v380 = vld [vmem:[%s5 + $0x48] sm:$0xff]
        %v381 = vld [vmem:[%s5 + $0x50] sm:$0xff]
        %v382 = vld [vmem:[%s5 + $0x58] sm:$0xff]
        %v383 = vld [vmem:[%s5 + $0x60] sm:$0xff]
        %v384 = vld [vmem:[%s5 + $0x68] sm:$0xff]
        %v385 = vld [vmem:[%s5 + $0x70] sm:$0xff]
        %v386 = vld [vmem:[%s5 + $0x78] sm:$0xff]
        %v387 = vld [vmem:[%s6] sm:$0xff]
        %v388 = vld [vmem:[%s6 + $0x8] sm:$0xff]
        %v389 = vld [vmem:[%s6 + $0x10] sm:$0xff]
        %v390 = vld [vmem:[%s6 + $0x18] sm:$0xff]
        %v391 = vld [vmem:[%s6 + $0x20] sm:$0xff]
        %v392 = vld [vmem:[%s6 + $0x28] sm:$0xff]
        %v393 = vld [vmem:[%s6 + $0x30] sm:$0xff]
        %v394 = vld [vmem:[%s6 + $0x38] sm:$0xff]
        %v395 = vld [vmem:[%s6 + $0x40] sm:$0xff]
        %v396 = vld [vmem:[%s6 + $0x48] sm:$0xff]
        %v397 = vld [vmem:[%s6 + $0x50] sm:$0xff]
        %v398 = vld [vmem:[%s6 + $0x58] sm:$0xff]
        %v399 = vld [vmem:[%s6 + $0x60] sm:$0xff]
        %v400 = vld [vmem:[%s6 + $0x68] sm:$0xff]
        %v401 = vld [vmem:[%s6 + $0x70] sm:$0xff]
        %v402 = vld [vmem:[%s6 + $0x78] sm:$0xff]
        %v403 = vld [vmem:[%s7] sm:$0xff]
        %v404 = vld [vmem:[%s7 + $0x8] sm:$0xff]
        %v405 = vld [vmem:[%s7 + $0x10] sm:$0xff]
        %v406 = vld [vmem:[%s7 + $0x18] sm:$0xff]
        %v407 = vld [vmem:[%s7 + $0x20] sm:$0xff]
        %v408 = vld [vmem:[%s7 + $0x28] sm:$0xff]
        %v409 = vld [vmem:[%s7 + $0x30] sm:$0xff]
        %v410 = vld [vmem:[%s7 + $0x38] sm:$0xff]
        %v411 = vld [vmem:[%s7 + $0x40] sm:$0xff]
        %v412 = vld [vmem:[%s7 + $0x48] sm:$0xff]
        %v413 = vld [vmem:[%s7 + $0x50] sm:$0xff]
        %v414 = vld [vmem:[%s7 + $0x58] sm:$0xff]
        %v415 = vld [vmem:[%s7 + $0x60] sm:$0xff]
        %v416 = vld [vmem:[%s7 + $0x68] sm:$0xff]
        %v417 = vld [vmem:[%s7 + $0x70] sm:$0xff]
        %v418 = vld [vmem:[%s7 + $0x78] sm:$0xff]
        %v419 = vld [vmem:[%s8] sm:$0xff]
        %v420 = vld [vmem:[%s8 + $0x8] sm:$0xff]
        %v421 = vld [vmem:[%s8 + $0x10] sm:$0xff]
        %v422 = vld [vmem:[%s8 + $0x18] sm:$0xff]
        %v423 = vld [vmem:[%s8 + $0x20] sm:$0xff]
        %v424 = vld [vmem:[%s8 + $0x28] sm:$0xff]
        %v425 = vld [vmem:[%s8 + $0x30] sm:$0xff]
        %v426 = vld [vmem:[%s8 + $0x38] sm:$0xff]
        %v427 = vld [vmem:[%s8 + $0x40] sm:$0xff]
        %v428 = vld [vmem:[%s8 + $0x48] sm:$0xff]
        %v429 = vld [vmem:[%s8 + $0x50] sm:$0xff]
        %v430 = vld [vmem:[%s8 + $0x58] sm:$0xff]
        %v431 = vld [vmem:[%s8 + $0x60] sm:$0xff]
        %v432 = vld [vmem:[%s8 + $0x68] sm:$0xff]
        %v433 = vld [vmem:[%s8 + $0x70] sm:$0xff]
        %v434 = vld [vmem:[%s8 + $0x78] sm:$0xff]
        %v435 = vld [vmem:[%s360] sm:$0xff]
        %v436 = vld [vmem:[%s360 + $0x8] sm:$0xff]
        %v437 = vld [vmem:[%s360 + $0x10] sm:$0xff]
        %v438 = vld [vmem:[%s360 + $0x18] sm:$0xff]
        %v439 = vld [vmem:[%s360 + $0x20] sm:$0xff]
        %v440 = vld [vmem:[%s360 + $0x28] sm:$0xff]
        %v441 = vld [vmem:[%s360 + $0x30] sm:$0xff]
        %v442 = vld [vmem:[%s360 + $0x38] sm:$0xff]
        %v443 = vld [vmem:[%s360 + $0x40] sm:$0xff]
        %v444 = vld [vmem:[%s360 + $0x48] sm:$0xff]
        %v445 = vld [vmem:[%s360 + $0x50] sm:$0xff]
        %v446 = vld [vmem:[%s360 + $0x58] sm:$0xff]
        %v447 = vld [vmem:[%s360 + $0x60] sm:$0xff]
        %v448 = vld [vmem:[%s360 + $0x68] sm:$0xff]
        %v449 = vld [vmem:[%s360 + $0x70] sm:$0xff]
        %v450 = vld [vmem:[%s360 + $0x78] sm:$0xff]
        %v451 = vld [vmem:[%s360 + $0x80] sm:$0xff]
        %v452 = vld [vmem:[%s360 + $0x88] sm:$0xff]
        %v453 = vld [vmem:[%s360 + $0x90] sm:$0xff]
        %v454 = vld [vmem:[%s360 + $0x98] sm:$0xff]
        %v455 = vld [vmem:[%s360 + $0xa0] sm:$0xff]
        %v456 = vld [vmem:[%s360 + $0xa8] sm:$0xff]
        %v457 = vld [vmem:[%s360 + $0xb0] sm:$0xff]
        %v458 = vld [vmem:[%s360 + $0xb8] sm:$0xff]
        %v459 = vld [vmem:[%s360 + $0xc0] sm:$0xff]
        %v460 = vld [vmem:[%s360 + $0xc8] sm:$0xff]
        %v461 = vld [vmem:[%s360 + $0xd0] sm:$0xff]
        %v462 = vld [vmem:[%s360 + $0xd8] sm:$0xff]
        %v463 = vld [vmem:[%s360 + $0xe0] sm:$0xff]
        %v464 = vld [vmem:[%s360 + $0xe8] sm:$0xff]
        %v465 = vld [vmem:[%s360 + $0xf0] sm:$0xff]
        %v466 = vld [vmem:[%s360 + $0xf8] sm:$0xff]
        %467 = vmatprep.subr.mxu0 0.0
        %468 = vmatpush1.xpose.msra.mxu0 0.0
        %469 = vmatprep.subr.mxu0 0.0
        %470 = vmatpush1.xpose.msra.mxu0 0.0
        %471 = vmatprep.subr.mxu0 0.0
        %472 = vmatpush1.xpose.msra.mxu0 0.0
        %473 = vmatprep.subr.mxu0 0.0
        %474 = vmatpush1.xpose.msra.mxu0 0.0
        %475 = vmatprep.subr.mxu0 0.0
        %476 = vmatpush1.xpose.msra.mxu0 0.0
        %477 = vmatprep.subr.mxu0 0.0
        %478 = vmatpush1.xpose.msra.mxu0 0.0
        %479 = vmatprep.subr.mxu0 0.0
        %480 = vmatpush1.xpose.msra.mxu0 0.0
        %481 = vmatprep.subr.mxu0 0.0
        %482 = vmatpush1.xpose.msra.mxu0 0.0
        %483 = vmatprep.subr.mxu0 0.0
        %484 = vmatpush1.xpose.msra.mxu0 0.0
        %485 = vmatprep.subr.mxu0 0.0
        %486 = vmatpush1.xpose.msra.mxu0 0.0
        %487 = vmatprep.subr.mxu0 0.0
        %488 = vmatpush1.xpose.msra.mxu0 0.0
        %489 = vmatprep.subr.mxu0 0.0
        %490 = vmatpush1.xpose.msra.mxu0 0.0
        %491 = vmatprep.subr.mxu0 0.0
        %492 = vmatpush1.xpose.msra.mxu0 0.0
        %493 = vmatprep.subr.mxu0 0.0
        %494 = vmatpush1.xpose.msra.mxu0 0.0
        %v495 = vand.u32 %v364, 4294901760
        %496 = vmatprep.subr.mxu0 %v495
        %v497 = vand.u32 %v363, 4294901760
        %498 = vmatpush1.xpose.msra.mxu0 %v497
        %v499 = vand.u32 %v362, 4294901760
        %500 = vmatprep.subr.mxu0 %v499
        %v501 = vand.u32 %v361, 4294901760
        %502 = vmatpush1.xpose.msra.mxu0 %v501
        %503 = vmatprep.subr.mxu0 0.0
        %504 = vmatpush2.xpose.msra.mxu0 0.0
        %505 = vmatprep.subr.mxu0 0.0
        %506 = vmatpush2.xpose.msra.mxu0 0.0
        %507 = vmatprep.subr.mxu0 0.0
        %508 = vmatpush2.xpose.msra.mxu0 0.0
        %509 = vmatprep.subr.mxu0 0.0
        %510 = vmatpush2.xpose.msra.mxu0 0.0
        %511 = vmatprep.subr.mxu0 0.0
        %512 = vmatpush2.xpose.msra.mxu0 0.0
        %513 = vmatprep.subr.mxu0 0.0
        %514 = vmatpush2.xpose.msra.mxu0 0.0
        %515 = vmatprep.subr.mxu0 0.0
        %516 = vmatpush2.xpose.msra.mxu0 0.0
        %517 = vmatprep.subr.mxu0 0.0
        %518 = vmatpush2.xpose.msra.mxu0 0.0
        %519 = vmatprep.subr.mxu0 0.0
        %520 = vmatpush2.xpose.msra.mxu0 0.0
        %521 = vmatprep.subr.mxu0 0.0
        %522 = vmatpush2.xpose.msra.mxu0 0.0
        %523 = vmatprep.subr.mxu0 0.0
        %524 = vmatpush2.xpose.msra.mxu0 0.0
        %525 = vmatprep.subr.mxu0 0.0
        %526 = vmatpush2.xpose.msra.mxu0 0.0
        %527 = vmatprep.subr.mxu0 0.0
        %528 = vmatpush2.xpose.msra.mxu0 0.0
        %529 = vmatprep.subr.mxu0 0.0
        %530 = vmatpush2.xpose.msra.mxu0 0.0
        %531 = vmatprep.subr.mxu0 0.0
        %532 = vmatpush2.xpose.msra.mxu0 0.0
        %533 = vmatprep.subr.mxu0 0.0
        %534 = vmatpush2.xpose.msra.mxu0 0.0
        %v535 = vand.u32 %v436, 4294901760
        %v536 = vsub.f32 %v436, %v535
        %v537 = vand.u32 %v536, 4294901760
        %v538 = vsub.f32 %v536, %v537
        %v539 = vand.u32 %v538, 4294901760
        %540 = vmatprep.mubr.f32.mxu0 %v539
        %v541 = vand.u32 %v435, 4294901760
        %v542 = vsub.f32 %v435, %v541
        %v543 = vand.u32 %v542, 4294901760
        %v544 = vsub.f32 %v542, %v543
        %v545 = vand.u32 %v544, 4294901760
        %546 = vmatmul.mubr.f32.gmra.mxu0 %v545
        %v547 = vpop.f32.mrf.mxu0
        %v548 = vadd.f32 0.0, %v547
        %v549 = vpop.f32.mrf.mxu0
        %v550 = vand.u32 %v438, 4294901760
        %v551 = vsub.f32 %v438, %v550
        %v552 = vand.u32 %v551, 4294901760
        %v553 = vsub.f32 %v551, %v552
        %v554 = vand.u32 %v553, 4294901760
        %555 = vmatprep.mubr.f32.mxu0 %v554
        %v556 = vand.u32 %v437, 4294901760
        %v557 = vsub.f32 %v437, %v556
        %v558 = vand.u32 %v557, 4294901760
        %v559 = vsub.f32 %v557, %v558
        %v560 = vand.u32 %v559, 4294901760
        %561 = vmatmul.mubr.f32.gmra.mxu0 %v560
        %v562 = vpop.f32.mrf.mxu0
        %v563 = vadd.f32 0.0, %v562
        %v564 = vpop.f32.mrf.mxu0
        %v565 = vand.u32 %v440, 4294901760
        %v566 = vsub.f32 %v440, %v565
        %v567 = vand.u32 %v566, 4294901760
        %v568 = vsub.f32 %v566, %v567
        %v569 = vand.u32 %v568, 4294901760
        %570 = vmatprep.mubr.f32.mxu0 %v569
        %v571 = vand.u32 %v439, 4294901760
        %v572 = vsub.f32 %v439, %v571
        %v573 = vand.u32 %v572, 4294901760
        %v574 = vsub.f32 %v572, %v573
        %v575 = vand.u32 %v574, 4294901760
        %576 = vmatmul.mubr.f32.gmra.mxu0 %v575
        %v577 = vpop.f32.mrf.mxu0
        %v578 = vadd.f32 0.0, %v577
        %v579 = vpop.f32.mrf.mxu0
        %v580 = vand.u32 %v442, 4294901760
        %v581 = vsub.f32 %v442, %v580
        %v582 = vand.u32 %v581, 4294901760
        %v583 = vsub.f32 %v581, %v582
        %v584 = vand.u32 %v583, 4294901760
        %585 = vmatprep.mubr.f32.mxu0 %v584
        %v586 = vand.u32 %v441, 4294901760
        %v587 = vsub.f32 %v441, %v586
        %v588 = vand.u32 %v587, 4294901760
        %v589 = vsub.f32 %v587, %v588
        %v590 = vand.u32 %v589, 4294901760
        %591 = vmatmul.mubr.f32.gmra.mxu0 %v590
        %v592 = vpop.f32.mrf.mxu0
        %v593 = vadd.f32 0.0, %v592
        %v594 = vpop.f32.mrf.mxu0
        %v595 = vand.u32 %v444, 4294901760
        %v596 = vsub.f32 %v444, %v595
        %v597 = vand.u32 %v596, 4294901760
        %v598 = vsub.f32 %v596, %v597
        %v599 = vand.u32 %v598, 4294901760
        %600 = vmatprep.mubr.f32.mxu0 %v599
        %v601 = vand.u32 %v443, 4294901760
        %v602 = vsub.f32 %v443, %v601
        %v603 = vand.u32 %v602, 4294901760
        %v604 = vsub.f32 %v602, %v603
        %v605 = vand.u32 %v604, 4294901760
        %606 = vmatmul.mubr.f32.gmra.mxu0 %v605
        %v607 = vpop.f32.mrf.mxu0
        %v608 = vadd.f32 0.0, %v607
        %v609 = vpop.f32.mrf.mxu0
        %v610 = vand.u32 %v446, 4294901760
        %v611 = vsub.f32 %v446, %v610
        %v612 = vand.u32 %v611, 4294901760
        %v613 = vsub.f32 %v611, %v612
        %v614 = vand.u32 %v613, 4294901760
        %615 = vmatprep.mubr.f32.mxu0 %v614
        %v616 = vand.u32 %v445, 4294901760
        %v617 = vsub.f32 %v445, %v616
        %v618 = vand.u32 %v617, 4294901760
        %v619 = vsub.f32 %v617, %v618
        %v620 = vand.u32 %v619, 4294901760
        %621 = vmatmul.mubr.f32.gmra.mxu0 %v620
        %v622 = vpop.f32.mrf.mxu0
        %v623 = vadd.f32 0.0, %v622
        %v624 = vpop.f32.mrf.mxu0
        %v625 = vand.u32 %v448, 4294901760
        %v626 = vsub.f32 %v448, %v625
        %v627 = vand.u32 %v626, 4294901760
        %v628 = vsub.f32 %v626, %v627
        %v629 = vand.u32 %v628, 4294901760
        %630 = vmatprep.mubr.f32.mxu0 %v629
        %v631 = vand.u32 %v447, 4294901760
        %v632 = vsub.f32 %v447, %v631
        %v633 = vand.u32 %v632, 4294901760
        %v634 = vsub.f32 %v632, %v633
        %v635 = vand.u32 %v634, 4294901760
        %636 = vmatmul.mubr.f32.gmra.mxu0 %v635
        %v637 = vpop.f32.mrf.mxu0
        %v638 = vadd.f32 0.0, %v637
        %v639 = vpop.f32.mrf.mxu0
        %v640 = vand.u32 %v450, 4294901760
        %v641 = vsub.f32 %v450, %v640
        %v642 = vand.u32 %v641, 4294901760
        %v643 = vsub.f32 %v641, %v642
        %v644 = vand.u32 %v643, 4294901760
        %645 = vmatprep.mubr.f32.mxu0 %v644
        %v646 = vand.u32 %v449, 4294901760
        %v647 = vsub.f32 %v449, %v646
        %v648 = vand.u32 %v647, 4294901760
        %v649 = vsub.f32 %v647, %v648
        %v650 = vand.u32 %v649, 4294901760
        %651 = vmatmul.mubr.f32.gmra.mxu0 %v650
        %v652 = vpop.f32.mrf.mxu0
        %v653 = vadd.f32 0.0, %v652
        %v654 = vpop.f32.mrf.mxu0
        %v655 = vand.u32 %v452, 4294901760
        %v656 = vsub.f32 %v452, %v655
        %v657 = vand.u32 %v656, 4294901760
        %v658 = vsub.f32 %v656, %v657
        %v659 = vand.u32 %v658, 4294901760
        %660 = vmatprep.mubr.f32.mxu0 %v659
        %v661 = vand.u32 %v451, 4294901760
        %v662 = vsub.f32 %v451, %v661
        %v663 = vand.u32 %v662, 4294901760
        %v664 = vsub.f32 %v662, %v663
        %v665 = vand.u32 %v664, 4294901760
        %666 = vmatmul.mubr.f32.gmra.mxu0 %v665
        %v667 = vpop.f32.mrf.mxu0
        %v668 = vadd.f32 0.0, %v667
        %v669 = vpop.f32.mrf.mxu0
        %v670 = vand.u32 %v454, 4294901760
        %v671 = vsub.f32 %v454, %v670
        %v672 = vand.u32 %v671, 4294901760
        %v673 = vsub.f32 %v671, %v672
        %v674 = vand.u32 %v673, 4294901760
        %675 = vmatprep.mubr.f32.mxu0 %v674
        %v676 = vand.u32 %v453, 4294901760
        %v677 = vsub.f32 %v453, %v676
        %v678 = vand.u32 %v677, 4294901760
        %v679 = vsub.f32 %v677, %v678
        %v680 = vand.u32 %v679, 4294901760
        %681 = vmatmul.mubr.f32.gmra.mxu0 %v680
        %v682 = vpop.f32.mrf.mxu0
        %v683 = vadd.f32 0.0, %v682
        %v684 = vpop.f32.mrf.mxu0
        %v685 = vand.u32 %v456, 4294901760
        %v686 = vsub.f32 %v456, %v685
        %v687 = vand.u32 %v686, 4294901760
        %v688 = vsub.f32 %v686, %v687
        %v689 = vand.u32 %v688, 4294901760
        %690 = vmatprep.mubr.f32.mxu0 %v689
        %v691 = vand.u32 %v455, 4294901760
        %v692 = vsub.f32 %v455, %v691
        %v693 = vand.u32 %v692, 4294901760
        %v694 = vsub.f32 %v692, %v693
        %v695 = vand.u32 %v694, 4294901760
        %696 = vmatmul.mubr.f32.gmra.mxu0 %v695
        %v697 = vpop.f32.mrf.mxu0
        %v698 = vadd.f32 0.0, %v697
        %v699 = vpop.f32.mrf.mxu0
        %v700 = vand.u32 %v458, 4294901760
        %v701 = vsub.f32 %v458, %v700
        %v702 = vand.u32 %v701, 4294901760
        %v703 = vsub.f32 %v701, %v702
        %v704 = vand.u32 %v703, 4294901760
        %705 = vmatprep.mubr.f32.mxu0 %v704
        %v706 = vand.u32 %v457, 4294901760
        %v707 = vsub.f32 %v457, %v706
        %v708 = vand.u32 %v707, 4294901760
        %v709 = vsub.f32 %v707, %v708
        %v710 = vand.u32 %v709, 4294901760
        %711 = vmatmul.mubr.f32.gmra.mxu0 %v710
        %v712 = vpop.f32.mrf.mxu0
        %v713 = vadd.f32 0.0, %v712
        %v714 = vpop.f32.mrf.mxu0
        %v715 = vand.u32 %v460, 4294901760
        %v716 = vsub.f32 %v460, %v715
        %v717 = vand.u32 %v716, 4294901760
        %v718 = vsub.f32 %v716, %v717
        %v719 = vand.u32 %v718, 4294901760
        %720 = vmatprep.mubr.f32.mxu0 %v719
        %v721 = vand.u32 %v459, 4294901760
        %v722 = vsub.f32 %v459, %v721
        %v723 = vand.u32 %v722, 4294901760
        %v724 = vsub.f32 %v722, %v723
        %v725 = vand.u32 %v724, 4294901760
        %726 = vmatmul.mubr.f32.gmra.mxu0 %v725
        %v727 = vpop.f32.mrf.mxu0
        %v728 = vadd.f32 0.0, %v727
        %v729 = vpop.f32.mrf.mxu0
        %v730 = vand.u32 %v462, 4294901760
        %v731 = vsub.f32 %v462, %v730
        %v732 = vand.u32 %v731, 4294901760
        %v733 = vsub.f32 %v731, %v732
        %v734 = vand.u32 %v733, 4294901760
        %735 = vmatprep.mubr.f32.mxu0 %v734
        %v736 = vand.u32 %v461, 4294901760
        %v737 = vsub.f32 %v461, %v736
        %v738 = vand.u32 %v737, 4294901760
        %v739 = vsub.f32 %v737, %v738
        %v740 = vand.u32 %v739, 4294901760
        %741 = vmatmul.mubr.f32.gmra.mxu0 %v740
        %v742 = vpop.f32.mrf.mxu0
        %v743 = vadd.f32 0.0, %v742
        %v744 = vpop.f32.mrf.mxu0
        %v745 = vand.u32 %v464, 4294901760
        %v746 = vsub.f32 %v464, %v745
        %v747 = vand.u32 %v746, 4294901760
        %v748 = vsub.f32 %v746, %v747
        %v749 = vand.u32 %v748, 4294901760
        %750 = vmatprep.mubr.f32.mxu0 %v749
        %v751 = vand.u32 %v463, 4294901760
        %v752 = vsub.f32 %v463, %v751
        %v753 = vand.u32 %v752, 4294901760
        %v754 = vsub.f32 %v752, %v753
        %v755 = vand.u32 %v754, 4294901760
        %756 = vmatmul.mubr.f32.gmra.mxu0 %v755
        %v757 = vpop.f32.mrf.mxu0
        %v758 = vadd.f32 0.0, %v757
        %v759 = vpop.f32.mrf.mxu0
        %v760 = vand.u32 %v466, 4294901760
        %v761 = vsub.f32 %v466, %v760
        %v762 = vand.u32 %v761, 4294901760
        %v763 = vsub.f32 %v761, %v762
        %v764 = vand.u32 %v763, 4294901760
        %765 = vmatprep.mubr.f32.mxu0 %v764
        %v766 = vand.u32 %v465, 4294901760
        %v767 = vsub.f32 %v465, %v766
        %v768 = vand.u32 %v767, 4294901760
        %v769 = vsub.f32 %v767, %v768
        %v770 = vand.u32 %v769, 4294901760
        %771 = vmatmul.mubr.f32.gmra.mxu0 %v770
        %v772 = vpop.f32.mrf.mxu0
        %v773 = vadd.f32 0.0, %v772
        %v774 = vpop.f32.mrf.mxu0
        %775 = vdwg.mxu0
        %776 = vmatprep.subr.mxu0 0.0
        %777 = vmatpush1.xpose.msra.mxu0 0.0
        %778 = vmatprep.subr.mxu0 0.0
        %779 = vmatpush1.xpose.msra.mxu0 0.0
        %780 = vmatprep.subr.mxu0 0.0
        %781 = vmatpush1.xpose.msra.mxu0 0.0
        %782 = vmatprep.subr.mxu0 0.0
        %783 = vmatpush1.xpose.msra.mxu0 0.0
        %784 = vmatprep.subr.mxu0 0.0
        %785 = vmatpush1.xpose.msra.mxu0 0.0
        %786 = vmatprep.subr.mxu0 0.0
        %787 = vmatpush1.xpose.msra.mxu0 0.0
        %788 = vmatprep.subr.mxu0 0.0
        %789 = vmatpush1.xpose.msra.mxu0 0.0
        %790 = vmatprep.subr.mxu0 0.0
        %791 = vmatpush1.xpose.msra.mxu0 0.0
        %792 = vmatprep.subr.mxu0 0.0
        %793 = vmatpush1.xpose.msra.mxu0 0.0
        %794 = vmatprep.subr.mxu0 0.0
        %795 = vmatpush1.xpose.msra.mxu0 0.0
        %796 = vmatprep.subr.mxu0 0.0
        %797 = vmatpush1.xpose.msra.mxu0 0.0
        %798 = vmatprep.subr.mxu0 0.0
        %799 = vmatpush1.xpose.msra.mxu0 0.0
        %800 = vmatprep.subr.mxu0 0.0
        %801 = vmatpush1.xpose.msra.mxu0 0.0
        %802 = vmatprep.subr.mxu0 0.0
        %803 = vmatpush1.xpose.msra.mxu0 0.0
        %v804 = vand.u32 %v364, 4294901760
        %v805 = vsub.f32 %v364, %v804
        %v806 = vand.u32 %v805, 4294901760
        %v807 = vsub.f32 %v805, %v806
        %v808 = vand.u32 %v807, 4294901760
        %809 = vmatprep.subr.mxu0 %v808
        %v810 = vand.u32 %v363, 4294901760
        %v811 = vsub.f32 %v363, %v810
        %v812 = vand.u32 %v811, 4294901760
        %v813 = vsub.f32 %v811, %v812
        %v814 = vand.u32 %v813, 4294901760
        %815 = vmatpush1.xpose.msra.mxu0 %v814
        %v816 = vand.u32 %v362, 4294901760
        %v817 = vsub.f32 %v362, %v816
        %v818 = vand.u32 %v817, 4294901760
        %v819 = vsub.f32 %v817, %v818
        %v820 = vand.u32 %v819, 4294901760
        %821 = vmatprep.subr.mxu0 %v820
        %v822 = vand.u32 %v361, 4294901760
        %v823 = vsub.f32 %v361, %v822
        %v824 = vand.u32 %v823, 4294901760
        %v825 = vsub.f32 %v823, %v824
        %v826 = vand.u32 %v825, 4294901760
        %827 = vmatpush1.xpose.msra.mxu0 %v826
        %828 = vmatprep.subr.mxu0 0.0
        %829 = vmatpush2.xpose.msra.mxu0 0.0
        %830 = vmatprep.subr.mxu0 0.0
        %831 = vmatpush2.xpose.msra.mxu0 0.0
        %832 = vmatprep.subr.mxu0 0.0
        %833 = vmatpush2.xpose.msra.mxu0 0.0
        %834 = vmatprep.subr.mxu0 0.0
        %835 = vmatpush2.xpose.msra.mxu0 0.0
        %836 = vmatprep.subr.mxu0 0.0
        %837 = vmatpush2.xpose.msra.mxu0 0.0
        %838 = vmatprep.subr.mxu0 0.0
        %839 = vmatpush2.xpose.msra.mxu0 0.0
        %840 = vmatprep.subr.mxu0 0.0
        %841 = vmatpush2.xpose.msra.mxu0 0.0
        %842 = vmatprep.subr.mxu0 0.0
        %843 = vmatpush2.xpose.msra.mxu0 0.0
        %844 = vmatprep.subr.mxu0 0.0
        %845 = vmatpush2.xpose.msra.mxu0 0.0
        %846 = vmatprep.subr.mxu0 0.0
        %847 = vmatpush2.xpose.msra.mxu0 0.0
        %848 = vmatprep.subr.mxu0 0.0
        %849 = vmatpush2.xpose.msra.mxu0 0.0
        %850 = vmatprep.subr.mxu0 0.0
        %851 = vmatpush2.xpose.msra.mxu0 0.0
        %852 = vmatprep.subr.mxu0 0.0
        %853 = vmatpush2.xpose.msra.mxu0 0.0
        %854 = vmatprep.subr.mxu0 0.0
        %855 = vmatpush2.xpose.msra.mxu0 0.0
        %856 = vmatprep.subr.mxu0 0.0
        %857 = vmatpush2.xpose.msra.mxu0 0.0
        %858 = vmatprep.subr.mxu0 0.0
        %859 = vmatpush2.xpose.msra.mxu0 0.0
        %v860 = vand.u32 %v436, 4294901760
        %861 = vmatprep.mubr.f32.mxu0 %v860
        %v862 = vand.u32 %v435, 4294901760
        %863 = vmatmul.mubr.f32.gmra.mxu0 %v862
        %v864 = vpop.f32.mrf.mxu0
        %v865 = vadd.f32 %v548, %v864
        %v866 = vpop.f32.mrf.mxu0
        %v867 = vand.u32 %v438, 4294901760
        %868 = vmatprep.mubr.f32.mxu0 %v867
        %v869 = vand.u32 %v437, 4294901760
        %870 = vmatmul.mubr.f32.gmra.mxu0 %v869
        %v871 = vpop.f32.mrf.mxu0
        %v872 = vadd.f32 %v563, %v871
        %v873 = vpop.f32.mrf.mxu0
        %v874 = vand.u32 %v440, 4294901760
        %875 = vmatprep.mubr.f32.mxu0 %v874
        %v876 = vand.u32 %v439, 4294901760
        %877 = vmatmul.mubr.f32.gmra.mxu0 %v876
        %v878 = vpop.f32.mrf.mxu0
        %v879 = vadd.f32 %v578, %v878
        %v880 = vpop.f32.mrf.mxu0
        %v881 = vand.u32 %v442, 4294901760
        %882 = vmatprep.mubr.f32.mxu0 %v881
        %v883 = vand.u32 %v441, 4294901760
        %884 = vmatmul.mubr.f32.gmra.mxu0 %v883
        %v885 = vpop.f32.mrf.mxu0
        %v886 = vadd.f32 %v593, %v885
        %v887 = vpop.f32.mrf.mxu0
        %v888 = vand.u32 %v444, 4294901760
        %889 = vmatprep.mubr.f32.mxu0 %v888
        %v890 = vand.u32 %v443, 4294901760
        %891 = vmatmul.mubr.f32.gmra.mxu0 %v890
        %v892 = vpop.f32.mrf.mxu0
        %v893 = vadd.f32 %v608, %v892
        %v894 = vpop.f32.mrf.mxu0
        %v895 = vand.u32 %v446, 4294901760
        %896 = vmatprep.mubr.f32.mxu0 %v895
        %v897 = vand.u32 %v445, 4294901760
        %898 = vmatmul.mubr.f32.gmra.mxu0 %v897
        %v899 = vpop.f32.mrf.mxu0
        %v900 = vadd.f32 %v623, %v899
        %v901 = vpop.f32.mrf.mxu0
        %v902 = vand.u32 %v448, 4294901760
        %903 = vmatprep.mubr.f32.mxu0 %v902
        %v904 = vand.u32 %v447, 4294901760
        %905 = vmatmul.mubr.f32.gmra.mxu0 %v904
        %v906 = vpop.f32.mrf.mxu0
        %v907 = vadd.f32 %v638, %v906
        %v908 = vpop.f32.mrf.mxu0
        %v909 = vand.u32 %v450, 4294901760
        %910 = vmatprep.mubr.f32.mxu0 %v909
        %v911 = vand.u32 %v449, 4294901760
        %912 = vmatmul.mubr.f32.gmra.mxu0 %v911
        %v913 = vpop.f32.mrf.mxu0
        %v914 = vadd.f32 %v653, %v913
        %v915 = vpop.f32.mrf.mxu0
        %v916 = vand.u32 %v452, 4294901760
        %917 = vmatprep.mubr.f32.mxu0 %v916
        %v918 = vand.u32 %v451, 4294901760
        %919 = vmatmul.mubr.f32.gmra.mxu0 %v918
        %v920 = vpop.f32.mrf.mxu0
        %v921 = vadd.f32 %v668, %v920
        %v922 = vpop.f32.mrf.mxu0
        %v923 = vand.u32 %v454, 4294901760
        %924 = vmatprep.mubr.f32.mxu0 %v923
        %v925 = vand.u32 %v453, 4294901760
        %926 = vmatmul.mubr.f32.gmra.mxu0 %v925
        %v927 = vpop.f32.mrf.mxu0
        %v928 = vadd.f32 %v683, %v927
        %v929 = vpop.f32.mrf.mxu0
        %v930 = vand.u32 %v456, 4294901760
        %931 = vmatprep.mubr.f32.mxu0 %v930
        %v932 = vand.u32 %v455, 4294901760
        %933 = vmatmul.mubr.f32.gmra.mxu0 %v932
        %v934 = vpop.f32.mrf.mxu0
        %v935 = vadd.f32 %v698, %v934
        %v936 = vpop.f32.mrf.mxu0
        %v937 = vand.u32 %v458, 4294901760
        %938 = vmatprep.mubr.f32.mxu0 %v937
        %v939 = vand.u32 %v457, 4294901760
        %940 = vmatmul.mubr.f32.gmra.mxu0 %v939
        %v941 = vpop.f32.mrf.mxu0
        %v942 = vadd.f32 %v713, %v941
        %v943 = vpop.f32.mrf.mxu0
        %v944 = vand.u32 %v460, 4294901760
        %945 = vmatprep.mubr.f32.mxu0 %v944
        %v946 = vand.u32 %v459, 4294901760
        %947 = vmatmul.mubr.f32.gmra.mxu0 %v946
        %v948 = vpop.f32.mrf.mxu0
        %v949 = vadd.f32 %v728, %v948
        %v950 = vpop.f32.mrf.mxu0
        %v951 = vand.u32 %v462, 4294901760
        %952 = vmatprep.mubr.f32.mxu0 %v951
        %v953 = vand.u32 %v461, 4294901760
        %954 = vmatmul.mubr.f32.gmra.mxu0 %v953
        %v955 = vpop.f32.mrf.mxu0
        %v956 = vadd.f32 %v743, %v955
        %v957 = vpop.f32.mrf.mxu0
        %v958 = vand.u32 %v464, 4294901760
        %959 = vmatprep.mubr.f32.mxu0 %v958
        %v960 = vand.u32 %v463, 4294901760
        %961 = vmatmul.mubr.f32.gmra.mxu0 %v960
        %v962 = vpop.f32.mrf.mxu0
        %v963 = vadd.f32 %v758, %v962
        %v964 = vpop.f32.mrf.mxu0
        %v965 = vand.u32 %v466, 4294901760
        %966 = vmatprep.mubr.f32.mxu0 %v965
        %v967 = vand.u32 %v465, 4294901760
        %968 = vmatmul.mubr.f32.gmra.mxu0 %v967
        %v969 = vpop.f32.mrf.mxu0
        %v970 = vadd.f32 %v773, %v969
        %v971 = vpop.f32.mrf.mxu0
        %972 = vdwg.mxu0
        %973 = vmatprep.subr.mxu0 0.0
        %974 = vmatpush1.xpose.msra.mxu0 0.0
        %975 = vmatprep.subr.mxu0 0.0
        %976 = vmatpush1.xpose.msra.mxu0 0.0
        %977 = vmatprep.subr.mxu0 0.0
        %978 = vmatpush1.xpose.msra.mxu0 0.0
        %979 = vmatprep.subr.mxu0 0.0
        %980 = vmatpush1.xpose.msra.mxu0 0.0
        %981 = vmatprep.subr.mxu0 0.0
        %982 = vmatpush1.xpose.msra.mxu0 0.0
        %983 = vmatprep.subr.mxu0 0.0
        %984 = vmatpush1.xpose.msra.mxu0 0.0
        %985 = vmatprep.subr.mxu0 0.0
        %986 = vmatpush1.xpose.msra.mxu0 0.0
        %987 = vmatprep.subr.mxu0 0.0
        %988 = vmatpush1.xpose.msra.mxu0 0.0
        %989 = vmatprep.subr.mxu0 0.0
        %990 = vmatpush1.xpose.msra.mxu0 0.0
        %991 = vmatprep.subr.mxu0 0.0
        %992 = vmatpush1.xpose.msra.mxu0 0.0
        %993 = vmatprep.subr.mxu0 0.0
        %994 = vmatpush1.xpose.msra.mxu0 0.0
        %995 = vmatprep.subr.mxu0 0.0
        %996 = vmatpush1.xpose.msra.mxu0 0.0
        %997 = vmatprep.subr.mxu0 0.0
        %998 = vmatpush1.xpose.msra.mxu0 0.0
        %999 = vmatprep.subr.mxu0 0.0
        %1000 = vmatpush1.xpose.msra.mxu0 0.0
        %v1001 = vand.u32 %v364, 4294901760
        %v1002 = vsub.f32 %v364, %v1001
        %1003 = vmatprep.subr.mxu0 %v1002
        %v1004 = vand.u32 %v363, 4294901760
        %v1005 = vsub.f32 %v363, %v1004
        %1006 = vmatpush1.xpose.msra.mxu0 %v1005
        %v1007 = vand.u32 %v362, 4294901760
        %v1008 = vsub.f32 %v362, %v1007
        %1009 = vmatprep.subr.mxu0 %v1008
        %v1010 = vand.u32 %v361, 4294901760
        %v1011 = vsub.f32 %v361, %v1010
        %1012 = vmatpush1.xpose.msra.mxu0 %v1011
        %1013 = vmatprep.subr.mxu0 0.0
        %1014 = vmatpush2.xpose.msra.mxu0 0.0
        %1015 = vmatprep.subr.mxu0 0.0
        %1016 = vmatpush2.xpose.msra.mxu0 0.0
        %1017 = vmatprep.subr.mxu0 0.0
        %1018 = vmatpush2.xpose.msra.mxu0 0.0
        %1019 = vmatprep.subr.mxu0 0.0
        %1020 = vmatpush2.xpose.msra.mxu0 0.0
        %1021 = vmatprep.subr.mxu0 0.0
        %1022 = vmatpush2.xpose.msra.mxu0 0.0
        %1023 = vmatprep.subr.mxu0 0.0
        %1024 = vmatpush2.xpose.msra.mxu0 0.0
        %1025 = vmatprep.subr.mxu0 0.0
        %1026 = vmatpush2.xpose.msra.mxu0 0.0
        %1027 = vmatprep.subr.mxu0 0.0
        %1028 = vmatpush2.xpose.msra.mxu0 0.0
        %1029 = vmatprep.subr.mxu0 0.0
        %1030 = vmatpush2.xpose.msra.mxu0 0.0
        %1031 = vmatprep.subr.mxu0 0.0
        %1032 = vmatpush2.xpose.msra.mxu0 0.0
        %1033 = vmatprep.subr.mxu0 0.0
        %1034 = vmatpush2.xpose.msra.mxu0 0.0
        %1035 = vmatprep.subr.mxu0 0.0
        %1036 = vmatpush2.xpose.msra.mxu0 0.0
        %1037 = vmatprep.subr.mxu0 0.0
        %1038 = vmatpush2.xpose.msra.mxu0 0.0
        %1039 = vmatprep.subr.mxu0 0.0
        %1040 = vmatpush2.xpose.msra.mxu0 0.0
        %1041 = vmatprep.subr.mxu0 0.0
        %1042 = vmatpush2.xpose.msra.mxu0 0.0
        %1043 = vmatprep.subr.mxu0 0.0
        %1044 = vmatpush2.xpose.msra.mxu0 0.0
        %v1045 = vand.u32 %v436, 4294901760
        %v1046 = vsub.f32 %v436, %v1045
        %1047 = vmatprep.mubr.f32.mxu0 %v1046
        %v1048 = vand.u32 %v435, 4294901760
        %v1049 = vsub.f32 %v435, %v1048
        %1050 = vmatmul.mubr.f32.gmra.mxu0 %v1049
        %v1051 = vpop.f32.mrf.mxu0
        %v1052 = vadd.f32 %v865, %v1051
        %v1053 = vpop.f32.mrf.mxu0
        %v1054 = vand.u32 %v438, 4294901760
        %v1055 = vsub.f32 %v438, %v1054
        %1056 = vmatprep.mubr.f32.mxu0 %v1055
        %v1057 = vand.u32 %v437, 4294901760
        %v1058 = vsub.f32 %v437, %v1057
        %1059 = vmatmul.mubr.f32.gmra.mxu0 %v1058
        %v1060 = vpop.f32.mrf.mxu0
        %v1061 = vadd.f32 %v872, %v1060
        %v1062 = vpop.f32.mrf.mxu0
        %v1063 = vand.u32 %v440, 4294901760
        %v1064 = vsub.f32 %v440, %v1063
        %1065 = vmatprep.mubr.f32.mxu0 %v1064
        %v1066 = vand.u32 %v439, 4294901760
        %v1067 = vsub.f32 %v439, %v1066
        %1068 = vmatmul.mubr.f32.gmra.mxu0 %v1067
        %v1069 = vpop.f32.mrf.mxu0
        %v1070 = vadd.f32 %v879, %v1069
        %v1071 = vpop.f32.mrf.mxu0
        %v1072 = vand.u32 %v442, 4294901760
        %v1073 = vsub.f32 %v442, %v1072
        %1074 = vmatprep.mubr.f32.mxu0 %v1073
        %v1075 = vand.u32 %v441, 4294901760
        %v1076 = vsub.f32 %v441, %v1075
        %1077 = vmatmul.mubr.f32.gmra.mxu0 %v1076
        %v1078 = vpop.f32.mrf.mxu0
        %v1079 = vadd.f32 %v886, %v1078
        %v1080 = vpop.f32.mrf.mxu0
        %v1081 = vand.u32 %v444, 4294901760
        %v1082 = vsub.f32 %v444, %v1081
        %1083 = vmatprep.mubr.f32.mxu0 %v1082
        %v1084 = vand.u32 %v443, 4294901760
        %v1085 = vsub.f32 %v443, %v1084
        %1086 = vmatmul.mubr.f32.gmra.mxu0 %v1085
        %v1087 = vpop.f32.mrf.mxu0
        %v1088 = vadd.f32 %v893, %v1087
        %v1089 = vpop.f32.mrf.mxu0
        %v1090 = vand.u32 %v446, 4294901760
        %v1091 = vsub.f32 %v446, %v1090
        %1092 = vmatprep.mubr.f32.mxu0 %v1091
        %v1093 = vand.u32 %v445, 4294901760
        %v1094 = vsub.f32 %v445, %v1093
        %1095 = vmatmul.mubr.f32.gmra.mxu0 %v1094
        %v1096 = vpop.f32.mrf.mxu0
        %v1097 = vadd.f32 %v900, %v1096
        %v1098 = vpop.f32.mrf.mxu0
        %v1099 = vand.u32 %v448, 4294901760
        %v1100 = vsub.f32 %v448, %v1099
        %1101 = vmatprep.mubr.f32.mxu0 %v1100
        %v1102 = vand.u32 %v447, 4294901760
        %v1103 = vsub.f32 %v447, %v1102
        %1104 = vmatmul.mubr.f32.gmra.mxu0 %v1103
        %v1105 = vpop.f32.mrf.mxu0
        %v1106 = vadd.f32 %v907, %v1105
        %v1107 = vpop.f32.mrf.mxu0
        %v1108 = vand.u32 %v450, 4294901760
        %v1109 = vsub.f32 %v450, %v1108
        %1110 = vmatprep.mubr.f32.mxu0 %v1109
        %v1111 = vand.u32 %v449, 4294901760
        %v1112 = vsub.f32 %v449, %v1111
        %1113 = vmatmul.mubr.f32.gmra.mxu0 %v1112
        %v1114 = vpop.f32.mrf.mxu0
        %v1115 = vadd.f32 %v914, %v1114
        %v1116 = vpop.f32.mrf.mxu0
        %v1117 = vand.u32 %v452, 4294901760
        %v1118 = vsub.f32 %v452, %v1117
        %1119 = vmatprep.mubr.f32.mxu0 %v1118
        %v1120 = vand.u32 %v451, 4294901760
        %v1121 = vsub.f32 %v451, %v1120
        %1122 = vmatmul.mubr.f32.gmra.mxu0 %v1121
        %v1123 = vpop.f32.mrf.mxu0
        %v1124 = vadd.f32 %v921, %v1123
        %v1125 = vpop.f32.mrf.mxu0
        %v1126 = vand.u32 %v454, 4294901760
        %v1127 = vsub.f32 %v454, %v1126
        %1128 = vmatprep.mubr.f32.mxu0 %v1127
        %v1129 = vand.u32 %v453, 4294901760
        %v1130 = vsub.f32 %v453, %v1129
        %1131 = vmatmul.mubr.f32.gmra.mxu0 %v1130
        %v1132 = vpop.f32.mrf.mxu0
        %v1133 = vadd.f32 %v928, %v1132
        %v1134 = vpop.f32.mrf.mxu0
        %v1135 = vand.u32 %v456, 4294901760
        %v1136 = vsub.f32 %v456, %v1135
        %1137 = vmatprep.mubr.f32.mxu0 %v1136
        %v1138 = vand.u32 %v455, 4294901760
        %v1139 = vsub.f32 %v455, %v1138
        %1140 = vmatmul.mubr.f32.gmra.mxu0 %v1139
        %v1141 = vpop.f32.mrf.mxu0
        %v1142 = vadd.f32 %v935, %v1141
        %v1143 = vpop.f32.mrf.mxu0
        %v1144 = vand.u32 %v458, 4294901760
        %v1145 = vsub.f32 %v458, %v1144
        %1146 = vmatprep.mubr.f32.mxu0 %v1145
        %v1147 = vand.u32 %v457, 4294901760
        %v1148 = vsub.f32 %v457, %v1147
        %1149 = vmatmul.mubr.f32.gmra.mxu0 %v1148
        %v1150 = vpop.f32.mrf.mxu0
        %v1151 = vadd.f32 %v942, %v1150
        %v1152 = vpop.f32.mrf.mxu0
        %v1153 = vand.u32 %v460, 4294901760
        %v1154 = vsub.f32 %v460, %v1153
        %1155 = vmatprep.mubr.f32.mxu0 %v1154
        %v1156 = vand.u32 %v459, 4294901760
        %v1157 = vsub.f32 %v459, %v1156
        %1158 = vmatmul.mubr.f32.gmra.mxu0 %v1157
        %v1159 = vpop.f32.mrf.mxu0
        %v1160 = vadd.f32 %v949, %v1159
        %v1161 = vpop.f32.mrf.mxu0
        %v1162 = vand.u32 %v462, 4294901760
        %v1163 = vsub.f32 %v462, %v1162
        %1164 = vmatprep.mubr.f32.mxu0 %v1163
        %v1165 = vand.u32 %v461, 4294901760
        %v1166 = vsub.f32 %v461, %v1165
        %1167 = vmatmul.mubr.f32.gmra.mxu0 %v1166
        %v1168 = vpop.f32.mrf.mxu0
        %v1169 = vadd.f32 %v956, %v1168
        %v1170 = vpop.f32.mrf.mxu0
        %v1171 = vand.u32 %v464, 4294901760
        %v1172 = vsub.f32 %v464, %v1171
        %1173 = vmatprep.mubr.f32.mxu0 %v1172
        %v1174 = vand.u32 %v463, 4294901760
        %v1175 = vsub.f32 %v463, %v1174
        %1176 = vmatmul.mubr.f32.gmra.mxu0 %v1175
        %v1177 = vpop.f32.mrf.mxu0
        %v1178 = vadd.f32 %v963, %v1177
        %v1179 = vpop.f32.mrf.mxu0
        %v1180 = vand.u32 %v466, 4294901760
        %v1181 = vsub.f32 %v466, %v1180
        %1182 = vmatprep.mubr.f32.mxu0 %v1181
        %v1183 = vand.u32 %v465, 4294901760
        %v1184 = vsub.f32 %v465, %v1183
        %1185 = vmatmul.mubr.f32.gmra.mxu0 %v1184
        %v1186 = vpop.f32.mrf.mxu0
        %v1187 = vadd.f32 %v970, %v1186
        %v1188 = vpop.f32.mrf.mxu0
        %1189 = vdwg.mxu0
        %1190 = vmatprep.subr.mxu0 0.0
        %1191 = vmatpush1.xpose.msra.mxu0 0.0
        %1192 = vmatprep.subr.mxu0 0.0
        %1193 = vmatpush1.xpose.msra.mxu0 0.0
        %1194 = vmatprep.subr.mxu0 0.0
        %1195 = vmatpush1.xpose.msra.mxu0 0.0
        %1196 = vmatprep.subr.mxu0 0.0
        %1197 = vmatpush1.xpose.msra.mxu0 0.0
        %1198 = vmatprep.subr.mxu0 0.0
        %1199 = vmatpush1.xpose.msra.mxu0 0.0
        %1200 = vmatprep.subr.mxu0 0.0
        %1201 = vmatpush1.xpose.msra.mxu0 0.0
        %1202 = vmatprep.subr.mxu0 0.0
        %1203 = vmatpush1.xpose.msra.mxu0 0.0
        %1204 = vmatprep.subr.mxu0 0.0
        %1205 = vmatpush1.xpose.msra.mxu0 0.0
        %1206 = vmatprep.subr.mxu0 0.0
        %1207 = vmatpush1.xpose.msra.mxu0 0.0
        %1208 = vmatprep.subr.mxu0 0.0
        %1209 = vmatpush1.xpose.msra.mxu0 0.0
        %1210 = vmatprep.subr.mxu0 0.0
        %1211 = vmatpush1.xpose.msra.mxu0 0.0
        %1212 = vmatprep.subr.mxu0 0.0
        %1213 = vmatpush1.xpose.msra.mxu0 0.0
        %1214 = vmatprep.subr.mxu0 0.0
        %1215 = vmatpush1.xpose.msra.mxu0 0.0
        %1216 = vmatprep.subr.mxu0 0.0
        %1217 = vmatpush1.xpose.msra.mxu0 0.0
        %v1218 = vand.u32 %v364, 4294901760
        %1219 = vmatprep.subr.mxu0 %v1218
        %v1220 = vand.u32 %v363, 4294901760
        %1221 = vmatpush1.xpose.msra.mxu0 %v1220
        %v1222 = vand.u32 %v362, 4294901760
        %1223 = vmatprep.subr.mxu0 %v1222
        %v1224 = vand.u32 %v361, 4294901760
        %1225 = vmatpush1.xpose.msra.mxu0 %v1224
        %1226 = vmatprep.subr.mxu0 0.0
        %1227 = vmatpush2.xpose.msra.mxu0 0.0
        %1228 = vmatprep.subr.mxu0 0.0
        %1229 = vmatpush2.xpose.msra.mxu0 0.0
        %1230 = vmatprep.subr.mxu0 0.0
        %1231 = vmatpush2.xpose.msra.mxu0 0.0
        %1232 = vmatprep.subr.mxu0 0.0
        %1233 = vmatpush2.xpose.msra.mxu0 0.0
        %1234 = vmatprep.subr.mxu0 0.0
        %1235 = vmatpush2.xpose.msra.mxu0 0.0
        %1236 = vmatprep.subr.mxu0 0.0
        %1237 = vmatpush2.xpose.msra.mxu0 0.0
        %1238 = vmatprep.subr.mxu0 0.0
        %1239 = vmatpush2.xpose.msra.mxu0 0.0
        %1240 = vmatprep.subr.mxu0 0.0
        %1241 = vmatpush2.xpose.msra.mxu0 0.0
        %1242 = vmatprep.subr.mxu0 0.0
        %1243 = vmatpush2.xpose.msra.mxu0 0.0
        %1244 = vmatprep.subr.mxu0 0.0
        %1245 = vmatpush2.xpose.msra.mxu0 0.0
        %1246 = vmatprep.subr.mxu0 0.0
        %1247 = vmatpush2.xpose.msra.mxu0 0.0
        %1248 = vmatprep.subr.mxu0 0.0
        %1249 = vmatpush2.xpose.msra.mxu0 0.0
        %1250 = vmatprep.subr.mxu0 0.0
        %1251 = vmatpush2.xpose.msra.mxu0 0.0
        %1252 = vmatprep.subr.mxu0 0.0
        %1253 = vmatpush2.xpose.msra.mxu0 0.0
        %1254 = vmatprep.subr.mxu0 0.0
        %1255 = vmatpush2.xpose.msra.mxu0 0.0
        %1256 = vmatprep.subr.mxu0 0.0
        %1257 = vmatpush2.xpose.msra.mxu0 0.0
        %v1258 = vand.u32 %v436, 4294901760
        %v1259 = vsub.f32 %v436, %v1258
        %v1260 = vand.u32 %v1259, 4294901760
        %1261 = vmatprep.mubr.f32.mxu0 %v1260
        %v1262 = vand.u32 %v435, 4294901760
        %v1263 = vsub.f32 %v435, %v1262
        %v1264 = vand.u32 %v1263, 4294901760
        %1265 = vmatmul.mubr.f32.gmra.mxu0 %v1264
        %v1266 = vpop.f32.mrf.mxu0
        %v1267 = vadd.f32 %v1052, %v1266
        %v1268 = vpop.f32.mrf.mxu0
        %v1269 = vand.u32 %v438, 4294901760
        %v1270 = vsub.f32 %v438, %v1269
        %v1271 = vand.u32 %v1270, 4294901760
        %1272 = vmatprep.mubr.f32.mxu0 %v1271
        %v1273 = vand.u32 %v437, 4294901760
        %v1274 = vsub.f32 %v437, %v1273
        %v1275 = vand.u32 %v1274, 4294901760
        %1276 = vmatmul.mubr.f32.gmra.mxu0 %v1275
        %v1277 = vpop.f32.mrf.mxu0
        %v1278 = vadd.f32 %v1061, %v1277
        %v1279 = vpop.f32.mrf.mxu0
        %v1280 = vand.u32 %v440, 4294901760
        %v1281 = vsub.f32 %v440, %v1280
        %v1282 = vand.u32 %v1281, 4294901760
        %1283 = vmatprep.mubr.f32.mxu0 %v1282
        %v1284 = vand.u32 %v439, 4294901760
        %v1285 = vsub.f32 %v439, %v1284
        %v1286 = vand.u32 %v1285, 4294901760
        %1287 = vmatmul.mubr.f32.gmra.mxu0 %v1286
        %v1288 = vpop.f32.mrf.mxu0
        %v1289 = vadd.f32 %v1070, %v1288
        %v1290 = vpop.f32.mrf.mxu0
        %v1291 = vand.u32 %v442, 4294901760
        %v1292 = vsub.f32 %v442, %v1291
        %v1293 = vand.u32 %v1292, 4294901760
        %1294 = vmatprep.mubr.f32.mxu0 %v1293
        %v1295 = vand.u32 %v441, 4294901760
        %v1296 = vsub.f32 %v441, %v1295
        %v1297 = vand.u32 %v1296, 4294901760
        %1298 = vmatmul.mubr.f32.gmra.mxu0 %v1297
        %v1299 = vpop.f32.mrf.mxu0
        %v1300 = vadd.f32 %v1079, %v1299
        %v1301 = vpop.f32.mrf.mxu0
        %v1302 = vand.u32 %v444, 4294901760
        %v1303 = vsub.f32 %v444, %v1302
        %v1304 = vand.u32 %v1303, 4294901760
        %1305 = vmatprep.mubr.f32.mxu0 %v1304
        %v1306 = vand.u32 %v443, 4294901760
        %v1307 = vsub.f32 %v443, %v1306
        %v1308 = vand.u32 %v1307, 4294901760
        %1309 = vmatmul.mubr.f32.gmra.mxu0 %v1308
        %v1310 = vpop.f32.mrf.mxu0
        %v1311 = vadd.f32 %v1088, %v1310
        %v1312 = vpop.f32.mrf.mxu0
        %v1313 = vand.u32 %v446, 4294901760
        %v1314 = vsub.f32 %v446, %v1313
        %v1315 = vand.u32 %v1314, 4294901760
        %1316 = vmatprep.mubr.f32.mxu0 %v1315
        %v1317 = vand.u32 %v445, 4294901760
        %v1318 = vsub.f32 %v445, %v1317
        %v1319 = vand.u32 %v1318, 4294901760
        %1320 = vmatmul.mubr.f32.gmra.mxu0 %v1319
        %v1321 = vpop.f32.mrf.mxu0
        %v1322 = vadd.f32 %v1097, %v1321
        %v1323 = vpop.f32.mrf.mxu0
        %v1324 = vand.u32 %v448, 4294901760
        %v1325 = vsub.f32 %v448, %v1324
        %v1326 = vand.u32 %v1325, 4294901760
        %1327 = vmatprep.mubr.f32.mxu0 %v1326
        %v1328 = vand.u32 %v447, 4294901760
        %v1329 = vsub.f32 %v447, %v1328
        %v1330 = vand.u32 %v1329, 4294901760
        %1331 = vmatmul.mubr.f32.gmra.mxu0 %v1330
        %v1332 = vpop.f32.mrf.mxu0
        %v1333 = vadd.f32 %v1106, %v1332
        %v1334 = vpop.f32.mrf.mxu0
        %v1335 = vand.u32 %v450, 4294901760
        %v1336 = vsub.f32 %v450, %v1335
        %v1337 = vand.u32 %v1336, 4294901760
        %1338 = vmatprep.mubr.f32.mxu0 %v1337
        %v1339 = vand.u32 %v449, 4294901760
        %v1340 = vsub.f32 %v449, %v1339
        %v1341 = vand.u32 %v1340, 4294901760
        %1342 = vmatmul.mubr.f32.gmra.mxu0 %v1341
        %v1343 = vpop.f32.mrf.mxu0
        %v1344 = vadd.f32 %v1115, %v1343
        %v1345 = vpop.f32.mrf.mxu0
        %v1346 = vand.u32 %v452, 4294901760
        %v1347 = vsub.f32 %v452, %v1346
        %v1348 = vand.u32 %v1347, 4294901760
        %1349 = vmatprep.mubr.f32.mxu0 %v1348
        %v1350 = vand.u32 %v451, 4294901760
        %v1351 = vsub.f32 %v451, %v1350
        %v1352 = vand.u32 %v1351, 4294901760
        %1353 = vmatmul.mubr.f32.gmra.mxu0 %v1352
        %v1354 = vpop.f32.mrf.mxu0
        %v1355 = vadd.f32 %v1124, %v1354
        %v1356 = vpop.f32.mrf.mxu0
        %v1357 = vand.u32 %v454, 4294901760
        %v1358 = vsub.f32 %v454, %v1357
        %v1359 = vand.u32 %v1358, 4294901760
        %1360 = vmatprep.mubr.f32.mxu0 %v1359
        %v1361 = vand.u32 %v453, 4294901760
        %v1362 = vsub.f32 %v453, %v1361
        %v1363 = vand.u32 %v1362, 4294901760
        %1364 = vmatmul.mubr.f32.gmra.mxu0 %v1363
        %v1365 = vpop.f32.mrf.mxu0
        %v1366 = vadd.f32 %v1133, %v1365
        %v1367 = vpop.f32.mrf.mxu0
        %v1368 = vand.u32 %v456, 4294901760
        %v1369 = vsub.f32 %v456, %v1368
        %v1370 = vand.u32 %v1369, 4294901760
        %1371 = vmatprep.mubr.f32.mxu0 %v1370
        %v1372 = vand.u32 %v455, 4294901760
        %v1373 = vsub.f32 %v455, %v1372
        %v1374 = vand.u32 %v1373, 4294901760
        %1375 = vmatmul.mubr.f32.gmra.mxu0 %v1374
        %v1376 = vpop.f32.mrf.mxu0
        %v1377 = vadd.f32 %v1142, %v1376
        %v1378 = vpop.f32.mrf.mxu0
        %v1379 = vand.u32 %v458, 4294901760
        %v1380 = vsub.f32 %v458, %v1379
        %v1381 = vand.u32 %v1380, 4294901760
        %1382 = vmatprep.mubr.f32.mxu0 %v1381
        %v1383 = vand.u32 %v457, 4294901760
        %v1384 = vsub.f32 %v457, %v1383
        %v1385 = vand.u32 %v1384, 4294901760
        %1386 = vmatmul.mubr.f32.gmra.mxu0 %v1385
        %v1387 = vpop.f32.mrf.mxu0
        %v1388 = vadd.f32 %v1151, %v1387
        %v1389 = vpop.f32.mrf.mxu0
        %v1390 = vand.u32 %v460, 4294901760
        %v1391 = vsub.f32 %v460, %v1390
        %v1392 = vand.u32 %v1391, 4294901760
        %1393 = vmatprep.mubr.f32.mxu0 %v1392
        %v1394 = vand.u32 %v459, 4294901760
        %v1395 = vsub.f32 %v459, %v1394
        %v1396 = vand.u32 %v1395, 4294901760
        %1397 = vmatmul.mubr.f32.gmra.mxu0 %v1396
        %v1398 = vpop.f32.mrf.mxu0
        %v1399 = vadd.f32 %v1160, %v1398
        %v1400 = vpop.f32.mrf.mxu0
        %v1401 = vand.u32 %v462, 4294901760
        %v1402 = vsub.f32 %v462, %v1401
        %v1403 = vand.u32 %v1402, 4294901760
        %1404 = vmatprep.mubr.f32.mxu0 %v1403
        %v1405 = vand.u32 %v461, 4294901760
        %v1406 = vsub.f32 %v461, %v1405
        %v1407 = vand.u32 %v1406, 4294901760
        %1408 = vmatmul.mubr.f32.gmra.mxu0 %v1407
        %v1409 = vpop.f32.mrf.mxu0
        %v1410 = vadd.f32 %v1169, %v1409
        %v1411 = vpop.f32.mrf.mxu0
        %v1412 = vand.u32 %v464, 4294901760
        %v1413 = vsub.f32 %v464, %v1412
        %v1414 = vand.u32 %v1413, 4294901760
        %1415 = vmatprep.mubr.f32.mxu0 %v1414
        %v1416 = vand.u32 %v463, 4294901760
        %v1417 = vsub.f32 %v463, %v1416
        %v1418 = vand.u32 %v1417, 4294901760
        %1419 = vmatmul.mubr.f32.gmra.mxu0 %v1418
        %v1420 = vpop.f32.mrf.mxu0
        %v1421 = vadd.f32 %v1178, %v1420
        %v1422 = vpop.f32.mrf.mxu0
        %v1423 = vand.u32 %v466, 4294901760
        %v1424 = vsub.f32 %v466, %v1423
        %v1425 = vand.u32 %v1424, 4294901760
        %1426 = vmatprep.mubr.f32.mxu0 %v1425
        %v1427 = vand.u32 %v465, 4294901760
        %v1428 = vsub.f32 %v465, %v1427
        %v1429 = vand.u32 %v1428, 4294901760
        %1430 = vmatmul.mubr.f32.gmra.mxu0 %v1429
        %v1431 = vpop.f32.mrf.mxu0
        %v1432 = vadd.f32 %v1187, %v1431
        %v1433 = vpop.f32.mrf.mxu0
        %1434 = vdwg.mxu0
        %1435 = vmatprep.subr.mxu0 0.0
        %1436 = vmatpush1.xpose.msra.mxu0 0.0
        %1437 = vmatprep.subr.mxu0 0.0
        %1438 = vmatpush1.xpose.msra.mxu0 0.0
        %1439 = vmatprep.subr.mxu0 0.0
        %1440 = vmatpush1.xpose.msra.mxu0 0.0
        %1441 = vmatprep.subr.mxu0 0.0
        %1442 = vmatpush1.xpose.msra.mxu0 0.0
        %1443 = vmatprep.subr.mxu0 0.0
        %1444 = vmatpush1.xpose.msra.mxu0 0.0
        %1445 = vmatprep.subr.mxu0 0.0
        %1446 = vmatpush1.xpose.msra.mxu0 0.0
        %1447 = vmatprep.subr.mxu0 0.0
        %1448 = vmatpush1.xpose.msra.mxu0 0.0
        %1449 = vmatprep.subr.mxu0 0.0
        %1450 = vmatpush1.xpose.msra.mxu0 0.0
        %1451 = vmatprep.subr.mxu0 0.0
        %1452 = vmatpush1.xpose.msra.mxu0 0.0
        %1453 = vmatprep.subr.mxu0 0.0
        %1454 = vmatpush1.xpose.msra.mxu0 0.0
        %1455 = vmatprep.subr.mxu0 0.0
        %1456 = vmatpush1.xpose.msra.mxu0 0.0
        %1457 = vmatprep.subr.mxu0 0.0
        %1458 = vmatpush1.xpose.msra.mxu0 0.0
        %1459 = vmatprep.subr.mxu0 0.0
        %1460 = vmatpush1.xpose.msra.mxu0 0.0
        %1461 = vmatprep.subr.mxu0 0.0
        %1462 = vmatpush1.xpose.msra.mxu0 0.0
        %v1463 = vand.u32 %v364, 4294901760
        %v1464 = vsub.f32 %v364, %v1463
        %v1465 = vand.u32 %v1464, 4294901760
        %1466 = vmatprep.subr.mxu0 %v1465
        %v1467 = vand.u32 %v363, 4294901760
        %v1468 = vsub.f32 %v363, %v1467
        %v1469 = vand.u32 %v1468, 4294901760
        %1470 = vmatpush1.xpose.msra.mxu0 %v1469
        %v1471 = vand.u32 %v362, 4294901760
        %v1472 = vsub.f32 %v362, %v1471
        %v1473 = vand.u32 %v1472, 4294901760
        %1474 = vmatprep.subr.mxu0 %v1473
        %v1475 = vand.u32 %v361, 4294901760
        %v1476 = vsub.f32 %v361, %v1475
        %v1477 = vand.u32 %v1476, 4294901760
        %1478 = vmatpush1.xpose.msra.mxu0 %v1477
        %1479 = vmatprep.subr.mxu0 0.0
        %1480 = vmatpush2.xpose.msra.mxu0 0.0
        %1481 = vmatprep.subr.mxu0 0.0
        %1482 = vmatpush2.xpose.msra.mxu0 0.0
        %1483 = vmatprep.subr.mxu0 0.0
        %1484 = vmatpush2.xpose.msra.mxu0 0.0
        %1485 = vmatprep.subr.mxu0 0.0
        %1486 = vmatpush2.xpose.msra.mxu0 0.0
        %1487 = vmatprep.subr.mxu0 0.0
        %1488 = vmatpush2.xpose.msra.mxu0 0.0
        %1489 = vmatprep.subr.mxu0 0.0
        %1490 = vmatpush2.xpose.msra.mxu0 0.0
        %1491 = vmatprep.subr.mxu0 0.0
        %1492 = vmatpush2.xpose.msra.mxu0 0.0
        %1493 = vmatprep.subr.mxu0 0.0
        %1494 = vmatpush2.xpose.msra.mxu0 0.0
        %1495 = vmatprep.subr.mxu0 0.0
        %1496 = vmatpush2.xpose.msra.mxu0 0.0
        %1497 = vmatprep.subr.mxu0 0.0
        %1498 = vmatpush2.xpose.msra.mxu0 0.0
        %1499 = vmatprep.subr.mxu0 0.0
        %1500 = vmatpush2.xpose.msra.mxu0 0.0
        %1501 = vmatprep.subr.mxu0 0.0
        %1502 = vmatpush2.xpose.msra.mxu0 0.0
        %1503 = vmatprep.subr.mxu0 0.0
        %1504 = vmatpush2.xpose.msra.mxu0 0.0
        %1505 = vmatprep.subr.mxu0 0.0
        %1506 = vmatpush2.xpose.msra.mxu0 0.0
        %1507 = vmatprep.subr.mxu0 0.0
        %1508 = vmatpush2.xpose.msra.mxu0 0.0
        %1509 = vmatprep.subr.mxu0 0.0
        %1510 = vmatpush2.xpose.msra.mxu0 0.0
        %v1511 = vand.u32 %v436, 4294901760
        %1512 = vmatprep.mubr.f32.mxu0 %v1511
        %v1513 = vand.u32 %v435, 4294901760
        %1514 = vmatmul.mubr.f32.gmra.mxu0 %v1513
        %v1515 = vpop.f32.mrf.mxu0
        %v1516 = vadd.f32 %v1267, %v1515
        %v1517 = vpop.f32.mrf.mxu0
        %v1518 = vand.u32 %v438, 4294901760
        %1519 = vmatprep.mubr.f32.mxu0 %v1518
        %v1520 = vand.u32 %v437, 4294901760
        %1521 = vmatmul.mubr.f32.gmra.mxu0 %v1520
        %v1522 = vpop.f32.mrf.mxu0
        %v1523 = vadd.f32 %v1278, %v1522
        %v1524 = vpop.f32.mrf.mxu0
        %v1525 = vand.u32 %v440, 4294901760
        %1526 = vmatprep.mubr.f32.mxu0 %v1525
        %v1527 = vand.u32 %v439, 4294901760
        %1528 = vmatmul.mubr.f32.gmra.mxu0 %v1527
        %v1529 = vpop.f32.mrf.mxu0
        %v1530 = vadd.f32 %v1289, %v1529
        %v1531 = vpop.f32.mrf.mxu0
        %v1532 = vand.u32 %v442, 4294901760
        %1533 = vmatprep.mubr.f32.mxu0 %v1532
        %v1534 = vand.u32 %v441, 4294901760
        %1535 = vmatmul.mubr.f32.gmra.mxu0 %v1534
        %v1536 = vpop.f32.mrf.mxu0
        %v1537 = vadd.f32 %v1300, %v1536
        %v1538 = vpop.f32.mrf.mxu0
        %v1539 = vand.u32 %v444, 4294901760
        %1540 = vmatprep.mubr.f32.mxu0 %v1539
        %v1541 = vand.u32 %v443, 4294901760
        %1542 = vmatmul.mubr.f32.gmra.mxu0 %v1541
        %v1543 = vpop.f32.mrf.mxu0
        %v1544 = vadd.f32 %v1311, %v1543
        %v1545 = vpop.f32.mrf.mxu0
        %v1546 = vand.u32 %v446, 4294901760
        %1547 = vmatprep.mubr.f32.mxu0 %v1546
        %v1548 = vand.u32 %v445, 4294901760
        %1549 = vmatmul.mubr.f32.gmra.mxu0 %v1548
        %v1550 = vpop.f32.mrf.mxu0
        %v1551 = vadd.f32 %v1322, %v1550
        %v1552 = vpop.f32.mrf.mxu0
        %v1553 = vand.u32 %v448, 4294901760
        %1554 = vmatprep.mubr.f32.mxu0 %v1553
        %v1555 = vand.u32 %v447, 4294901760
        %1556 = vmatmul.mubr.f32.gmra.mxu0 %v1555
        %v1557 = vpop.f32.mrf.mxu0
        %v1558 = vadd.f32 %v1333, %v1557
        %v1559 = vpop.f32.mrf.mxu0
        %v1560 = vand.u32 %v450, 4294901760
        %1561 = vmatprep.mubr.f32.mxu0 %v1560
        %v1562 = vand.u32 %v449, 4294901760
        %1563 = vmatmul.mubr.f32.gmra.mxu0 %v1562
        %v1564 = vpop.f32.mrf.mxu0
        %v1565 = vadd.f32 %v1344, %v1564
        %v1566 = vpop.f32.mrf.mxu0
        %v1567 = vand.u32 %v452, 4294901760
        %1568 = vmatprep.mubr.f32.mxu0 %v1567
        %v1569 = vand.u32 %v451, 4294901760
        %1570 = vmatmul.mubr.f32.gmra.mxu0 %v1569
        %v1571 = vpop.f32.mrf.mxu0
        %v1572 = vadd.f32 %v1355, %v1571
        %v1573 = vpop.f32.mrf.mxu0
        %v1574 = vand.u32 %v454, 4294901760
        %1575 = vmatprep.mubr.f32.mxu0 %v1574
        %v1576 = vand.u32 %v453, 4294901760
        %1577 = vmatmul.mubr.f32.gmra.mxu0 %v1576
        %v1578 = vpop.f32.mrf.mxu0
        %v1579 = vadd.f32 %v1366, %v1578
        %v1580 = vpop.f32.mrf.mxu0
        %v1581 = vand.u32 %v456, 4294901760
        %1582 = vmatprep.mubr.f32.mxu0 %v1581
        %v1583 = vand.u32 %v455, 4294901760
        %1584 = vmatmul.mubr.f32.gmra.mxu0 %v1583
        %v1585 = vpop.f32.mrf.mxu0
        %v1586 = vadd.f32 %v1377, %v1585
        %v1587 = vpop.f32.mrf.mxu0
        %v1588 = vand.u32 %v458, 4294901760
        %1589 = vmatprep.mubr.f32.mxu0 %v1588
        %v1590 = vand.u32 %v457, 4294901760
        %1591 = vmatmul.mubr.f32.gmra.mxu0 %v1590
        %v1592 = vpop.f32.mrf.mxu0
        %v1593 = vadd.f32 %v1388, %v1592
        %v1594 = vpop.f32.mrf.mxu0
        %v1595 = vand.u32 %v460, 4294901760
        %1596 = vmatprep.mubr.f32.mxu0 %v1595
        %v1597 = vand.u32 %v459, 4294901760
        %1598 = vmatmul.mubr.f32.gmra.mxu0 %v1597
        %v1599 = vpop.f32.mrf.mxu0
        %v1600 = vadd.f32 %v1399, %v1599
        %v1601 = vpop.f32.mrf.mxu0
        %v1602 = vand.u32 %v462, 4294901760
        %1603 = vmatprep.mubr.f32.mxu0 %v1602
        %v1604 = vand.u32 %v461, 4294901760
        %1605 = vmatmul.mubr.f32.gmra.mxu0 %v1604
        %v1606 = vpop.f32.mrf.mxu0
        %v1607 = vadd.f32 %v1410, %v1606
        %v1608 = vpop.f32.mrf.mxu0
        %v1609 = vand.u32 %v464, 4294901760
        %1610 = vmatprep.mubr.f32.mxu0 %v1609
        %v1611 = vand.u32 %v463, 4294901760
        %1612 = vmatmul.mubr.f32.gmra.mxu0 %v1611
        %v1613 = vpop.f32.mrf.mxu0
        %v1614 = vadd.f32 %v1421, %v1613
        %v1615 = vpop.f32.mrf.mxu0
        %v1616 = vand.u32 %v466, 4294901760
        %1617 = vmatprep.mubr.f32.mxu0 %v1616
        %v1618 = vand.u32 %v465, 4294901760
        %1619 = vmatmul.mubr.f32.gmra.mxu0 %v1618
        %v1620 = vpop.f32.mrf.mxu0
        %v1621 = vadd.f32 %v1432, %v1620
        %v1622 = vpop.f32.mrf.mxu0
        %1623 = vdwg.mxu0
        %1624 = vmatprep.subr.mxu0 0.0
        %1625 = vmatpush1.xpose.msra.mxu0 0.0
        %1626 = vmatprep.subr.mxu0 0.0
        %1627 = vmatpush1.xpose.msra.mxu0 0.0
        %1628 = vmatprep.subr.mxu0 0.0
        %1629 = vmatpush1.xpose.msra.mxu0 0.0
        %1630 = vmatprep.subr.mxu0 0.0
        %1631 = vmatpush1.xpose.msra.mxu0 0.0
        %1632 = vmatprep.subr.mxu0 0.0
        %1633 = vmatpush1.xpose.msra.mxu0 0.0
        %1634 = vmatprep.subr.mxu0 0.0
        %1635 = vmatpush1.xpose.msra.mxu0 0.0
        %1636 = vmatprep.subr.mxu0 0.0
        %1637 = vmatpush1.xpose.msra.mxu0 0.0
        %1638 = vmatprep.subr.mxu0 0.0
        %1639 = vmatpush1.xpose.msra.mxu0 0.0
        %1640 = vmatprep.subr.mxu0 0.0
        %1641 = vmatpush1.xpose.msra.mxu0 0.0
        %1642 = vmatprep.subr.mxu0 0.0
        %1643 = vmatpush1.xpose.msra.mxu0 0.0
        %1644 = vmatprep.subr.mxu0 0.0
        %1645 = vmatpush1.xpose.msra.mxu0 0.0
        %1646 = vmatprep.subr.mxu0 0.0
        %1647 = vmatpush1.xpose.msra.mxu0 0.0
        %1648 = vmatprep.subr.mxu0 0.0
        %1649 = vmatpush1.xpose.msra.mxu0 0.0
        %1650 = vmatprep.subr.mxu0 0.0
        %1651 = vmatpush1.xpose.msra.mxu0 0.0
        %v1652 = vand.u32 %v364, 4294901760
        %1653 = vmatprep.subr.mxu0 %v1652
        %v1654 = vand.u32 %v363, 4294901760
        %1655 = vmatpush1.xpose.msra.mxu0 %v1654
        %v1656 = vand.u32 %v362, 4294901760
        %1657 = vmatprep.subr.mxu0 %v1656
        %v1658 = vand.u32 %v361, 4294901760
        %1659 = vmatpush1.xpose.msra.mxu0 %v1658
        %1660 = vmatprep.subr.mxu0 0.0
        %1661 = vmatpush2.xpose.msra.mxu0 0.0
        %1662 = vmatprep.subr.mxu0 0.0
        %1663 = vmatpush2.xpose.msra.mxu0 0.0
        %1664 = vmatprep.subr.mxu0 0.0
        %1665 = vmatpush2.xpose.msra.mxu0 0.0
        %1666 = vmatprep.subr.mxu0 0.0
        %1667 = vmatpush2.xpose.msra.mxu0 0.0
        %1668 = vmatprep.subr.mxu0 0.0
        %1669 = vmatpush2.xpose.msra.mxu0 0.0
        %1670 = vmatprep.subr.mxu0 0.0
        %1671 = vmatpush2.xpose.msra.mxu0 0.0
        %1672 = vmatprep.subr.mxu0 0.0
        %1673 = vmatpush2.xpose.msra.mxu0 0.0
        %1674 = vmatprep.subr.mxu0 0.0
        %1675 = vmatpush2.xpose.msra.mxu0 0.0
        %1676 = vmatprep.subr.mxu0 0.0
        %1677 = vmatpush2.xpose.msra.mxu0 0.0
        %1678 = vmatprep.subr.mxu0 0.0
        %1679 = vmatpush2.xpose.msra.mxu0 0.0
        %1680 = vmatprep.subr.mxu0 0.0
        %1681 = vmatpush2.xpose.msra.mxu0 0.0
        %1682 = vmatprep.subr.mxu0 0.0
        %1683 = vmatpush2.xpose.msra.mxu0 0.0
        %1684 = vmatprep.subr.mxu0 0.0
        %1685 = vmatpush2.xpose.msra.mxu0 0.0
        %1686 = vmatprep.subr.mxu0 0.0
        %1687 = vmatpush2.xpose.msra.mxu0 0.0
        %1688 = vmatprep.subr.mxu0 0.0
        %1689 = vmatpush2.xpose.msra.mxu0 0.0
        %1690 = vmatprep.subr.mxu0 0.0
        %1691 = vmatpush2.xpose.msra.mxu0 0.0
        %v1692 = vand.u32 %v436, 4294901760
        %1693 = vmatprep.mubr.f32.mxu0 %v1692
        %v1694 = vand.u32 %v435, 4294901760
        %1695 = vmatmul.mubr.f32.gmra.mxu0 %v1694
        %v1696 = vpop.f32.mrf.mxu0
        %v1697 = vadd.f32 %v1516, %v1696
        %v1698 = vpop.f32.mrf.mxu0
        %v1699 = vand.u32 %v438, 4294901760
        %1700 = vmatprep.mubr.f32.mxu0 %v1699
        %v1701 = vand.u32 %v437, 4294901760
        %1702 = vmatmul.mubr.f32.gmra.mxu0 %v1701
        %v1703 = vpop.f32.mrf.mxu0
        %v1704 = vadd.f32 %v1523, %v1703
        %v1705 = vpop.f32.mrf.mxu0
        %v1706 = vand.u32 %v440, 4294901760
        %1707 = vmatprep.mubr.f32.mxu0 %v1706
        %v1708 = vand.u32 %v439, 4294901760
        %1709 = vmatmul.mubr.f32.gmra.mxu0 %v1708
        %v1710 = vpop.f32.mrf.mxu0
        %v1711 = vadd.f32 %v1530, %v1710
        %v1712 = vpop.f32.mrf.mxu0
        %v1713 = vand.u32 %v442, 4294901760
        %1714 = vmatprep.mubr.f32.mxu0 %v1713
        %v1715 = vand.u32 %v441, 4294901760
        %1716 = vmatmul.mubr.f32.gmra.mxu0 %v1715
        %v1717 = vpop.f32.mrf.mxu0
        %v1718 = vadd.f32 %v1537, %v1717
        %v1719 = vpop.f32.mrf.mxu0
        %v1720 = vand.u32 %v444, 4294901760
        %1721 = vmatprep.mubr.f32.mxu0 %v1720
        %v1722 = vand.u32 %v443, 4294901760
        %1723 = vmatmul.mubr.f32.gmra.mxu0 %v1722
        %v1724 = vpop.f32.mrf.mxu0
        %v1725 = vadd.f32 %v1544, %v1724
        %v1726 = vpop.f32.mrf.mxu0
        %v1727 = vand.u32 %v446, 4294901760
        %1728 = vmatprep.mubr.f32.mxu0 %v1727
        %v1729 = vand.u32 %v445, 4294901760
        %1730 = vmatmul.mubr.f32.gmra.mxu0 %v1729
        %v1731 = vpop.f32.mrf.mxu0
        %v1732 = vadd.f32 %v1551, %v1731
        %v1733 = vpop.f32.mrf.mxu0
        %v1734 = vand.u32 %v448, 4294901760
        %1735 = vmatprep.mubr.f32.mxu0 %v1734
        %v1736 = vand.u32 %v447, 4294901760
        %1737 = vmatmul.mubr.f32.gmra.mxu0 %v1736
        %v1738 = vpop.f32.mrf.mxu0
        %v1739 = vadd.f32 %v1558, %v1738
        %v1740 = vpop.f32.mrf.mxu0
        %v1741 = vand.u32 %v450, 4294901760
        %1742 = vmatprep.mubr.f32.mxu0 %v1741
        %v1743 = vand.u32 %v449, 4294901760
        %1744 = vmatmul.mubr.f32.gmra.mxu0 %v1743
        %v1745 = vpop.f32.mrf.mxu0
        %v1746 = vadd.f32 %v1565, %v1745
        %v1747 = vpop.f32.mrf.mxu0
        %v1748 = vand.u32 %v452, 4294901760
        %1749 = vmatprep.mubr.f32.mxu0 %v1748
        %v1750 = vand.u32 %v451, 4294901760
        %1751 = vmatmul.mubr.f32.gmra.mxu0 %v1750
        %v1752 = vpop.f32.mrf.mxu0
        %v1753 = vadd.f32 %v1572, %v1752
        %v1754 = vpop.f32.mrf.mxu0
        %v1755 = vand.u32 %v454, 4294901760
        %1756 = vmatprep.mubr.f32.mxu0 %v1755
        %v1757 = vand.u32 %v453, 4294901760
        %1758 = vmatmul.mubr.f32.gmra.mxu0 %v1757
        %v1759 = vpop.f32.mrf.mxu0
        %v1760 = vadd.f32 %v1579, %v1759
        %v1761 = vpop.f32.mrf.mxu0
        %v1762 = vand.u32 %v456, 4294901760
        %1763 = vmatprep.mubr.f32.mxu0 %v1762
        %v1764 = vand.u32 %v455, 4294901760
        %1765 = vmatmul.mubr.f32.gmra.mxu0 %v1764
        %v1766 = vpop.f32.mrf.mxu0
        %v1767 = vadd.f32 %v1586, %v1766
        %v1768 = vpop.f32.mrf.mxu0
        %v1769 = vand.u32 %v458, 4294901760
        %1770 = vmatprep.mubr.f32.mxu0 %v1769
        %v1771 = vand.u32 %v457, 4294901760
        %1772 = vmatmul.mubr.f32.gmra.mxu0 %v1771
        %v1773 = vpop.f32.mrf.mxu0
        %v1774 = vadd.f32 %v1593, %v1773
        %v1775 = vpop.f32.mrf.mxu0
        %v1776 = vand.u32 %v460, 4294901760
        %1777 = vmatprep.mubr.f32.mxu0 %v1776
        %v1778 = vand.u32 %v459, 4294901760
        %1779 = vmatmul.mubr.f32.gmra.mxu0 %v1778
        %v1780 = vpop.f32.mrf.mxu0
        %v1781 = vadd.f32 %v1600, %v1780
        %v1782 = vpop.f32.mrf.mxu0
        %v1783 = vand.u32 %v462, 4294901760
        %1784 = vmatprep.mubr.f32.mxu0 %v1783
        %v1785 = vand.u32 %v461, 4294901760
        %1786 = vmatmul.mubr.f32.gmra.mxu0 %v1785
        %v1787 = vpop.f32.mrf.mxu0
        %v1788 = vadd.f32 %v1607, %v1787
        %v1789 = vpop.f32.mrf.mxu0
        %v1790 = vand.u32 %v464, 4294901760
        %1791 = vmatprep.mubr.f32.mxu0 %v1790
        %v1792 = vand.u32 %v463, 4294901760
        %1793 = vmatmul.mubr.f32.gmra.mxu0 %v1792
        %v1794 = vpop.f32.mrf.mxu0
        %v1795 = vadd.f32 %v1614, %v1794
        %v1796 = vpop.f32.mrf.mxu0
        %v1797 = vand.u32 %v466, 4294901760
        %1798 = vmatprep.mubr.f32.mxu0 %v1797
        %v1799 = vand.u32 %v465, 4294901760
        %1800 = vmatmul.mubr.f32.gmra.mxu0 %v1799
        %v1801 = vpop.f32.mrf.mxu0
        %v1802 = vadd.f32 %v1621, %v1801
        %v1803 = vpop.f32.mrf.mxu0
        %1804 = vdwg.mxu0
        %v1805 = vmul.f32 %v1697, 0.0625
        %v1806 = vmul.f32 %v1704, 0.0625
        %v1807 = vmul.f32 %v1711, 0.0625
        %v1808 = vmul.f32 %v1718, 0.0625
        %v1809 = vmul.f32 %v1725, 0.0625
        %v1810 = vmul.f32 %v1732, 0.0625
        %v1811 = vmul.f32 %v1739, 0.0625
        %v1812 = vmul.f32 %v1746, 0.0625
        %v1813 = vmul.f32 %v1753, 0.0625
        %v1814 = vmul.f32 %v1760, 0.0625
        %v1815 = vmul.f32 %v1767, 0.0625
        %v1816 = vmul.f32 %v1774, 0.0625
        %v1817 = vmul.f32 %v1781, 0.0625
        %v1818 = vmul.f32 %v1788, 0.0625
        %v1819 = vmul.f32 %v1795, 0.0625
        %v1820 = vmul.f32 %v1802, 0.0625
        %1821 = vmatprep.subr.mxu0 0.0
        %1822 = vmatpush1.xpose.msra.mxu0 0.0
        %1823 = vmatprep.subr.mxu0 0.0
        %1824 = vmatpush1.xpose.msra.mxu0 0.0
        %1825 = vmatprep.subr.mxu0 0.0
        %1826 = vmatpush1.xpose.msra.mxu0 0.0
        %1827 = vmatprep.subr.mxu0 0.0
        %1828 = vmatpush1.xpose.msra.mxu0 0.0
        %1829 = vmatprep.subr.mxu0 0.0
        %1830 = vmatpush1.xpose.msra.mxu0 0.0
        %1831 = vmatprep.subr.mxu0 0.0
        %1832 = vmatpush1.xpose.msra.mxu0 0.0
        %1833 = vmatprep.subr.mxu0 0.0
        %1834 = vmatpush1.xpose.msra.mxu0 0.0
        %1835 = vmatprep.subr.mxu0 0.0
        %1836 = vmatpush1.xpose.msra.mxu0 0.0
        %1837 = vmatprep.subr.mxu0 0.0
        %1838 = vmatpush1.xpose.msra.mxu0 0.0
        %1839 = vmatprep.subr.mxu0 0.0
        %1840 = vmatpush1.xpose.msra.mxu0 0.0
        %1841 = vmatprep.subr.mxu0 0.0
        %1842 = vmatpush1.xpose.msra.mxu0 0.0
        %1843 = vmatprep.subr.mxu0 0.0
        %1844 = vmatpush1.xpose.msra.mxu0 0.0
        %1845 = vmatprep.subr.mxu0 0.0
        %1846 = vmatpush1.xpose.msra.mxu0 0.0
        %1847 = vmatprep.subr.mxu0 0.0
        %1848 = vmatpush1.xpose.msra.mxu0 0.0
        %v1849 = vand.u32 %v368, 4294901760
        %1850 = vmatprep.subr.mxu0 %v1849
        %v1851 = vand.u32 %v367, 4294901760
        %1852 = vmatpush1.xpose.msra.mxu0 %v1851
        %v1853 = vand.u32 %v366, 4294901760
        %1854 = vmatprep.subr.mxu0 %v1853
        %v1855 = vand.u32 %v365, 4294901760
        %1856 = vmatpush1.xpose.msra.mxu0 %v1855
        %1857 = vmatprep.subr.mxu0 0.0
        %1858 = vmatpush2.xpose.msra.mxu0 0.0
        %1859 = vmatprep.subr.mxu0 0.0
        %1860 = vmatpush2.xpose.msra.mxu0 0.0
        %1861 = vmatprep.subr.mxu0 0.0
        %1862 = vmatpush2.xpose.msra.mxu0 0.0
        %1863 = vmatprep.subr.mxu0 0.0
        %1864 = vmatpush2.xpose.msra.mxu0 0.0
        %1865 = vmatprep.subr.mxu0 0.0
        %1866 = vmatpush2.xpose.msra.mxu0 0.0
        %1867 = vmatprep.subr.mxu0 0.0
        %1868 = vmatpush2.xpose.msra.mxu0 0.0
        %1869 = vmatprep.subr.mxu0 0.0
        %1870 = vmatpush2.xpose.msra.mxu0 0.0
        %1871 = vmatprep.subr.mxu0 0.0
        %1872 = vmatpush2.xpose.msra.mxu0 0.0
        %1873 = vmatprep.subr.mxu0 0.0
        %1874 = vmatpush2.xpose.msra.mxu0 0.0
        %1875 = vmatprep.subr.mxu0 0.0
        %1876 = vmatpush2.xpose.msra.mxu0 0.0
        %1877 = vmatprep.subr.mxu0 0.0
        %1878 = vmatpush2.xpose.msra.mxu0 0.0
        %1879 = vmatprep.subr.mxu0 0.0
        %1880 = vmatpush2.xpose.msra.mxu0 0.0
        %1881 = vmatprep.subr.mxu0 0.0
        %1882 = vmatpush2.xpose.msra.mxu0 0.0
        %1883 = vmatprep.subr.mxu0 0.0
        %1884 = vmatpush2.xpose.msra.mxu0 0.0
        %1885 = vmatprep.subr.mxu0 0.0
        %1886 = vmatpush2.xpose.msra.mxu0 0.0
        %1887 = vmatprep.subr.mxu0 0.0
        %1888 = vmatpush2.xpose.msra.mxu0 0.0
        %v1889 = vand.u32 %v436, 4294901760
        %v1890 = vsub.f32 %v436, %v1889
        %v1891 = vand.u32 %v1890, 4294901760
        %v1892 = vsub.f32 %v1890, %v1891
        %v1893 = vand.u32 %v1892, 4294901760
        %1894 = vmatprep.mubr.f32.mxu0 %v1893
        %v1895 = vand.u32 %v435, 4294901760
        %v1896 = vsub.f32 %v435, %v1895
        %v1897 = vand.u32 %v1896, 4294901760
        %v1898 = vsub.f32 %v1896, %v1897
        %v1899 = vand.u32 %v1898, 4294901760
        %1900 = vmatmul.mubr.f32.gmra.mxu0 %v1899
        %v1901 = vpop.f32.mrf.mxu0
        %v1902 = vadd.f32 0.0, %v1901
        %v1903 = vpop.f32.mrf.mxu0
        %v1904 = vand.u32 %v438, 4294901760
        %v1905 = vsub.f32 %v438, %v1904
        %v1906 = vand.u32 %v1905, 4294901760
        %v1907 = vsub.f32 %v1905, %v1906
        %v1908 = vand.u32 %v1907, 4294901760
        %1909 = vmatprep.mubr.f32.mxu0 %v1908
        %v1910 = vand.u32 %v437, 4294901760
        %v1911 = vsub.f32 %v437, %v1910
        %v1912 = vand.u32 %v1911, 4294901760
        %v1913 = vsub.f32 %v1911, %v1912
        %v1914 = vand.u32 %v1913, 4294901760
        %1915 = vmatmul.mubr.f32.gmra.mxu0 %v1914
        %v1916 = vpop.f32.mrf.mxu0
        %v1917 = vadd.f32 0.0, %v1916
        %v1918 = vpop.f32.mrf.mxu0
        %v1919 = vand.u32 %v440, 4294901760
        %v1920 = vsub.f32 %v440, %v1919
        %v1921 = vand.u32 %v1920, 4294901760
        %v1922 = vsub.f32 %v1920, %v1921
        %v1923 = vand.u32 %v1922, 4294901760
        %1924 = vmatprep.mubr.f32.mxu0 %v1923
        %v1925 = vand.u32 %v439, 4294901760
        %v1926 = vsub.f32 %v439, %v1925
        %v1927 = vand.u32 %v1926, 4294901760
        %v1928 = vsub.f32 %v1926, %v1927
        %v1929 = vand.u32 %v1928, 4294901760
        %1930 = vmatmul.mubr.f32.gmra.mxu0 %v1929
        %v1931 = vpop.f32.mrf.mxu0
        %v1932 = vadd.f32 0.0, %v1931
        %v1933 = vpop.f32.mrf.mxu0
        %v1934 = vand.u32 %v442, 4294901760
        %v1935 = vsub.f32 %v442, %v1934
        %v1936 = vand.u32 %v1935, 4294901760
        %v1937 = vsub.f32 %v1935, %v1936
        %v1938 = vand.u32 %v1937, 4294901760
        %1939 = vmatprep.mubr.f32.mxu0 %v1938
        %v1940 = vand.u32 %v441, 4294901760
        %v1941 = vsub.f32 %v441, %v1940
        %v1942 = vand.u32 %v1941, 4294901760
        %v1943 = vsub.f32 %v1941, %v1942
        %v1944 = vand.u32 %v1943, 4294901760
        %1945 = vmatmul.mubr.f32.gmra.mxu0 %v1944
        %v1946 = vpop.f32.mrf.mxu0
        %v1947 = vadd.f32 0.0, %v1946
        %v1948 = vpop.f32.mrf.mxu0
        %v1949 = vand.u32 %v444, 4294901760
        %v1950 = vsub.f32 %v444, %v1949
        %v1951 = vand.u32 %v1950, 4294901760
        %v1952 = vsub.f32 %v1950, %v1951
        %v1953 = vand.u32 %v1952, 4294901760
        %1954 = vmatprep.mubr.f32.mxu0 %v1953
        %v1955 = vand.u32 %v443, 4294901760
        %v1956 = vsub.f32 %v443, %v1955
        %v1957 = vand.u32 %v1956, 4294901760
        %v1958 = vsub.f32 %v1956, %v1957
        %v1959 = vand.u32 %v1958, 4294901760
        %1960 = vmatmul.mubr.f32.gmra.mxu0 %v1959
        %v1961 = vpop.f32.mrf.mxu0
        %v1962 = vadd.f32 0.0, %v1961
        %v1963 = vpop.f32.mrf.mxu0
        %v1964 = vand.u32 %v446, 4294901760
        %v1965 = vsub.f32 %v446, %v1964
        %v1966 = vand.u32 %v1965, 4294901760
        %v1967 = vsub.f32 %v1965, %v1966
        %v1968 = vand.u32 %v1967, 4294901760
        %1969 = vmatprep.mubr.f32.mxu0 %v1968
        %v1970 = vand.u32 %v445, 4294901760
        %v1971 = vsub.f32 %v445, %v1970
        %v1972 = vand.u32 %v1971, 4294901760
        %v1973 = vsub.f32 %v1971, %v1972
        %v1974 = vand.u32 %v1973, 4294901760
        %1975 = vmatmul.mubr.f32.gmra.mxu0 %v1974
        %v1976 = vpop.f32.mrf.mxu0
        %v1977 = vadd.f32 0.0, %v1976
        %v1978 = vpop.f32.mrf.mxu0
        %v1979 = vand.u32 %v448, 4294901760
        %v1980 = vsub.f32 %v448, %v1979
        %v1981 = vand.u32 %v1980, 4294901760
        %v1982 = vsub.f32 %v1980, %v1981
        %v1983 = vand.u32 %v1982, 4294901760
        %1984 = vmatprep.mubr.f32.mxu0 %v1983
        %v1985 = vand.u32 %v447, 4294901760
        %v1986 = vsub.f32 %v447, %v1985
        %v1987 = vand.u32 %v1986, 4294901760
        %v1988 = vsub.f32 %v1986, %v1987
        %v1989 = vand.u32 %v1988, 4294901760
        %1990 = vmatmul.mubr.f32.gmra.mxu0 %v1989
        %v1991 = vpop.f32.mrf.mxu0
        %v1992 = vadd.f32 0.0, %v1991
        %v1993 = vpop.f32.mrf.mxu0
        %v1994 = vand.u32 %v450, 4294901760
        %v1995 = vsub.f32 %v450, %v1994
        %v1996 = vand.u32 %v1995, 4294901760
        %v1997 = vsub.f32 %v1995, %v1996
        %v1998 = vand.u32 %v1997, 4294901760
        %1999 = vmatprep.mubr.f32.mxu0 %v1998
        %v2000 = vand.u32 %v449, 4294901760
        %v2001 = vsub.f32 %v449, %v2000
        %v2002 = vand.u32 %v2001, 4294901760
        %v2003 = vsub.f32 %v2001, %v2002
        %v2004 = vand.u32 %v2003, 4294901760
        %2005 = vmatmul.mubr.f32.gmra.mxu0 %v2004
        %v2006 = vpop.f32.mrf.mxu0
        %v2007 = vadd.f32 0.0, %v2006
        %v2008 = vpop.f32.mrf.mxu0
        %v2009 = vand.u32 %v452, 4294901760
        %v2010 = vsub.f32 %v452, %v2009
        %v2011 = vand.u32 %v2010, 4294901760
        %v2012 = vsub.f32 %v2010, %v2011
        %v2013 = vand.u32 %v2012, 4294901760
        %2014 = vmatprep.mubr.f32.mxu0 %v2013
        %v2015 = vand.u32 %v451, 4294901760
        %v2016 = vsub.f32 %v451, %v2015
        %v2017 = vand.u32 %v2016, 4294901760
        %v2018 = vsub.f32 %v2016, %v2017
        %v2019 = vand.u32 %v2018, 4294901760
        %2020 = vmatmul.mubr.f32.gmra.mxu0 %v2019
        %v2021 = vpop.f32.mrf.mxu0
        %v2022 = vadd.f32 0.0, %v2021
        %v2023 = vpop.f32.mrf.mxu0
        %v2024 = vand.u32 %v454, 4294901760
        %v2025 = vsub.f32 %v454, %v2024
        %v2026 = vand.u32 %v2025, 4294901760
        %v2027 = vsub.f32 %v2025, %v2026
        %v2028 = vand.u32 %v2027, 4294901760
        %2029 = vmatprep.mubr.f32.mxu0 %v2028
        %v2030 = vand.u32 %v453, 4294901760
        %v2031 = vsub.f32 %v453, %v2030
        %v2032 = vand.u32 %v2031, 4294901760
        %v2033 = vsub.f32 %v2031, %v2032
        %v2034 = vand.u32 %v2033, 4294901760
        %2035 = vmatmul.mubr.f32.gmra.mxu0 %v2034
        %v2036 = vpop.f32.mrf.mxu0
        %v2037 = vadd.f32 0.0, %v2036
        %v2038 = vpop.f32.mrf.mxu0
        %v2039 = vand.u32 %v456, 4294901760
        %v2040 = vsub.f32 %v456, %v2039
        %v2041 = vand.u32 %v2040, 4294901760
        %v2042 = vsub.f32 %v2040, %v2041
        %v2043 = vand.u32 %v2042, 4294901760
        %2044 = vmatprep.mubr.f32.mxu0 %v2043
        %v2045 = vand.u32 %v455, 4294901760
        %v2046 = vsub.f32 %v455, %v2045
        %v2047 = vand.u32 %v2046, 4294901760
        %v2048 = vsub.f32 %v2046, %v2047
        %v2049 = vand.u32 %v2048, 4294901760
        %2050 = vmatmul.mubr.f32.gmra.mxu0 %v2049
        %v2051 = vpop.f32.mrf.mxu0
        %v2052 = vadd.f32 0.0, %v2051
        %v2053 = vpop.f32.mrf.mxu0
        %v2054 = vand.u32 %v458, 4294901760
        %v2055 = vsub.f32 %v458, %v2054
        %v2056 = vand.u32 %v2055, 4294901760
        %v2057 = vsub.f32 %v2055, %v2056
        %v2058 = vand.u32 %v2057, 4294901760
        %2059 = vmatprep.mubr.f32.mxu0 %v2058
        %v2060 = vand.u32 %v457, 4294901760
        %v2061 = vsub.f32 %v457, %v2060
        %v2062 = vand.u32 %v2061, 4294901760
        %v2063 = vsub.f32 %v2061, %v2062
        %v2064 = vand.u32 %v2063, 4294901760
        %2065 = vmatmul.mubr.f32.gmra.mxu0 %v2064
        %v2066 = vpop.f32.mrf.mxu0
        %v2067 = vadd.f32 0.0, %v2066
        %v2068 = vpop.f32.mrf.mxu0
        %v2069 = vand.u32 %v460, 4294901760
        %v2070 = vsub.f32 %v460, %v2069
        %v2071 = vand.u32 %v2070, 4294901760
        %v2072 = vsub.f32 %v2070, %v2071
        %v2073 = vand.u32 %v2072, 4294901760
        %2074 = vmatprep.mubr.f32.mxu0 %v2073
        %v2075 = vand.u32 %v459, 4294901760
        %v2076 = vsub.f32 %v459, %v2075
        %v2077 = vand.u32 %v2076, 4294901760
        %v2078 = vsub.f32 %v2076, %v2077
        %v2079 = vand.u32 %v2078, 4294901760
        %2080 = vmatmul.mubr.f32.gmra.mxu0 %v2079
        %v2081 = vpop.f32.mrf.mxu0
        %v2082 = vadd.f32 0.0, %v2081
        %v2083 = vpop.f32.mrf.mxu0
        %v2084 = vand.u32 %v462, 4294901760
        %v2085 = vsub.f32 %v462, %v2084
        %v2086 = vand.u32 %v2085, 4294901760
        %v2087 = vsub.f32 %v2085, %v2086
        %v2088 = vand.u32 %v2087, 4294901760
        %2089 = vmatprep.mubr.f32.mxu0 %v2088
        %v2090 = vand.u32 %v461, 4294901760
        %v2091 = vsub.f32 %v461, %v2090
        %v2092 = vand.u32 %v2091, 4294901760
        %v2093 = vsub.f32 %v2091, %v2092
        %v2094 = vand.u32 %v2093, 4294901760
        %2095 = vmatmul.mubr.f32.gmra.mxu0 %v2094
        %v2096 = vpop.f32.mrf.mxu0
        %v2097 = vadd.f32 0.0, %v2096
        %v2098 = vpop.f32.mrf.mxu0
        %v2099 = vand.u32 %v464, 4294901760
        %v2100 = vsub.f32 %v464, %v2099
        %v2101 = vand.u32 %v2100, 4294901760
        %v2102 = vsub.f32 %v2100, %v2101
        %v2103 = vand.u32 %v2102, 4294901760
        %2104 = vmatprep.mubr.f32.mxu0 %v2103
        %v2105 = vand.u32 %v463, 4294901760
        %v2106 = vsub.f32 %v463, %v2105
        %v2107 = vand.u32 %v2106, 4294901760
        %v2108 = vsub.f32 %v2106, %v2107
        %v2109 = vand.u32 %v2108, 4294901760
        %2110 = vmatmul.mubr.f32.gmra.mxu0 %v2109
        %v2111 = vpop.f32.mrf.mxu0
        %v2112 = vadd.f32 0.0, %v2111
        %v2113 = vpop.f32.mrf.mxu0
        %v2114 = vand.u32 %v466, 4294901760
        %v2115 = vsub.f32 %v466, %v2114
        %v2116 = vand.u32 %v2115, 4294901760
        %v2117 = vsub.f32 %v2115, %v2116
        %v2118 = vand.u32 %v2117, 4294901760
        %2119 = vmatprep.mubr.f32.mxu0 %v2118
        %v2120 = vand.u32 %v465, 4294901760
        %v2121 = vsub.f32 %v465, %v2120
        %v2122 = vand.u32 %v2121, 4294901760
        %v2123 = vsub.f32 %v2121, %v2122
        %v2124 = vand.u32 %v2123, 4294901760
        %2125 = vmatmul.mubr.f32.gmra.mxu0 %v2124
        %v2126 = vpop.f32.mrf.mxu0
        %v2127 = vadd.f32 0.0, %v2126
        %v2128 = vpop.f32.mrf.mxu0
        %2129 = vdwg.mxu0
        %2130 = vmatprep.subr.mxu0 0.0
        %2131 = vmatpush1.xpose.msra.mxu0 0.0
        %2132 = vmatprep.subr.mxu0 0.0
        %2133 = vmatpush1.xpose.msra.mxu0 0.0
        %2134 = vmatprep.subr.mxu0 0.0
        %2135 = vmatpush1.xpose.msra.mxu0 0.0
        %2136 = vmatprep.subr.mxu0 0.0
        %2137 = vmatpush1.xpose.msra.mxu0 0.0
        %2138 = vmatprep.subr.mxu0 0.0
        %2139 = vmatpush1.xpose.msra.mxu0 0.0
        %2140 = vmatprep.subr.mxu0 0.0
        %2141 = vmatpush1.xpose.msra.mxu0 0.0
        %2142 = vmatprep.subr.mxu0 0.0
        %2143 = vmatpush1.xpose.msra.mxu0 0.0
        %2144 = vmatprep.subr.mxu0 0.0
        %2145 = vmatpush1.xpose.msra.mxu0 0.0
        %2146 = vmatprep.subr.mxu0 0.0
        %2147 = vmatpush1.xpose.msra.mxu0 0.0
        %2148 = vmatprep.subr.mxu0 0.0
        %2149 = vmatpush1.xpose.msra.mxu0 0.0
        %2150 = vmatprep.subr.mxu0 0.0
        %2151 = vmatpush1.xpose.msra.mxu0 0.0
        %2152 = vmatprep.subr.mxu0 0.0
        %2153 = vmatpush1.xpose.msra.mxu0 0.0
        %2154 = vmatprep.subr.mxu0 0.0
        %2155 = vmatpush1.xpose.msra.mxu0 0.0
        %2156 = vmatprep.subr.mxu0 0.0
        %2157 = vmatpush1.xpose.msra.mxu0 0.0
        %v2158 = vand.u32 %v368, 4294901760
        %v2159 = vsub.f32 %v368, %v2158
        %v2160 = vand.u32 %v2159, 4294901760
        %v2161 = vsub.f32 %v2159, %v2160
        %v2162 = vand.u32 %v2161, 4294901760
        %2163 = vmatprep.subr.mxu0 %v2162
        %v2164 = vand.u32 %v367, 4294901760
        %v2165 = vsub.f32 %v367, %v2164
        %v2166 = vand.u32 %v2165, 4294901760
        %v2167 = vsub.f32 %v2165, %v2166
        %v2168 = vand.u32 %v2167, 4294901760
        %2169 = vmatpush1.xpose.msra.mxu0 %v2168
        %v2170 = vand.u32 %v366, 4294901760
        %v2171 = vsub.f32 %v366, %v2170
        %v2172 = vand.u32 %v2171, 4294901760
        %v2173 = vsub.f32 %v2171, %v2172
        %v2174 = vand.u32 %v2173, 4294901760
        %2175 = vmatprep.subr.mxu0 %v2174
        %v2176 = vand.u32 %v365, 4294901760
        %v2177 = vsub.f32 %v365, %v2176
        %v2178 = vand.u32 %v2177, 4294901760
        %v2179 = vsub.f32 %v2177, %v2178
        %v2180 = vand.u32 %v2179, 4294901760
        %2181 = vmatpush1.xpose.msra.mxu0 %v2180
        %2182 = vmatprep.subr.mxu0 0.0
        %2183 = vmatpush2.xpose.msra.mxu0 0.0
        %2184 = vmatprep.subr.mxu0 0.0
        %2185 = vmatpush2.xpose.msra.mxu0 0.0
        %2186 = vmatprep.subr.mxu0 0.0
        %2187 = vmatpush2.xpose.msra.mxu0 0.0
        %2188 = vmatprep.subr.mxu0 0.0
        %2189 = vmatpush2.xpose.msra.mxu0 0.0
        %2190 = vmatprep.subr.mxu0 0.0
        %2191 = vmatpush2.xpose.msra.mxu0 0.0
        %2192 = vmatprep.subr.mxu0 0.0
        %2193 = vmatpush2.xpose.msra.mxu0 0.0
        %2194 = vmatprep.subr.mxu0 0.0
        %2195 = vmatpush2.xpose.msra.mxu0 0.0
        %2196 = vmatprep.subr.mxu0 0.0
        %2197 = vmatpush2.xpose.msra.mxu0 0.0
        %2198 = vmatprep.subr.mxu0 0.0
        %2199 = vmatpush2.xpose.msra.mxu0 0.0
        %2200 = vmatprep.subr.mxu0 0.0
        %2201 = vmatpush2.xpose.msra.mxu0 0.0
        %2202 = vmatprep.subr.mxu0 0.0
        %2203 = vmatpush2.xpose.msra.mxu0 0.0
        %2204 = vmatprep.subr.mxu0 0.0
        %2205 = vmatpush2.xpose.msra.mxu0 0.0
        %2206 = vmatprep.subr.mxu0 0.0
        %2207 = vmatpush2.xpose.msra.mxu0 0.0
        %2208 = vmatprep.subr.mxu0 0.0
        %2209 = vmatpush2.xpose.msra.mxu0 0.0
        %2210 = vmatprep.subr.mxu0 0.0
        %2211 = vmatpush2.xpose.msra.mxu0 0.0
        %2212 = vmatprep.subr.mxu0 0.0
        %2213 = vmatpush2.xpose.msra.mxu0 0.0
        %v2214 = vand.u32 %v436, 4294901760
        %2215 = vmatprep.mubr.f32.mxu0 %v2214
        %v2216 = vand.u32 %v435, 4294901760
        %2217 = vmatmul.mubr.f32.gmra.mxu0 %v2216
        %v2218 = vpop.f32.mrf.mxu0
        %v2219 = vadd.f32 %v1902, %v2218
        %v2220 = vpop.f32.mrf.mxu0
        %v2221 = vand.u32 %v438, 4294901760
        %2222 = vmatprep.mubr.f32.mxu0 %v2221
        %v2223 = vand.u32 %v437, 4294901760
        %2224 = vmatmul.mubr.f32.gmra.mxu0 %v2223
        %v2225 = vpop.f32.mrf.mxu0
        %v2226 = vadd.f32 %v1917, %v2225
        %v2227 = vpop.f32.mrf.mxu0
        %v2228 = vand.u32 %v440, 4294901760
        %2229 = vmatprep.mubr.f32.mxu0 %v2228
        %v2230 = vand.u32 %v439, 4294901760
        %2231 = vmatmul.mubr.f32.gmra.mxu0 %v2230
        %v2232 = vpop.f32.mrf.mxu0
        %v2233 = vadd.f32 %v1932, %v2232
        %v2234 = vpop.f32.mrf.mxu0
        %v2235 = vand.u32 %v442, 4294901760
        %2236 = vmatprep.mubr.f32.mxu0 %v2235
        %v2237 = vand.u32 %v441, 4294901760
        %2238 = vmatmul.mubr.f32.gmra.mxu0 %v2237
        %v2239 = vpop.f32.mrf.mxu0
        %v2240 = vadd.f32 %v1947, %v2239
        %v2241 = vpop.f32.mrf.mxu0
        %v2242 = vand.u32 %v444, 4294901760
        %2243 = vmatprep.mubr.f32.mxu0 %v2242
        %v2244 = vand.u32 %v443, 4294901760
        %2245 = vmatmul.mubr.f32.gmra.mxu0 %v2244
        %v2246 = vpop.f32.mrf.mxu0
        %v2247 = vadd.f32 %v1962, %v2246
        %v2248 = vpop.f32.mrf.mxu0
        %v2249 = vand.u32 %v446, 4294901760
        %2250 = vmatprep.mubr.f32.mxu0 %v2249
        %v2251 = vand.u32 %v445, 4294901760
        %2252 = vmatmul.mubr.f32.gmra.mxu0 %v2251
        %v2253 = vpop.f32.mrf.mxu0
        %v2254 = vadd.f32 %v1977, %v2253
        %v2255 = vpop.f32.mrf.mxu0
        %v2256 = vand.u32 %v448, 4294901760
        %2257 = vmatprep.mubr.f32.mxu0 %v2256
        %v2258 = vand.u32 %v447, 4294901760
        %2259 = vmatmul.mubr.f32.gmra.mxu0 %v2258
        %v2260 = vpop.f32.mrf.mxu0
        %v2261 = vadd.f32 %v1992, %v2260
        %v2262 = vpop.f32.mrf.mxu0
        %v2263 = vand.u32 %v450, 4294901760
        %2264 = vmatprep.mubr.f32.mxu0 %v2263
        %v2265 = vand.u32 %v449, 4294901760
        %2266 = vmatmul.mubr.f32.gmra.mxu0 %v2265
        %v2267 = vpop.f32.mrf.mxu0
        %v2268 = vadd.f32 %v2007, %v2267
        %v2269 = vpop.f32.mrf.mxu0
        %v2270 = vand.u32 %v452, 4294901760
        %2271 = vmatprep.mubr.f32.mxu0 %v2270
        %v2272 = vand.u32 %v451, 4294901760
        %2273 = vmatmul.mubr.f32.gmra.mxu0 %v2272
        %v2274 = vpop.f32.mrf.mxu0
        %v2275 = vadd.f32 %v2022, %v2274
        %v2276 = vpop.f32.mrf.mxu0
        %v2277 = vand.u32 %v454, 4294901760
        %2278 = vmatprep.mubr.f32.mxu0 %v2277
        %v2279 = vand.u32 %v453, 4294901760
        %2280 = vmatmul.mubr.f32.gmra.mxu0 %v2279
        %v2281 = vpop.f32.mrf.mxu0
        %v2282 = vadd.f32 %v2037, %v2281
        %v2283 = vpop.f32.mrf.mxu0
        %v2284 = vand.u32 %v456, 4294901760
        %2285 = vmatprep.mubr.f32.mxu0 %v2284
        %v2286 = vand.u32 %v455, 4294901760
        %2287 = vmatmul.mubr.f32.gmra.mxu0 %v2286
        %v2288 = vpop.f32.mrf.mxu0
        %v2289 = vadd.f32 %v2052, %v2288
        %v2290 = vpop.f32.mrf.mxu0
        %v2291 = vand.u32 %v458, 4294901760
        %2292 = vmatprep.mubr.f32.mxu0 %v2291
        %v2293 = vand.u32 %v457, 4294901760
        %2294 = vmatmul.mubr.f32.gmra.mxu0 %v2293
        %v2295 = vpop.f32.mrf.mxu0
        %v2296 = vadd.f32 %v2067, %v2295
        %v2297 = vpop.f32.mrf.mxu0
        %v2298 = vand.u32 %v460, 4294901760
        %2299 = vmatprep.mubr.f32.mxu0 %v2298
        %v2300 = vand.u32 %v459, 4294901760
        %2301 = vmatmul.mubr.f32.gmra.mxu0 %v2300
        %v2302 = vpop.f32.mrf.mxu0
        %v2303 = vadd.f32 %v2082, %v2302
        %v2304 = vpop.f32.mrf.mxu0
        %v2305 = vand.u32 %v462, 4294901760
        %2306 = vmatprep.mubr.f32.mxu0 %v2305
        %v2307 = vand.u32 %v461, 4294901760
        %2308 = vmatmul.mubr.f32.gmra.mxu0 %v2307
        %v2309 = vpop.f32.mrf.mxu0
        %v2310 = vadd.f32 %v2097, %v2309
        %v2311 = vpop.f32.mrf.mxu0
        %v2312 = vand.u32 %v464, 4294901760
        %2313 = vmatprep.mubr.f32.mxu0 %v2312
        %v2314 = vand.u32 %v463, 4294901760
        %2315 = vmatmul.mubr.f32.gmra.mxu0 %v2314
        %v2316 = vpop.f32.mrf.mxu0
        %v2317 = vadd.f32 %v2112, %v2316
        %v2318 = vpop.f32.mrf.mxu0
        %v2319 = vand.u32 %v466, 4294901760
        %2320 = vmatprep.mubr.f32.mxu0 %v2319
        %v2321 = vand.u32 %v465, 4294901760
        %2322 = vmatmul.mubr.f32.gmra.mxu0 %v2321
        %v2323 = vpop.f32.mrf.mxu0
        %v2324 = vadd.f32 %v2127, %v2323
        %v2325 = vpop.f32.mrf.mxu0
        %2326 = vdwg.mxu0
        %2327 = vmatprep.subr.mxu0 0.0
        %2328 = vmatpush1.xpose.msra.mxu0 0.0
        %2329 = vmatprep.subr.mxu0 0.0
        %2330 = vmatpush1.xpose.msra.mxu0 0.0
        %2331 = vmatprep.subr.mxu0 0.0
        %2332 = vmatpush1.xpose.msra.mxu0 0.0
        %2333 = vmatprep.subr.mxu0 0.0
        %2334 = vmatpush1.xpose.msra.mxu0 0.0
        %2335 = vmatprep.subr.mxu0 0.0
        %2336 = vmatpush1.xpose.msra.mxu0 0.0
        %2337 = vmatprep.subr.mxu0 0.0
        %2338 = vmatpush1.xpose.msra.mxu0 0.0
        %2339 = vmatprep.subr.mxu0 0.0
        %2340 = vmatpush1.xpose.msra.mxu0 0.0
        %2341 = vmatprep.subr.mxu0 0.0
        %2342 = vmatpush1.xpose.msra.mxu0 0.0
        %2343 = vmatprep.subr.mxu0 0.0
        %2344 = vmatpush1.xpose.msra.mxu0 0.0
        %2345 = vmatprep.subr.mxu0 0.0
        %2346 = vmatpush1.xpose.msra.mxu0 0.0
        %2347 = vmatprep.subr.mxu0 0.0
        %2348 = vmatpush1.xpose.msra.mxu0 0.0
        %2349 = vmatprep.subr.mxu0 0.0
        %2350 = vmatpush1.xpose.msra.mxu0 0.0
        %2351 = vmatprep.subr.mxu0 0.0
        %2352 = vmatpush1.xpose.msra.mxu0 0.0
        %2353 = vmatprep.subr.mxu0 0.0
        %2354 = vmatpush1.xpose.msra.mxu0 0.0
        %v2355 = vand.u32 %v368, 4294901760
        %v2356 = vsub.f32 %v368, %v2355
        %2357 = vmatprep.subr.mxu0 %v2356
        %v2358 = vand.u32 %v367, 4294901760
        %v2359 = vsub.f32 %v367, %v2358
        %2360 = vmatpush1.xpose.msra.mxu0 %v2359
        %v2361 = vand.u32 %v366, 4294901760
        %v2362 = vsub.f32 %v366, %v2361
        %2363 = vmatprep.subr.mxu0 %v2362
        %v2364 = vand.u32 %v365, 4294901760
        %v2365 = vsub.f32 %v365, %v2364
        %2366 = vmatpush1.xpose.msra.mxu0 %v2365
        %2367 = vmatprep.subr.mxu0 0.0
        %2368 = vmatpush2.xpose.msra.mxu0 0.0
        %2369 = vmatprep.subr.mxu0 0.0
        %2370 = vmatpush2.xpose.msra.mxu0 0.0
        %2371 = vmatprep.subr.mxu0 0.0
        %2372 = vmatpush2.xpose.msra.mxu0 0.0
        %2373 = vmatprep.subr.mxu0 0.0
        %2374 = vmatpush2.xpose.msra.mxu0 0.0
        %2375 = vmatprep.subr.mxu0 0.0
        %2376 = vmatpush2.xpose.msra.mxu0 0.0
        %2377 = vmatprep.subr.mxu0 0.0
        %2378 = vmatpush2.xpose.msra.mxu0 0.0
        %2379 = vmatprep.subr.mxu0 0.0
        %2380 = vmatpush2.xpose.msra.mxu0 0.0
        %2381 = vmatprep.subr.mxu0 0.0
        %2382 = vmatpush2.xpose.msra.mxu0 0.0
        %2383 = vmatprep.subr.mxu0 0.0
        %2384 = vmatpush2.xpose.msra.mxu0 0.0
        %2385 = vmatprep.subr.mxu0 0.0
        %2386 = vmatpush2.xpose.msra.mxu0 0.0
        %2387 = vmatprep.subr.mxu0 0.0
        %2388 = vmatpush2.xpose.msra.mxu0 0.0
        %2389 = vmatprep.subr.mxu0 0.0
        %2390 = vmatpush2.xpose.msra.mxu0 0.0
        %2391 = vmatprep.subr.mxu0 0.0
        %2392 = vmatpush2.xpose.msra.mxu0 0.0
        %2393 = vmatprep.subr.mxu0 0.0
        %2394 = vmatpush2.xpose.msra.mxu0 0.0
        %2395 = vmatprep.subr.mxu0 0.0
        %2396 = vmatpush2.xpose.msra.mxu0 0.0
        %2397 = vmatprep.subr.mxu0 0.0
        %2398 = vmatpush2.xpose.msra.mxu0 0.0
        %v2399 = vand.u32 %v436, 4294901760
        %v2400 = vsub.f32 %v436, %v2399
        %2401 = vmatprep.mubr.f32.mxu0 %v2400
        %v2402 = vand.u32 %v435, 4294901760
        %v2403 = vsub.f32 %v435, %v2402
        %2404 = vmatmul.mubr.f32.gmra.mxu0 %v2403
        %v2405 = vpop.f32.mrf.mxu0
        %v2406 = vadd.f32 %v2219, %v2405
        %v2407 = vpop.f32.mrf.mxu0
        %v2408 = vand.u32 %v438, 4294901760
        %v2409 = vsub.f32 %v438, %v2408
        %2410 = vmatprep.mubr.f32.mxu0 %v2409
        %v2411 = vand.u32 %v437, 4294901760
        %v2412 = vsub.f32 %v437, %v2411
        %2413 = vmatmul.mubr.f32.gmra.mxu0 %v2412
        %v2414 = vpop.f32.mrf.mxu0
        %v2415 = vadd.f32 %v2226, %v2414
        %v2416 = vpop.f32.mrf.mxu0
        %v2417 = vand.u32 %v440, 4294901760
        %v2418 = vsub.f32 %v440, %v2417
        %2419 = vmatprep.mubr.f32.mxu0 %v2418
        %v2420 = vand.u32 %v439, 4294901760
        %v2421 = vsub.f32 %v439, %v2420
        %2422 = vmatmul.mubr.f32.gmra.mxu0 %v2421
        %v2423 = vpop.f32.mrf.mxu0
        %v2424 = vadd.f32 %v2233, %v2423
        %v2425 = vpop.f32.mrf.mxu0
        %v2426 = vand.u32 %v442, 4294901760
        %v2427 = vsub.f32 %v442, %v2426
        %2428 = vmatprep.mubr.f32.mxu0 %v2427
        %v2429 = vand.u32 %v441, 4294901760
        %v2430 = vsub.f32 %v441, %v2429
        %2431 = vmatmul.mubr.f32.gmra.mxu0 %v2430
        %v2432 = vpop.f32.mrf.mxu0
        %v2433 = vadd.f32 %v2240, %v2432
        %v2434 = vpop.f32.mrf.mxu0
        %v2435 = vand.u32 %v444, 4294901760
        %v2436 = vsub.f32 %v444, %v2435
        %2437 = vmatprep.mubr.f32.mxu0 %v2436
        %v2438 = vand.u32 %v443, 4294901760
        %v2439 = vsub.f32 %v443, %v2438
        %2440 = vmatmul.mubr.f32.gmra.mxu0 %v2439
        %v2441 = vpop.f32.mrf.mxu0
        %v2442 = vadd.f32 %v2247, %v2441
        %v2443 = vpop.f32.mrf.mxu0
        %v2444 = vand.u32 %v446, 4294901760
        %v2445 = vsub.f32 %v446, %v2444
        %2446 = vmatprep.mubr.f32.mxu0 %v2445
        %v2447 = vand.u32 %v445, 4294901760
        %v2448 = vsub.f32 %v445, %v2447
        %2449 = vmatmul.mubr.f32.gmra.mxu0 %v2448
        %v2450 = vpop.f32.mrf.mxu0
        %v2451 = vadd.f32 %v2254, %v2450
        %v2452 = vpop.f32.mrf.mxu0
        %v2453 = vand.u32 %v448, 4294901760
        %v2454 = vsub.f32 %v448, %v2453
        %2455 = vmatprep.mubr.f32.mxu0 %v2454
        %v2456 = vand.u32 %v447, 4294901760
        %v2457 = vsub.f32 %v447, %v2456
        %2458 = vmatmul.mubr.f32.gmra.mxu0 %v2457
        %v2459 = vpop.f32.mrf.mxu0
        %v2460 = vadd.f32 %v2261, %v2459
        %v2461 = vpop.f32.mrf.mxu0
        %v2462 = vand.u32 %v450, 4294901760
        %v2463 = vsub.f32 %v450, %v2462
        %2464 = vmatprep.mubr.f32.mxu0 %v2463
        %v2465 = vand.u32 %v449, 4294901760
        %v2466 = vsub.f32 %v449, %v2465
        %2467 = vmatmul.mubr.f32.gmra.mxu0 %v2466
        %v2468 = vpop.f32.mrf.mxu0
        %v2469 = vadd.f32 %v2268, %v2468
        %v2470 = vpop.f32.mrf.mxu0
        %v2471 = vand.u32 %v452, 4294901760
        %v2472 = vsub.f32 %v452, %v2471
        %2473 = vmatprep.mubr.f32.mxu0 %v2472
        %v2474 = vand.u32 %v451, 4294901760
        %v2475 = vsub.f32 %v451, %v2474
        %2476 = vmatmul.mubr.f32.gmra.mxu0 %v2475
        %v2477 = vpop.f32.mrf.mxu0
        %v2478 = vadd.f32 %v2275, %v2477
        %v2479 = vpop.f32.mrf.mxu0
        %v2480 = vand.u32 %v454, 4294901760
        %v2481 = vsub.f32 %v454, %v2480
        %2482 = vmatprep.mubr.f32.mxu0 %v2481
        %v2483 = vand.u32 %v453, 4294901760
        %v2484 = vsub.f32 %v453, %v2483
        %2485 = vmatmul.mubr.f32.gmra.mxu0 %v2484
        %v2486 = vpop.f32.mrf.mxu0
        %v2487 = vadd.f32 %v2282, %v2486
        %v2488 = vpop.f32.mrf.mxu0
        %v2489 = vand.u32 %v456, 4294901760
        %v2490 = vsub.f32 %v456, %v2489
        %2491 = vmatprep.mubr.f32.mxu0 %v2490
        %v2492 = vand.u32 %v455, 4294901760
        %v2493 = vsub.f32 %v455, %v2492
        %2494 = vmatmul.mubr.f32.gmra.mxu0 %v2493
        %v2495 = vpop.f32.mrf.mxu0
        %v2496 = vadd.f32 %v2289, %v2495
        %v2497 = vpop.f32.mrf.mxu0
        %v2498 = vand.u32 %v458, 4294901760
        %v2499 = vsub.f32 %v458, %v2498
        %2500 = vmatprep.mubr.f32.mxu0 %v2499
        %v2501 = vand.u32 %v457, 4294901760
        %v2502 = vsub.f32 %v457, %v2501
        %2503 = vmatmul.mubr.f32.gmra.mxu0 %v2502
        %v2504 = vpop.f32.mrf.mxu0
        %v2505 = vadd.f32 %v2296, %v2504
        %v2506 = vpop.f32.mrf.mxu0
        %v2507 = vand.u32 %v460, 4294901760
        %v2508 = vsub.f32 %v460, %v2507
        %2509 = vmatprep.mubr.f32.mxu0 %v2508
        %v2510 = vand.u32 %v459, 4294901760
        %v2511 = vsub.f32 %v459, %v2510
        %2512 = vmatmul.mubr.f32.gmra.mxu0 %v2511
        %v2513 = vpop.f32.mrf.mxu0
        %v2514 = vadd.f32 %v2303, %v2513
        %v2515 = vpop.f32.mrf.mxu0
        %v2516 = vand.u32 %v462, 4294901760
        %v2517 = vsub.f32 %v462, %v2516
        %2518 = vmatprep.mubr.f32.mxu0 %v2517
        %v2519 = vand.u32 %v461, 4294901760
        %v2520 = vsub.f32 %v461, %v2519
        %2521 = vmatmul.mubr.f32.gmra.mxu0 %v2520
        %v2522 = vpop.f32.mrf.mxu0
        %v2523 = vadd.f32 %v2310, %v2522
        %v2524 = vpop.f32.mrf.mxu0
        %v2525 = vand.u32 %v464, 4294901760
        %v2526 = vsub.f32 %v464, %v2525
        %2527 = vmatprep.mubr.f32.mxu0 %v2526
        %v2528 = vand.u32 %v463, 4294901760
        %v2529 = vsub.f32 %v463, %v2528
        %2530 = vmatmul.mubr.f32.gmra.mxu0 %v2529
        %v2531 = vpop.f32.mrf.mxu0
        %v2532 = vadd.f32 %v2317, %v2531
        %v2533 = vpop.f32.mrf.mxu0
        %v2534 = vand.u32 %v466, 4294901760
        %v2535 = vsub.f32 %v466, %v2534
        %2536 = vmatprep.mubr.f32.mxu0 %v2535
        %v2537 = vand.u32 %v465, 4294901760
        %v2538 = vsub.f32 %v465, %v2537
        %2539 = vmatmul.mubr.f32.gmra.mxu0 %v2538
        %v2540 = vpop.f32.mrf.mxu0
        %v2541 = vadd.f32 %v2324, %v2540
        %v2542 = vpop.f32.mrf.mxu0
        %2543 = vdwg.mxu0
        %2544 = vmatprep.subr.mxu0 0.0
        %2545 = vmatpush1.xpose.msra.mxu0 0.0
        %2546 = vmatprep.subr.mxu0 0.0
        %2547 = vmatpush1.xpose.msra.mxu0 0.0
        %2548 = vmatprep.subr.mxu0 0.0
        %2549 = vmatpush1.xpose.msra.mxu0 0.0
        %2550 = vmatprep.subr.mxu0 0.0
        %2551 = vmatpush1.xpose.msra.mxu0 0.0
        %2552 = vmatprep.subr.mxu0 0.0
        %2553 = vmatpush1.xpose.msra.mxu0 0.0
        %2554 = vmatprep.subr.mxu0 0.0
        %2555 = vmatpush1.xpose.msra.mxu0 0.0
        %2556 = vmatprep.subr.mxu0 0.0
        %2557 = vmatpush1.xpose.msra.mxu0 0.0
        %2558 = vmatprep.subr.mxu0 0.0
        %2559 = vmatpush1.xpose.msra.mxu0 0.0
        %2560 = vmatprep.subr.mxu0 0.0
        %2561 = vmatpush1.xpose.msra.mxu0 0.0
        %2562 = vmatprep.subr.mxu0 0.0
        %2563 = vmatpush1.xpose.msra.mxu0 0.0
        %2564 = vmatprep.subr.mxu0 0.0
        %2565 = vmatpush1.xpose.msra.mxu0 0.0
        %2566 = vmatprep.subr.mxu0 0.0
        %2567 = vmatpush1.xpose.msra.mxu0 0.0
        %2568 = vmatprep.subr.mxu0 0.0
        %2569 = vmatpush1.xpose.msra.mxu0 0.0
        %2570 = vmatprep.subr.mxu0 0.0
        %2571 = vmatpush1.xpose.msra.mxu0 0.0
        %v2572 = vand.u32 %v368, 4294901760
        %2573 = vmatprep.subr.mxu0 %v2572
        %v2574 = vand.u32 %v367, 4294901760
        %2575 = vmatpush1.xpose.msra.mxu0 %v2574
        %v2576 = vand.u32 %v366, 4294901760
        %2577 = vmatprep.subr.mxu0 %v2576
        %v2578 = vand.u32 %v365, 4294901760
        %2579 = vmatpush1.xpose.msra.mxu0 %v2578
        %2580 = vmatprep.subr.mxu0 0.0
        %2581 = vmatpush2.xpose.msra.mxu0 0.0
        %2582 = vmatprep.subr.mxu0 0.0
        %2583 = vmatpush2.xpose.msra.mxu0 0.0
        %2584 = vmatprep.subr.mxu0 0.0
        %2585 = vmatpush2.xpose.msra.mxu0 0.0
        %2586 = vmatprep.subr.mxu0 0.0
        %2587 = vmatpush2.xpose.msra.mxu0 0.0
        %2588 = vmatprep.subr.mxu0 0.0
        %2589 = vmatpush2.xpose.msra.mxu0 0.0
        %2590 = vmatprep.subr.mxu0 0.0
        %2591 = vmatpush2.xpose.msra.mxu0 0.0
        %2592 = vmatprep.subr.mxu0 0.0
        %2593 = vmatpush2.xpose.msra.mxu0 0.0
        %2594 = vmatprep.subr.mxu0 0.0
        %2595 = vmatpush2.xpose.msra.mxu0 0.0
        %2596 = vmatprep.subr.mxu0 0.0
        %2597 = vmatpush2.xpose.msra.mxu0 0.0
        %2598 = vmatprep.subr.mxu0 0.0
        %2599 = vmatpush2.xpose.msra.mxu0 0.0
        %2600 = vmatprep.subr.mxu0 0.0
        %2601 = vmatpush2.xpose.msra.mxu0 0.0
        %2602 = vmatprep.subr.mxu0 0.0
        %2603 = vmatpush2.xpose.msra.mxu0 0.0
        %2604 = vmatprep.subr.mxu0 0.0
        %2605 = vmatpush2.xpose.msra.mxu0 0.0
        %2606 = vmatprep.subr.mxu0 0.0
        %2607 = vmatpush2.xpose.msra.mxu0 0.0
        %2608 = vmatprep.subr.mxu0 0.0
        %2609 = vmatpush2.xpose.msra.mxu0 0.0
        %2610 = vmatprep.subr.mxu0 0.0
        %2611 = vmatpush2.xpose.msra.mxu0 0.0
        %v2612 = vand.u32 %v436, 4294901760
        %v2613 = vsub.f32 %v436, %v2612
        %v2614 = vand.u32 %v2613, 4294901760
        %2615 = vmatprep.mubr.f32.mxu0 %v2614
        %v2616 = vand.u32 %v435, 4294901760
        %v2617 = vsub.f32 %v435, %v2616
        %v2618 = vand.u32 %v2617, 4294901760
        %2619 = vmatmul.mubr.f32.gmra.mxu0 %v2618
        %v2620 = vpop.f32.mrf.mxu0
        %v2621 = vadd.f32 %v2406, %v2620
        %v2622 = vpop.f32.mrf.mxu0
        %v2623 = vand.u32 %v438, 4294901760
        %v2624 = vsub.f32 %v438, %v2623
        %v2625 = vand.u32 %v2624, 4294901760
        %2626 = vmatprep.mubr.f32.mxu0 %v2625
        %v2627 = vand.u32 %v437, 4294901760
        %v2628 = vsub.f32 %v437, %v2627
        %v2629 = vand.u32 %v2628, 4294901760
        %2630 = vmatmul.mubr.f32.gmra.mxu0 %v2629
        %v2631 = vpop.f32.mrf.mxu0
        %v2632 = vadd.f32 %v2415, %v2631
        %v2633 = vpop.f32.mrf.mxu0
        %v2634 = vand.u32 %v440, 4294901760
        %v2635 = vsub.f32 %v440, %v2634
        %v2636 = vand.u32 %v2635, 4294901760
        %2637 = vmatprep.mubr.f32.mxu0 %v2636
        %v2638 = vand.u32 %v439, 4294901760
        %v2639 = vsub.f32 %v439, %v2638
        %v2640 = vand.u32 %v2639, 4294901760
        %2641 = vmatmul.mubr.f32.gmra.mxu0 %v2640
        %v2642 = vpop.f32.mrf.mxu0
        %v2643 = vadd.f32 %v2424, %v2642
        %v2644 = vpop.f32.mrf.mxu0
        %v2645 = vand.u32 %v442, 4294901760
        %v2646 = vsub.f32 %v442, %v2645
        %v2647 = vand.u32 %v2646, 4294901760
        %2648 = vmatprep.mubr.f32.mxu0 %v2647
        %v2649 = vand.u32 %v441, 4294901760
        %v2650 = vsub.f32 %v441, %v2649
        %v2651 = vand.u32 %v2650, 4294901760
        %2652 = vmatmul.mubr.f32.gmra.mxu0 %v2651
        %v2653 = vpop.f32.mrf.mxu0
        %v2654 = vadd.f32 %v2433, %v2653
        %v2655 = vpop.f32.mrf.mxu0
        %v2656 = vand.u32 %v444, 4294901760
        %v2657 = vsub.f32 %v444, %v2656
        %v2658 = vand.u32 %v2657, 4294901760
        %2659 = vmatprep.mubr.f32.mxu0 %v2658
        %v2660 = vand.u32 %v443, 4294901760
        %v2661 = vsub.f32 %v443, %v2660
        %v2662 = vand.u32 %v2661, 4294901760
        %2663 = vmatmul.mubr.f32.gmra.mxu0 %v2662
        %v2664 = vpop.f32.mrf.mxu0
        %v2665 = vadd.f32 %v2442, %v2664
        %v2666 = vpop.f32.mrf.mxu0
        %v2667 = vand.u32 %v446, 4294901760
        %v2668 = vsub.f32 %v446, %v2667
        %v2669 = vand.u32 %v2668, 4294901760
        %2670 = vmatprep.mubr.f32.mxu0 %v2669
        %v2671 = vand.u32 %v445, 4294901760
        %v2672 = vsub.f32 %v445, %v2671
        %v2673 = vand.u32 %v2672, 4294901760
        %2674 = vmatmul.mubr.f32.gmra.mxu0 %v2673
        %v2675 = vpop.f32.mrf.mxu0
        %v2676 = vadd.f32 %v2451, %v2675
        %v2677 = vpop.f32.mrf.mxu0
        %v2678 = vand.u32 %v448, 4294901760
        %v2679 = vsub.f32 %v448, %v2678
        %v2680 = vand.u32 %v2679, 4294901760
        %2681 = vmatprep.mubr.f32.mxu0 %v2680
        %v2682 = vand.u32 %v447, 4294901760
        %v2683 = vsub.f32 %v447, %v2682
        %v2684 = vand.u32 %v2683, 4294901760
        %2685 = vmatmul.mubr.f32.gmra.mxu0 %v2684
        %v2686 = vpop.f32.mrf.mxu0
        %v2687 = vadd.f32 %v2460, %v2686
        %v2688 = vpop.f32.mrf.mxu0
        %v2689 = vand.u32 %v450, 4294901760
        %v2690 = vsub.f32 %v450, %v2689
        %v2691 = vand.u32 %v2690, 4294901760
        %2692 = vmatprep.mubr.f32.mxu0 %v2691
        %v2693 = vand.u32 %v449, 4294901760
        %v2694 = vsub.f32 %v449, %v2693
        %v2695 = vand.u32 %v2694, 4294901760
        %2696 = vmatmul.mubr.f32.gmra.mxu0 %v2695
        %v2697 = vpop.f32.mrf.mxu0
        %v2698 = vadd.f32 %v2469, %v2697
        %v2699 = vpop.f32.mrf.mxu0
        %v2700 = vand.u32 %v452, 4294901760
        %v2701 = vsub.f32 %v452, %v2700
        %v2702 = vand.u32 %v2701, 4294901760
        %2703 = vmatprep.mubr.f32.mxu0 %v2702
        %v2704 = vand.u32 %v451, 4294901760
        %v2705 = vsub.f32 %v451, %v2704
        %v2706 = vand.u32 %v2705, 4294901760
        %2707 = vmatmul.mubr.f32.gmra.mxu0 %v2706
        %v2708 = vpop.f32.mrf.mxu0
        %v2709 = vadd.f32 %v2478, %v2708
        %v2710 = vpop.f32.mrf.mxu0
        %v2711 = vand.u32 %v454, 4294901760
        %v2712 = vsub.f32 %v454, %v2711
        %v2713 = vand.u32 %v2712, 4294901760
        %2714 = vmatprep.mubr.f32.mxu0 %v2713
        %v2715 = vand.u32 %v453, 4294901760
        %v2716 = vsub.f32 %v453, %v2715
        %v2717 = vand.u32 %v2716, 4294901760
        %2718 = vmatmul.mubr.f32.gmra.mxu0 %v2717
        %v2719 = vpop.f32.mrf.mxu0
        %v2720 = vadd.f32 %v2487, %v2719
        %v2721 = vpop.f32.mrf.mxu0
        %v2722 = vand.u32 %v456, 4294901760
        %v2723 = vsub.f32 %v456, %v2722
        %v2724 = vand.u32 %v2723, 4294901760
        %2725 = vmatprep.mubr.f32.mxu0 %v2724
        %v2726 = vand.u32 %v455, 4294901760
        %v2727 = vsub.f32 %v455, %v2726
        %v2728 = vand.u32 %v2727, 4294901760
        %2729 = vmatmul.mubr.f32.gmra.mxu0 %v2728
        %v2730 = vpop.f32.mrf.mxu0
        %v2731 = vadd.f32 %v2496, %v2730
        %v2732 = vpop.f32.mrf.mxu0
        %v2733 = vand.u32 %v458, 4294901760
        %v2734 = vsub.f32 %v458, %v2733
        %v2735 = vand.u32 %v2734, 4294901760
        %2736 = vmatprep.mubr.f32.mxu0 %v2735
        %v2737 = vand.u32 %v457, 4294901760
        %v2738 = vsub.f32 %v457, %v2737
        %v2739 = vand.u32 %v2738, 4294901760
        %2740 = vmatmul.mubr.f32.gmra.mxu0 %v2739
        %v2741 = vpop.f32.mrf.mxu0
        %v2742 = vadd.f32 %v2505, %v2741
        %v2743 = vpop.f32.mrf.mxu0
        %v2744 = vand.u32 %v460, 4294901760
        %v2745 = vsub.f32 %v460, %v2744
        %v2746 = vand.u32 %v2745, 4294901760
        %2747 = vmatprep.mubr.f32.mxu0 %v2746
        %v2748 = vand.u32 %v459, 4294901760
        %v2749 = vsub.f32 %v459, %v2748
        %v2750 = vand.u32 %v2749, 4294901760
        %2751 = vmatmul.mubr.f32.gmra.mxu0 %v2750
        %v2752 = vpop.f32.mrf.mxu0
        %v2753 = vadd.f32 %v2514, %v2752
        %v2754 = vpop.f32.mrf.mxu0
        %v2755 = vand.u32 %v462, 4294901760
        %v2756 = vsub.f32 %v462, %v2755
        %v2757 = vand.u32 %v2756, 4294901760
        %2758 = vmatprep.mubr.f32.mxu0 %v2757
        %v2759 = vand.u32 %v461, 4294901760
        %v2760 = vsub.f32 %v461, %v2759
        %v2761 = vand.u32 %v2760, 4294901760
        %2762 = vmatmul.mubr.f32.gmra.mxu0 %v2761
        %v2763 = vpop.f32.mrf.mxu0
        %v2764 = vadd.f32 %v2523, %v2763
        %v2765 = vpop.f32.mrf.mxu0
        %v2766 = vand.u32 %v464, 4294901760
        %v2767 = vsub.f32 %v464, %v2766
        %v2768 = vand.u32 %v2767, 4294901760
        %2769 = vmatprep.mubr.f32.mxu0 %v2768
        %v2770 = vand.u32 %v463, 4294901760
        %v2771 = vsub.f32 %v463, %v2770
        %v2772 = vand.u32 %v2771, 4294901760
        %2773 = vmatmul.mubr.f32.gmra.mxu0 %v2772
        %v2774 = vpop.f32.mrf.mxu0
        %v2775 = vadd.f32 %v2532, %v2774
        %v2776 = vpop.f32.mrf.mxu0
        %v2777 = vand.u32 %v466, 4294901760
        %v2778 = vsub.f32 %v466, %v2777
        %v2779 = vand.u32 %v2778, 4294901760
        %2780 = vmatprep.mubr.f32.mxu0 %v2779
        %v2781 = vand.u32 %v465, 4294901760
        %v2782 = vsub.f32 %v465, %v2781
        %v2783 = vand.u32 %v2782, 4294901760
        %2784 = vmatmul.mubr.f32.gmra.mxu0 %v2783
        %v2785 = vpop.f32.mrf.mxu0
        %v2786 = vadd.f32 %v2541, %v2785
        %v2787 = vpop.f32.mrf.mxu0
        %2788 = vdwg.mxu0
        %2789 = vmatprep.subr.mxu0 0.0
        %2790 = vmatpush1.xpose.msra.mxu0 0.0
        %2791 = vmatprep.subr.mxu0 0.0
        %2792 = vmatpush1.xpose.msra.mxu0 0.0
        %2793 = vmatprep.subr.mxu0 0.0
        %2794 = vmatpush1.xpose.msra.mxu0 0.0
        %2795 = vmatprep.subr.mxu0 0.0
        %2796 = vmatpush1.xpose.msra.mxu0 0.0
        %2797 = vmatprep.subr.mxu0 0.0
        %2798 = vmatpush1.xpose.msra.mxu0 0.0
        %2799 = vmatprep.subr.mxu0 0.0
        %2800 = vmatpush1.xpose.msra.mxu0 0.0
        %2801 = vmatprep.subr.mxu0 0.0
        %2802 = vmatpush1.xpose.msra.mxu0 0.0
        %2803 = vmatprep.subr.mxu0 0.0
        %2804 = vmatpush1.xpose.msra.mxu0 0.0
        %2805 = vmatprep.subr.mxu0 0.0
        %2806 = vmatpush1.xpose.msra.mxu0 0.0
        %2807 = vmatprep.subr.mxu0 0.0
        %2808 = vmatpush1.xpose.msra.mxu0 0.0
        %2809 = vmatprep.subr.mxu0 0.0
        %2810 = vmatpush1.xpose.msra.mxu0 0.0
        %2811 = vmatprep.subr.mxu0 0.0
        %2812 = vmatpush1.xpose.msra.mxu0 0.0
        %2813 = vmatprep.subr.mxu0 0.0
        %2814 = vmatpush1.xpose.msra.mxu0 0.0
        %2815 = vmatprep.subr.mxu0 0.0
        %2816 = vmatpush1.xpose.msra.mxu0 0.0
        %v2817 = vand.u32 %v368, 4294901760
        %v2818 = vsub.f32 %v368, %v2817
        %v2819 = vand.u32 %v2818, 4294901760
        %2820 = vmatprep.subr.mxu0 %v2819
        %v2821 = vand.u32 %v367, 4294901760
        %v2822 = vsub.f32 %v367, %v2821
        %v2823 = vand.u32 %v2822, 4294901760
        %2824 = vmatpush1.xpose.msra.mxu0 %v2823
        %v2825 = vand.u32 %v366, 4294901760
        %v2826 = vsub.f32 %v366, %v2825
        %v2827 = vand.u32 %v2826, 4294901760
        %2828 = vmatprep.subr.mxu0 %v2827
        %v2829 = vand.u32 %v365, 4294901760
        %v2830 = vsub.f32 %v365, %v2829
        %v2831 = vand.u32 %v2830, 4294901760
        %2832 = vmatpush1.xpose.msra.mxu0 %v2831
        %2833 = vmatprep.subr.mxu0 0.0
        %2834 = vmatpush2.xpose.msra.mxu0 0.0
        %2835 = vmatprep.subr.mxu0 0.0
        %2836 = vmatpush2.xpose.msra.mxu0 0.0
        %2837 = vmatprep.subr.mxu0 0.0
        %2838 = vmatpush2.xpose.msra.mxu0 0.0
        %2839 = vmatprep.subr.mxu0 0.0
        %2840 = vmatpush2.xpose.msra.mxu0 0.0
        %2841 = vmatprep.subr.mxu0 0.0
        %2842 = vmatpush2.xpose.msra.mxu0 0.0
        %2843 = vmatprep.subr.mxu0 0.0
        %2844 = vmatpush2.xpose.msra.mxu0 0.0
        %2845 = vmatprep.subr.mxu0 0.0
        %2846 = vmatpush2.xpose.msra.mxu0 0.0
        %2847 = vmatprep.subr.mxu0 0.0
        %2848 = vmatpush2.xpose.msra.mxu0 0.0
        %2849 = vmatprep.subr.mxu0 0.0
        %2850 = vmatpush2.xpose.msra.mxu0 0.0
        %2851 = vmatprep.subr.mxu0 0.0
        %2852 = vmatpush2.xpose.msra.mxu0 0.0
        %2853 = vmatprep.subr.mxu0 0.0
        %2854 = vmatpush2.xpose.msra.mxu0 0.0
        %2855 = vmatprep.subr.mxu0 0.0
        %2856 = vmatpush2.xpose.msra.mxu0 0.0
        %2857 = vmatprep.subr.mxu0 0.0
        %2858 = vmatpush2.xpose.msra.mxu0 0.0
        %2859 = vmatprep.subr.mxu0 0.0
        %2860 = vmatpush2.xpose.msra.mxu0 0.0
        %2861 = vmatprep.subr.mxu0 0.0
        %2862 = vmatpush2.xpose.msra.mxu0 0.0
        %2863 = vmatprep.subr.mxu0 0.0
        %2864 = vmatpush2.xpose.msra.mxu0 0.0
        %v2865 = vand.u32 %v436, 4294901760
        %2866 = vmatprep.mubr.f32.mxu0 %v2865
        %v2867 = vand.u32 %v435, 4294901760
        %2868 = vmatmul.mubr.f32.gmra.mxu0 %v2867
        %v2869 = vpop.f32.mrf.mxu0
        %v2870 = vadd.f32 %v2621, %v2869
        %v2871 = vpop.f32.mrf.mxu0
        %v2872 = vand.u32 %v438, 4294901760
        %2873 = vmatprep.mubr.f32.mxu0 %v2872
        %v2874 = vand.u32 %v437, 4294901760
        %2875 = vmatmul.mubr.f32.gmra.mxu0 %v2874
        %v2876 = vpop.f32.mrf.mxu0
        %v2877 = vadd.f32 %v2632, %v2876
        %v2878 = vpop.f32.mrf.mxu0
        %v2879 = vand.u32 %v440, 4294901760
        %2880 = vmatprep.mubr.f32.mxu0 %v2879
        %v2881 = vand.u32 %v439, 4294901760
        %2882 = vmatmul.mubr.f32.gmra.mxu0 %v2881
        %v2883 = vpop.f32.mrf.mxu0
        %v2884 = vadd.f32 %v2643, %v2883
        %v2885 = vpop.f32.mrf.mxu0
        %v2886 = vand.u32 %v442, 4294901760
        %2887 = vmatprep.mubr.f32.mxu0 %v2886
        %v2888 = vand.u32 %v441, 4294901760
        %2889 = vmatmul.mubr.f32.gmra.mxu0 %v2888
        %v2890 = vpop.f32.mrf.mxu0
        %v2891 = vadd.f32 %v2654, %v2890
        %v2892 = vpop.f32.mrf.mxu0
        %v2893 = vand.u32 %v444, 4294901760
        %2894 = vmatprep.mubr.f32.mxu0 %v2893
        %v2895 = vand.u32 %v443, 4294901760
        %2896 = vmatmul.mubr.f32.gmra.mxu0 %v2895
        %v2897 = vpop.f32.mrf.mxu0
        %v2898 = vadd.f32 %v2665, %v2897
        %v2899 = vpop.f32.mrf.mxu0
        %v2900 = vand.u32 %v446, 4294901760
        %2901 = vmatprep.mubr.f32.mxu0 %v2900
        %v2902 = vand.u32 %v445, 4294901760
        %2903 = vmatmul.mubr.f32.gmra.mxu0 %v2902
        %v2904 = vpop.f32.mrf.mxu0
        %v2905 = vadd.f32 %v2676, %v2904
        %v2906 = vpop.f32.mrf.mxu0
        %v2907 = vand.u32 %v448, 4294901760
        %2908 = vmatprep.mubr.f32.mxu0 %v2907
        %v2909 = vand.u32 %v447, 4294901760
        %2910 = vmatmul.mubr.f32.gmra.mxu0 %v2909
        %v2911 = vpop.f32.mrf.mxu0
        %v2912 = vadd.f32 %v2687, %v2911
        %v2913 = vpop.f32.mrf.mxu0
        %v2914 = vand.u32 %v450, 4294901760
        %2915 = vmatprep.mubr.f32.mxu0 %v2914
        %v2916 = vand.u32 %v449, 4294901760
        %2917 = vmatmul.mubr.f32.gmra.mxu0 %v2916
        %v2918 = vpop.f32.mrf.mxu0
        %v2919 = vadd.f32 %v2698, %v2918
        %v2920 = vpop.f32.mrf.mxu0
        %v2921 = vand.u32 %v452, 4294901760
        %2922 = vmatprep.mubr.f32.mxu0 %v2921
        %v2923 = vand.u32 %v451, 4294901760
        %2924 = vmatmul.mubr.f32.gmra.mxu0 %v2923
        %v2925 = vpop.f32.mrf.mxu0
        %v2926 = vadd.f32 %v2709, %v2925
        %v2927 = vpop.f32.mrf.mxu0
        %v2928 = vand.u32 %v454, 4294901760
        %2929 = vmatprep.mubr.f32.mxu0 %v2928
        %v2930 = vand.u32 %v453, 4294901760
        %2931 = vmatmul.mubr.f32.gmra.mxu0 %v2930
        %v2932 = vpop.f32.mrf.mxu0
        %v2933 = vadd.f32 %v2720, %v2932
        %v2934 = vpop.f32.mrf.mxu0
        %v2935 = vand.u32 %v456, 4294901760
        %2936 = vmatprep.mubr.f32.mxu0 %v2935
        %v2937 = vand.u32 %v455, 4294901760
        %2938 = vmatmul.mubr.f32.gmra.mxu0 %v2937
        %v2939 = vpop.f32.mrf.mxu0
        %v2940 = vadd.f32 %v2731, %v2939
        %v2941 = vpop.f32.mrf.mxu0
        %v2942 = vand.u32 %v458, 4294901760
        %2943 = vmatprep.mubr.f32.mxu0 %v2942
        %v2944 = vand.u32 %v457, 4294901760
        %2945 = vmatmul.mubr.f32.gmra.mxu0 %v2944
        %v2946 = vpop.f32.mrf.mxu0
        %v2947 = vadd.f32 %v2742, %v2946
        %v2948 = vpop.f32.mrf.mxu0
        %v2949 = vand.u32 %v460, 4294901760
        %2950 = vmatprep.mubr.f32.mxu0 %v2949
        %v2951 = vand.u32 %v459, 4294901760
        %2952 = vmatmul.mubr.f32.gmra.mxu0 %v2951
        %v2953 = vpop.f32.mrf.mxu0
        %v2954 = vadd.f32 %v2753, %v2953
        %v2955 = vpop.f32.mrf.mxu0
        %v2956 = vand.u32 %v462, 4294901760
        %2957 = vmatprep.mubr.f32.mxu0 %v2956
        %v2958 = vand.u32 %v461, 4294901760
        %2959 = vmatmul.mubr.f32.gmra.mxu0 %v2958
        %v2960 = vpop.f32.mrf.mxu0
        %v2961 = vadd.f32 %v2764, %v2960
        %v2962 = vpop.f32.mrf.mxu0
        %v2963 = vand.u32 %v464, 4294901760
        %2964 = vmatprep.mubr.f32.mxu0 %v2963
        %v2965 = vand.u32 %v463, 4294901760
        %2966 = vmatmul.mubr.f32.gmra.mxu0 %v2965
        %v2967 = vpop.f32.mrf.mxu0
        %v2968 = vadd.f32 %v2775, %v2967
        %v2969 = vpop.f32.mrf.mxu0
        %v2970 = vand.u32 %v466, 4294901760
        %2971 = vmatprep.mubr.f32.mxu0 %v2970
        %v2972 = vand.u32 %v465, 4294901760
        %2973 = vmatmul.mubr.f32.gmra.mxu0 %v2972
        %v2974 = vpop.f32.mrf.mxu0
        %v2975 = vadd.f32 %v2786, %v2974
        %v2976 = vpop.f32.mrf.mxu0
        %2977 = vdwg.mxu0
        %2978 = vmatprep.subr.mxu0 0.0
        %2979 = vmatpush1.xpose.msra.mxu0 0.0
        %2980 = vmatprep.subr.mxu0 0.0
        %2981 = vmatpush1.xpose.msra.mxu0 0.0
        %2982 = vmatprep.subr.mxu0 0.0
        %2983 = vmatpush1.xpose.msra.mxu0 0.0
        %2984 = vmatprep.subr.mxu0 0.0
        %2985 = vmatpush1.xpose.msra.mxu0 0.0
        %2986 = vmatprep.subr.mxu0 0.0
        %2987 = vmatpush1.xpose.msra.mxu0 0.0
        %2988 = vmatprep.subr.mxu0 0.0
        %2989 = vmatpush1.xpose.msra.mxu0 0.0
        %2990 = vmatprep.subr.mxu0 0.0
        %2991 = vmatpush1.xpose.msra.mxu0 0.0
        %2992 = vmatprep.subr.mxu0 0.0
        %2993 = vmatpush1.xpose.msra.mxu0 0.0
        %2994 = vmatprep.subr.mxu0 0.0
        %2995 = vmatpush1.xpose.msra.mxu0 0.0
        %2996 = vmatprep.subr.mxu0 0.0
        %2997 = vmatpush1.xpose.msra.mxu0 0.0
        %2998 = vmatprep.subr.mxu0 0.0
        %2999 = vmatpush1.xpose.msra.mxu0 0.0
        %3000 = vmatprep.subr.mxu0 0.0
        %3001 = vmatpush1.xpose.msra.mxu0 0.0
        %3002 = vmatprep.subr.mxu0 0.0
        %3003 = vmatpush1.xpose.msra.mxu0 0.0
        %3004 = vmatprep.subr.mxu0 0.0
        %3005 = vmatpush1.xpose.msra.mxu0 0.0
        %v3006 = vand.u32 %v368, 4294901760
        %3007 = vmatprep.subr.mxu0 %v3006
        %v3008 = vand.u32 %v367, 4294901760
        %3009 = vmatpush1.xpose.msra.mxu0 %v3008
        %v3010 = vand.u32 %v366, 4294901760
        %3011 = vmatprep.subr.mxu0 %v3010
        %v3012 = vand.u32 %v365, 4294901760
        %3013 = vmatpush1.xpose.msra.mxu0 %v3012
        %3014 = vmatprep.subr.mxu0 0.0
        %3015 = vmatpush2.xpose.msra.mxu0 0.0
        %3016 = vmatprep.subr.mxu0 0.0
        %3017 = vmatpush2.xpose.msra.mxu0 0.0
        %3018 = vmatprep.subr.mxu0 0.0
        %3019 = vmatpush2.xpose.msra.mxu0 0.0
        %3020 = vmatprep.subr.mxu0 0.0
        %3021 = vmatpush2.xpose.msra.mxu0 0.0
        %3022 = vmatprep.subr.mxu0 0.0
        %3023 = vmatpush2.xpose.msra.mxu0 0.0
        %3024 = vmatprep.subr.mxu0 0.0
        %3025 = vmatpush2.xpose.msra.mxu0 0.0
        %3026 = vmatprep.subr.mxu0 0.0
        %3027 = vmatpush2.xpose.msra.mxu0 0.0
        %3028 = vmatprep.subr.mxu0 0.0
        %3029 = vmatpush2.xpose.msra.mxu0 0.0
        %3030 = vmatprep.subr.mxu0 0.0
        %3031 = vmatpush2.xpose.msra.mxu0 0.0
        %3032 = vmatprep.subr.mxu0 0.0
        %3033 = vmatpush2.xpose.msra.mxu0 0.0
        %3034 = vmatprep.subr.mxu0 0.0
        %3035 = vmatpush2.xpose.msra.mxu0 0.0
        %3036 = vmatprep.subr.mxu0 0.0
        %3037 = vmatpush2.xpose.msra.mxu0 0.0
        %3038 = vmatprep.subr.mxu0 0.0
        %3039 = vmatpush2.xpose.msra.mxu0 0.0
        %3040 = vmatprep.subr.mxu0 0.0
        %3041 = vmatpush2.xpose.msra.mxu0 0.0
        %3042 = vmatprep.subr.mxu0 0.0
        %3043 = vmatpush2.xpose.msra.mxu0 0.0
        %3044 = vmatprep.subr.mxu0 0.0
        %3045 = vmatpush2.xpose.msra.mxu0 0.0
        %v3046 = vand.u32 %v436, 4294901760
        %3047 = vmatprep.mubr.f32.mxu0 %v3046
        %v3048 = vand.u32 %v435, 4294901760
        %3049 = vmatmul.mubr.f32.gmra.mxu0 %v3048
        %v3050 = vpop.f32.mrf.mxu0
        %v3051 = vadd.f32 %v2870, %v3050
        %v3052 = vpop.f32.mrf.mxu0
        %v3053 = vand.u32 %v438, 4294901760
        %3054 = vmatprep.mubr.f32.mxu0 %v3053
        %v3055 = vand.u32 %v437, 4294901760
        %3056 = vmatmul.mubr.f32.gmra.mxu0 %v3055
        %v3057 = vpop.f32.mrf.mxu0
        %v3058 = vadd.f32 %v2877, %v3057
        %v3059 = vpop.f32.mrf.mxu0
        %v3060 = vand.u32 %v440, 4294901760
        %3061 = vmatprep.mubr.f32.mxu0 %v3060
        %v3062 = vand.u32 %v439, 4294901760
        %3063 = vmatmul.mubr.f32.gmra.mxu0 %v3062
        %v3064 = vpop.f32.mrf.mxu0
        %v3065 = vadd.f32 %v2884, %v3064
        %v3066 = vpop.f32.mrf.mxu0
        %v3067 = vand.u32 %v442, 4294901760
        %3068 = vmatprep.mubr.f32.mxu0 %v3067
        %v3069 = vand.u32 %v441, 4294901760
        %3070 = vmatmul.mubr.f32.gmra.mxu0 %v3069
        %v3071 = vpop.f32.mrf.mxu0
        %v3072 = vadd.f32 %v2891, %v3071
        %v3073 = vpop.f32.mrf.mxu0
        %v3074 = vand.u32 %v444, 4294901760
        %3075 = vmatprep.mubr.f32.mxu0 %v3074
        %v3076 = vand.u32 %v443, 4294901760
        %3077 = vmatmul.mubr.f32.gmra.mxu0 %v3076
        %v3078 = vpop.f32.mrf.mxu0
        %v3079 = vadd.f32 %v2898, %v3078
        %v3080 = vpop.f32.mrf.mxu0
        %v3081 = vand.u32 %v446, 4294901760
        %3082 = vmatprep.mubr.f32.mxu0 %v3081
        %v3083 = vand.u32 %v445, 4294901760
        %3084 = vmatmul.mubr.f32.gmra.mxu0 %v3083
        %v3085 = vpop.f32.mrf.mxu0
        %v3086 = vadd.f32 %v2905, %v3085
        %v3087 = vpop.f32.mrf.mxu0
        %v3088 = vand.u32 %v448, 4294901760
        %3089 = vmatprep.mubr.f32.mxu0 %v3088
        %v3090 = vand.u32 %v447, 4294901760
        %3091 = vmatmul.mubr.f32.gmra.mxu0 %v3090
        %v3092 = vpop.f32.mrf.mxu0
        %v3093 = vadd.f32 %v2912, %v3092
        %v3094 = vpop.f32.mrf.mxu0
        %v3095 = vand.u32 %v450, 4294901760
        %3096 = vmatprep.mubr.f32.mxu0 %v3095
        %v3097 = vand.u32 %v449, 4294901760
        %3098 = vmatmul.mubr.f32.gmra.mxu0 %v3097
        %v3099 = vpop.f32.mrf.mxu0
        %v3100 = vadd.f32 %v2919, %v3099
        %v3101 = vpop.f32.mrf.mxu0
        %v3102 = vand.u32 %v452, 4294901760
        %3103 = vmatprep.mubr.f32.mxu0 %v3102
        %v3104 = vand.u32 %v451, 4294901760
        %3105 = vmatmul.mubr.f32.gmra.mxu0 %v3104
        %v3106 = vpop.f32.mrf.mxu0
        %v3107 = vadd.f32 %v2926, %v3106
        %v3108 = vpop.f32.mrf.mxu0
        %v3109 = vand.u32 %v454, 4294901760
        %3110 = vmatprep.mubr.f32.mxu0 %v3109
        %v3111 = vand.u32 %v453, 4294901760
        %3112 = vmatmul.mubr.f32.gmra.mxu0 %v3111
        %v3113 = vpop.f32.mrf.mxu0
        %v3114 = vadd.f32 %v2933, %v3113
        %v3115 = vpop.f32.mrf.mxu0
        %v3116 = vand.u32 %v456, 4294901760
        %3117 = vmatprep.mubr.f32.mxu0 %v3116
        %v3118 = vand.u32 %v455, 4294901760
        %3119 = vmatmul.mubr.f32.gmra.mxu0 %v3118
        %v3120 = vpop.f32.mrf.mxu0
        %v3121 = vadd.f32 %v2940, %v3120
        %v3122 = vpop.f32.mrf.mxu0
        %v3123 = vand.u32 %v458, 4294901760
        %3124 = vmatprep.mubr.f32.mxu0 %v3123
        %v3125 = vand.u32 %v457, 4294901760
        %3126 = vmatmul.mubr.f32.gmra.mxu0 %v3125
        %v3127 = vpop.f32.mrf.mxu0
        %v3128 = vadd.f32 %v2947, %v3127
        %v3129 = vpop.f32.mrf.mxu0
        %v3130 = vand.u32 %v460, 4294901760
        %3131 = vmatprep.mubr.f32.mxu0 %v3130
        %v3132 = vand.u32 %v459, 4294901760
        %3133 = vmatmul.mubr.f32.gmra.mxu0 %v3132
        %v3134 = vpop.f32.mrf.mxu0
        %v3135 = vadd.f32 %v2954, %v3134
        %v3136 = vpop.f32.mrf.mxu0
        %v3137 = vand.u32 %v462, 4294901760
        %3138 = vmatprep.mubr.f32.mxu0 %v3137
        %v3139 = vand.u32 %v461, 4294901760
        %3140 = vmatmul.mubr.f32.gmra.mxu0 %v3139
        %v3141 = vpop.f32.mrf.mxu0
        %v3142 = vadd.f32 %v2961, %v3141
        %v3143 = vpop.f32.mrf.mxu0
        %v3144 = vand.u32 %v464, 4294901760
        %3145 = vmatprep.mubr.f32.mxu0 %v3144
        %v3146 = vand.u32 %v463, 4294901760
        %3147 = vmatmul.mubr.f32.gmra.mxu0 %v3146
        %v3148 = vpop.f32.mrf.mxu0
        %v3149 = vadd.f32 %v2968, %v3148
        %v3150 = vpop.f32.mrf.mxu0
        %v3151 = vand.u32 %v466, 4294901760
        %3152 = vmatprep.mubr.f32.mxu0 %v3151
        %v3153 = vand.u32 %v465, 4294901760
        %3154 = vmatmul.mubr.f32.gmra.mxu0 %v3153
        %v3155 = vpop.f32.mrf.mxu0
        %v3156 = vadd.f32 %v2975, %v3155
        %v3157 = vpop.f32.mrf.mxu0
        %3158 = vdwg.mxu0
        %v3159 = vmul.f32 %v3051, 0.0625
        %v3160 = vmul.f32 %v3058, 0.0625
        %v3161 = vmul.f32 %v3065, 0.0625
        %v3162 = vmul.f32 %v3072, 0.0625
        %v3163 = vmul.f32 %v3079, 0.0625
        %v3164 = vmul.f32 %v3086, 0.0625
        %v3165 = vmul.f32 %v3093, 0.0625
        %v3166 = vmul.f32 %v3100, 0.0625
        %v3167 = vmul.f32 %v3107, 0.0625
        %v3168 = vmul.f32 %v3114, 0.0625
        %v3169 = vmul.f32 %v3121, 0.0625
        %v3170 = vmul.f32 %v3128, 0.0625
        %v3171 = vmul.f32 %v3135, 0.0625
        %v3172 = vmul.f32 %v3142, 0.0625
        %v3173 = vmul.f32 %v3149, 0.0625
        %v3174 = vmul.f32 %v3156, 0.0625
        %3176 = vset.pattern.permute.xlu0 0
        %3177 = vperm.xlu0 %3176, %v370
        %v3178 = vpop.permute.xlu0 %3177
        %3180 = vmatprep.subr.mxu0 0.0
        %v3181 = vand.u32 %v1820, 4294901760
        %3182 = vmatpush1.msra.mxu0 %v3181
        %3183 = vmatprep.subr.mxu0 0.0
        %v3184 = vand.u32 %v1819, 4294901760
        %3185 = vmatpush1.msra.mxu0 %v3184
        %3186 = vmatprep.subr.mxu0 0.0
        %v3187 = vand.u32 %v1818, 4294901760
        %3188 = vmatpush1.msra.mxu0 %v3187
        %3189 = vmatprep.subr.mxu0 0.0
        %v3190 = vand.u32 %v1817, 4294901760
        %3191 = vmatpush1.msra.mxu0 %v3190
        %3192 = vmatprep.subr.mxu0 0.0
        %v3193 = vand.u32 %v1816, 4294901760
        %3194 = vmatpush1.msra.mxu0 %v3193
        %3195 = vmatprep.subr.mxu0 0.0
        %v3196 = vand.u32 %v1815, 4294901760
        %3197 = vmatpush1.msra.mxu0 %v3196
        %3198 = vmatprep.subr.mxu0 0.0
        %v3199 = vand.u32 %v1814, 4294901760
        %3200 = vmatpush1.msra.mxu0 %v3199
        %3201 = vmatprep.subr.mxu0 0.0
        %v3202 = vand.u32 %v1813, 4294901760
        %3203 = vmatpush1.msra.mxu0 %v3202
        %3204 = vmatprep.subr.mxu0 0.0
        %v3205 = vand.u32 %v1812, 4294901760
        %3206 = vmatpush1.msra.mxu0 %v3205
        %3207 = vmatprep.subr.mxu0 0.0
        %v3208 = vand.u32 %v1811, 4294901760
        %3209 = vmatpush1.msra.mxu0 %v3208
        %3210 = vmatprep.subr.mxu0 0.0
        %v3211 = vand.u32 %v1810, 4294901760
        %3212 = vmatpush1.msra.mxu0 %v3211
        %3213 = vmatprep.subr.mxu0 0.0
        %v3214 = vand.u32 %v1809, 4294901760
        %3215 = vmatpush1.msra.mxu0 %v3214
        %3216 = vmatprep.subr.mxu0 0.0
        %v3217 = vand.u32 %v1808, 4294901760
        %3218 = vmatpush1.msra.mxu0 %v3217
        %3219 = vmatprep.subr.mxu0 0.0
        %v3220 = vand.u32 %v1807, 4294901760
        %3221 = vmatpush1.msra.mxu0 %v3220
        %3222 = vmatprep.subr.mxu0 0.0
        %v3223 = vand.u32 %v1806, 4294901760
        %3224 = vmatpush1.msra.mxu0 %v3223
        %3225 = vmatprep.subr.mxu0 0.0
        %v3226 = vand.u32 %v1805, 4294901760
        %3227 = vmatpush1.msra.mxu0 %v3226
        %3228 = vmatprep.subr.mxu0 0.0
        %3229 = vmatpush2.msra.mxu0 0.0
        %3230 = vmatprep.subr.mxu0 0.0
        %3231 = vmatpush2.msra.mxu0 0.0
        %3232 = vmatprep.subr.mxu0 0.0
        %3233 = vmatpush2.msra.mxu0 0.0
        %3234 = vmatprep.subr.mxu0 0.0
        %3235 = vmatpush2.msra.mxu0 0.0
        %3236 = vmatprep.subr.mxu0 0.0
        %3237 = vmatpush2.msra.mxu0 0.0
        %3238 = vmatprep.subr.mxu0 0.0
        %3239 = vmatpush2.msra.mxu0 0.0
        %3240 = vmatprep.subr.mxu0 0.0
        %3241 = vmatpush2.msra.mxu0 0.0
        %3242 = vmatprep.subr.mxu0 0.0
        %3243 = vmatpush2.msra.mxu0 0.0
        %3244 = vmatprep.subr.mxu0 0.0
        %3245 = vmatpush2.msra.mxu0 0.0
        %3246 = vmatprep.subr.mxu0 0.0
        %3247 = vmatpush2.msra.mxu0 0.0
        %3248 = vmatprep.subr.mxu0 0.0
        %3249 = vmatpush2.msra.mxu0 0.0
        %3250 = vmatprep.subr.mxu0 0.0
        %3251 = vmatpush2.msra.mxu0 0.0
        %3252 = vmatprep.subr.mxu0 0.0
        %3253 = vmatpush2.msra.mxu0 0.0
        %3254 = vmatprep.subr.mxu0 0.0
        %3255 = vmatpush2.msra.mxu0 0.0
        %3256 = vmatprep.subr.mxu0 0.0
        %3257 = vmatpush2.msra.mxu0 0.0
        %3258 = vmatprep.subr.mxu0 0.0
        %3259 = vmatpush2.msra.mxu0 0.0
        %3260 = vmatprep.mubr.f32.mxu0 0.0
        %v3261 = vand.u32 %v369, 4294901760
        %v3262 = vsub.f32 %v369, %v3261
        %v3263 = vand.u32 %v3262, 4294901760
        %v3264 = vsub.f32 %v3262, %v3263
        %v3265 = vand.u32 %v3264, 4294901760
        %3266 = vmatmul.mubr.f32.gmra.mxu0 %v3265
        %v3267 = vpop.f32.mrf.mxu0
        %v3268 = vadd.f32 %v3178, %v3267
        %v3269 = vpop.f32.mrf.mxu0
        %3270 = vdwg.mxu0
        %3271 = vmatprep.subr.mxu0 0.0
        %v3272 = vand.u32 %v1820, 4294901760
        %v3273 = vsub.f32 %v1820, %v3272
        %v3274 = vand.u32 %v3273, 4294901760
        %v3275 = vsub.f32 %v3273, %v3274
        %v3276 = vand.u32 %v3275, 4294901760
        %3277 = vmatpush1.msra.mxu0 %v3276
        %3278 = vmatprep.subr.mxu0 0.0
        %v3279 = vand.u32 %v1819, 4294901760
        %v3280 = vsub.f32 %v1819, %v3279
        %v3281 = vand.u32 %v3280, 4294901760
        %v3282 = vsub.f32 %v3280, %v3281
        %v3283 = vand.u32 %v3282, 4294901760
        %3284 = vmatpush1.msra.mxu0 %v3283
        %3285 = vmatprep.subr.mxu0 0.0
        %v3286 = vand.u32 %v1818, 4294901760
        %v3287 = vsub.f32 %v1818, %v3286
        %v3288 = vand.u32 %v3287, 4294901760
        %v3289 = vsub.f32 %v3287, %v3288
        %v3290 = vand.u32 %v3289, 4294901760
        %3291 = vmatpush1.msra.mxu0 %v3290
        %3292 = vmatprep.subr.mxu0 0.0
        %v3293 = vand.u32 %v1817, 4294901760
        %v3294 = vsub.f32 %v1817, %v3293
        %v3295 = vand.u32 %v3294, 4294901760
        %v3296 = vsub.f32 %v3294, %v3295
        %v3297 = vand.u32 %v3296, 4294901760
        %3298 = vmatpush1.msra.mxu0 %v3297
        %3299 = vmatprep.subr.mxu0 0.0
        %v3300 = vand.u32 %v1816, 4294901760
        %v3301 = vsub.f32 %v1816, %v3300
        %v3302 = vand.u32 %v3301, 4294901760
        %v3303 = vsub.f32 %v3301, %v3302
        %v3304 = vand.u32 %v3303, 4294901760
        %3305 = vmatpush1.msra.mxu0 %v3304
        %3306 = vmatprep.subr.mxu0 0.0
        %v3307 = vand.u32 %v1815, 4294901760
        %v3308 = vsub.f32 %v1815, %v3307
        %v3309 = vand.u32 %v3308, 4294901760
        %v3310 = vsub.f32 %v3308, %v3309
        %v3311 = vand.u32 %v3310, 4294901760
        %3312 = vmatpush1.msra.mxu0 %v3311
        %3313 = vmatprep.subr.mxu0 0.0
        %v3314 = vand.u32 %v1814, 4294901760
        %v3315 = vsub.f32 %v1814, %v3314
        %v3316 = vand.u32 %v3315, 4294901760
        %v3317 = vsub.f32 %v3315, %v3316
        %v3318 = vand.u32 %v3317, 4294901760
        %3319 = vmatpush1.msra.mxu0 %v3318
        %3320 = vmatprep.subr.mxu0 0.0
        %v3321 = vand.u32 %v1813, 4294901760
        %v3322 = vsub.f32 %v1813, %v3321
        %v3323 = vand.u32 %v3322, 4294901760
        %v3324 = vsub.f32 %v3322, %v3323
        %v3325 = vand.u32 %v3324, 4294901760
        %3326 = vmatpush1.msra.mxu0 %v3325
        %3327 = vmatprep.subr.mxu0 0.0
        %v3328 = vand.u32 %v1812, 4294901760
        %v3329 = vsub.f32 %v1812, %v3328
        %v3330 = vand.u32 %v3329, 4294901760
        %v3331 = vsub.f32 %v3329, %v3330
        %v3332 = vand.u32 %v3331, 4294901760
        %3333 = vmatpush1.msra.mxu0 %v3332
        %3334 = vmatprep.subr.mxu0 0.0
        %v3335 = vand.u32 %v1811, 4294901760
        %v3336 = vsub.f32 %v1811, %v3335
        %v3337 = vand.u32 %v3336, 4294901760
        %v3338 = vsub.f32 %v3336, %v3337
        %v3339 = vand.u32 %v3338, 4294901760
        %3340 = vmatpush1.msra.mxu0 %v3339
        %3341 = vmatprep.subr.mxu0 0.0
        %v3342 = vand.u32 %v1810, 4294901760
        %v3343 = vsub.f32 %v1810, %v3342
        %v3344 = vand.u32 %v3343, 4294901760
        %v3345 = vsub.f32 %v3343, %v3344
        %v3346 = vand.u32 %v3345, 4294901760
        %3347 = vmatpush1.msra.mxu0 %v3346
        %3348 = vmatprep.subr.mxu0 0.0
        %v3349 = vand.u32 %v1809, 4294901760
        %v3350 = vsub.f32 %v1809, %v3349
        %v3351 = vand.u32 %v3350, 4294901760
        %v3352 = vsub.f32 %v3350, %v3351
        %v3353 = vand.u32 %v3352, 4294901760
        %3354 = vmatpush1.msra.mxu0 %v3353
        %3355 = vmatprep.subr.mxu0 0.0
        %v3356 = vand.u32 %v1808, 4294901760
        %v3357 = vsub.f32 %v1808, %v3356
        %v3358 = vand.u32 %v3357, 4294901760
        %v3359 = vsub.f32 %v3357, %v3358
        %v3360 = vand.u32 %v3359, 4294901760
        %3361 = vmatpush1.msra.mxu0 %v3360
        %3362 = vmatprep.subr.mxu0 0.0
        %v3363 = vand.u32 %v1807, 4294901760
        %v3364 = vsub.f32 %v1807, %v3363
        %v3365 = vand.u32 %v3364, 4294901760
        %v3366 = vsub.f32 %v3364, %v3365
        %v3367 = vand.u32 %v3366, 4294901760
        %3368 = vmatpush1.msra.mxu0 %v3367
        %3369 = vmatprep.subr.mxu0 0.0
        %v3370 = vand.u32 %v1806, 4294901760
        %v3371 = vsub.f32 %v1806, %v3370
        %v3372 = vand.u32 %v3371, 4294901760
        %v3373 = vsub.f32 %v3371, %v3372
        %v3374 = vand.u32 %v3373, 4294901760
        %3375 = vmatpush1.msra.mxu0 %v3374
        %3376 = vmatprep.subr.mxu0 0.0
        %v3377 = vand.u32 %v1805, 4294901760
        %v3378 = vsub.f32 %v1805, %v3377
        %v3379 = vand.u32 %v3378, 4294901760
        %v3380 = vsub.f32 %v3378, %v3379
        %v3381 = vand.u32 %v3380, 4294901760
        %3382 = vmatpush1.msra.mxu0 %v3381
        %3383 = vmatprep.subr.mxu0 0.0
        %3384 = vmatpush2.msra.mxu0 0.0
        %3385 = vmatprep.subr.mxu0 0.0
        %3386 = vmatpush2.msra.mxu0 0.0
        %3387 = vmatprep.subr.mxu0 0.0
        %3388 = vmatpush2.msra.mxu0 0.0
        %3389 = vmatprep.subr.mxu0 0.0
        %3390 = vmatpush2.msra.mxu0 0.0
        %3391 = vmatprep.subr.mxu0 0.0
        %3392 = vmatpush2.msra.mxu0 0.0
        %3393 = vmatprep.subr.mxu0 0.0
        %3394 = vmatpush2.msra.mxu0 0.0
        %3395 = vmatprep.subr.mxu0 0.0
        %3396 = vmatpush2.msra.mxu0 0.0
        %3397 = vmatprep.subr.mxu0 0.0
        %3398 = vmatpush2.msra.mxu0 0.0
        %3399 = vmatprep.subr.mxu0 0.0
        %3400 = vmatpush2.msra.mxu0 0.0
        %3401 = vmatprep.subr.mxu0 0.0
        %3402 = vmatpush2.msra.mxu0 0.0
        %3403 = vmatprep.subr.mxu0 0.0
        %3404 = vmatpush2.msra.mxu0 0.0
        %3405 = vmatprep.subr.mxu0 0.0
        %3406 = vmatpush2.msra.mxu0 0.0
        %3407 = vmatprep.subr.mxu0 0.0
        %3408 = vmatpush2.msra.mxu0 0.0
        %3409 = vmatprep.subr.mxu0 0.0
        %3410 = vmatpush2.msra.mxu0 0.0
        %3411 = vmatprep.subr.mxu0 0.0
        %3412 = vmatpush2.msra.mxu0 0.0
        %3413 = vmatprep.subr.mxu0 0.0
        %3414 = vmatpush2.msra.mxu0 0.0
        %3415 = vmatprep.mubr.f32.mxu0 0.0
        %v3416 = vand.u32 %v369, 4294901760
        %3417 = vmatmul.mubr.f32.gmra.mxu0 %v3416
        %v3418 = vpop.f32.mrf.mxu0
        %v3419 = vadd.f32 %v3268, %v3418
        %v3420 = vpop.f32.mrf.mxu0
        %3421 = vdwg.mxu0
        %3422 = vmatprep.subr.mxu0 0.0
        %v3423 = vand.u32 %v1820, 4294901760
        %v3424 = vsub.f32 %v1820, %v3423
        %3425 = vmatpush1.msra.mxu0 %v3424
        %3426 = vmatprep.subr.mxu0 0.0
        %v3427 = vand.u32 %v1819, 4294901760
        %v3428 = vsub.f32 %v1819, %v3427
        %3429 = vmatpush1.msra.mxu0 %v3428
        %3430 = vmatprep.subr.mxu0 0.0
        %v3431 = vand.u32 %v1818, 4294901760
        %v3432 = vsub.f32 %v1818, %v3431
        %3433 = vmatpush1.msra.mxu0 %v3432
        %3434 = vmatprep.subr.mxu0 0.0
        %v3435 = vand.u32 %v1817, 4294901760
        %v3436 = vsub.f32 %v1817, %v3435
        %3437 = vmatpush1.msra.mxu0 %v3436
        %3438 = vmatprep.subr.mxu0 0.0
        %v3439 = vand.u32 %v1816, 4294901760
        %v3440 = vsub.f32 %v1816, %v3439
        %3441 = vmatpush1.msra.mxu0 %v3440
        %3442 = vmatprep.subr.mxu0 0.0
        %v3443 = vand.u32 %v1815, 4294901760
        %v3444 = vsub.f32 %v1815, %v3443
        %3445 = vmatpush1.msra.mxu0 %v3444
        %3446 = vmatprep.subr.mxu0 0.0
        %v3447 = vand.u32 %v1814, 4294901760
        %v3448 = vsub.f32 %v1814, %v3447
        %3449 = vmatpush1.msra.mxu0 %v3448
        %3450 = vmatprep.subr.mxu0 0.0
        %v3451 = vand.u32 %v1813, 4294901760
        %v3452 = vsub.f32 %v1813, %v3451
        %3453 = vmatpush1.msra.mxu0 %v3452
        %3454 = vmatprep.subr.mxu0 0.0
        %v3455 = vand.u32 %v1812, 4294901760
        %v3456 = vsub.f32 %v1812, %v3455
        %3457 = vmatpush1.msra.mxu0 %v3456
        %3458 = vmatprep.subr.mxu0 0.0
        %v3459 = vand.u32 %v1811, 4294901760
        %v3460 = vsub.f32 %v1811, %v3459
        %3461 = vmatpush1.msra.mxu0 %v3460
        %3462 = vmatprep.subr.mxu0 0.0
        %v3463 = vand.u32 %v1810, 4294901760
        %v3464 = vsub.f32 %v1810, %v3463
        %3465 = vmatpush1.msra.mxu0 %v3464
        %3466 = vmatprep.subr.mxu0 0.0
        %v3467 = vand.u32 %v1809, 4294901760
        %v3468 = vsub.f32 %v1809, %v3467
        %3469 = vmatpush1.msra.mxu0 %v3468
        %3470 = vmatprep.subr.mxu0 0.0
        %v3471 = vand.u32 %v1808, 4294901760
        %v3472 = vsub.f32 %v1808, %v3471
        %3473 = vmatpush1.msra.mxu0 %v3472
        %3474 = vmatprep.subr.mxu0 0.0
        %v3475 = vand.u32 %v1807, 4294901760
        %v3476 = vsub.f32 %v1807, %v3475
        %3477 = vmatpush1.msra.mxu0 %v3476
        %3478 = vmatprep.subr.mxu0 0.0
        %v3479 = vand.u32 %v1806, 4294901760
        %v3480 = vsub.f32 %v1806, %v3479
        %3481 = vmatpush1.msra.mxu0 %v3480
        %3482 = vmatprep.subr.mxu0 0.0
        %v3483 = vand.u32 %v1805, 4294901760
        %v3484 = vsub.f32 %v1805, %v3483
        %3485 = vmatpush1.msra.mxu0 %v3484
        %3486 = vmatprep.subr.mxu0 0.0
        %3487 = vmatpush2.msra.mxu0 0.0
        %3488 = vmatprep.subr.mxu0 0.0
        %3489 = vmatpush2.msra.mxu0 0.0
        %3490 = vmatprep.subr.mxu0 0.0
        %3491 = vmatpush2.msra.mxu0 0.0
        %3492 = vmatprep.subr.mxu0 0.0
        %3493 = vmatpush2.msra.mxu0 0.0
        %3494 = vmatprep.subr.mxu0 0.0
        %3495 = vmatpush2.msra.mxu0 0.0
        %3496 = vmatprep.subr.mxu0 0.0
        %3497 = vmatpush2.msra.mxu0 0.0
        %3498 = vmatprep.subr.mxu0 0.0
        %3499 = vmatpush2.msra.mxu0 0.0
        %3500 = vmatprep.subr.mxu0 0.0
        %3501 = vmatpush2.msra.mxu0 0.0
        %3502 = vmatprep.subr.mxu0 0.0
        %3503 = vmatpush2.msra.mxu0 0.0
        %3504 = vmatprep.subr.mxu0 0.0
        %3505 = vmatpush2.msra.mxu0 0.0
        %3506 = vmatprep.subr.mxu0 0.0
        %3507 = vmatpush2.msra.mxu0 0.0
        %3508 = vmatprep.subr.mxu0 0.0
        %3509 = vmatpush2.msra.mxu0 0.0
        %3510 = vmatprep.subr.mxu0 0.0
        %3511 = vmatpush2.msra.mxu0 0.0
        %3512 = vmatprep.subr.mxu0 0.0
        %3513 = vmatpush2.msra.mxu0 0.0
        %3514 = vmatprep.subr.mxu0 0.0
        %3515 = vmatpush2.msra.mxu0 0.0
        %3516 = vmatprep.subr.mxu0 0.0
        %3517 = vmatpush2.msra.mxu0 0.0
        %3518 = vmatprep.mubr.f32.mxu0 0.0
        %v3519 = vand.u32 %v369, 4294901760
        %v3520 = vsub.f32 %v369, %v3519
        %3521 = vmatmul.mubr.f32.gmra.mxu0 %v3520
        %v3522 = vpop.f32.mrf.mxu0
        %v3523 = vadd.f32 %v3419, %v3522
        %v3524 = vpop.f32.mrf.mxu0
        %3525 = vdwg.mxu0
        %3526 = vmatprep.subr.mxu0 0.0
        %v3527 = vand.u32 %v1820, 4294901760
        %3528 = vmatpush1.msra.mxu0 %v3527
        %3529 = vmatprep.subr.mxu0 0.0
        %v3530 = vand.u32 %v1819, 4294901760
        %3531 = vmatpush1.msra.mxu0 %v3530
        %3532 = vmatprep.subr.mxu0 0.0
        %v3533 = vand.u32 %v1818, 4294901760
        %3534 = vmatpush1.msra.mxu0 %v3533
        %3535 = vmatprep.subr.mxu0 0.0
        %v3536 = vand.u32 %v1817, 4294901760
        %3537 = vmatpush1.msra.mxu0 %v3536
        %3538 = vmatprep.subr.mxu0 0.0
        %v3539 = vand.u32 %v1816, 4294901760
        %3540 = vmatpush1.msra.mxu0 %v3539
        %3541 = vmatprep.subr.mxu0 0.0
        %v3542 = vand.u32 %v1815, 4294901760
        %3543 = vmatpush1.msra.mxu0 %v3542
        %3544 = vmatprep.subr.mxu0 0.0
        %v3545 = vand.u32 %v1814, 4294901760
        %3546 = vmatpush1.msra.mxu0 %v3545
        %3547 = vmatprep.subr.mxu0 0.0
        %v3548 = vand.u32 %v1813, 4294901760
        %3549 = vmatpush1.msra.mxu0 %v3548
        %3550 = vmatprep.subr.mxu0 0.0
        %v3551 = vand.u32 %v1812, 4294901760
        %3552 = vmatpush1.msra.mxu0 %v3551
        %3553 = vmatprep.subr.mxu0 0.0
        %v3554 = vand.u32 %v1811, 4294901760
        %3555 = vmatpush1.msra.mxu0 %v3554
        %3556 = vmatprep.subr.mxu0 0.0
        %v3557 = vand.u32 %v1810, 4294901760
        %3558 = vmatpush1.msra.mxu0 %v3557
        %3559 = vmatprep.subr.mxu0 0.0
        %v3560 = vand.u32 %v1809, 4294901760
        %3561 = vmatpush1.msra.mxu0 %v3560
        %3562 = vmatprep.subr.mxu0 0.0
        %v3563 = vand.u32 %v1808, 4294901760
        %3564 = vmatpush1.msra.mxu0 %v3563
        %3565 = vmatprep.subr.mxu0 0.0
        %v3566 = vand.u32 %v1807, 4294901760
        %3567 = vmatpush1.msra.mxu0 %v3566
        %3568 = vmatprep.subr.mxu0 0.0
        %v3569 = vand.u32 %v1806, 4294901760
        %3570 = vmatpush1.msra.mxu0 %v3569
        %3571 = vmatprep.subr.mxu0 0.0
        %v3572 = vand.u32 %v1805, 4294901760
        %3573 = vmatpush1.msra.mxu0 %v3572
        %3574 = vmatprep.subr.mxu0 0.0
        %3575 = vmatpush2.msra.mxu0 0.0
        %3576 = vmatprep.subr.mxu0 0.0
        %3577 = vmatpush2.msra.mxu0 0.0
        %3578 = vmatprep.subr.mxu0 0.0
        %3579 = vmatpush2.msra.mxu0 0.0
        %3580 = vmatprep.subr.mxu0 0.0
        %3581 = vmatpush2.msra.mxu0 0.0
        %3582 = vmatprep.subr.mxu0 0.0
        %3583 = vmatpush2.msra.mxu0 0.0
        %3584 = vmatprep.subr.mxu0 0.0
        %3585 = vmatpush2.msra.mxu0 0.0
        %3586 = vmatprep.subr.mxu0 0.0
        %3587 = vmatpush2.msra.mxu0 0.0
        %3588 = vmatprep.subr.mxu0 0.0
        %3589 = vmatpush2.msra.mxu0 0.0
        %3590 = vmatprep.subr.mxu0 0.0
        %3591 = vmatpush2.msra.mxu0 0.0
        %3592 = vmatprep.subr.mxu0 0.0
        %3593 = vmatpush2.msra.mxu0 0.0
        %3594 = vmatprep.subr.mxu0 0.0
        %3595 = vmatpush2.msra.mxu0 0.0
        %3596 = vmatprep.subr.mxu0 0.0
        %3597 = vmatpush2.msra.mxu0 0.0
        %3598 = vmatprep.subr.mxu0 0.0
        %3599 = vmatpush2.msra.mxu0 0.0
        %3600 = vmatprep.subr.mxu0 0.0
        %3601 = vmatpush2.msra.mxu0 0.0
        %3602 = vmatprep.subr.mxu0 0.0
        %3603 = vmatpush2.msra.mxu0 0.0
        %3604 = vmatprep.subr.mxu0 0.0
        %3605 = vmatpush2.msra.mxu0 0.0
        %3606 = vmatprep.mubr.f32.mxu0 0.0
        %v3607 = vand.u32 %v369, 4294901760
        %v3608 = vsub.f32 %v369, %v3607
        %v3609 = vand.u32 %v3608, 4294901760
        %3610 = vmatmul.mubr.f32.gmra.mxu0 %v3609
        %v3611 = vpop.f32.mrf.mxu0
        %v3612 = vadd.f32 %v3523, %v3611
        %v3613 = vpop.f32.mrf.mxu0
        %3614 = vdwg.mxu0
        %3615 = vmatprep.subr.mxu0 0.0
        %v3616 = vand.u32 %v1820, 4294901760
        %v3617 = vsub.f32 %v1820, %v3616
        %v3618 = vand.u32 %v3617, 4294901760
        %3619 = vmatpush1.msra.mxu0 %v3618
        %3620 = vmatprep.subr.mxu0 0.0
        %v3621 = vand.u32 %v1819, 4294901760
        %v3622 = vsub.f32 %v1819, %v3621
        %v3623 = vand.u32 %v3622, 4294901760
        %3624 = vmatpush1.msra.mxu0 %v3623
        %3625 = vmatprep.subr.mxu0 0.0
        %v3626 = vand.u32 %v1818, 4294901760
        %v3627 = vsub.f32 %v1818, %v3626
        %v3628 = vand.u32 %v3627, 4294901760
        %3629 = vmatpush1.msra.mxu0 %v3628
        %3630 = vmatprep.subr.mxu0 0.0
        %v3631 = vand.u32 %v1817, 4294901760
        %v3632 = vsub.f32 %v1817, %v3631
        %v3633 = vand.u32 %v3632, 4294901760
        %3634 = vmatpush1.msra.mxu0 %v3633
        %3635 = vmatprep.subr.mxu0 0.0
        %v3636 = vand.u32 %v1816, 4294901760
        %v3637 = vsub.f32 %v1816, %v3636
        %v3638 = vand.u32 %v3637, 4294901760
        %3639 = vmatpush1.msra.mxu0 %v3638
        %3640 = vmatprep.subr.mxu0 0.0
        %v3641 = vand.u32 %v1815, 4294901760
        %v3642 = vsub.f32 %v1815, %v3641
        %v3643 = vand.u32 %v3642, 4294901760
        %3644 = vmatpush1.msra.mxu0 %v3643
        %3645 = vmatprep.subr.mxu0 0.0
        %v3646 = vand.u32 %v1814, 4294901760
        %v3647 = vsub.f32 %v1814, %v3646
        %v3648 = vand.u32 %v3647, 4294901760
        %3649 = vmatpush1.msra.mxu0 %v3648
        %3650 = vmatprep.subr.mxu0 0.0
        %v3651 = vand.u32 %v1813, 4294901760
        %v3652 = vsub.f32 %v1813, %v3651
        %v3653 = vand.u32 %v3652, 4294901760
        %3654 = vmatpush1.msra.mxu0 %v3653
        %3655 = vmatprep.subr.mxu0 0.0
        %v3656 = vand.u32 %v1812, 4294901760
        %v3657 = vsub.f32 %v1812, %v3656
        %v3658 = vand.u32 %v3657, 4294901760
        %3659 = vmatpush1.msra.mxu0 %v3658
        %3660 = vmatprep.subr.mxu0 0.0
        %v3661 = vand.u32 %v1811, 4294901760
        %v3662 = vsub.f32 %v1811, %v3661
        %v3663 = vand.u32 %v3662, 4294901760
        %3664 = vmatpush1.msra.mxu0 %v3663
        %3665 = vmatprep.subr.mxu0 0.0
        %v3666 = vand.u32 %v1810, 4294901760
        %v3667 = vsub.f32 %v1810, %v3666
        %v3668 = vand.u32 %v3667, 4294901760
        %3669 = vmatpush1.msra.mxu0 %v3668
        %3670 = vmatprep.subr.mxu0 0.0
        %v3671 = vand.u32 %v1809, 4294901760
        %v3672 = vsub.f32 %v1809, %v3671
        %v3673 = vand.u32 %v3672, 4294901760
        %3674 = vmatpush1.msra.mxu0 %v3673
        %3675 = vmatprep.subr.mxu0 0.0
        %v3676 = vand.u32 %v1808, 4294901760
        %v3677 = vsub.f32 %v1808, %v3676
        %v3678 = vand.u32 %v3677, 4294901760
        %3679 = vmatpush1.msra.mxu0 %v3678
        %3680 = vmatprep.subr.mxu0 0.0
        %v3681 = vand.u32 %v1807, 4294901760
        %v3682 = vsub.f32 %v1807, %v3681
        %v3683 = vand.u32 %v3682, 4294901760
        %3684 = vmatpush1.msra.mxu0 %v3683
        %3685 = vmatprep.subr.mxu0 0.0
        %v3686 = vand.u32 %v1806, 4294901760
        %v3687 = vsub.f32 %v1806, %v3686
        %v3688 = vand.u32 %v3687, 4294901760
        %3689 = vmatpush1.msra.mxu0 %v3688
        %3690 = vmatprep.subr.mxu0 0.0
        %v3691 = vand.u32 %v1805, 4294901760
        %v3692 = vsub.f32 %v1805, %v3691
        %v3693 = vand.u32 %v3692, 4294901760
        %3694 = vmatpush1.msra.mxu0 %v3693
        %3695 = vmatprep.subr.mxu0 0.0
        %3696 = vmatpush2.msra.mxu0 0.0
        %3697 = vmatprep.subr.mxu0 0.0
        %3698 = vmatpush2.msra.mxu0 0.0
        %3699 = vmatprep.subr.mxu0 0.0
        %3700 = vmatpush2.msra.mxu0 0.0
        %3701 = vmatprep.subr.mxu0 0.0
        %3702 = vmatpush2.msra.mxu0 0.0
        %3703 = vmatprep.subr.mxu0 0.0
        %3704 = vmatpush2.msra.mxu0 0.0
        %3705 = vmatprep.subr.mxu0 0.0
        %3706 = vmatpush2.msra.mxu0 0.0
        %3707 = vmatprep.subr.mxu0 0.0
        %3708 = vmatpush2.msra.mxu0 0.0
        %3709 = vmatprep.subr.mxu0 0.0
        %3710 = vmatpush2.msra.mxu0 0.0
        %3711 = vmatprep.subr.mxu0 0.0
        %3712 = vmatpush2.msra.mxu0 0.0
        %3713 = vmatprep.subr.mxu0 0.0
        %3714 = vmatpush2.msra.mxu0 0.0
        %3715 = vmatprep.subr.mxu0 0.0
        %3716 = vmatpush2.msra.mxu0 0.0
        %3717 = vmatprep.subr.mxu0 0.0
        %3718 = vmatpush2.msra.mxu0 0.0
        %3719 = vmatprep.subr.mxu0 0.0
        %3720 = vmatpush2.msra.mxu0 0.0
        %3721 = vmatprep.subr.mxu0 0.0
        %3722 = vmatpush2.msra.mxu0 0.0
        %3723 = vmatprep.subr.mxu0 0.0
        %3724 = vmatpush2.msra.mxu0 0.0
        %3725 = vmatprep.subr.mxu0 0.0
        %3726 = vmatpush2.msra.mxu0 0.0
        %3727 = vmatprep.mubr.f32.mxu0 0.0
        %v3728 = vand.u32 %v369, 4294901760
        %3729 = vmatmul.mubr.f32.gmra.mxu0 %v3728
        %v3730 = vpop.f32.mrf.mxu0
        %v3731 = vadd.f32 %v3612, %v3730
        %v3732 = vpop.f32.mrf.mxu0
        %3733 = vdwg.mxu0
        %3734 = vmatprep.subr.mxu0 0.0
        %v3735 = vand.u32 %v1820, 4294901760
        %3736 = vmatpush1.msra.mxu0 %v3735
        %3737 = vmatprep.subr.mxu0 0.0
        %v3738 = vand.u32 %v1819, 4294901760
        %3739 = vmatpush1.msra.mxu0 %v3738
        %3740 = vmatprep.subr.mxu0 0.0
        %v3741 = vand.u32 %v1818, 4294901760
        %3742 = vmatpush1.msra.mxu0 %v3741
        %3743 = vmatprep.subr.mxu0 0.0
        %v3744 = vand.u32 %v1817, 4294901760
        %3745 = vmatpush1.msra.mxu0 %v3744
        %3746 = vmatprep.subr.mxu0 0.0
        %v3747 = vand.u32 %v1816, 4294901760
        %3748 = vmatpush1.msra.mxu0 %v3747
        %3749 = vmatprep.subr.mxu0 0.0
        %v3750 = vand.u32 %v1815, 4294901760
        %3751 = vmatpush1.msra.mxu0 %v3750
        %3752 = vmatprep.subr.mxu0 0.0
        %v3753 = vand.u32 %v1814, 4294901760
        %3754 = vmatpush1.msra.mxu0 %v3753
        %3755 = vmatprep.subr.mxu0 0.0
        %v3756 = vand.u32 %v1813, 4294901760
        %3757 = vmatpush1.msra.mxu0 %v3756
        %3758 = vmatprep.subr.mxu0 0.0
        %v3759 = vand.u32 %v1812, 4294901760
        %3760 = vmatpush1.msra.mxu0 %v3759
        %3761 = vmatprep.subr.mxu0 0.0
        %v3762 = vand.u32 %v1811, 4294901760
        %3763 = vmatpush1.msra.mxu0 %v3762
        %3764 = vmatprep.subr.mxu0 0.0
        %v3765 = vand.u32 %v1810, 4294901760
        %3766 = vmatpush1.msra.mxu0 %v3765
        %3767 = vmatprep.subr.mxu0 0.0
        %v3768 = vand.u32 %v1809, 4294901760
        %3769 = vmatpush1.msra.mxu0 %v3768
        %3770 = vmatprep.subr.mxu0 0.0
        %v3771 = vand.u32 %v1808, 4294901760
        %3772 = vmatpush1.msra.mxu0 %v3771
        %3773 = vmatprep.subr.mxu0 0.0
        %v3774 = vand.u32 %v1807, 4294901760
        %3775 = vmatpush1.msra.mxu0 %v3774
        %3776 = vmatprep.subr.mxu0 0.0
        %v3777 = vand.u32 %v1806, 4294901760
        %3778 = vmatpush1.msra.mxu0 %v3777
        %3779 = vmatprep.subr.mxu0 0.0
        %v3780 = vand.u32 %v1805, 4294901760
        %3781 = vmatpush1.msra.mxu0 %v3780
        %3782 = vmatprep.subr.mxu0 0.0
        %3783 = vmatpush2.msra.mxu0 0.0
        %3784 = vmatprep.subr.mxu0 0.0
        %3785 = vmatpush2.msra.mxu0 0.0
        %3786 = vmatprep.subr.mxu0 0.0
        %3787 = vmatpush2.msra.mxu0 0.0
        %3788 = vmatprep.subr.mxu0 0.0
        %3789 = vmatpush2.msra.mxu0 0.0
        %3790 = vmatprep.subr.mxu0 0.0
        %3791 = vmatpush2.msra.mxu0 0.0
        %3792 = vmatprep.subr.mxu0 0.0
        %3793 = vmatpush2.msra.mxu0 0.0
        %3794 = vmatprep.subr.mxu0 0.0
        %3795 = vmatpush2.msra.mxu0 0.0
        %3796 = vmatprep.subr.mxu0 0.0
        %3797 = vmatpush2.msra.mxu0 0.0
        %3798 = vmatprep.subr.mxu0 0.0
        %3799 = vmatpush2.msra.mxu0 0.0
        %3800 = vmatprep.subr.mxu0 0.0
        %3801 = vmatpush2.msra.mxu0 0.0
        %3802 = vmatprep.subr.mxu0 0.0
        %3803 = vmatpush2.msra.mxu0 0.0
        %3804 = vmatprep.subr.mxu0 0.0
        %3805 = vmatpush2.msra.mxu0 0.0
        %3806 = vmatprep.subr.mxu0 0.0
        %3807 = vmatpush2.msra.mxu0 0.0
        %3808 = vmatprep.subr.mxu0 0.0
        %3809 = vmatpush2.msra.mxu0 0.0
        %3810 = vmatprep.subr.mxu0 0.0
        %3811 = vmatpush2.msra.mxu0 0.0
        %3812 = vmatprep.subr.mxu0 0.0
        %3813 = vmatpush2.msra.mxu0 0.0
        %3814 = vmatprep.mubr.f32.mxu0 0.0
        %v3815 = vand.u32 %v369, 4294901760
        %3816 = vmatmul.mubr.f32.gmra.mxu0 %v3815
        %v3817 = vpop.f32.mrf.mxu0
        %v3818 = vadd.f32 %v3731, %v3817
        %v3819 = vpop.f32.mrf.mxu0
        %3820 = vdwg.mxu0
        %v3821 = vadd.f32 %v3818, 3.0
        %v3822 = vmax.f32 %v3821, 0.0
        %v3823 = vmin.f32 %v3822, 6.0
        %v3824 = vmul.f32 %v3823, 0.16666667
        %v3825 = vmul.f32 %v3818, %v3824
        %3826 = vmatprep.subr.mxu0 0.0
        %v3827 = vand.u32 %v3174, 4294901760
        %3828 = vmatpush1.msra.mxu0 %v3827
        %3829 = vmatprep.subr.mxu0 0.0
        %v3830 = vand.u32 %v3173, 4294901760
        %3831 = vmatpush1.msra.mxu0 %v3830
        %3832 = vmatprep.subr.mxu0 0.0
        %v3833 = vand.u32 %v3172, 4294901760
        %3834 = vmatpush1.msra.mxu0 %v3833
        %3835 = vmatprep.subr.mxu0 0.0
        %v3836 = vand.u32 %v3171, 4294901760
        %3837 = vmatpush1.msra.mxu0 %v3836
        %3838 = vmatprep.subr.mxu0 0.0
        %v3839 = vand.u32 %v3170, 4294901760
        %3840 = vmatpush1.msra.mxu0 %v3839
        %3841 = vmatprep.subr.mxu0 0.0
        %v3842 = vand.u32 %v3169, 4294901760
        %3843 = vmatpush1.msra.mxu0 %v3842
        %3844 = vmatprep.subr.mxu0 0.0
        %v3845 = vand.u32 %v3168, 4294901760
        %3846 = vmatpush1.msra.mxu0 %v3845
        %3847 = vmatprep.subr.mxu0 0.0
        %v3848 = vand.u32 %v3167, 4294901760
        %3849 = vmatpush1.msra.mxu0 %v3848
        %3850 = vmatprep.subr.mxu0 0.0
        %v3851 = vand.u32 %v3166, 4294901760
        %3852 = vmatpush1.msra.mxu0 %v3851
        %3853 = vmatprep.subr.mxu0 0.0
        %v3854 = vand.u32 %v3165, 4294901760
        %3855 = vmatpush1.msra.mxu0 %v3854
        %3856 = vmatprep.subr.mxu0 0.0
        %v3857 = vand.u32 %v3164, 4294901760
        %3858 = vmatpush1.msra.mxu0 %v3857
        %3859 = vmatprep.subr.mxu0 0.0
        %v3860 = vand.u32 %v3163, 4294901760
        %3861 = vmatpush1.msra.mxu0 %v3860
        %3862 = vmatprep.subr.mxu0 0.0
        %v3863 = vand.u32 %v3162, 4294901760
        %3864 = vmatpush1.msra.mxu0 %v3863
        %3865 = vmatprep.subr.mxu0 0.0
        %v3866 = vand.u32 %v3161, 4294901760
        %3867 = vmatpush1.msra.mxu0 %v3866
        %3868 = vmatprep.subr.mxu0 0.0
        %v3869 = vand.u32 %v3160, 4294901760
        %3870 = vmatpush1.msra.mxu0 %v3869
        %3871 = vmatprep.subr.mxu0 0.0
        %v3872 = vand.u32 %v3159, 4294901760
        %3873 = vmatpush1.msra.mxu0 %v3872
        %3874 = vmatprep.subr.mxu0 0.0
        %3875 = vmatpush2.msra.mxu0 0.0
        %3876 = vmatprep.subr.mxu0 0.0
        %3877 = vmatpush2.msra.mxu0 0.0
        %3878 = vmatprep.subr.mxu0 0.0
        %3879 = vmatpush2.msra.mxu0 0.0
        %3880 = vmatprep.subr.mxu0 0.0
        %3881 = vmatpush2.msra.mxu0 0.0
        %3882 = vmatprep.subr.mxu0 0.0
        %3883 = vmatpush2.msra.mxu0 0.0
        %3884 = vmatprep.subr.mxu0 0.0
        %3885 = vmatpush2.msra.mxu0 0.0
        %3886 = vmatprep.subr.mxu0 0.0
        %3887 = vmatpush2.msra.mxu0 0.0
        %3888 = vmatprep.subr.mxu0 0.0
        %3889 = vmatpush2.msra.mxu0 0.0
        %3890 = vmatprep.subr.mxu0 0.0
        %3891 = vmatpush2.msra.mxu0 0.0
        %3892 = vmatprep.subr.mxu0 0.0
        %3893 = vmatpush2.msra.mxu0 0.0
        %3894 = vmatprep.subr.mxu0 0.0
        %3895 = vmatpush2.msra.mxu0 0.0
        %3896 = vmatprep.subr.mxu0 0.0
        %3897 = vmatpush2.msra.mxu0 0.0
        %3898 = vmatprep.subr.mxu0 0.0
        %3899 = vmatpush2.msra.mxu0 0.0
        %3900 = vmatprep.subr.mxu0 0.0
        %3901 = vmatpush2.msra.mxu0 0.0
        %3902 = vmatprep.subr.mxu0 0.0
        %3903 = vmatpush2.msra.mxu0 0.0
        %3904 = vmatprep.subr.mxu0 0.0
        %3905 = vmatpush2.msra.mxu0 0.0
        %3906 = vmatprep.mubr.f32.mxu0 0.0
        %v3907 = vand.u32 %v369, 4294901760
        %v3908 = vsub.f32 %v369, %v3907
        %v3909 = vand.u32 %v3908, 4294901760
        %v3910 = vsub.f32 %v3908, %v3909
        %v3911 = vand.u32 %v3910, 4294901760
        %3912 = vmatmul.mubr.f32.gmra.mxu0 %v3911
        %v3913 = vpop.f32.mrf.mxu0
        %v3914 = vadd.f32 %v3178, %v3913
        %v3915 = vpop.f32.mrf.mxu0
        %3916 = vdwg.mxu0
        %3917 = vmatprep.subr.mxu0 0.0
        %v3918 = vand.u32 %v3174, 4294901760
        %v3919 = vsub.f32 %v3174, %v3918
        %v3920 = vand.u32 %v3919, 4294901760
        %v3921 = vsub.f32 %v3919, %v3920
        %v3922 = vand.u32 %v3921, 4294901760
        %3923 = vmatpush1.msra.mxu0 %v3922
        %3924 = vmatprep.subr.mxu0 0.0
        %v3925 = vand.u32 %v3173, 4294901760
        %v3926 = vsub.f32 %v3173, %v3925
        %v3927 = vand.u32 %v3926, 4294901760
        %v3928 = vsub.f32 %v3926, %v3927
        %v3929 = vand.u32 %v3928, 4294901760
        %3930 = vmatpush1.msra.mxu0 %v3929
        %3931 = vmatprep.subr.mxu0 0.0
        %v3932 = vand.u32 %v3172, 4294901760
        %v3933 = vsub.f32 %v3172, %v3932
        %v3934 = vand.u32 %v3933, 4294901760
        %v3935 = vsub.f32 %v3933, %v3934
        %v3936 = vand.u32 %v3935, 4294901760
        %3937 = vmatpush1.msra.mxu0 %v3936
        %3938 = vmatprep.subr.mxu0 0.0
        %v3939 = vand.u32 %v3171, 4294901760
        %v3940 = vsub.f32 %v3171, %v3939
        %v3941 = vand.u32 %v3940, 4294901760
        %v3942 = vsub.f32 %v3940, %v3941
        %v3943 = vand.u32 %v3942, 4294901760
        %3944 = vmatpush1.msra.mxu0 %v3943
        %3945 = vmatprep.subr.mxu0 0.0
        %v3946 = vand.u32 %v3170, 4294901760
        %v3947 = vsub.f32 %v3170, %v3946
        %v3948 = vand.u32 %v3947, 4294901760
        %v3949 = vsub.f32 %v3947, %v3948
        %v3950 = vand.u32 %v3949, 4294901760
        %3951 = vmatpush1.msra.mxu0 %v3950
        %3952 = vmatprep.subr.mxu0 0.0
        %v3953 = vand.u32 %v3169, 4294901760
        %v3954 = vsub.f32 %v3169, %v3953
        %v3955 = vand.u32 %v3954, 4294901760
        %v3956 = vsub.f32 %v3954, %v3955
        %v3957 = vand.u32 %v3956, 4294901760
        %3958 = vmatpush1.msra.mxu0 %v3957
        %3959 = vmatprep.subr.mxu0 0.0
        %v3960 = vand.u32 %v3168, 4294901760
        %v3961 = vsub.f32 %v3168, %v3960
        %v3962 = vand.u32 %v3961, 4294901760
        %v3963 = vsub.f32 %v3961, %v3962
        %v3964 = vand.u32 %v3963, 4294901760
        %3965 = vmatpush1.msra.mxu0 %v3964
        %3966 = vmatprep.subr.mxu0 0.0
        %v3967 = vand.u32 %v3167, 4294901760
        %v3968 = vsub.f32 %v3167, %v3967
        %v3969 = vand.u32 %v3968, 4294901760
        %v3970 = vsub.f32 %v3968, %v3969
        %v3971 = vand.u32 %v3970, 4294901760
        %3972 = vmatpush1.msra.mxu0 %v3971
        %3973 = vmatprep.subr.mxu0 0.0
        %v3974 = vand.u32 %v3166, 4294901760
        %v3975 = vsub.f32 %v3166, %v3974
        %v3976 = vand.u32 %v3975, 4294901760
        %v3977 = vsub.f32 %v3975, %v3976
        %v3978 = vand.u32 %v3977, 4294901760
        %3979 = vmatpush1.msra.mxu0 %v3978
        %3980 = vmatprep.subr.mxu0 0.0
        %v3981 = vand.u32 %v3165, 4294901760
        %v3982 = vsub.f32 %v3165, %v3981
        %v3983 = vand.u32 %v3982, 4294901760
        %v3984 = vsub.f32 %v3982, %v3983
        %v3985 = vand.u32 %v3984, 4294901760
        %3986 = vmatpush1.msra.mxu0 %v3985
        %3987 = vmatprep.subr.mxu0 0.0
        %v3988 = vand.u32 %v3164, 4294901760
        %v3989 = vsub.f32 %v3164, %v3988
        %v3990 = vand.u32 %v3989, 4294901760
        %v3991 = vsub.f32 %v3989, %v3990
        %v3992 = vand.u32 %v3991, 4294901760
        %3993 = vmatpush1.msra.mxu0 %v3992
        %3994 = vmatprep.subr.mxu0 0.0
        %v3995 = vand.u32 %v3163, 4294901760
        %v3996 = vsub.f32 %v3163, %v3995
        %v3997 = vand.u32 %v3996, 4294901760
        %v3998 = vsub.f32 %v3996, %v3997
        %v3999 = vand.u32 %v3998, 4294901760
        %4000 = vmatpush1.msra.mxu0 %v3999
        %4001 = vmatprep.subr.mxu0 0.0
        %v4002 = vand.u32 %v3162, 4294901760
        %v4003 = vsub.f32 %v3162, %v4002
        %v4004 = vand.u32 %v4003, 4294901760
        %v4005 = vsub.f32 %v4003, %v4004
        %v4006 = vand.u32 %v4005, 4294901760
        %4007 = vmatpush1.msra.mxu0 %v4006
        %4008 = vmatprep.subr.mxu0 0.0
        %v4009 = vand.u32 %v3161, 4294901760
        %v4010 = vsub.f32 %v3161, %v4009
        %v4011 = vand.u32 %v4010, 4294901760
        %v4012 = vsub.f32 %v4010, %v4011
        %v4013 = vand.u32 %v4012, 4294901760
        %4014 = vmatpush1.msra.mxu0 %v4013
        %4015 = vmatprep.subr.mxu0 0.0
        %v4016 = vand.u32 %v3160, 4294901760
        %v4017 = vsub.f32 %v3160, %v4016
        %v4018 = vand.u32 %v4017, 4294901760
        %v4019 = vsub.f32 %v4017, %v4018
        %v4020 = vand.u32 %v4019, 4294901760
        %4021 = vmatpush1.msra.mxu0 %v4020
        %4022 = vmatprep.subr.mxu0 0.0
        %v4023 = vand.u32 %v3159, 4294901760
        %v4024 = vsub.f32 %v3159, %v4023
        %v4025 = vand.u32 %v4024, 4294901760
        %v4026 = vsub.f32 %v4024, %v4025
        %v4027 = vand.u32 %v4026, 4294901760
        %4028 = vmatpush1.msra.mxu0 %v4027
        %4029 = vmatprep.subr.mxu0 0.0
        %4030 = vmatpush2.msra.mxu0 0.0
        %4031 = vmatprep.subr.mxu0 0.0
        %4032 = vmatpush2.msra.mxu0 0.0
        %4033 = vmatprep.subr.mxu0 0.0
        %4034 = vmatpush2.msra.mxu0 0.0
        %4035 = vmatprep.subr.mxu0 0.0
        %4036 = vmatpush2.msra.mxu0 0.0
        %4037 = vmatprep.subr.mxu0 0.0
        %4038 = vmatpush2.msra.mxu0 0.0
        %4039 = vmatprep.subr.mxu0 0.0
        %4040 = vmatpush2.msra.mxu0 0.0
        %4041 = vmatprep.subr.mxu0 0.0
        %4042 = vmatpush2.msra.mxu0 0.0
        %4043 = vmatprep.subr.mxu0 0.0
        %4044 = vmatpush2.msra.mxu0 0.0
        %4045 = vmatprep.subr.mxu0 0.0
        %4046 = vmatpush2.msra.mxu0 0.0
        %4047 = vmatprep.subr.mxu0 0.0
        %4048 = vmatpush2.msra.mxu0 0.0
        %4049 = vmatprep.subr.mxu0 0.0
        %4050 = vmatpush2.msra.mxu0 0.0
        %4051 = vmatprep.subr.mxu0 0.0
        %4052 = vmatpush2.msra.mxu0 0.0
        %4053 = vmatprep.subr.mxu0 0.0
        %4054 = vmatpush2.msra.mxu0 0.0
        %4055 = vmatprep.subr.mxu0 0.0
        %4056 = vmatpush2.msra.mxu0 0.0
        %4057 = vmatprep.subr.mxu0 0.0
        %4058 = vmatpush2.msra.mxu0 0.0
        %4059 = vmatprep.subr.mxu0 0.0
        %4060 = vmatpush2.msra.mxu0 0.0
        %4061 = vmatprep.mubr.f32.mxu0 0.0
        %v4062 = vand.u32 %v369, 4294901760
        %4063 = vmatmul.mubr.f32.gmra.mxu0 %v4062
        %v4064 = vpop.f32.mrf.mxu0
        %v4065 = vadd.f32 %v3914, %v4064
        %v4066 = vpop.f32.mrf.mxu0
        %4067 = vdwg.mxu0
        %4068 = vmatprep.subr.mxu0 0.0
        %v4069 = vand.u32 %v3174, 4294901760
        %v4070 = vsub.f32 %v3174, %v4069
        %4071 = vmatpush1.msra.mxu0 %v4070
        %4072 = vmatprep.subr.mxu0 0.0
        %v4073 = vand.u32 %v3173, 4294901760
        %v4074 = vsub.f32 %v3173, %v4073
        %4075 = vmatpush1.msra.mxu0 %v4074
        %4076 = vmatprep.subr.mxu0 0.0
        %v4077 = vand.u32 %v3172, 4294901760
        %v4078 = vsub.f32 %v3172, %v4077
        %4079 = vmatpush1.msra.mxu0 %v4078
        %4080 = vmatprep.subr.mxu0 0.0
        %v4081 = vand.u32 %v3171, 4294901760
        %v4082 = vsub.f32 %v3171, %v4081
        %4083 = vmatpush1.msra.mxu0 %v4082
        %4084 = vmatprep.subr.mxu0 0.0
        %v4085 = vand.u32 %v3170, 4294901760
        %v4086 = vsub.f32 %v3170, %v4085
        %4087 = vmatpush1.msra.mxu0 %v4086
        %4088 = vmatprep.subr.mxu0 0.0
        %v4089 = vand.u32 %v3169, 4294901760
        %v4090 = vsub.f32 %v3169, %v4089
        %4091 = vmatpush1.msra.mxu0 %v4090
        %4092 = vmatprep.subr.mxu0 0.0
        %v4093 = vand.u32 %v3168, 4294901760
        %v4094 = vsub.f32 %v3168, %v4093
        %4095 = vmatpush1.msra.mxu0 %v4094
        %4096 = vmatprep.subr.mxu0 0.0
        %v4097 = vand.u32 %v3167, 4294901760
        %v4098 = vsub.f32 %v3167, %v4097
        %4099 = vmatpush1.msra.mxu0 %v4098
        %4100 = vmatprep.subr.mxu0 0.0
        %v4101 = vand.u32 %v3166, 4294901760
        %v4102 = vsub.f32 %v3166, %v4101
        %4103 = vmatpush1.msra.mxu0 %v4102
        %4104 = vmatprep.subr.mxu0 0.0
        %v4105 = vand.u32 %v3165, 4294901760
        %v4106 = vsub.f32 %v3165, %v4105
        %4107 = vmatpush1.msra.mxu0 %v4106
        %4108 = vmatprep.subr.mxu0 0.0
        %v4109 = vand.u32 %v3164, 4294901760
        %v4110 = vsub.f32 %v3164, %v4109
        %4111 = vmatpush1.msra.mxu0 %v4110
        %4112 = vmatprep.subr.mxu0 0.0
        %v4113 = vand.u32 %v3163, 4294901760
        %v4114 = vsub.f32 %v3163, %v4113
        %4115 = vmatpush1.msra.mxu0 %v4114
        %4116 = vmatprep.subr.mxu0 0.0
        %v4117 = vand.u32 %v3162, 4294901760
        %v4118 = vsub.f32 %v3162, %v4117
        %4119 = vmatpush1.msra.mxu0 %v4118
        %4120 = vmatprep.subr.mxu0 0.0
        %v4121 = vand.u32 %v3161, 4294901760
        %v4122 = vsub.f32 %v3161, %v4121
        %4123 = vmatpush1.msra.mxu0 %v4122
        %4124 = vmatprep.subr.mxu0 0.0
        %v4125 = vand.u32 %v3160, 4294901760
        %v4126 = vsub.f32 %v3160, %v4125
        %4127 = vmatpush1.msra.mxu0 %v4126
        %4128 = vmatprep.subr.mxu0 0.0
        %v4129 = vand.u32 %v3159, 4294901760
        %v4130 = vsub.f32 %v3159, %v4129
        %4131 = vmatpush1.msra.mxu0 %v4130
        %4132 = vmatprep.subr.mxu0 0.0
        %4133 = vmatpush2.msra.mxu0 0.0
        %4134 = vmatprep.subr.mxu0 0.0
        %4135 = vmatpush2.msra.mxu0 0.0
        %4136 = vmatprep.subr.mxu0 0.0
        %4137 = vmatpush2.msra.mxu0 0.0
        %4138 = vmatprep.subr.mxu0 0.0
        %4139 = vmatpush2.msra.mxu0 0.0
        %4140 = vmatprep.subr.mxu0 0.0
        %4141 = vmatpush2.msra.mxu0 0.0
        %4142 = vmatprep.subr.mxu0 0.0
        %4143 = vmatpush2.msra.mxu0 0.0
        %4144 = vmatprep.subr.mxu0 0.0
        %4145 = vmatpush2.msra.mxu0 0.0
        %4146 = vmatprep.subr.mxu0 0.0
        %4147 = vmatpush2.msra.mxu0 0.0
        %4148 = vmatprep.subr.mxu0 0.0
        %4149 = vmatpush2.msra.mxu0 0.0
        %4150 = vmatprep.subr.mxu0 0.0
        %4151 = vmatpush2.msra.mxu0 0.0
        %4152 = vmatprep.subr.mxu0 0.0
        %4153 = vmatpush2.msra.mxu0 0.0
        %4154 = vmatprep.subr.mxu0 0.0
        %4155 = vmatpush2.msra.mxu0 0.0
        %4156 = vmatprep.subr.mxu0 0.0
        %4157 = vmatpush2.msra.mxu0 0.0
        %4158 = vmatprep.subr.mxu0 0.0
        %4159 = vmatpush2.msra.mxu0 0.0
        %4160 = vmatprep.subr.mxu0 0.0
        %4161 = vmatpush2.msra.mxu0 0.0
        %4162 = vmatprep.subr.mxu0 0.0
        %4163 = vmatpush2.msra.mxu0 0.0
        %4164 = vmatprep.mubr.f32.mxu0 0.0
        %v4165 = vand.u32 %v369, 4294901760
        %v4166 = vsub.f32 %v369, %v4165
        %4167 = vmatmul.mubr.f32.gmra.mxu0 %v4166
        %v4168 = vpop.f32.mrf.mxu0
        %v4169 = vadd.f32 %v4065, %v4168
        %v4170 = vpop.f32.mrf.mxu0
        %4171 = vdwg.mxu0
        %4172 = vmatprep.subr.mxu0 0.0
        %v4173 = vand.u32 %v3174, 4294901760
        %4174 = vmatpush1.msra.mxu0 %v4173
        %4175 = vmatprep.subr.mxu0 0.0
        %v4176 = vand.u32 %v3173, 4294901760
        %4177 = vmatpush1.msra.mxu0 %v4176
        %4178 = vmatprep.subr.mxu0 0.0
        %v4179 = vand.u32 %v3172, 4294901760
        %4180 = vmatpush1.msra.mxu0 %v4179
        %4181 = vmatprep.subr.mxu0 0.0
        %v4182 = vand.u32 %v3171, 4294901760
        %4183 = vmatpush1.msra.mxu0 %v4182
        %4184 = vmatprep.subr.mxu0 0.0
        %v4185 = vand.u32 %v3170, 4294901760
        %4186 = vmatpush1.msra.mxu0 %v4185
        %4187 = vmatprep.subr.mxu0 0.0
        %v4188 = vand.u32 %v3169, 4294901760
        %4189 = vmatpush1.msra.mxu0 %v4188
        %4190 = vmatprep.subr.mxu0 0.0
        %v4191 = vand.u32 %v3168, 4294901760
        %4192 = vmatpush1.msra.mxu0 %v4191
        %4193 = vmatprep.subr.mxu0 0.0
        %v4194 = vand.u32 %v3167, 4294901760
        %4195 = vmatpush1.msra.mxu0 %v4194
        %4196 = vmatprep.subr.mxu0 0.0
        %v4197 = vand.u32 %v3166, 4294901760
        %4198 = vmatpush1.msra.mxu0 %v4197
        %4199 = vmatprep.subr.mxu0 0.0
        %v4200 = vand.u32 %v3165, 4294901760
        %4201 = vmatpush1.msra.mxu0 %v4200
        %4202 = vmatprep.subr.mxu0 0.0
        %v4203 = vand.u32 %v3164, 4294901760
        %4204 = vmatpush1.msra.mxu0 %v4203
        %4205 = vmatprep.subr.mxu0 0.0
        %v4206 = vand.u32 %v3163, 4294901760
        %4207 = vmatpush1.msra.mxu0 %v4206
        %4208 = vmatprep.subr.mxu0 0.0
        %v4209 = vand.u32 %v3162, 4294901760
        %4210 = vmatpush1.msra.mxu0 %v4209
        %4211 = vmatprep.subr.mxu0 0.0
        %v4212 = vand.u32 %v3161, 4294901760
        %4213 = vmatpush1.msra.mxu0 %v4212
        %4214 = vmatprep.subr.mxu0 0.0
        %v4215 = vand.u32 %v3160, 4294901760
        %4216 = vmatpush1.msra.mxu0 %v4215
        %4217 = vmatprep.subr.mxu0 0.0
        %v4218 = vand.u32 %v3159, 4294901760
        %4219 = vmatpush1.msra.mxu0 %v4218
        %4220 = vmatprep.subr.mxu0 0.0
        %4221 = vmatpush2.msra.mxu0 0.0
        %4222 = vmatprep.subr.mxu0 0.0
        %4223 = vmatpush2.msra.mxu0 0.0
        %4224 = vmatprep.subr.mxu0 0.0
        %4225 = vmatpush2.msra.mxu0 0.0
        %4226 = vmatprep.subr.mxu0 0.0
        %4227 = vmatpush2.msra.mxu0 0.0
        %4228 = vmatprep.subr.mxu0 0.0
        %4229 = vmatpush2.msra.mxu0 0.0
        %4230 = vmatprep.subr.mxu0 0.0
        %4231 = vmatpush2.msra.mxu0 0.0
        %4232 = vmatprep.subr.mxu0 0.0
        %4233 = vmatpush2.msra.mxu0 0.0
        %4234 = vmatprep.subr.mxu0 0.0
        %4235 = vmatpush2.msra.mxu0 0.0
        %4236 = vmatprep.subr.mxu0 0.0
        %4237 = vmatpush2.msra.mxu0 0.0
        %4238 = vmatprep.subr.mxu0 0.0
        %4239 = vmatpush2.msra.mxu0 0.0
        %4240 = vmatprep.subr.mxu0 0.0
        %4241 = vmatpush2.msra.mxu0 0.0
        %4242 = vmatprep.subr.mxu0 0.0
        %4243 = vmatpush2.msra.mxu0 0.0
        %4244 = vmatprep.subr.mxu0 0.0
        %4245 = vmatpush2.msra.mxu0 0.0
        %4246 = vmatprep.subr.mxu0 0.0
        %4247 = vmatpush2.msra.mxu0 0.0
        %4248 = vmatprep.subr.mxu0 0.0
        %4249 = vmatpush2.msra.mxu0 0.0
        %4250 = vmatprep.subr.mxu0 0.0
        %4251 = vmatpush2.msra.mxu0 0.0
        %4252 = vmatprep.mubr.f32.mxu0 0.0
        %v4253 = vand.u32 %v369, 4294901760
        %v4254 = vsub.f32 %v369, %v4253
        %v4255 = vand.u32 %v4254, 4294901760
        %4256 = vmatmul.mubr.f32.gmra.mxu0 %v4255
        %v4257 = vpop.f32.mrf.mxu0
        %v4258 = vadd.f32 %v4169, %v4257
        %v4259 = vpop.f32.mrf.mxu0
        %4260 = vdwg.mxu0
        %4261 = vmatprep.subr.mxu0 0.0
        %v4262 = vand.u32 %v3174, 4294901760
        %v4263 = vsub.f32 %v3174, %v4262
        %v4264 = vand.u32 %v4263, 4294901760
        %4265 = vmatpush1.msra.mxu0 %v4264
        %4266 = vmatprep.subr.mxu0 0.0
        %v4267 = vand.u32 %v3173, 4294901760
        %v4268 = vsub.f32 %v3173, %v4267
        %v4269 = vand.u32 %v4268, 4294901760
        %4270 = vmatpush1.msra.mxu0 %v4269
        %4271 = vmatprep.subr.mxu0 0.0
        %v4272 = vand.u32 %v3172, 4294901760
        %v4273 = vsub.f32 %v3172, %v4272
        %v4274 = vand.u32 %v4273, 4294901760
        %4275 = vmatpush1.msra.mxu0 %v4274
        %4276 = vmatprep.subr.mxu0 0.0
        %v4277 = vand.u32 %v3171, 4294901760
        %v4278 = vsub.f32 %v3171, %v4277
        %v4279 = vand.u32 %v4278, 4294901760
        %4280 = vmatpush1.msra.mxu0 %v4279
        %4281 = vmatprep.subr.mxu0 0.0
        %v4282 = vand.u32 %v3170, 4294901760
        %v4283 = vsub.f32 %v3170, %v4282
        %v4284 = vand.u32 %v4283, 4294901760
        %4285 = vmatpush1.msra.mxu0 %v4284
        %4286 = vmatprep.subr.mxu0 0.0
        %v4287 = vand.u32 %v3169, 4294901760
        %v4288 = vsub.f32 %v3169, %v4287
        %v4289 = vand.u32 %v4288, 4294901760
        %4290 = vmatpush1.msra.mxu0 %v4289
        %4291 = vmatprep.subr.mxu0 0.0
        %v4292 = vand.u32 %v3168, 4294901760
        %v4293 = vsub.f32 %v3168, %v4292
        %v4294 = vand.u32 %v4293, 4294901760
        %4295 = vmatpush1.msra.mxu0 %v4294
        %4296 = vmatprep.subr.mxu0 0.0
        %v4297 = vand.u32 %v3167, 4294901760
        %v4298 = vsub.f32 %v3167, %v4297
        %v4299 = vand.u32 %v4298, 4294901760
        %4300 = vmatpush1.msra.mxu0 %v4299
        %4301 = vmatprep.subr.mxu0 0.0
        %v4302 = vand.u32 %v3166, 4294901760
        %v4303 = vsub.f32 %v3166, %v4302
        %v4304 = vand.u32 %v4303, 4294901760
        %4305 = vmatpush1.msra.mxu0 %v4304
        %4306 = vmatprep.subr.mxu0 0.0
        %v4307 = vand.u32 %v3165, 4294901760
        %v4308 = vsub.f32 %v3165, %v4307
        %v4309 = vand.u32 %v4308, 4294901760
        %4310 = vmatpush1.msra.mxu0 %v4309
        %4311 = vmatprep.subr.mxu0 0.0
        %v4312 = vand.u32 %v3164, 4294901760
        %v4313 = vsub.f32 %v3164, %v4312
        %v4314 = vand.u32 %v4313, 4294901760
        %4315 = vmatpush1.msra.mxu0 %v4314
        %4316 = vmatprep.subr.mxu0 0.0
        %v4317 = vand.u32 %v3163, 4294901760
        %v4318 = vsub.f32 %v3163, %v4317
        %v4319 = vand.u32 %v4318, 4294901760
        %4320 = vmatpush1.msra.mxu0 %v4319
        %4321 = vmatprep.subr.mxu0 0.0
        %v4322 = vand.u32 %v3162, 4294901760
        %v4323 = vsub.f32 %v3162, %v4322
        %v4324 = vand.u32 %v4323, 4294901760
        %4325 = vmatpush1.msra.mxu0 %v4324
        %4326 = vmatprep.subr.mxu0 0.0
        %v4327 = vand.u32 %v3161, 4294901760
        %v4328 = vsub.f32 %v3161, %v4327
        %v4329 = vand.u32 %v4328, 4294901760
        %4330 = vmatpush1.msra.mxu0 %v4329
        %4331 = vmatprep.subr.mxu0 0.0
        %v4332 = vand.u32 %v3160, 4294901760
        %v4333 = vsub.f32 %v3160, %v4332
        %v4334 = vand.u32 %v4333, 4294901760
        %4335 = vmatpush1.msra.mxu0 %v4334
        %4336 = vmatprep.subr.mxu0 0.0
        %v4337 = vand.u32 %v3159, 4294901760
        %v4338 = vsub.f32 %v3159, %v4337
        %v4339 = vand.u32 %v4338, 4294901760
        %4340 = vmatpush1.msra.mxu0 %v4339
        %4341 = vmatprep.subr.mxu0 0.0
        %4342 = vmatpush2.msra.mxu0 0.0
        %4343 = vmatprep.subr.mxu0 0.0
        %4344 = vmatpush2.msra.mxu0 0.0
        %4345 = vmatprep.subr.mxu0 0.0
        %4346 = vmatpush2.msra.mxu0 0.0
        %4347 = vmatprep.subr.mxu0 0.0
        %4348 = vmatpush2.msra.mxu0 0.0
        %4349 = vmatprep.subr.mxu0 0.0
        %4350 = vmatpush2.msra.mxu0 0.0
        %4351 = vmatprep.subr.mxu0 0.0
        %4352 = vmatpush2.msra.mxu0 0.0
        %4353 = vmatprep.subr.mxu0 0.0
        %4354 = vmatpush2.msra.mxu0 0.0
        %4355 = vmatprep.subr.mxu0 0.0
        %4356 = vmatpush2.msra.mxu0 0.0
        %4357 = vmatprep.subr.mxu0 0.0
        %4358 = vmatpush2.msra.mxu0 0.0
        %4359 = vmatprep.subr.mxu0 0.0
        %4360 = vmatpush2.msra.mxu0 0.0
        %4361 = vmatprep.subr.mxu0 0.0
        %4362 = vmatpush2.msra.mxu0 0.0
        %4363 = vmatprep.subr.mxu0 0.0
        %4364 = vmatpush2.msra.mxu0 0.0
        %4365 = vmatprep.subr.mxu0 0.0
        %4366 = vmatpush2.msra.mxu0 0.0
        %4367 = vmatprep.subr.mxu0 0.0
        %4368 = vmatpush2.msra.mxu0 0.0
        %4369 = vmatprep.subr.mxu0 0.0
        %4370 = vmatpush2.msra.mxu0 0.0
        %4371 = vmatprep.subr.mxu0 0.0
        %4372 = vmatpush2.msra.mxu0 0.0
        %4373 = vmatprep.mubr.f32.mxu0 0.0
        %v4374 = vand.u32 %v369, 4294901760
        %4375 = vmatmul.mubr.f32.gmra.mxu0 %v4374
        %v4376 = vpop.f32.mrf.mxu0
        %v4377 = vadd.f32 %v4258, %v4376
        %v4378 = vpop.f32.mrf.mxu0
        %4379 = vdwg.mxu0
        %4380 = vmatprep.subr.mxu0 0.0
        %v4381 = vand.u32 %v3174, 4294901760
        %4382 = vmatpush1.msra.mxu0 %v4381
        %4383 = vmatprep.subr.mxu0 0.0
        %v4384 = vand.u32 %v3173, 4294901760
        %4385 = vmatpush1.msra.mxu0 %v4384
        %4386 = vmatprep.subr.mxu0 0.0
        %v4387 = vand.u32 %v3172, 4294901760
        %4388 = vmatpush1.msra.mxu0 %v4387
        %4389 = vmatprep.subr.mxu0 0.0
        %v4390 = vand.u32 %v3171, 4294901760
        %4391 = vmatpush1.msra.mxu0 %v4390
        %4392 = vmatprep.subr.mxu0 0.0
        %v4393 = vand.u32 %v3170, 4294901760
        %4394 = vmatpush1.msra.mxu0 %v4393
        %4395 = vmatprep.subr.mxu0 0.0
        %v4396 = vand.u32 %v3169, 4294901760
        %4397 = vmatpush1.msra.mxu0 %v4396
        %4398 = vmatprep.subr.mxu0 0.0
        %v4399 = vand.u32 %v3168, 4294901760
        %4400 = vmatpush1.msra.mxu0 %v4399
        %4401 = vmatprep.subr.mxu0 0.0
        %v4402 = vand.u32 %v3167, 4294901760
        %4403 = vmatpush1.msra.mxu0 %v4402
        %4404 = vmatprep.subr.mxu0 0.0
        %v4405 = vand.u32 %v3166, 4294901760
        %4406 = vmatpush1.msra.mxu0 %v4405
        %4407 = vmatprep.subr.mxu0 0.0
        %v4408 = vand.u32 %v3165, 4294901760
        %4409 = vmatpush1.msra.mxu0 %v4408
        %4410 = vmatprep.subr.mxu0 0.0
        %v4411 = vand.u32 %v3164, 4294901760
        %4412 = vmatpush1.msra.mxu0 %v4411
        %4413 = vmatprep.subr.mxu0 0.0
        %v4414 = vand.u32 %v3163, 4294901760
        %4415 = vmatpush1.msra.mxu0 %v4414
        %4416 = vmatprep.subr.mxu0 0.0
        %v4417 = vand.u32 %v3162, 4294901760
        %4418 = vmatpush1.msra.mxu0 %v4417
        %4419 = vmatprep.subr.mxu0 0.0
        %v4420 = vand.u32 %v3161, 4294901760
        %4421 = vmatpush1.msra.mxu0 %v4420
        %4422 = vmatprep.subr.mxu0 0.0
        %v4423 = vand.u32 %v3160, 4294901760
        %4424 = vmatpush1.msra.mxu0 %v4423
        %4425 = vmatprep.subr.mxu0 0.0
        %v4426 = vand.u32 %v3159, 4294901760
        %4427 = vmatpush1.msra.mxu0 %v4426
        %4428 = vmatprep.subr.mxu0 0.0
        %4429 = vmatpush2.msra.mxu0 0.0
        %4430 = vmatprep.subr.mxu0 0.0
        %4431 = vmatpush2.msra.mxu0 0.0
        %4432 = vmatprep.subr.mxu0 0.0
        %4433 = vmatpush2.msra.mxu0 0.0
        %4434 = vmatprep.subr.mxu0 0.0
        %4435 = vmatpush2.msra.mxu0 0.0
        %4436 = vmatprep.subr.mxu0 0.0
        %4437 = vmatpush2.msra.mxu0 0.0
        %4438 = vmatprep.subr.mxu0 0.0
        %4439 = vmatpush2.msra.mxu0 0.0
        %4440 = vmatprep.subr.mxu0 0.0
        %4441 = vmatpush2.msra.mxu0 0.0
        %4442 = vmatprep.subr.mxu0 0.0
        %4443 = vmatpush2.msra.mxu0 0.0
        %4444 = vmatprep.subr.mxu0 0.0
        %4445 = vmatpush2.msra.mxu0 0.0
        %4446 = vmatprep.subr.mxu0 0.0
        %4447 = vmatpush2.msra.mxu0 0.0
        %4448 = vmatprep.subr.mxu0 0.0
        %4449 = vmatpush2.msra.mxu0 0.0
        %4450 = vmatprep.subr.mxu0 0.0
        %4451 = vmatpush2.msra.mxu0 0.0
        %4452 = vmatprep.subr.mxu0 0.0
        %4453 = vmatpush2.msra.mxu0 0.0
        %4454 = vmatprep.subr.mxu0 0.0
        %4455 = vmatpush2.msra.mxu0 0.0
        %4456 = vmatprep.subr.mxu0 0.0
        %4457 = vmatpush2.msra.mxu0 0.0
        %4458 = vmatprep.subr.mxu0 0.0
        %4459 = vmatpush2.msra.mxu0 0.0
        %4460 = vmatprep.mubr.f32.mxu0 0.0
        %v4461 = vand.u32 %v369, 4294901760
        %4462 = vmatmul.mubr.f32.gmra.mxu0 %v4461
        %v4463 = vpop.f32.mrf.mxu0
        %v4464 = vadd.f32 %v4377, %v4463
        %v4465 = vpop.f32.mrf.mxu0
        %4466 = vdwg.mxu0
        %v4467 = vadd.f32 %v4464, 3.0
        %v4468 = vmax.f32 %v4467, 0.0
        %v4469 = vmin.f32 %v4468, 6.0
        %v4470 = vmul.f32 %v4469, 0.16666667
        %v4471 = vmul.f32 %v4464, %v4470
        %4473 = vset.pattern.permute.xlu0 0
        %4474 = vperm.xlu0 %4473, %v387
        %v4475 = vpop.permute.xlu0 %4474
        %4478 = vset.pattern.permute.xlu0 0
        %4479 = vperm.xlu0 %4478, %v388
        %v4480 = vpop.permute.xlu0 %4479
        %4483 = vset.pattern.permute.xlu0 0
        %4484 = vperm.xlu0 %4483, %v389
        %v4485 = vpop.permute.xlu0 %4484
        %4488 = vset.pattern.permute.xlu0 0
        %4489 = vperm.xlu0 %4488, %v390
        %v4490 = vpop.permute.xlu0 %4489
        %4493 = vset.pattern.permute.xlu0 0
        %4494 = vperm.xlu0 %4493, %v391
        %v4495 = vpop.permute.xlu0 %4494
        %4498 = vset.pattern.permute.xlu0 0
        %4499 = vperm.xlu0 %4498, %v392
        %v4500 = vpop.permute.xlu0 %4499
        %4503 = vset.pattern.permute.xlu0 0
        %4504 = vperm.xlu0 %4503, %v393
        %v4505 = vpop.permute.xlu0 %4504
        %4508 = vset.pattern.permute.xlu0 0
        %4509 = vperm.xlu0 %4508, %v394
        %v4510 = vpop.permute.xlu0 %4509
        %4513 = vset.pattern.permute.xlu0 0
        %4514 = vperm.xlu0 %4513, %v395
        %v4515 = vpop.permute.xlu0 %4514
        %4518 = vset.pattern.permute.xlu0 0
        %4519 = vperm.xlu0 %4518, %v396
        %v4520 = vpop.permute.xlu0 %4519
        %4523 = vset.pattern.permute.xlu0 0
        %4524 = vperm.xlu0 %4523, %v397
        %v4525 = vpop.permute.xlu0 %4524
        %4528 = vset.pattern.permute.xlu0 0
        %4529 = vperm.xlu0 %4528, %v398
        %v4530 = vpop.permute.xlu0 %4529
        %4533 = vset.pattern.permute.xlu0 0
        %4534 = vperm.xlu0 %4533, %v399
        %v4535 = vpop.permute.xlu0 %4534
        %4538 = vset.pattern.permute.xlu0 0
        %4539 = vperm.xlu0 %4538, %v400
        %v4540 = vpop.permute.xlu0 %4539
        %4543 = vset.pattern.permute.xlu0 0
        %4544 = vperm.xlu0 %4543, %v401
        %v4545 = vpop.permute.xlu0 %4544
        %4548 = vset.pattern.permute.xlu0 0
        %4549 = vperm.xlu0 %4548, %v402
        %v4550 = vpop.permute.xlu0 %4549
        %vm4552 = vcmask 64512
        %v4554 = vsel %vm4552, %v371, 0
        %v4557 = vsel %vm4552, %v372, 0
        %v4560 = vsel %vm4552, %v373, 0
        %v4563 = vsel %vm4552, %v374, 0
        %v4566 = vsel %vm4552, %v375, 0
        %v4569 = vsel %vm4552, %v376, 0
        %v4572 = vsel %vm4552, %v377, 0
        %v4575 = vsel %vm4552, %v378, 0
        %v4578 = vsel %vm4552, %v379, 0
        %v4581 = vsel %vm4552, %v380, 0
        %v4584 = vsel %vm4552, %v381, 0
        %v4587 = vsel %vm4552, %v382, 0
        %v4590 = vsel %vm4552, %v383, 0
        %v4593 = vsel %vm4552, %v384, 0
        %v4596 = vsel %vm4552, %v385, 0
        %v4599 = vsel %vm4552, %v386, 0
        %4601 = vmatprep.subr.mxu0 0.0
        %4602 = vmatpush1.msra.mxu0 0.0
        %4603 = vmatprep.subr.mxu0 0.0
        %4604 = vmatpush1.msra.mxu0 0.0
        %4605 = vmatprep.subr.mxu0 0.0
        %4606 = vmatpush1.msra.mxu0 0.0
        %4607 = vmatprep.subr.mxu0 0.0
        %4608 = vmatpush1.msra.mxu0 0.0
        %4609 = vmatprep.subr.mxu0 0.0
        %4610 = vmatpush1.msra.mxu0 0.0
        %4611 = vmatprep.subr.mxu0 0.0
        %4612 = vmatpush1.msra.mxu0 0.0
        %4613 = vmatprep.subr.mxu0 0.0
        %4614 = vmatpush1.msra.mxu0 0.0
        %4615 = vmatprep.subr.mxu0 0.0
        %4616 = vmatpush1.msra.mxu0 0.0
        %4617 = vmatprep.subr.mxu0 0.0
        %4618 = vmatpush1.msra.mxu0 0.0
        %4619 = vmatprep.subr.mxu0 0.0
        %4620 = vmatpush1.msra.mxu0 0.0
        %4621 = vmatprep.subr.mxu0 0.0
        %4622 = vmatpush1.msra.mxu0 0.0
        %4623 = vmatprep.subr.mxu0 0.0
        %4624 = vmatpush1.msra.mxu0 0.0
        %4625 = vmatprep.subr.mxu0 0.0
        %4626 = vmatpush1.msra.mxu0 0.0
        %4627 = vmatprep.subr.mxu0 0.0
        %4628 = vmatpush1.msra.mxu0 0.0
        %4629 = vmatprep.subr.mxu0 0.0
        %4630 = vmatpush1.msra.mxu0 0.0
        %4631 = vmatprep.subr.mxu0 0.0
        %v4632 = vand.u32 %v3825, 4294901760
        %4633 = vmatpush1.msra.mxu0 %v4632
        %4634 = vmatprep.subr.mxu0 0.0
        %4635 = vmatpush2.msra.mxu0 0.0
        %4636 = vmatprep.subr.mxu0 0.0
        %4637 = vmatpush2.msra.mxu0 0.0
        %4638 = vmatprep.subr.mxu0 0.0
        %4639 = vmatpush2.msra.mxu0 0.0
        %4640 = vmatprep.subr.mxu0 0.0
        %4641 = vmatpush2.msra.mxu0 0.0
        %4642 = vmatprep.subr.mxu0 0.0
        %4643 = vmatpush2.msra.mxu0 0.0
        %4644 = vmatprep.subr.mxu0 0.0
        %4645 = vmatpush2.msra.mxu0 0.0
        %4646 = vmatprep.subr.mxu0 0.0
        %4647 = vmatpush2.msra.mxu0 0.0
        %4648 = vmatprep.subr.mxu0 0.0
        %4649 = vmatpush2.msra.mxu0 0.0
        %4650 = vmatprep.subr.mxu0 0.0
        %4651 = vmatpush2.msra.mxu0 0.0
        %4652 = vmatprep.subr.mxu0 0.0
        %4653 = vmatpush2.msra.mxu0 0.0
        %4654 = vmatprep.subr.mxu0 0.0
        %4655 = vmatpush2.msra.mxu0 0.0
        %4656 = vmatprep.subr.mxu0 0.0
        %4657 = vmatpush2.msra.mxu0 0.0
        %4658 = vmatprep.subr.mxu0 0.0
        %4659 = vmatpush2.msra.mxu0 0.0
        %4660 = vmatprep.subr.mxu0 0.0
        %4661 = vmatpush2.msra.mxu0 0.0
        %4662 = vmatprep.subr.mxu0 0.0
        %4663 = vmatpush2.msra.mxu0 0.0
        %4664 = vmatprep.subr.mxu0 0.0
        %4665 = vmatpush2.msra.mxu0 0.0
        %4666 = vmatprep.mubr.f32.mxu0 0.0
        %v4667 = vand.u32 %v4554, 4294901760
        %v4668 = vsub.f32 %v4554, %v4667
        %v4669 = vand.u32 %v4668, 4294901760
        %v4670 = vsub.f32 %v4668, %v4669
        %v4671 = vand.u32 %v4670, 4294901760
        %4672 = vmatmul.mubr.f32.gmra.mxu0 %v4671
        %v4673 = vpop.f32.mrf.mxu0
        %v4674 = vadd.f32 %v4475, %v4673
        %v4675 = vpop.f32.mrf.mxu0
        %4676 = vmatprep.mubr.f32.mxu0 0.0
        %v4677 = vand.u32 %v4557, 4294901760
        %v4678 = vsub.f32 %v4557, %v4677
        %v4679 = vand.u32 %v4678, 4294901760
        %v4680 = vsub.f32 %v4678, %v4679
        %v4681 = vand.u32 %v4680, 4294901760
        %4682 = vmatmul.mubr.f32.gmra.mxu0 %v4681
        %v4683 = vpop.f32.mrf.mxu0
        %v4684 = vadd.f32 %v4480, %v4683
        %v4685 = vpop.f32.mrf.mxu0
        %4686 = vmatprep.mubr.f32.mxu0 0.0
        %v4687 = vand.u32 %v4560, 4294901760
        %v4688 = vsub.f32 %v4560, %v4687
        %v4689 = vand.u32 %v4688, 4294901760
        %v4690 = vsub.f32 %v4688, %v4689
        %v4691 = vand.u32 %v4690, 4294901760
        %4692 = vmatmul.mubr.f32.gmra.mxu0 %v4691
        %v4693 = vpop.f32.mrf.mxu0
        %v4694 = vadd.f32 %v4485, %v4693
        %v4695 = vpop.f32.mrf.mxu0
        %4696 = vmatprep.mubr.f32.mxu0 0.0
        %v4697 = vand.u32 %v4563, 4294901760
        %v4698 = vsub.f32 %v4563, %v4697
        %v4699 = vand.u32 %v4698, 4294901760
        %v4700 = vsub.f32 %v4698, %v4699
        %v4701 = vand.u32 %v4700, 4294901760
        %4702 = vmatmul.mubr.f32.gmra.mxu0 %v4701
        %v4703 = vpop.f32.mrf.mxu0
        %v4704 = vadd.f32 %v4490, %v4703
        %v4705 = vpop.f32.mrf.mxu0
        %4706 = vmatprep.mubr.f32.mxu0 0.0
        %v4707 = vand.u32 %v4566, 4294901760
        %v4708 = vsub.f32 %v4566, %v4707
        %v4709 = vand.u32 %v4708, 4294901760
        %v4710 = vsub.f32 %v4708, %v4709
        %v4711 = vand.u32 %v4710, 4294901760
        %4712 = vmatmul.mubr.f32.gmra.mxu0 %v4711
        %v4713 = vpop.f32.mrf.mxu0
        %v4714 = vadd.f32 %v4495, %v4713
        %v4715 = vpop.f32.mrf.mxu0
        %4716 = vmatprep.mubr.f32.mxu0 0.0
        %v4717 = vand.u32 %v4569, 4294901760
        %v4718 = vsub.f32 %v4569, %v4717
        %v4719 = vand.u32 %v4718, 4294901760
        %v4720 = vsub.f32 %v4718, %v4719
        %v4721 = vand.u32 %v4720, 4294901760
        %4722 = vmatmul.mubr.f32.gmra.mxu0 %v4721
        %v4723 = vpop.f32.mrf.mxu0
        %v4724 = vadd.f32 %v4500, %v4723
        %v4725 = vpop.f32.mrf.mxu0
        %4726 = vmatprep.mubr.f32.mxu0 0.0
        %v4727 = vand.u32 %v4572, 4294901760
        %v4728 = vsub.f32 %v4572, %v4727
        %v4729 = vand.u32 %v4728, 4294901760
        %v4730 = vsub.f32 %v4728, %v4729
        %v4731 = vand.u32 %v4730, 4294901760
        %4732 = vmatmul.mubr.f32.gmra.mxu0 %v4731
        %v4733 = vpop.f32.mrf.mxu0
        %v4734 = vadd.f32 %v4505, %v4733
        %v4735 = vpop.f32.mrf.mxu0
        %4736 = vmatprep.mubr.f32.mxu0 0.0
        %v4737 = vand.u32 %v4575, 4294901760
        %v4738 = vsub.f32 %v4575, %v4737
        %v4739 = vand.u32 %v4738, 4294901760
        %v4740 = vsub.f32 %v4738, %v4739
        %v4741 = vand.u32 %v4740, 4294901760
        %4742 = vmatmul.mubr.f32.gmra.mxu0 %v4741
        %v4743 = vpop.f32.mrf.mxu0
        %v4744 = vadd.f32 %v4510, %v4743
        %v4745 = vpop.f32.mrf.mxu0
        %4746 = vmatprep.mubr.f32.mxu0 0.0
        %v4747 = vand.u32 %v4578, 4294901760
        %v4748 = vsub.f32 %v4578, %v4747
        %v4749 = vand.u32 %v4748, 4294901760
        %v4750 = vsub.f32 %v4748, %v4749
        %v4751 = vand.u32 %v4750, 4294901760
        %4752 = vmatmul.mubr.f32.gmra.mxu0 %v4751
        %v4753 = vpop.f32.mrf.mxu0
        %v4754 = vadd.f32 %v4515, %v4753
        %v4755 = vpop.f32.mrf.mxu0
        %4756 = vmatprep.mubr.f32.mxu0 0.0
        %v4757 = vand.u32 %v4581, 4294901760
        %v4758 = vsub.f32 %v4581, %v4757
        %v4759 = vand.u32 %v4758, 4294901760
        %v4760 = vsub.f32 %v4758, %v4759
        %v4761 = vand.u32 %v4760, 4294901760
        %4762 = vmatmul.mubr.f32.gmra.mxu0 %v4761
        %v4763 = vpop.f32.mrf.mxu0
        %v4764 = vadd.f32 %v4520, %v4763
        %v4765 = vpop.f32.mrf.mxu0
        %4766 = vmatprep.mubr.f32.mxu0 0.0
        %v4767 = vand.u32 %v4584, 4294901760
        %v4768 = vsub.f32 %v4584, %v4767
        %v4769 = vand.u32 %v4768, 4294901760
        %v4770 = vsub.f32 %v4768, %v4769
        %v4771 = vand.u32 %v4770, 4294901760
        %4772 = vmatmul.mubr.f32.gmra.mxu0 %v4771
        %v4773 = vpop.f32.mrf.mxu0
        %v4774 = vadd.f32 %v4525, %v4773
        %v4775 = vpop.f32.mrf.mxu0
        %4776 = vmatprep.mubr.f32.mxu0 0.0
        %v4777 = vand.u32 %v4587, 4294901760
        %v4778 = vsub.f32 %v4587, %v4777
        %v4779 = vand.u32 %v4778, 4294901760
        %v4780 = vsub.f32 %v4778, %v4779
        %v4781 = vand.u32 %v4780, 4294901760
        %4782 = vmatmul.mubr.f32.gmra.mxu0 %v4781
        %v4783 = vpop.f32.mrf.mxu0
        %v4784 = vadd.f32 %v4530, %v4783
        %v4785 = vpop.f32.mrf.mxu0
        %4786 = vmatprep.mubr.f32.mxu0 0.0
        %v4787 = vand.u32 %v4590, 4294901760
        %v4788 = vsub.f32 %v4590, %v4787
        %v4789 = vand.u32 %v4788, 4294901760
        %v4790 = vsub.f32 %v4788, %v4789
        %v4791 = vand.u32 %v4790, 4294901760
        %4792 = vmatmul.mubr.f32.gmra.mxu0 %v4791
        %v4793 = vpop.f32.mrf.mxu0
        %v4794 = vadd.f32 %v4535, %v4793
        %v4795 = vpop.f32.mrf.mxu0
        %4796 = vmatprep.mubr.f32.mxu0 0.0
        %v4797 = vand.u32 %v4593, 4294901760
        %v4798 = vsub.f32 %v4593, %v4797
        %v4799 = vand.u32 %v4798, 4294901760
        %v4800 = vsub.f32 %v4798, %v4799
        %v4801 = vand.u32 %v4800, 4294901760
        %4802 = vmatmul.mubr.f32.gmra.mxu0 %v4801
        %v4803 = vpop.f32.mrf.mxu0
        %v4804 = vadd.f32 %v4540, %v4803
        %v4805 = vpop.f32.mrf.mxu0
        %4806 = vmatprep.mubr.f32.mxu0 0.0
        %v4807 = vand.u32 %v4596, 4294901760
        %v4808 = vsub.f32 %v4596, %v4807
        %v4809 = vand.u32 %v4808, 4294901760
        %v4810 = vsub.f32 %v4808, %v4809
        %v4811 = vand.u32 %v4810, 4294901760
        %4812 = vmatmul.mubr.f32.gmra.mxu0 %v4811
        %v4813 = vpop.f32.mrf.mxu0
        %v4814 = vadd.f32 %v4545, %v4813
        %v4815 = vpop.f32.mrf.mxu0
        %4816 = vmatprep.mubr.f32.mxu0 0.0
        %v4817 = vand.u32 %v4599, 4294901760
        %v4818 = vsub.f32 %v4599, %v4817
        %v4819 = vand.u32 %v4818, 4294901760
        %v4820 = vsub.f32 %v4818, %v4819
        %v4821 = vand.u32 %v4820, 4294901760
        %4822 = vmatmul.mubr.f32.gmra.mxu0 %v4821
        %v4823 = vpop.f32.mrf.mxu0
        %v4824 = vadd.f32 %v4550, %v4823
        %v4825 = vpop.f32.mrf.mxu0
        %4826 = vdwg.mxu0
        %4827 = vmatprep.subr.mxu0 0.0
        %4828 = vmatpush1.msra.mxu0 0.0
        %4829 = vmatprep.subr.mxu0 0.0
        %4830 = vmatpush1.msra.mxu0 0.0
        %4831 = vmatprep.subr.mxu0 0.0
        %4832 = vmatpush1.msra.mxu0 0.0
        %4833 = vmatprep.subr.mxu0 0.0
        %4834 = vmatpush1.msra.mxu0 0.0
        %4835 = vmatprep.subr.mxu0 0.0
        %4836 = vmatpush1.msra.mxu0 0.0
        %4837 = vmatprep.subr.mxu0 0.0
        %4838 = vmatpush1.msra.mxu0 0.0
        %4839 = vmatprep.subr.mxu0 0.0
        %4840 = vmatpush1.msra.mxu0 0.0
        %4841 = vmatprep.subr.mxu0 0.0
        %4842 = vmatpush1.msra.mxu0 0.0
        %4843 = vmatprep.subr.mxu0 0.0
        %4844 = vmatpush1.msra.mxu0 0.0
        %4845 = vmatprep.subr.mxu0 0.0
        %4846 = vmatpush1.msra.mxu0 0.0
        %4847 = vmatprep.subr.mxu0 0.0
        %4848 = vmatpush1.msra.mxu0 0.0
        %4849 = vmatprep.subr.mxu0 0.0
        %4850 = vmatpush1.msra.mxu0 0.0
        %4851 = vmatprep.subr.mxu0 0.0
        %4852 = vmatpush1.msra.mxu0 0.0
        %4853 = vmatprep.subr.mxu0 0.0
        %4854 = vmatpush1.msra.mxu0 0.0
        %4855 = vmatprep.subr.mxu0 0.0
        %4856 = vmatpush1.msra.mxu0 0.0
        %4857 = vmatprep.subr.mxu0 0.0
        %v4858 = vand.u32 %v3825, 4294901760
        %v4859 = vsub.f32 %v3825, %v4858
        %v4860 = vand.u32 %v4859, 4294901760
        %v4861 = vsub.f32 %v4859, %v4860
        %v4862 = vand.u32 %v4861, 4294901760
        %4863 = vmatpush1.msra.mxu0 %v4862
        %4864 = vmatprep.subr.mxu0 0.0
        %4865 = vmatpush2.msra.mxu0 0.0
        %4866 = vmatprep.subr.mxu0 0.0
        %4867 = vmatpush2.msra.mxu0 0.0
        %4868 = vmatprep.subr.mxu0 0.0
        %4869 = vmatpush2.msra.mxu0 0.0
        %4870 = vmatprep.subr.mxu0 0.0
        %4871 = vmatpush2.msra.mxu0 0.0
        %4872 = vmatprep.subr.mxu0 0.0
        %4873 = vmatpush2.msra.mxu0 0.0
        %4874 = vmatprep.subr.mxu0 0.0
        %4875 = vmatpush2.msra.mxu0 0.0
        %4876 = vmatprep.subr.mxu0 0.0
        %4877 = vmatpush2.msra.mxu0 0.0
        %4878 = vmatprep.subr.mxu0 0.0
        %4879 = vmatpush2.msra.mxu0 0.0
        %4880 = vmatprep.subr.mxu0 0.0
        %4881 = vmatpush2.msra.mxu0 0.0
        %4882 = vmatprep.subr.mxu0 0.0
        %4883 = vmatpush2.msra.mxu0 0.0
        %4884 = vmatprep.subr.mxu0 0.0
        %4885 = vmatpush2.msra.mxu0 0.0
        %4886 = vmatprep.subr.mxu0 0.0
        %4887 = vmatpush2.msra.mxu0 0.0
        %4888 = vmatprep.subr.mxu0 0.0
        %4889 = vmatpush2.msra.mxu0 0.0
        %4890 = vmatprep.subr.mxu0 0.0
        %4891 = vmatpush2.msra.mxu0 0.0
        %4892 = vmatprep.subr.mxu0 0.0
        %4893 = vmatpush2.msra.mxu0 0.0
        %4894 = vmatprep.subr.mxu0 0.0
        %4895 = vmatpush2.msra.mxu0 0.0
        %4896 = vmatprep.mubr.f32.mxu0 0.0
        %v4897 = vand.u32 %v4554, 4294901760
        %4898 = vmatmul.mubr.f32.gmra.mxu0 %v4897
        %v4899 = vpop.f32.mrf.mxu0
        %v4900 = vadd.f32 %v4674, %v4899
        %v4901 = vpop.f32.mrf.mxu0
        %4902 = vmatprep.mubr.f32.mxu0 0.0
        %v4903 = vand.u32 %v4557, 4294901760
        %4904 = vmatmul.mubr.f32.gmra.mxu0 %v4903
        %v4905 = vpop.f32.mrf.mxu0
        %v4906 = vadd.f32 %v4684, %v4905
        %v4907 = vpop.f32.mrf.mxu0
        %4908 = vmatprep.mubr.f32.mxu0 0.0
        %v4909 = vand.u32 %v4560, 4294901760
        %4910 = vmatmul.mubr.f32.gmra.mxu0 %v4909
        %v4911 = vpop.f32.mrf.mxu0
        %v4912 = vadd.f32 %v4694, %v4911
        %v4913 = vpop.f32.mrf.mxu0
        %4914 = vmatprep.mubr.f32.mxu0 0.0
        %v4915 = vand.u32 %v4563, 4294901760
        %4916 = vmatmul.mubr.f32.gmra.mxu0 %v4915
        %v4917 = vpop.f32.mrf.mxu0
        %v4918 = vadd.f32 %v4704, %v4917
        %v4919 = vpop.f32.mrf.mxu0
        %4920 = vmatprep.mubr.f32.mxu0 0.0
        %v4921 = vand.u32 %v4566, 4294901760
        %4922 = vmatmul.mubr.f32.gmra.mxu0 %v4921
        %v4923 = vpop.f32.mrf.mxu0
        %v4924 = vadd.f32 %v4714, %v4923
        %v4925 = vpop.f32.mrf.mxu0
        %4926 = vmatprep.mubr.f32.mxu0 0.0
        %v4927 = vand.u32 %v4569, 4294901760
        %4928 = vmatmul.mubr.f32.gmra.mxu0 %v4927
        %v4929 = vpop.f32.mrf.mxu0
        %v4930 = vadd.f32 %v4724, %v4929
        %v4931 = vpop.f32.mrf.mxu0
        %4932 = vmatprep.mubr.f32.mxu0 0.0
        %v4933 = vand.u32 %v4572, 4294901760
        %4934 = vmatmul.mubr.f32.gmra.mxu0 %v4933
        %v4935 = vpop.f32.mrf.mxu0
        %v4936 = vadd.f32 %v4734, %v4935
        %v4937 = vpop.f32.mrf.mxu0
        %4938 = vmatprep.mubr.f32.mxu0 0.0
        %v4939 = vand.u32 %v4575, 4294901760
        %4940 = vmatmul.mubr.f32.gmra.mxu0 %v4939
        %v4941 = vpop.f32.mrf.mxu0
        %v4942 = vadd.f32 %v4744, %v4941
        %v4943 = vpop.f32.mrf.mxu0
        %4944 = vmatprep.mubr.f32.mxu0 0.0
        %v4945 = vand.u32 %v4578, 4294901760
        %4946 = vmatmul.mubr.f32.gmra.mxu0 %v4945
        %v4947 = vpop.f32.mrf.mxu0
        %v4948 = vadd.f32 %v4754, %v4947
        %v4949 = vpop.f32.mrf.mxu0
        %4950 = vmatprep.mubr.f32.mxu0 0.0
        %v4951 = vand.u32 %v4581, 4294901760
        %4952 = vmatmul.mubr.f32.gmra.mxu0 %v4951
        %v4953 = vpop.f32.mrf.mxu0
        %v4954 = vadd.f32 %v4764, %v4953
        %v4955 = vpop.f32.mrf.mxu0
        %4956 = vmatprep.mubr.f32.mxu0 0.0
        %v4957 = vand.u32 %v4584, 4294901760
        %4958 = vmatmul.mubr.f32.gmra.mxu0 %v4957
        %v4959 = vpop.f32.mrf.mxu0
        %v4960 = vadd.f32 %v4774, %v4959
        %v4961 = vpop.f32.mrf.mxu0
        %4962 = vmatprep.mubr.f32.mxu0 0.0
        %v4963 = vand.u32 %v4587, 4294901760
        %4964 = vmatmul.mubr.f32.gmra.mxu0 %v4963
        %v4965 = vpop.f32.mrf.mxu0
        %v4966 = vadd.f32 %v4784, %v4965
        %v4967 = vpop.f32.mrf.mxu0
        %4968 = vmatprep.mubr.f32.mxu0 0.0
        %v4969 = vand.u32 %v4590, 4294901760
        %4970 = vmatmul.mubr.f32.gmra.mxu0 %v4969
        %v4971 = vpop.f32.mrf.mxu0
        %v4972 = vadd.f32 %v4794, %v4971
        %v4973 = vpop.f32.mrf.mxu0
        %4974 = vmatprep.mubr.f32.mxu0 0.0
        %v4975 = vand.u32 %v4593, 4294901760
        %4976 = vmatmul.mubr.f32.gmra.mxu0 %v4975
        %v4977 = vpop.f32.mrf.mxu0
        %v4978 = vadd.f32 %v4804, %v4977
        %v4979 = vpop.f32.mrf.mxu0
        %4980 = vmatprep.mubr.f32.mxu0 0.0
        %v4981 = vand.u32 %v4596, 4294901760
        %4982 = vmatmul.mubr.f32.gmra.mxu0 %v4981
        %v4983 = vpop.f32.mrf.mxu0
        %v4984 = vadd.f32 %v4814, %v4983
        %v4985 = vpop.f32.mrf.mxu0
        %4986 = vmatprep.mubr.f32.mxu0 0.0
        %v4987 = vand.u32 %v4599, 4294901760
        %4988 = vmatmul.mubr.f32.gmra.mxu0 %v4987
        %v4989 = vpop.f32.mrf.mxu0
        %v4990 = vadd.f32 %v4824, %v4989
        %v4991 = vpop.f32.mrf.mxu0
        %4992 = vdwg.mxu0
        %4993 = vmatprep.subr.mxu0 0.0
        %4994 = vmatpush1.msra.mxu0 0.0
        %4995 = vmatprep.subr.mxu0 0.0
        %4996 = vmatpush1.msra.mxu0 0.0
        %4997 = vmatprep.subr.mxu0 0.0
        %4998 = vmatpush1.msra.mxu0 0.0
        %4999 = vmatprep.subr.mxu0 0.0
        %5000 = vmatpush1.msra.mxu0 0.0
        %5001 = vmatprep.subr.mxu0 0.0
        %5002 = vmatpush1.msra.mxu0 0.0
        %5003 = vmatprep.subr.mxu0 0.0
        %5004 = vmatpush1.msra.mxu0 0.0
        %5005 = vmatprep.subr.mxu0 0.0
        %5006 = vmatpush1.msra.mxu0 0.0
        %5007 = vmatprep.subr.mxu0 0.0
        %5008 = vmatpush1.msra.mxu0 0.0
        %5009 = vmatprep.subr.mxu0 0.0
        %5010 = vmatpush1.msra.mxu0 0.0
        %5011 = vmatprep.subr.mxu0 0.0
        %5012 = vmatpush1.msra.mxu0 0.0
        %5013 = vmatprep.subr.mxu0 0.0
        %5014 = vmatpush1.msra.mxu0 0.0
        %5015 = vmatprep.subr.mxu0 0.0
        %5016 = vmatpush1.msra.mxu0 0.0
        %5017 = vmatprep.subr.mxu0 0.0
        %5018 = vmatpush1.msra.mxu0 0.0
        %5019 = vmatprep.subr.mxu0 0.0
        %5020 = vmatpush1.msra.mxu0 0.0
        %5021 = vmatprep.subr.mxu0 0.0
        %5022 = vmatpush1.msra.mxu0 0.0
        %5023 = vmatprep.subr.mxu0 0.0
        %v5024 = vand.u32 %v3825, 4294901760
        %v5025 = vsub.f32 %v3825, %v5024
        %5026 = vmatpush1.msra.mxu0 %v5025
        %5027 = vmatprep.subr.mxu0 0.0
        %5028 = vmatpush2.msra.mxu0 0.0
        %5029 = vmatprep.subr.mxu0 0.0
        %5030 = vmatpush2.msra.mxu0 0.0
        %5031 = vmatprep.subr.mxu0 0.0
        %5032 = vmatpush2.msra.mxu0 0.0
        %5033 = vmatprep.subr.mxu0 0.0
        %5034 = vmatpush2.msra.mxu0 0.0
        %5035 = vmatprep.subr.mxu0 0.0
        %5036 = vmatpush2.msra.mxu0 0.0
        %5037 = vmatprep.subr.mxu0 0.0
        %5038 = vmatpush2.msra.mxu0 0.0
        %5039 = vmatprep.subr.mxu0 0.0
        %5040 = vmatpush2.msra.mxu0 0.0
        %5041 = vmatprep.subr.mxu0 0.0
        %5042 = vmatpush2.msra.mxu0 0.0
        %5043 = vmatprep.subr.mxu0 0.0
        %5044 = vmatpush2.msra.mxu0 0.0
        %5045 = vmatprep.subr.mxu0 0.0
        %5046 = vmatpush2.msra.mxu0 0.0
        %5047 = vmatprep.subr.mxu0 0.0
        %5048 = vmatpush2.msra.mxu0 0.0
        %5049 = vmatprep.subr.mxu0 0.0
        %5050 = vmatpush2.msra.mxu0 0.0
        %5051 = vmatprep.subr.mxu0 0.0
        %5052 = vmatpush2.msra.mxu0 0.0
        %5053 = vmatprep.subr.mxu0 0.0
        %5054 = vmatpush2.msra.mxu0 0.0
        %5055 = vmatprep.subr.mxu0 0.0
        %5056 = vmatpush2.msra.mxu0 0.0
        %5057 = vmatprep.subr.mxu0 0.0
        %5058 = vmatpush2.msra.mxu0 0.0
        %5059 = vmatprep.mubr.f32.mxu0 0.0
        %v5060 = vand.u32 %v4554, 4294901760
        %v5061 = vsub.f32 %v4554, %v5060
        %5062 = vmatmul.mubr.f32.gmra.mxu0 %v5061
        %v5063 = vpop.f32.mrf.mxu0
        %v5064 = vadd.f32 %v4900, %v5063
        %v5065 = vpop.f32.mrf.mxu0
        %5066 = vmatprep.mubr.f32.mxu0 0.0
        %v5067 = vand.u32 %v4557, 4294901760
        %v5068 = vsub.f32 %v4557, %v5067
        %5069 = vmatmul.mubr.f32.gmra.mxu0 %v5068
        %v5070 = vpop.f32.mrf.mxu0
        %v5071 = vadd.f32 %v4906, %v5070
        %v5072 = vpop.f32.mrf.mxu0
        %5073 = vmatprep.mubr.f32.mxu0 0.0
        %v5074 = vand.u32 %v4560, 4294901760
        %v5075 = vsub.f32 %v4560, %v5074
        %5076 = vmatmul.mubr.f32.gmra.mxu0 %v5075
        %v5077 = vpop.f32.mrf.mxu0
        %v5078 = vadd.f32 %v4912, %v5077
        %v5079 = vpop.f32.mrf.mxu0
        %5080 = vmatprep.mubr.f32.mxu0 0.0
        %v5081 = vand.u32 %v4563, 4294901760
        %v5082 = vsub.f32 %v4563, %v5081
        %5083 = vmatmul.mubr.f32.gmra.mxu0 %v5082
        %v5084 = vpop.f32.mrf.mxu0
        %v5085 = vadd.f32 %v4918, %v5084
        %v5086 = vpop.f32.mrf.mxu0
        %5087 = vmatprep.mubr.f32.mxu0 0.0
        %v5088 = vand.u32 %v4566, 4294901760
        %v5089 = vsub.f32 %v4566, %v5088
        %5090 = vmatmul.mubr.f32.gmra.mxu0 %v5089
        %v5091 = vpop.f32.mrf.mxu0
        %v5092 = vadd.f32 %v4924, %v5091
        %v5093 = vpop.f32.mrf.mxu0
        %5094 = vmatprep.mubr.f32.mxu0 0.0
        %v5095 = vand.u32 %v4569, 4294901760
        %v5096 = vsub.f32 %v4569, %v5095
        %5097 = vmatmul.mubr.f32.gmra.mxu0 %v5096
        %v5098 = vpop.f32.mrf.mxu0
        %v5099 = vadd.f32 %v4930, %v5098
        %v5100 = vpop.f32.mrf.mxu0
        %5101 = vmatprep.mubr.f32.mxu0 0.0
        %v5102 = vand.u32 %v4572, 4294901760
        %v5103 = vsub.f32 %v4572, %v5102
        %5104 = vmatmul.mubr.f32.gmra.mxu0 %v5103
        %v5105 = vpop.f32.mrf.mxu0
        %v5106 = vadd.f32 %v4936, %v5105
        %v5107 = vpop.f32.mrf.mxu0
        %5108 = vmatprep.mubr.f32.mxu0 0.0
        %v5109 = vand.u32 %v4575, 4294901760
        %v5110 = vsub.f32 %v4575, %v5109
        %5111 = vmatmul.mubr.f32.gmra.mxu0 %v5110
        %v5112 = vpop.f32.mrf.mxu0
        %v5113 = vadd.f32 %v4942, %v5112
        %v5114 = vpop.f32.mrf.mxu0
        %5115 = vmatprep.mubr.f32.mxu0 0.0
        %v5116 = vand.u32 %v4578, 4294901760
        %v5117 = vsub.f32 %v4578, %v5116
        %5118 = vmatmul.mubr.f32.gmra.mxu0 %v5117
        %v5119 = vpop.f32.mrf.mxu0
        %v5120 = vadd.f32 %v4948, %v5119
        %v5121 = vpop.f32.mrf.mxu0
        %5122 = vmatprep.mubr.f32.mxu0 0.0
        %v5123 = vand.u32 %v4581, 4294901760
        %v5124 = vsub.f32 %v4581, %v5123
        %5125 = vmatmul.mubr.f32.gmra.mxu0 %v5124
        %v5126 = vpop.f32.mrf.mxu0
        %v5127 = vadd.f32 %v4954, %v5126
        %v5128 = vpop.f32.mrf.mxu0
        %5129 = vmatprep.mubr.f32.mxu0 0.0
        %v5130 = vand.u32 %v4584, 4294901760
        %v5131 = vsub.f32 %v4584, %v5130
        %5132 = vmatmul.mubr.f32.gmra.mxu0 %v5131
        %v5133 = vpop.f32.mrf.mxu0
        %v5134 = vadd.f32 %v4960, %v5133
        %v5135 = vpop.f32.mrf.mxu0
        %5136 = vmatprep.mubr.f32.mxu0 0.0
        %v5137 = vand.u32 %v4587, 4294901760
        %v5138 = vsub.f32 %v4587, %v5137
        %5139 = vmatmul.mubr.f32.gmra.mxu0 %v5138
        %v5140 = vpop.f32.mrf.mxu0
        %v5141 = vadd.f32 %v4966, %v5140
        %v5142 = vpop.f32.mrf.mxu0
        %5143 = vmatprep.mubr.f32.mxu0 0.0
        %v5144 = vand.u32 %v4590, 4294901760
        %v5145 = vsub.f32 %v4590, %v5144
        %5146 = vmatmul.mubr.f32.gmra.mxu0 %v5145
        %v5147 = vpop.f32.mrf.mxu0
        %v5148 = vadd.f32 %v4972, %v5147
        %v5149 = vpop.f32.mrf.mxu0
        %5150 = vmatprep.mubr.f32.mxu0 0.0
        %v5151 = vand.u32 %v4593, 4294901760
        %v5152 = vsub.f32 %v4593, %v5151
        %5153 = vmatmul.mubr.f32.gmra.mxu0 %v5152
        %v5154 = vpop.f32.mrf.mxu0
        %v5155 = vadd.f32 %v4978, %v5154
        %v5156 = vpop.f32.mrf.mxu0
        %5157 = vmatprep.mubr.f32.mxu0 0.0
        %v5158 = vand.u32 %v4596, 4294901760
        %v5159 = vsub.f32 %v4596, %v5158
        %5160 = vmatmul.mubr.f32.gmra.mxu0 %v5159
        %v5161 = vpop.f32.mrf.mxu0
        %v5162 = vadd.f32 %v4984, %v5161
        %v5163 = vpop.f32.mrf.mxu0
        %5164 = vmatprep.mubr.f32.mxu0 0.0
        %v5165 = vand.u32 %v4599, 4294901760
        %v5166 = vsub.f32 %v4599, %v5165
        %5167 = vmatmul.mubr.f32.gmra.mxu0 %v5166
        %v5168 = vpop.f32.mrf.mxu0
        %v5169 = vadd.f32 %v4990, %v5168
        %v5170 = vpop.f32.mrf.mxu0
        %5171 = vdwg.mxu0
        %5172 = vmatprep.subr.mxu0 0.0
        %5173 = vmatpush1.msra.mxu0 0.0
        %5174 = vmatprep.subr.mxu0 0.0
        %5175 = vmatpush1.msra.mxu0 0.0
        %5176 = vmatprep.subr.mxu0 0.0
        %5177 = vmatpush1.msra.mxu0 0.0
        %5178 = vmatprep.subr.mxu0 0.0
        %5179 = vmatpush1.msra.mxu0 0.0
        %5180 = vmatprep.subr.mxu0 0.0
        %5181 = vmatpush1.msra.mxu0 0.0
        %5182 = vmatprep.subr.mxu0 0.0
        %5183 = vmatpush1.msra.mxu0 0.0
        %5184 = vmatprep.subr.mxu0 0.0
        %5185 = vmatpush1.msra.mxu0 0.0
        %5186 = vmatprep.subr.mxu0 0.0
        %5187 = vmatpush1.msra.mxu0 0.0
        %5188 = vmatprep.subr.mxu0 0.0
        %5189 = vmatpush1.msra.mxu0 0.0
        %5190 = vmatprep.subr.mxu0 0.0
        %5191 = vmatpush1.msra.mxu0 0.0
        %5192 = vmatprep.subr.mxu0 0.0
        %5193 = vmatpush1.msra.mxu0 0.0
        %5194 = vmatprep.subr.mxu0 0.0
        %5195 = vmatpush1.msra.mxu0 0.0
        %5196 = vmatprep.subr.mxu0 0.0
        %5197 = vmatpush1.msra.mxu0 0.0
        %5198 = vmatprep.subr.mxu0 0.0
        %5199 = vmatpush1.msra.mxu0 0.0
        %5200 = vmatprep.subr.mxu0 0.0
        %5201 = vmatpush1.msra.mxu0 0.0
        %5202 = vmatprep.subr.mxu0 0.0
        %v5203 = vand.u32 %v3825, 4294901760
        %5204 = vmatpush1.msra.mxu0 %v5203
        %5205 = vmatprep.subr.mxu0 0.0
        %5206 = vmatpush2.msra.mxu0 0.0
        %5207 = vmatprep.subr.mxu0 0.0
        %5208 = vmatpush2.msra.mxu0 0.0
        %5209 = vmatprep.subr.mxu0 0.0
        %5210 = vmatpush2.msra.mxu0 0.0
        %5211 = vmatprep.subr.mxu0 0.0
        %5212 = vmatpush2.msra.mxu0 0.0
        %5213 = vmatprep.subr.mxu0 0.0
        %5214 = vmatpush2.msra.mxu0 0.0
        %5215 = vmatprep.subr.mxu0 0.0
        %5216 = vmatpush2.msra.mxu0 0.0
        %5217 = vmatprep.subr.mxu0 0.0
        %5218 = vmatpush2.msra.mxu0 0.0
        %5219 = vmatprep.subr.mxu0 0.0
        %5220 = vmatpush2.msra.mxu0 0.0
        %5221 = vmatprep.subr.mxu0 0.0
        %5222 = vmatpush2.msra.mxu0 0.0
        %5223 = vmatprep.subr.mxu0 0.0
        %5224 = vmatpush2.msra.mxu0 0.0
        %5225 = vmatprep.subr.mxu0 0.0
        %5226 = vmatpush2.msra.mxu0 0.0
        %5227 = vmatprep.subr.mxu0 0.0
        %5228 = vmatpush2.msra.mxu0 0.0
        %5229 = vmatprep.subr.mxu0 0.0
        %5230 = vmatpush2.msra.mxu0 0.0
        %5231 = vmatprep.subr.mxu0 0.0
        %5232 = vmatpush2.msra.mxu0 0.0
        %5233 = vmatprep.subr.mxu0 0.0
        %5234 = vmatpush2.msra.mxu0 0.0
        %5235 = vmatprep.subr.mxu0 0.0
        %5236 = vmatpush2.msra.mxu0 0.0
        %5237 = vmatprep.mubr.f32.mxu0 0.0
        %v5238 = vand.u32 %v4554, 4294901760
        %v5239 = vsub.f32 %v4554, %v5238
        %v5240 = vand.u32 %v5239, 4294901760
        %5241 = vmatmul.mubr.f32.gmra.mxu0 %v5240
        %v5242 = vpop.f32.mrf.mxu0
        %v5243 = vadd.f32 %v5064, %v5242
        %v5244 = vpop.f32.mrf.mxu0
        %5245 = vmatprep.mubr.f32.mxu0 0.0
        %v5246 = vand.u32 %v4557, 4294901760
        %v5247 = vsub.f32 %v4557, %v5246
        %v5248 = vand.u32 %v5247, 4294901760
        %5249 = vmatmul.mubr.f32.gmra.mxu0 %v5248
        %v5250 = vpop.f32.mrf.mxu0
        %v5251 = vadd.f32 %v5071, %v5250
        %v5252 = vpop.f32.mrf.mxu0
        %5253 = vmatprep.mubr.f32.mxu0 0.0
        %v5254 = vand.u32 %v4560, 4294901760
        %v5255 = vsub.f32 %v4560, %v5254
        %v5256 = vand.u32 %v5255, 4294901760
        %5257 = vmatmul.mubr.f32.gmra.mxu0 %v5256
        %v5258 = vpop.f32.mrf.mxu0
        %v5259 = vadd.f32 %v5078, %v5258
        %v5260 = vpop.f32.mrf.mxu0
        %5261 = vmatprep.mubr.f32.mxu0 0.0
        %v5262 = vand.u32 %v4563, 4294901760
        %v5263 = vsub.f32 %v4563, %v5262
        %v5264 = vand.u32 %v5263, 4294901760
        %5265 = vmatmul.mubr.f32.gmra.mxu0 %v5264
        %v5266 = vpop.f32.mrf.mxu0
        %v5267 = vadd.f32 %v5085, %v5266
        %v5268 = vpop.f32.mrf.mxu0
        %5269 = vmatprep.mubr.f32.mxu0 0.0
        %v5270 = vand.u32 %v4566, 4294901760
        %v5271 = vsub.f32 %v4566, %v5270
        %v5272 = vand.u32 %v5271, 4294901760
        %5273 = vmatmul.mubr.f32.gmra.mxu0 %v5272
        %v5274 = vpop.f32.mrf.mxu0
        %v5275 = vadd.f32 %v5092, %v5274
        %v5276 = vpop.f32.mrf.mxu0
        %5277 = vmatprep.mubr.f32.mxu0 0.0
        %v5278 = vand.u32 %v4569, 4294901760
        %v5279 = vsub.f32 %v4569, %v5278
        %v5280 = vand.u32 %v5279, 4294901760
        %5281 = vmatmul.mubr.f32.gmra.mxu0 %v5280
        %v5282 = vpop.f32.mrf.mxu0
        %v5283 = vadd.f32 %v5099, %v5282
        %v5284 = vpop.f32.mrf.mxu0
        %5285 = vmatprep.mubr.f32.mxu0 0.0
        %v5286 = vand.u32 %v4572, 4294901760
        %v5287 = vsub.f32 %v4572, %v5286
        %v5288 = vand.u32 %v5287, 4294901760
        %5289 = vmatmul.mubr.f32.gmra.mxu0 %v5288
        %v5290 = vpop.f32.mrf.mxu0
        %v5291 = vadd.f32 %v5106, %v5290
        %v5292 = vpop.f32.mrf.mxu0
        %5293 = vmatprep.mubr.f32.mxu0 0.0
        %v5294 = vand.u32 %v4575, 4294901760
        %v5295 = vsub.f32 %v4575, %v5294
        %v5296 = vand.u32 %v5295, 4294901760
        %5297 = vmatmul.mubr.f32.gmra.mxu0 %v5296
        %v5298 = vpop.f32.mrf.mxu0
        %v5299 = vadd.f32 %v5113, %v5298
        %v5300 = vpop.f32.mrf.mxu0
        %5301 = vmatprep.mubr.f32.mxu0 0.0
        %v5302 = vand.u32 %v4578, 4294901760
        %v5303 = vsub.f32 %v4578, %v5302
        %v5304 = vand.u32 %v5303, 4294901760
        %5305 = vmatmul.mubr.f32.gmra.mxu0 %v5304
        %v5306 = vpop.f32.mrf.mxu0
        %v5307 = vadd.f32 %v5120, %v5306
        %v5308 = vpop.f32.mrf.mxu0
        %5309 = vmatprep.mubr.f32.mxu0 0.0
        %v5310 = vand.u32 %v4581, 4294901760
        %v5311 = vsub.f32 %v4581, %v5310
        %v5312 = vand.u32 %v5311, 4294901760
        %5313 = vmatmul.mubr.f32.gmra.mxu0 %v5312
        %v5314 = vpop.f32.mrf.mxu0
        %v5315 = vadd.f32 %v5127, %v5314
        %v5316 = vpop.f32.mrf.mxu0
        %5317 = vmatprep.mubr.f32.mxu0 0.0
        %v5318 = vand.u32 %v4584, 4294901760
        %v5319 = vsub.f32 %v4584, %v5318
        %v5320 = vand.u32 %v5319, 4294901760
        %5321 = vmatmul.mubr.f32.gmra.mxu0 %v5320
        %v5322 = vpop.f32.mrf.mxu0
        %v5323 = vadd.f32 %v5134, %v5322
        %v5324 = vpop.f32.mrf.mxu0
        %5325 = vmatprep.mubr.f32.mxu0 0.0
        %v5326 = vand.u32 %v4587, 4294901760
        %v5327 = vsub.f32 %v4587, %v5326
        %v5328 = vand.u32 %v5327, 4294901760
        %5329 = vmatmul.mubr.f32.gmra.mxu0 %v5328
        %v5330 = vpop.f32.mrf.mxu0
        %v5331 = vadd.f32 %v5141, %v5330
        %v5332 = vpop.f32.mrf.mxu0
        %5333 = vmatprep.mubr.f32.mxu0 0.0
        %v5334 = vand.u32 %v4590, 4294901760
        %v5335 = vsub.f32 %v4590, %v5334
        %v5336 = vand.u32 %v5335, 4294901760
        %5337 = vmatmul.mubr.f32.gmra.mxu0 %v5336
        %v5338 = vpop.f32.mrf.mxu0
        %v5339 = vadd.f32 %v5148, %v5338
        %v5340 = vpop.f32.mrf.mxu0
        %5341 = vmatprep.mubr.f32.mxu0 0.0
        %v5342 = vand.u32 %v4593, 4294901760
        %v5343 = vsub.f32 %v4593, %v5342
        %v5344 = vand.u32 %v5343, 4294901760
        %5345 = vmatmul.mubr.f32.gmra.mxu0 %v5344
        %v5346 = vpop.f32.mrf.mxu0
        %v5347 = vadd.f32 %v5155, %v5346
        %v5348 = vpop.f32.mrf.mxu0
        %5349 = vmatprep.mubr.f32.mxu0 0.0
        %v5350 = vand.u32 %v4596, 4294901760
        %v5351 = vsub.f32 %v4596, %v5350
        %v5352 = vand.u32 %v5351, 4294901760
        %5353 = vmatmul.mubr.f32.gmra.mxu0 %v5352
        %v5354 = vpop.f32.mrf.mxu0
        %v5355 = vadd.f32 %v5162, %v5354
        %v5356 = vpop.f32.mrf.mxu0
        %5357 = vmatprep.mubr.f32.mxu0 0.0
        %v5358 = vand.u32 %v4599, 4294901760
        %v5359 = vsub.f32 %v4599, %v5358
        %v5360 = vand.u32 %v5359, 4294901760
        %5361 = vmatmul.mubr.f32.gmra.mxu0 %v5360
        %v5362 = vpop.f32.mrf.mxu0
        %v5363 = vadd.f32 %v5169, %v5362
        %v5364 = vpop.f32.mrf.mxu0
        %5365 = vdwg.mxu0
        %5366 = vmatprep.subr.mxu0 0.0
        %5367 = vmatpush1.msra.mxu0 0.0
        %5368 = vmatprep.subr.mxu0 0.0
        %5369 = vmatpush1.msra.mxu0 0.0
        %5370 = vmatprep.subr.mxu0 0.0
        %5371 = vmatpush1.msra.mxu0 0.0
        %5372 = vmatprep.subr.mxu0 0.0
        %5373 = vmatpush1.msra.mxu0 0.0
        %5374 = vmatprep.subr.mxu0 0.0
        %5375 = vmatpush1.msra.mxu0 0.0
        %5376 = vmatprep.subr.mxu0 0.0
        %5377 = vmatpush1.msra.mxu0 0.0
        %5378 = vmatprep.subr.mxu0 0.0
        %5379 = vmatpush1.msra.mxu0 0.0
        %5380 = vmatprep.subr.mxu0 0.0
        %5381 = vmatpush1.msra.mxu0 0.0
        %5382 = vmatprep.subr.mxu0 0.0
        %5383 = vmatpush1.msra.mxu0 0.0
        %5384 = vmatprep.subr.mxu0 0.0
        %5385 = vmatpush1.msra.mxu0 0.0
        %5386 = vmatprep.subr.mxu0 0.0
        %5387 = vmatpush1.msra.mxu0 0.0
        %5388 = vmatprep.subr.mxu0 0.0
        %5389 = vmatpush1.msra.mxu0 0.0
        %5390 = vmatprep.subr.mxu0 0.0
        %5391 = vmatpush1.msra.mxu0 0.0
        %5392 = vmatprep.subr.mxu0 0.0
        %5393 = vmatpush1.msra.mxu0 0.0
        %5394 = vmatprep.subr.mxu0 0.0
        %5395 = vmatpush1.msra.mxu0 0.0
        %5396 = vmatprep.subr.mxu0 0.0
        %v5397 = vand.u32 %v3825, 4294901760
        %v5398 = vsub.f32 %v3825, %v5397
        %v5399 = vand.u32 %v5398, 4294901760
        %5400 = vmatpush1.msra.mxu0 %v5399
        %5401 = vmatprep.subr.mxu0 0.0
        %5402 = vmatpush2.msra.mxu0 0.0
        %5403 = vmatprep.subr.mxu0 0.0
        %5404 = vmatpush2.msra.mxu0 0.0
        %5405 = vmatprep.subr.mxu0 0.0
        %5406 = vmatpush2.msra.mxu0 0.0
        %5407 = vmatprep.subr.mxu0 0.0
        %5408 = vmatpush2.msra.mxu0 0.0
        %5409 = vmatprep.subr.mxu0 0.0
        %5410 = vmatpush2.msra.mxu0 0.0
        %5411 = vmatprep.subr.mxu0 0.0
        %5412 = vmatpush2.msra.mxu0 0.0
        %5413 = vmatprep.subr.mxu0 0.0
        %5414 = vmatpush2.msra.mxu0 0.0
        %5415 = vmatprep.subr.mxu0 0.0
        %5416 = vmatpush2.msra.mxu0 0.0
        %5417 = vmatprep.subr.mxu0 0.0
        %5418 = vmatpush2.msra.mxu0 0.0
        %5419 = vmatprep.subr.mxu0 0.0
        %5420 = vmatpush2.msra.mxu0 0.0
        %5421 = vmatprep.subr.mxu0 0.0
        %5422 = vmatpush2.msra.mxu0 0.0
        %5423 = vmatprep.subr.mxu0 0.0
        %5424 = vmatpush2.msra.mxu0 0.0
        %5425 = vmatprep.subr.mxu0 0.0
        %5426 = vmatpush2.msra.mxu0 0.0
        %5427 = vmatprep.subr.mxu0 0.0
        %5428 = vmatpush2.msra.mxu0 0.0
        %5429 = vmatprep.subr.mxu0 0.0
        %5430 = vmatpush2.msra.mxu0 0.0
        %5431 = vmatprep.subr.mxu0 0.0
        %5432 = vmatpush2.msra.mxu0 0.0
        %5433 = vmatprep.mubr.f32.mxu0 0.0
        %v5434 = vand.u32 %v4554, 4294901760
        %5435 = vmatmul.mubr.f32.gmra.mxu0 %v5434
        %v5436 = vpop.f32.mrf.mxu0
        %v5437 = vadd.f32 %v5243, %v5436
        %v5438 = vpop.f32.mrf.mxu0
        %5439 = vmatprep.mubr.f32.mxu0 0.0
        %v5440 = vand.u32 %v4557, 4294901760
        %5441 = vmatmul.mubr.f32.gmra.mxu0 %v5440
        %v5442 = vpop.f32.mrf.mxu0
        %v5443 = vadd.f32 %v5251, %v5442
        %v5444 = vpop.f32.mrf.mxu0
        %5445 = vmatprep.mubr.f32.mxu0 0.0
        %v5446 = vand.u32 %v4560, 4294901760
        %5447 = vmatmul.mubr.f32.gmra.mxu0 %v5446
        %v5448 = vpop.f32.mrf.mxu0
        %v5449 = vadd.f32 %v5259, %v5448
        %v5450 = vpop.f32.mrf.mxu0
        %5451 = vmatprep.mubr.f32.mxu0 0.0
        %v5452 = vand.u32 %v4563, 4294901760
        %5453 = vmatmul.mubr.f32.gmra.mxu0 %v5452
        %v5454 = vpop.f32.mrf.mxu0
        %v5455 = vadd.f32 %v5267, %v5454
        %v5456 = vpop.f32.mrf.mxu0
        %5457 = vmatprep.mubr.f32.mxu0 0.0
        %v5458 = vand.u32 %v4566, 4294901760
        %5459 = vmatmul.mubr.f32.gmra.mxu0 %v5458
        %v5460 = vpop.f32.mrf.mxu0
        %v5461 = vadd.f32 %v5275, %v5460
        %v5462 = vpop.f32.mrf.mxu0
        %5463 = vmatprep.mubr.f32.mxu0 0.0
        %v5464 = vand.u32 %v4569, 4294901760
        %5465 = vmatmul.mubr.f32.gmra.mxu0 %v5464
        %v5466 = vpop.f32.mrf.mxu0
        %v5467 = vadd.f32 %v5283, %v5466
        %v5468 = vpop.f32.mrf.mxu0
        %5469 = vmatprep.mubr.f32.mxu0 0.0
        %v5470 = vand.u32 %v4572, 4294901760
        %5471 = vmatmul.mubr.f32.gmra.mxu0 %v5470
        %v5472 = vpop.f32.mrf.mxu0
        %v5473 = vadd.f32 %v5291, %v5472
        %v5474 = vpop.f32.mrf.mxu0
        %5475 = vmatprep.mubr.f32.mxu0 0.0
        %v5476 = vand.u32 %v4575, 4294901760
        %5477 = vmatmul.mubr.f32.gmra.mxu0 %v5476
        %v5478 = vpop.f32.mrf.mxu0
        %v5479 = vadd.f32 %v5299, %v5478
        %v5480 = vpop.f32.mrf.mxu0
        %5481 = vmatprep.mubr.f32.mxu0 0.0
        %v5482 = vand.u32 %v4578, 4294901760
        %5483 = vmatmul.mubr.f32.gmra.mxu0 %v5482
        %v5484 = vpop.f32.mrf.mxu0
        %v5485 = vadd.f32 %v5307, %v5484
        %v5486 = vpop.f32.mrf.mxu0
        %5487 = vmatprep.mubr.f32.mxu0 0.0
        %v5488 = vand.u32 %v4581, 4294901760
        %5489 = vmatmul.mubr.f32.gmra.mxu0 %v5488
        %v5490 = vpop.f32.mrf.mxu0
        %v5491 = vadd.f32 %v5315, %v5490
        %v5492 = vpop.f32.mrf.mxu0
        %5493 = vmatprep.mubr.f32.mxu0 0.0
        %v5494 = vand.u32 %v4584, 4294901760
        %5495 = vmatmul.mubr.f32.gmra.mxu0 %v5494
        %v5496 = vpop.f32.mrf.mxu0
        %v5497 = vadd.f32 %v5323, %v5496
        %v5498 = vpop.f32.mrf.mxu0
        %5499 = vmatprep.mubr.f32.mxu0 0.0
        %v5500 = vand.u32 %v4587, 4294901760
        %5501 = vmatmul.mubr.f32.gmra.mxu0 %v5500
        %v5502 = vpop.f32.mrf.mxu0
        %v5503 = vadd.f32 %v5331, %v5502
        %v5504 = vpop.f32.mrf.mxu0
        %5505 = vmatprep.mubr.f32.mxu0 0.0
        %v5506 = vand.u32 %v4590, 4294901760
        %5507 = vmatmul.mubr.f32.gmra.mxu0 %v5506
        %v5508 = vpop.f32.mrf.mxu0
        %v5509 = vadd.f32 %v5339, %v5508
        %v5510 = vpop.f32.mrf.mxu0
        %5511 = vmatprep.mubr.f32.mxu0 0.0
        %v5512 = vand.u32 %v4593, 4294901760
        %5513 = vmatmul.mubr.f32.gmra.mxu0 %v5512
        %v5514 = vpop.f32.mrf.mxu0
        %v5515 = vadd.f32 %v5347, %v5514
        %v5516 = vpop.f32.mrf.mxu0
        %5517 = vmatprep.mubr.f32.mxu0 0.0
        %v5518 = vand.u32 %v4596, 4294901760
        %5519 = vmatmul.mubr.f32.gmra.mxu0 %v5518
        %v5520 = vpop.f32.mrf.mxu0
        %v5521 = vadd.f32 %v5355, %v5520
        %v5522 = vpop.f32.mrf.mxu0
        %5523 = vmatprep.mubr.f32.mxu0 0.0
        %v5524 = vand.u32 %v4599, 4294901760
        %5525 = vmatmul.mubr.f32.gmra.mxu0 %v5524
        %v5526 = vpop.f32.mrf.mxu0
        %v5527 = vadd.f32 %v5363, %v5526
        %v5528 = vpop.f32.mrf.mxu0
        %5529 = vdwg.mxu0
        %5530 = vmatprep.subr.mxu0 0.0
        %5531 = vmatpush1.msra.mxu0 0.0
        %5532 = vmatprep.subr.mxu0 0.0
        %5533 = vmatpush1.msra.mxu0 0.0
        %5534 = vmatprep.subr.mxu0 0.0
        %5535 = vmatpush1.msra.mxu0 0.0
        %5536 = vmatprep.subr.mxu0 0.0
        %5537 = vmatpush1.msra.mxu0 0.0
        %5538 = vmatprep.subr.mxu0 0.0
        %5539 = vmatpush1.msra.mxu0 0.0
        %5540 = vmatprep.subr.mxu0 0.0
        %5541 = vmatpush1.msra.mxu0 0.0
        %5542 = vmatprep.subr.mxu0 0.0
        %5543 = vmatpush1.msra.mxu0 0.0
        %5544 = vmatprep.subr.mxu0 0.0
        %5545 = vmatpush1.msra.mxu0 0.0
        %5546 = vmatprep.subr.mxu0 0.0
        %5547 = vmatpush1.msra.mxu0 0.0
        %5548 = vmatprep.subr.mxu0 0.0
        %5549 = vmatpush1.msra.mxu0 0.0
        %5550 = vmatprep.subr.mxu0 0.0
        %5551 = vmatpush1.msra.mxu0 0.0
        %5552 = vmatprep.subr.mxu0 0.0
        %5553 = vmatpush1.msra.mxu0 0.0
        %5554 = vmatprep.subr.mxu0 0.0
        %5555 = vmatpush1.msra.mxu0 0.0
        %5556 = vmatprep.subr.mxu0 0.0
        %5557 = vmatpush1.msra.mxu0 0.0
        %5558 = vmatprep.subr.mxu0 0.0
        %5559 = vmatpush1.msra.mxu0 0.0
        %5560 = vmatprep.subr.mxu0 0.0
        %v5561 = vand.u32 %v3825, 4294901760
        %5562 = vmatpush1.msra.mxu0 %v5561
        %5563 = vmatprep.subr.mxu0 0.0
        %5564 = vmatpush2.msra.mxu0 0.0
        %5565 = vmatprep.subr.mxu0 0.0
        %5566 = vmatpush2.msra.mxu0 0.0
        %5567 = vmatprep.subr.mxu0 0.0
        %5568 = vmatpush2.msra.mxu0 0.0
        %5569 = vmatprep.subr.mxu0 0.0
        %5570 = vmatpush2.msra.mxu0 0.0
        %5571 = vmatprep.subr.mxu0 0.0
        %5572 = vmatpush2.msra.mxu0 0.0
        %5573 = vmatprep.subr.mxu0 0.0
        %5574 = vmatpush2.msra.mxu0 0.0
        %5575 = vmatprep.subr.mxu0 0.0
        %5576 = vmatpush2.msra.mxu0 0.0
        %5577 = vmatprep.subr.mxu0 0.0
        %5578 = vmatpush2.msra.mxu0 0.0
        %5579 = vmatprep.subr.mxu0 0.0
        %5580 = vmatpush2.msra.mxu0 0.0
        %5581 = vmatprep.subr.mxu0 0.0
        %5582 = vmatpush2.msra.mxu0 0.0
        %5583 = vmatprep.subr.mxu0 0.0
        %5584 = vmatpush2.msra.mxu0 0.0
        %5585 = vmatprep.subr.mxu0 0.0
        %5586 = vmatpush2.msra.mxu0 0.0
        %5587 = vmatprep.subr.mxu0 0.0
        %5588 = vmatpush2.msra.mxu0 0.0
        %5589 = vmatprep.subr.mxu0 0.0
        %5590 = vmatpush2.msra.mxu0 0.0
        %5591 = vmatprep.subr.mxu0 0.0
        %5592 = vmatpush2.msra.mxu0 0.0
        %5593 = vmatprep.subr.mxu0 0.0
        %5594 = vmatpush2.msra.mxu0 0.0
        %5595 = vmatprep.mubr.f32.mxu0 0.0
        %v5596 = vand.u32 %v4554, 4294901760
        %5597 = vmatmul.mubr.f32.gmra.mxu0 %v5596
        %v5598 = vpop.f32.mrf.mxu0
        %v5599 = vadd.f32 %v5437, %v5598
        %v5600 = vpop.f32.mrf.mxu0
        %5601 = vmatprep.mubr.f32.mxu0 0.0
        %v5602 = vand.u32 %v4557, 4294901760
        %5603 = vmatmul.mubr.f32.gmra.mxu0 %v5602
        %v5604 = vpop.f32.mrf.mxu0
        %v5605 = vadd.f32 %v5443, %v5604
        %v5606 = vpop.f32.mrf.mxu0
        %5607 = vmatprep.mubr.f32.mxu0 0.0
        %v5608 = vand.u32 %v4560, 4294901760
        %5609 = vmatmul.mubr.f32.gmra.mxu0 %v5608
        %v5610 = vpop.f32.mrf.mxu0
        %v5611 = vadd.f32 %v5449, %v5610
        %v5612 = vpop.f32.mrf.mxu0
        %5613 = vmatprep.mubr.f32.mxu0 0.0
        %v5614 = vand.u32 %v4563, 4294901760
        %5615 = vmatmul.mubr.f32.gmra.mxu0 %v5614
        %v5616 = vpop.f32.mrf.mxu0
        %v5617 = vadd.f32 %v5455, %v5616
        %v5618 = vpop.f32.mrf.mxu0
        %5619 = vmatprep.mubr.f32.mxu0 0.0
        %v5620 = vand.u32 %v4566, 4294901760
        %5621 = vmatmul.mubr.f32.gmra.mxu0 %v5620
        %v5622 = vpop.f32.mrf.mxu0
        %v5623 = vadd.f32 %v5461, %v5622
        %v5624 = vpop.f32.mrf.mxu0
        %5625 = vmatprep.mubr.f32.mxu0 0.0
        %v5626 = vand.u32 %v4569, 4294901760
        %5627 = vmatmul.mubr.f32.gmra.mxu0 %v5626
        %v5628 = vpop.f32.mrf.mxu0
        %v5629 = vadd.f32 %v5467, %v5628
        %v5630 = vpop.f32.mrf.mxu0
        %5631 = vmatprep.mubr.f32.mxu0 0.0
        %v5632 = vand.u32 %v4572, 4294901760
        %5633 = vmatmul.mubr.f32.gmra.mxu0 %v5632
        %v5634 = vpop.f32.mrf.mxu0
        %v5635 = vadd.f32 %v5473, %v5634
        %v5636 = vpop.f32.mrf.mxu0
        %5637 = vmatprep.mubr.f32.mxu0 0.0
        %v5638 = vand.u32 %v4575, 4294901760
        %5639 = vmatmul.mubr.f32.gmra.mxu0 %v5638
        %v5640 = vpop.f32.mrf.mxu0
        %v5641 = vadd.f32 %v5479, %v5640
        %v5642 = vpop.f32.mrf.mxu0
        %5643 = vmatprep.mubr.f32.mxu0 0.0
        %v5644 = vand.u32 %v4578, 4294901760
        %5645 = vmatmul.mubr.f32.gmra.mxu0 %v5644
        %v5646 = vpop.f32.mrf.mxu0
        %v5647 = vadd.f32 %v5485, %v5646
        %v5648 = vpop.f32.mrf.mxu0
        %5649 = vmatprep.mubr.f32.mxu0 0.0
        %v5650 = vand.u32 %v4581, 4294901760
        %5651 = vmatmul.mubr.f32.gmra.mxu0 %v5650
        %v5652 = vpop.f32.mrf.mxu0
        %v5653 = vadd.f32 %v5491, %v5652
        %v5654 = vpop.f32.mrf.mxu0
        %5655 = vmatprep.mubr.f32.mxu0 0.0
        %v5656 = vand.u32 %v4584, 4294901760
        %5657 = vmatmul.mubr.f32.gmra.mxu0 %v5656
        %v5658 = vpop.f32.mrf.mxu0
        %v5659 = vadd.f32 %v5497, %v5658
        %v5660 = vpop.f32.mrf.mxu0
        %5661 = vmatprep.mubr.f32.mxu0 0.0
        %v5662 = vand.u32 %v4587, 4294901760
        %5663 = vmatmul.mubr.f32.gmra.mxu0 %v5662
        %v5664 = vpop.f32.mrf.mxu0
        %v5665 = vadd.f32 %v5503, %v5664
        %v5666 = vpop.f32.mrf.mxu0
        %5667 = vmatprep.mubr.f32.mxu0 0.0
        %v5668 = vand.u32 %v4590, 4294901760
        %5669 = vmatmul.mubr.f32.gmra.mxu0 %v5668
        %v5670 = vpop.f32.mrf.mxu0
        %v5671 = vadd.f32 %v5509, %v5670
        %v5672 = vpop.f32.mrf.mxu0
        %5673 = vmatprep.mubr.f32.mxu0 0.0
        %v5674 = vand.u32 %v4593, 4294901760
        %5675 = vmatmul.mubr.f32.gmra.mxu0 %v5674
        %v5676 = vpop.f32.mrf.mxu0
        %v5677 = vadd.f32 %v5515, %v5676
        %v5678 = vpop.f32.mrf.mxu0
        %5679 = vmatprep.mubr.f32.mxu0 0.0
        %v5680 = vand.u32 %v4596, 4294901760
        %5681 = vmatmul.mubr.f32.gmra.mxu0 %v5680
        %v5682 = vpop.f32.mrf.mxu0
        %v5683 = vadd.f32 %v5521, %v5682
        %v5684 = vpop.f32.mrf.mxu0
        %5685 = vmatprep.mubr.f32.mxu0 0.0
        %v5686 = vand.u32 %v4599, 4294901760
        %5687 = vmatmul.mubr.f32.gmra.mxu0 %v5686
        %v5688 = vpop.f32.mrf.mxu0
        %v5689 = vadd.f32 %v5527, %v5688
        %v5690 = vpop.f32.mrf.mxu0
        %5691 = vdwg.mxu0
        %5693 = vset.pattern.permute.xlu0 0
        %5694 = vperm.xlu0 %5693, %v419
        %v5695 = vpop.permute.xlu0 %5694
        %5698 = vset.pattern.permute.xlu0 0
        %5699 = vperm.xlu0 %5698, %v420
        %v5700 = vpop.permute.xlu0 %5699
        %5703 = vset.pattern.permute.xlu0 0
        %5704 = vperm.xlu0 %5703, %v421
        %v5705 = vpop.permute.xlu0 %5704
        %5708 = vset.pattern.permute.xlu0 0
        %5709 = vperm.xlu0 %5708, %v422
        %v5710 = vpop.permute.xlu0 %5709
        %5713 = vset.pattern.permute.xlu0 0
        %5714 = vperm.xlu0 %5713, %v423
        %v5715 = vpop.permute.xlu0 %5714
        %5718 = vset.pattern.permute.xlu0 0
        %5719 = vperm.xlu0 %5718, %v424
        %v5720 = vpop.permute.xlu0 %5719
        %5723 = vset.pattern.permute.xlu0 0
        %5724 = vperm.xlu0 %5723, %v425
        %v5725 = vpop.permute.xlu0 %5724
        %5728 = vset.pattern.permute.xlu0 0
        %5729 = vperm.xlu0 %5728, %v426
        %v5730 = vpop.permute.xlu0 %5729
        %5733 = vset.pattern.permute.xlu0 0
        %5734 = vperm.xlu0 %5733, %v427
        %v5735 = vpop.permute.xlu0 %5734
        %5738 = vset.pattern.permute.xlu0 0
        %5739 = vperm.xlu0 %5738, %v428
        %v5740 = vpop.permute.xlu0 %5739
        %5743 = vset.pattern.permute.xlu0 0
        %5744 = vperm.xlu0 %5743, %v429
        %v5745 = vpop.permute.xlu0 %5744
        %5748 = vset.pattern.permute.xlu0 0
        %5749 = vperm.xlu0 %5748, %v430
        %v5750 = vpop.permute.xlu0 %5749
        %5753 = vset.pattern.permute.xlu0 0
        %5754 = vperm.xlu0 %5753, %v431
        %v5755 = vpop.permute.xlu0 %5754
        %5758 = vset.pattern.permute.xlu0 0
        %5759 = vperm.xlu0 %5758, %v432
        %v5760 = vpop.permute.xlu0 %5759
        %5763 = vset.pattern.permute.xlu0 0
        %5764 = vperm.xlu0 %5763, %v433
        %v5765 = vpop.permute.xlu0 %5764
        %5768 = vset.pattern.permute.xlu0 0
        %5769 = vperm.xlu0 %5768, %v434
        %v5770 = vpop.permute.xlu0 %5769
        %v5773 = vsel %vm4552, %v403, 0
        %v5776 = vsel %vm4552, %v404, 0
        %v5779 = vsel %vm4552, %v405, 0
        %v5782 = vsel %vm4552, %v406, 0
        %v5785 = vsel %vm4552, %v407, 0
        %v5788 = vsel %vm4552, %v408, 0
        %v5791 = vsel %vm4552, %v409, 0
        %v5794 = vsel %vm4552, %v410, 0
        %v5797 = vsel %vm4552, %v411, 0
        %v5800 = vsel %vm4552, %v412, 0
        %v5803 = vsel %vm4552, %v413, 0
        %v5806 = vsel %vm4552, %v414, 0
        %v5809 = vsel %vm4552, %v415, 0
        %v5812 = vsel %vm4552, %v416, 0
        %v5815 = vsel %vm4552, %v417, 0
        %v5818 = vsel %vm4552, %v418, 0
        %5820 = vmatprep.subr.mxu0 0.0
        %5821 = vmatpush1.msra.mxu0 0.0
        %5822 = vmatprep.subr.mxu0 0.0
        %5823 = vmatpush1.msra.mxu0 0.0
        %5824 = vmatprep.subr.mxu0 0.0
        %5825 = vmatpush1.msra.mxu0 0.0
        %5826 = vmatprep.subr.mxu0 0.0
        %5827 = vmatpush1.msra.mxu0 0.0
        %5828 = vmatprep.subr.mxu0 0.0
        %5829 = vmatpush1.msra.mxu0 0.0
        %5830 = vmatprep.subr.mxu0 0.0
        %5831 = vmatpush1.msra.mxu0 0.0
        %5832 = vmatprep.subr.mxu0 0.0
        %5833 = vmatpush1.msra.mxu0 0.0
        %5834 = vmatprep.subr.mxu0 0.0
        %5835 = vmatpush1.msra.mxu0 0.0
        %5836 = vmatprep.subr.mxu0 0.0
        %5837 = vmatpush1.msra.mxu0 0.0
        %5838 = vmatprep.subr.mxu0 0.0
        %5839 = vmatpush1.msra.mxu0 0.0
        %5840 = vmatprep.subr.mxu0 0.0
        %5841 = vmatpush1.msra.mxu0 0.0
        %5842 = vmatprep.subr.mxu0 0.0
        %5843 = vmatpush1.msra.mxu0 0.0
        %5844 = vmatprep.subr.mxu0 0.0
        %5845 = vmatpush1.msra.mxu0 0.0
        %5846 = vmatprep.subr.mxu0 0.0
        %5847 = vmatpush1.msra.mxu0 0.0
        %5848 = vmatprep.subr.mxu0 0.0
        %5849 = vmatpush1.msra.mxu0 0.0
        %5850 = vmatprep.subr.mxu0 0.0
        %v5851 = vand.u32 %v4471, 4294901760
        %5852 = vmatpush1.msra.mxu0 %v5851
        %5853 = vmatprep.subr.mxu0 0.0
        %5854 = vmatpush2.msra.mxu0 0.0
        %5855 = vmatprep.subr.mxu0 0.0
        %5856 = vmatpush2.msra.mxu0 0.0
        %5857 = vmatprep.subr.mxu0 0.0
        %5858 = vmatpush2.msra.mxu0 0.0
        %5859 = vmatprep.subr.mxu0 0.0
        %5860 = vmatpush2.msra.mxu0 0.0
        %5861 = vmatprep.subr.mxu0 0.0
        %5862 = vmatpush2.msra.mxu0 0.0
        %5863 = vmatprep.subr.mxu0 0.0
        %5864 = vmatpush2.msra.mxu0 0.0
        %5865 = vmatprep.subr.mxu0 0.0
        %5866 = vmatpush2.msra.mxu0 0.0
        %5867 = vmatprep.subr.mxu0 0.0
        %5868 = vmatpush2.msra.mxu0 0.0
        %5869 = vmatprep.subr.mxu0 0.0
        %5870 = vmatpush2.msra.mxu0 0.0
        %5871 = vmatprep.subr.mxu0 0.0
        %5872 = vmatpush2.msra.mxu0 0.0
        %5873 = vmatprep.subr.mxu0 0.0
        %5874 = vmatpush2.msra.mxu0 0.0
        %5875 = vmatprep.subr.mxu0 0.0
        %5876 = vmatpush2.msra.mxu0 0.0
        %5877 = vmatprep.subr.mxu0 0.0
        %5878 = vmatpush2.msra.mxu0 0.0
        %5879 = vmatprep.subr.mxu0 0.0
        %5880 = vmatpush2.msra.mxu0 0.0
        %5881 = vmatprep.subr.mxu0 0.0
        %5882 = vmatpush2.msra.mxu0 0.0
        %5883 = vmatprep.subr.mxu0 0.0
        %5884 = vmatpush2.msra.mxu0 0.0
        %5885 = vmatprep.mubr.f32.mxu0 0.0
        %v5886 = vand.u32 %v5773, 4294901760
        %v5887 = vsub.f32 %v5773, %v5886
        %v5888 = vand.u32 %v5887, 4294901760
        %v5889 = vsub.f32 %v5887, %v5888
        %v5890 = vand.u32 %v5889, 4294901760
        %5891 = vmatmul.mubr.f32.gmra.mxu0 %v5890
        %v5892 = vpop.f32.mrf.mxu0
        %v5893 = vadd.f32 %v5695, %v5892
        %v5894 = vpop.f32.mrf.mxu0
        %5895 = vmatprep.mubr.f32.mxu0 0.0
        %v5896 = vand.u32 %v5776, 4294901760
        %v5897 = vsub.f32 %v5776, %v5896
        %v5898 = vand.u32 %v5897, 4294901760
        %v5899 = vsub.f32 %v5897, %v5898
        %v5900 = vand.u32 %v5899, 4294901760
        %5901 = vmatmul.mubr.f32.gmra.mxu0 %v5900
        %v5902 = vpop.f32.mrf.mxu0
        %v5903 = vadd.f32 %v5700, %v5902
        %v5904 = vpop.f32.mrf.mxu0
        %5905 = vmatprep.mubr.f32.mxu0 0.0
        %v5906 = vand.u32 %v5779, 4294901760
        %v5907 = vsub.f32 %v5779, %v5906
        %v5908 = vand.u32 %v5907, 4294901760
        %v5909 = vsub.f32 %v5907, %v5908
        %v5910 = vand.u32 %v5909, 4294901760
        %5911 = vmatmul.mubr.f32.gmra.mxu0 %v5910
        %v5912 = vpop.f32.mrf.mxu0
        %v5913 = vadd.f32 %v5705, %v5912
        %v5914 = vpop.f32.mrf.mxu0
        %5915 = vmatprep.mubr.f32.mxu0 0.0
        %v5916 = vand.u32 %v5782, 4294901760
        %v5917 = vsub.f32 %v5782, %v5916
        %v5918 = vand.u32 %v5917, 4294901760
        %v5919 = vsub.f32 %v5917, %v5918
        %v5920 = vand.u32 %v5919, 4294901760
        %5921 = vmatmul.mubr.f32.gmra.mxu0 %v5920
        %v5922 = vpop.f32.mrf.mxu0
        %v5923 = vadd.f32 %v5710, %v5922
        %v5924 = vpop.f32.mrf.mxu0
        %5925 = vmatprep.mubr.f32.mxu0 0.0
        %v5926 = vand.u32 %v5785, 4294901760
        %v5927 = vsub.f32 %v5785, %v5926
        %v5928 = vand.u32 %v5927, 4294901760
        %v5929 = vsub.f32 %v5927, %v5928
        %v5930 = vand.u32 %v5929, 4294901760
        %5931 = vmatmul.mubr.f32.gmra.mxu0 %v5930
        %v5932 = vpop.f32.mrf.mxu0
        %v5933 = vadd.f32 %v5715, %v5932
        %v5934 = vpop.f32.mrf.mxu0
        %5935 = vmatprep.mubr.f32.mxu0 0.0
        %v5936 = vand.u32 %v5788, 4294901760
        %v5937 = vsub.f32 %v5788, %v5936
        %v5938 = vand.u32 %v5937, 4294901760
        %v5939 = vsub.f32 %v5937, %v5938
        %v5940 = vand.u32 %v5939, 4294901760
        %5941 = vmatmul.mubr.f32.gmra.mxu0 %v5940
        %v5942 = vpop.f32.mrf.mxu0
        %v5943 = vadd.f32 %v5720, %v5942
        %v5944 = vpop.f32.mrf.mxu0
        %5945 = vmatprep.mubr.f32.mxu0 0.0
        %v5946 = vand.u32 %v5791, 4294901760
        %v5947 = vsub.f32 %v5791, %v5946
        %v5948 = vand.u32 %v5947, 4294901760
        %v5949 = vsub.f32 %v5947, %v5948
        %v5950 = vand.u32 %v5949, 4294901760
        %5951 = vmatmul.mubr.f32.gmra.mxu0 %v5950
        %v5952 = vpop.f32.mrf.mxu0
        %v5953 = vadd.f32 %v5725, %v5952
        %v5954 = vpop.f32.mrf.mxu0
        %5955 = vmatprep.mubr.f32.mxu0 0.0
        %v5956 = vand.u32 %v5794, 4294901760
        %v5957 = vsub.f32 %v5794, %v5956
        %v5958 = vand.u32 %v5957, 4294901760
        %v5959 = vsub.f32 %v5957, %v5958
        %v5960 = vand.u32 %v5959, 4294901760
        %5961 = vmatmul.mubr.f32.gmra.mxu0 %v5960
        %v5962 = vpop.f32.mrf.mxu0
        %v5963 = vadd.f32 %v5730, %v5962
        %v5964 = vpop.f32.mrf.mxu0
        %5965 = vmatprep.mubr.f32.mxu0 0.0
        %v5966 = vand.u32 %v5797, 4294901760
        %v5967 = vsub.f32 %v5797, %v5966
        %v5968 = vand.u32 %v5967, 4294901760
        %v5969 = vsub.f32 %v5967, %v5968
        %v5970 = vand.u32 %v5969, 4294901760
        %5971 = vmatmul.mubr.f32.gmra.mxu0 %v5970
        %v5972 = vpop.f32.mrf.mxu0
        %v5973 = vadd.f32 %v5735, %v5972
        %v5974 = vpop.f32.mrf.mxu0
        %5975 = vmatprep.mubr.f32.mxu0 0.0
        %v5976 = vand.u32 %v5800, 4294901760
        %v5977 = vsub.f32 %v5800, %v5976
        %v5978 = vand.u32 %v5977, 4294901760
        %v5979 = vsub.f32 %v5977, %v5978
        %v5980 = vand.u32 %v5979, 4294901760
        %5981 = vmatmul.mubr.f32.gmra.mxu0 %v5980
        %v5982 = vpop.f32.mrf.mxu0
        %v5983 = vadd.f32 %v5740, %v5982
        %v5984 = vpop.f32.mrf.mxu0
        %5985 = vmatprep.mubr.f32.mxu0 0.0
        %v5986 = vand.u32 %v5803, 4294901760
        %v5987 = vsub.f32 %v5803, %v5986
        %v5988 = vand.u32 %v5987, 4294901760
        %v5989 = vsub.f32 %v5987, %v5988
        %v5990 = vand.u32 %v5989, 4294901760
        %5991 = vmatmul.mubr.f32.gmra.mxu0 %v5990
        %v5992 = vpop.f32.mrf.mxu0
        %v5993 = vadd.f32 %v5745, %v5992
        %v5994 = vpop.f32.mrf.mxu0
        %5995 = vmatprep.mubr.f32.mxu0 0.0
        %v5996 = vand.u32 %v5806, 4294901760
        %v5997 = vsub.f32 %v5806, %v5996
        %v5998 = vand.u32 %v5997, 4294901760
        %v5999 = vsub.f32 %v5997, %v5998
        %v6000 = vand.u32 %v5999, 4294901760
        %6001 = vmatmul.mubr.f32.gmra.mxu0 %v6000
        %v6002 = vpop.f32.mrf.mxu0
        %v6003 = vadd.f32 %v5750, %v6002
        %v6004 = vpop.f32.mrf.mxu0
        %6005 = vmatprep.mubr.f32.mxu0 0.0
        %v6006 = vand.u32 %v5809, 4294901760
        %v6007 = vsub.f32 %v5809, %v6006
        %v6008 = vand.u32 %v6007, 4294901760
        %v6009 = vsub.f32 %v6007, %v6008
        %v6010 = vand.u32 %v6009, 4294901760
        %6011 = vmatmul.mubr.f32.gmra.mxu0 %v6010
        %v6012 = vpop.f32.mrf.mxu0
        %v6013 = vadd.f32 %v5755, %v6012
        %v6014 = vpop.f32.mrf.mxu0
        %6015 = vmatprep.mubr.f32.mxu0 0.0
        %v6016 = vand.u32 %v5812, 4294901760
        %v6017 = vsub.f32 %v5812, %v6016
        %v6018 = vand.u32 %v6017, 4294901760
        %v6019 = vsub.f32 %v6017, %v6018
        %v6020 = vand.u32 %v6019, 4294901760
        %6021 = vmatmul.mubr.f32.gmra.mxu0 %v6020
        %v6022 = vpop.f32.mrf.mxu0
        %v6023 = vadd.f32 %v5760, %v6022
        %v6024 = vpop.f32.mrf.mxu0
        %6025 = vmatprep.mubr.f32.mxu0 0.0
        %v6026 = vand.u32 %v5815, 4294901760
        %v6027 = vsub.f32 %v5815, %v6026
        %v6028 = vand.u32 %v6027, 4294901760
        %v6029 = vsub.f32 %v6027, %v6028
        %v6030 = vand.u32 %v6029, 4294901760
        %6031 = vmatmul.mubr.f32.gmra.mxu0 %v6030
        %v6032 = vpop.f32.mrf.mxu0
        %v6033 = vadd.f32 %v5765, %v6032
        %v6034 = vpop.f32.mrf.mxu0
        %6035 = vmatprep.mubr.f32.mxu0 0.0
        %v6036 = vand.u32 %v5818, 4294901760
        %v6037 = vsub.f32 %v5818, %v6036
        %v6038 = vand.u32 %v6037, 4294901760
        %v6039 = vsub.f32 %v6037, %v6038
        %v6040 = vand.u32 %v6039, 4294901760
        %6041 = vmatmul.mubr.f32.gmra.mxu0 %v6040
        %v6042 = vpop.f32.mrf.mxu0
        %v6043 = vadd.f32 %v5770, %v6042
        %v6044 = vpop.f32.mrf.mxu0
        %6045 = vdwg.mxu0
        %6046 = vmatprep.subr.mxu0 0.0
        %6047 = vmatpush1.msra.mxu0 0.0
        %6048 = vmatprep.subr.mxu0 0.0
        %6049 = vmatpush1.msra.mxu0 0.0
        %6050 = vmatprep.subr.mxu0 0.0
        %6051 = vmatpush1.msra.mxu0 0.0
        %6052 = vmatprep.subr.mxu0 0.0
        %6053 = vmatpush1.msra.mxu0 0.0
        %6054 = vmatprep.subr.mxu0 0.0
        %6055 = vmatpush1.msra.mxu0 0.0
        %6056 = vmatprep.subr.mxu0 0.0
        %6057 = vmatpush1.msra.mxu0 0.0
        %6058 = vmatprep.subr.mxu0 0.0
        %6059 = vmatpush1.msra.mxu0 0.0
        %6060 = vmatprep.subr.mxu0 0.0
        %6061 = vmatpush1.msra.mxu0 0.0
        %6062 = vmatprep.subr.mxu0 0.0
        %6063 = vmatpush1.msra.mxu0 0.0
        %6064 = vmatprep.subr.mxu0 0.0
        %6065 = vmatpush1.msra.mxu0 0.0
        %6066 = vmatprep.subr.mxu0 0.0
        %6067 = vmatpush1.msra.mxu0 0.0
        %6068 = vmatprep.subr.mxu0 0.0
        %6069 = vmatpush1.msra.mxu0 0.0
        %6070 = vmatprep.subr.mxu0 0.0
        %6071 = vmatpush1.msra.mxu0 0.0
        %6072 = vmatprep.subr.mxu0 0.0
        %6073 = vmatpush1.msra.mxu0 0.0
        %6074 = vmatprep.subr.mxu0 0.0
        %6075 = vmatpush1.msra.mxu0 0.0
        %6076 = vmatprep.subr.mxu0 0.0
        %v6077 = vand.u32 %v4471, 4294901760
        %v6078 = vsub.f32 %v4471, %v6077
        %v6079 = vand.u32 %v6078, 4294901760
        %v6080 = vsub.f32 %v6078, %v6079
        %v6081 = vand.u32 %v6080, 4294901760
        %6082 = vmatpush1.msra.mxu0 %v6081
        %6083 = vmatprep.subr.mxu0 0.0
        %6084 = vmatpush2.msra.mxu0 0.0
        %6085 = vmatprep.subr.mxu0 0.0
        %6086 = vmatpush2.msra.mxu0 0.0
        %6087 = vmatprep.subr.mxu0 0.0
        %6088 = vmatpush2.msra.mxu0 0.0
        %6089 = vmatprep.subr.mxu0 0.0
        %6090 = vmatpush2.msra.mxu0 0.0
        %6091 = vmatprep.subr.mxu0 0.0
        %6092 = vmatpush2.msra.mxu0 0.0
        %6093 = vmatprep.subr.mxu0 0.0
        %6094 = vmatpush2.msra.mxu0 0.0
        %6095 = vmatprep.subr.mxu0 0.0
        %6096 = vmatpush2.msra.mxu0 0.0
        %6097 = vmatprep.subr.mxu0 0.0
        %6098 = vmatpush2.msra.mxu0 0.0
        %6099 = vmatprep.subr.mxu0 0.0
        %6100 = vmatpush2.msra.mxu0 0.0
        %6101 = vmatprep.subr.mxu0 0.0
        %6102 = vmatpush2.msra.mxu0 0.0
        %6103 = vmatprep.subr.mxu0 0.0
        %6104 = vmatpush2.msra.mxu0 0.0
        %6105 = vmatprep.subr.mxu0 0.0
        %6106 = vmatpush2.msra.mxu0 0.0
        %6107 = vmatprep.subr.mxu0 0.0
        %6108 = vmatpush2.msra.mxu0 0.0
        %6109 = vmatprep.subr.mxu0 0.0
        %6110 = vmatpush2.msra.mxu0 0.0
        %6111 = vmatprep.subr.mxu0 0.0
        %6112 = vmatpush2.msra.mxu0 0.0
        %6113 = vmatprep.subr.mxu0 0.0
        %6114 = vmatpush2.msra.mxu0 0.0
        %6115 = vmatprep.mubr.f32.mxu0 0.0
        %v6116 = vand.u32 %v5773, 4294901760
        %6117 = vmatmul.mubr.f32.gmra.mxu0 %v6116
        %v6118 = vpop.f32.mrf.mxu0
        %v6119 = vadd.f32 %v5893, %v6118
        %v6120 = vpop.f32.mrf.mxu0
        %6121 = vmatprep.mubr.f32.mxu0 0.0
        %v6122 = vand.u32 %v5776, 4294901760
        %6123 = vmatmul.mubr.f32.gmra.mxu0 %v6122
        %v6124 = vpop.f32.mrf.mxu0
        %v6125 = vadd.f32 %v5903, %v6124
        %v6126 = vpop.f32.mrf.mxu0
        %6127 = vmatprep.mubr.f32.mxu0 0.0
        %v6128 = vand.u32 %v5779, 4294901760
        %6129 = vmatmul.mubr.f32.gmra.mxu0 %v6128
        %v6130 = vpop.f32.mrf.mxu0
        %v6131 = vadd.f32 %v5913, %v6130
        %v6132 = vpop.f32.mrf.mxu0
        %6133 = vmatprep.mubr.f32.mxu0 0.0
        %v6134 = vand.u32 %v5782, 4294901760
        %6135 = vmatmul.mubr.f32.gmra.mxu0 %v6134
        %v6136 = vpop.f32.mrf.mxu0
        %v6137 = vadd.f32 %v5923, %v6136
        %v6138 = vpop.f32.mrf.mxu0
        %6139 = vmatprep.mubr.f32.mxu0 0.0
        %v6140 = vand.u32 %v5785, 4294901760
        %6141 = vmatmul.mubr.f32.gmra.mxu0 %v6140
        %v6142 = vpop.f32.mrf.mxu0
        %v6143 = vadd.f32 %v5933, %v6142
        %v6144 = vpop.f32.mrf.mxu0
        %6145 = vmatprep.mubr.f32.mxu0 0.0
        %v6146 = vand.u32 %v5788, 4294901760
        %6147 = vmatmul.mubr.f32.gmra.mxu0 %v6146
        %v6148 = vpop.f32.mrf.mxu0
        %v6149 = vadd.f32 %v5943, %v6148
        %v6150 = vpop.f32.mrf.mxu0
        %6151 = vmatprep.mubr.f32.mxu0 0.0
        %v6152 = vand.u32 %v5791, 4294901760
        %6153 = vmatmul.mubr.f32.gmra.mxu0 %v6152
        %v6154 = vpop.f32.mrf.mxu0
        %v6155 = vadd.f32 %v5953, %v6154
        %v6156 = vpop.f32.mrf.mxu0
        %6157 = vmatprep.mubr.f32.mxu0 0.0
        %v6158 = vand.u32 %v5794, 4294901760
        %6159 = vmatmul.mubr.f32.gmra.mxu0 %v6158
        %v6160 = vpop.f32.mrf.mxu0
        %v6161 = vadd.f32 %v5963, %v6160
        %v6162 = vpop.f32.mrf.mxu0
        %6163 = vmatprep.mubr.f32.mxu0 0.0
        %v6164 = vand.u32 %v5797, 4294901760
        %6165 = vmatmul.mubr.f32.gmra.mxu0 %v6164
        %v6166 = vpop.f32.mrf.mxu0
        %v6167 = vadd.f32 %v5973, %v6166
        %v6168 = vpop.f32.mrf.mxu0
        %6169 = vmatprep.mubr.f32.mxu0 0.0
        %v6170 = vand.u32 %v5800, 4294901760
        %6171 = vmatmul.mubr.f32.gmra.mxu0 %v6170
        %v6172 = vpop.f32.mrf.mxu0
        %v6173 = vadd.f32 %v5983, %v6172
        %v6174 = vpop.f32.mrf.mxu0
        %6175 = vmatprep.mubr.f32.mxu0 0.0
        %v6176 = vand.u32 %v5803, 4294901760
        %6177 = vmatmul.mubr.f32.gmra.mxu0 %v6176
        %v6178 = vpop.f32.mrf.mxu0
        %v6179 = vadd.f32 %v5993, %v6178
        %v6180 = vpop.f32.mrf.mxu0
        %6181 = vmatprep.mubr.f32.mxu0 0.0
        %v6182 = vand.u32 %v5806, 4294901760
        %6183 = vmatmul.mubr.f32.gmra.mxu0 %v6182
        %v6184 = vpop.f32.mrf.mxu0
        %v6185 = vadd.f32 %v6003, %v6184
        %v6186 = vpop.f32.mrf.mxu0
        %6187 = vmatprep.mubr.f32.mxu0 0.0
        %v6188 = vand.u32 %v5809, 4294901760
        %6189 = vmatmul.mubr.f32.gmra.mxu0 %v6188
        %v6190 = vpop.f32.mrf.mxu0
        %v6191 = vadd.f32 %v6013, %v6190
        %v6192 = vpop.f32.mrf.mxu0
        %6193 = vmatprep.mubr.f32.mxu0 0.0
        %v6194 = vand.u32 %v5812, 4294901760
        %6195 = vmatmul.mubr.f32.gmra.mxu0 %v6194
        %v6196 = vpop.f32.mrf.mxu0
        %v6197 = vadd.f32 %v6023, %v6196
        %v6198 = vpop.f32.mrf.mxu0
        %6199 = vmatprep.mubr.f32.mxu0 0.0
        %v6200 = vand.u32 %v5815, 4294901760
        %6201 = vmatmul.mubr.f32.gmra.mxu0 %v6200
        %v6202 = vpop.f32.mrf.mxu0
        %v6203 = vadd.f32 %v6033, %v6202
        %v6204 = vpop.f32.mrf.mxu0
        %6205 = vmatprep.mubr.f32.mxu0 0.0
        %v6206 = vand.u32 %v5818, 4294901760
        %6207 = vmatmul.mubr.f32.gmra.mxu0 %v6206
        %v6208 = vpop.f32.mrf.mxu0
        %v6209 = vadd.f32 %v6043, %v6208
        %v6210 = vpop.f32.mrf.mxu0
        %6211 = vdwg.mxu0
        %6212 = vmatprep.subr.mxu0 0.0
        %6213 = vmatpush1.msra.mxu0 0.0
        %6214 = vmatprep.subr.mxu0 0.0
        %6215 = vmatpush1.msra.mxu0 0.0
        %6216 = vmatprep.subr.mxu0 0.0
        %6217 = vmatpush1.msra.mxu0 0.0
        %6218 = vmatprep.subr.mxu0 0.0
        %6219 = vmatpush1.msra.mxu0 0.0
        %6220 = vmatprep.subr.mxu0 0.0
        %6221 = vmatpush1.msra.mxu0 0.0
        %6222 = vmatprep.subr.mxu0 0.0
        %6223 = vmatpush1.msra.mxu0 0.0
        %6224 = vmatprep.subr.mxu0 0.0
        %6225 = vmatpush1.msra.mxu0 0.0
        %6226 = vmatprep.subr.mxu0 0.0
        %6227 = vmatpush1.msra.mxu0 0.0
        %6228 = vmatprep.subr.mxu0 0.0
        %6229 = vmatpush1.msra.mxu0 0.0
        %6230 = vmatprep.subr.mxu0 0.0
        %6231 = vmatpush1.msra.mxu0 0.0
        %6232 = vmatprep.subr.mxu0 0.0
        %6233 = vmatpush1.msra.mxu0 0.0
        %6234 = vmatprep.subr.mxu0 0.0
        %6235 = vmatpush1.msra.mxu0 0.0
        %6236 = vmatprep.subr.mxu0 0.0
        %6237 = vmatpush1.msra.mxu0 0.0
        %6238 = vmatprep.subr.mxu0 0.0
        %6239 = vmatpush1.msra.mxu0 0.0
        %6240 = vmatprep.subr.mxu0 0.0
        %6241 = vmatpush1.msra.mxu0 0.0
        %6242 = vmatprep.subr.mxu0 0.0
        %v6243 = vand.u32 %v4471, 4294901760
        %v6244 = vsub.f32 %v4471, %v6243
        %6245 = vmatpush1.msra.mxu0 %v6244
        %6246 = vmatprep.subr.mxu0 0.0
        %6247 = vmatpush2.msra.mxu0 0.0
        %6248 = vmatprep.subr.mxu0 0.0
        %6249 = vmatpush2.msra.mxu0 0.0
        %6250 = vmatprep.subr.mxu0 0.0
        %6251 = vmatpush2.msra.mxu0 0.0
        %6252 = vmatprep.subr.mxu0 0.0
        %6253 = vmatpush2.msra.mxu0 0.0
        %6254 = vmatprep.subr.mxu0 0.0
        %6255 = vmatpush2.msra.mxu0 0.0
        %6256 = vmatprep.subr.mxu0 0.0
        %6257 = vmatpush2.msra.mxu0 0.0
        %6258 = vmatprep.subr.mxu0 0.0
        %6259 = vmatpush2.msra.mxu0 0.0
        %6260 = vmatprep.subr.mxu0 0.0
        %6261 = vmatpush2.msra.mxu0 0.0
        %6262 = vmatprep.subr.mxu0 0.0
        %6263 = vmatpush2.msra.mxu0 0.0
        %6264 = vmatprep.subr.mxu0 0.0
        %6265 = vmatpush2.msra.mxu0 0.0
        %6266 = vmatprep.subr.mxu0 0.0
        %6267 = vmatpush2.msra.mxu0 0.0
        %6268 = vmatprep.subr.mxu0 0.0
        %6269 = vmatpush2.msra.mxu0 0.0
        %6270 = vmatprep.subr.mxu0 0.0
        %6271 = vmatpush2.msra.mxu0 0.0
        %6272 = vmatprep.subr.mxu0 0.0
        %6273 = vmatpush2.msra.mxu0 0.0
        %6274 = vmatprep.subr.mxu0 0.0
        %6275 = vmatpush2.msra.mxu0 0.0
        %6276 = vmatprep.subr.mxu0 0.0
        %6277 = vmatpush2.msra.mxu0 0.0
        %6278 = vmatprep.mubr.f32.mxu0 0.0
        %v6279 = vand.u32 %v5773, 4294901760
        %v6280 = vsub.f32 %v5773, %v6279
        %6281 = vmatmul.mubr.f32.gmra.mxu0 %v6280
        %v6282 = vpop.f32.mrf.mxu0
        %v6283 = vadd.f32 %v6119, %v6282
        %v6284 = vpop.f32.mrf.mxu0
        %6285 = vmatprep.mubr.f32.mxu0 0.0
        %v6286 = vand.u32 %v5776, 4294901760
        %v6287 = vsub.f32 %v5776, %v6286
        %6288 = vmatmul.mubr.f32.gmra.mxu0 %v6287
        %v6289 = vpop.f32.mrf.mxu0
        %v6290 = vadd.f32 %v6125, %v6289
        %v6291 = vpop.f32.mrf.mxu0
        %6292 = vmatprep.mubr.f32.mxu0 0.0
        %v6293 = vand.u32 %v5779, 4294901760
        %v6294 = vsub.f32 %v5779, %v6293
        %6295 = vmatmul.mubr.f32.gmra.mxu0 %v6294
        %v6296 = vpop.f32.mrf.mxu0
        %v6297 = vadd.f32 %v6131, %v6296
        %v6298 = vpop.f32.mrf.mxu0
        %6299 = vmatprep.mubr.f32.mxu0 0.0
        %v6300 = vand.u32 %v5782, 4294901760
        %v6301 = vsub.f32 %v5782, %v6300
        %6302 = vmatmul.mubr.f32.gmra.mxu0 %v6301
        %v6303 = vpop.f32.mrf.mxu0
        %v6304 = vadd.f32 %v6137, %v6303
        %v6305 = vpop.f32.mrf.mxu0
        %6306 = vmatprep.mubr.f32.mxu0 0.0
        %v6307 = vand.u32 %v5785, 4294901760
        %v6308 = vsub.f32 %v5785, %v6307
        %6309 = vmatmul.mubr.f32.gmra.mxu0 %v6308
        %v6310 = vpop.f32.mrf.mxu0
        %v6311 = vadd.f32 %v6143, %v6310
        %v6312 = vpop.f32.mrf.mxu0
        %6313 = vmatprep.mubr.f32.mxu0 0.0
        %v6314 = vand.u32 %v5788, 4294901760
        %v6315 = vsub.f32 %v5788, %v6314
        %6316 = vmatmul.mubr.f32.gmra.mxu0 %v6315
        %v6317 = vpop.f32.mrf.mxu0
        %v6318 = vadd.f32 %v6149, %v6317
        %v6319 = vpop.f32.mrf.mxu0
        %6320 = vmatprep.mubr.f32.mxu0 0.0
        %v6321 = vand.u32 %v5791, 4294901760
        %v6322 = vsub.f32 %v5791, %v6321
        %6323 = vmatmul.mubr.f32.gmra.mxu0 %v6322
        %v6324 = vpop.f32.mrf.mxu0
        %v6325 = vadd.f32 %v6155, %v6324
        %v6326 = vpop.f32.mrf.mxu0
        %6327 = vmatprep.mubr.f32.mxu0 0.0
        %v6328 = vand.u32 %v5794, 4294901760
        %v6329 = vsub.f32 %v5794, %v6328
        %6330 = vmatmul.mubr.f32.gmra.mxu0 %v6329
        %v6331 = vpop.f32.mrf.mxu0
        %v6332 = vadd.f32 %v6161, %v6331
        %v6333 = vpop.f32.mrf.mxu0
        %6334 = vmatprep.mubr.f32.mxu0 0.0
        %v6335 = vand.u32 %v5797, 4294901760
        %v6336 = vsub.f32 %v5797, %v6335
        %6337 = vmatmul.mubr.f32.gmra.mxu0 %v6336
        %v6338 = vpop.f32.mrf.mxu0
        %v6339 = vadd.f32 %v6167, %v6338
        %v6340 = vpop.f32.mrf.mxu0
        %6341 = vmatprep.mubr.f32.mxu0 0.0
        %v6342 = vand.u32 %v5800, 4294901760
        %v6343 = vsub.f32 %v5800, %v6342
        %6344 = vmatmul.mubr.f32.gmra.mxu0 %v6343
        %v6345 = vpop.f32.mrf.mxu0
        %v6346 = vadd.f32 %v6173, %v6345
        %v6347 = vpop.f32.mrf.mxu0
        %6348 = vmatprep.mubr.f32.mxu0 0.0
        %v6349 = vand.u32 %v5803, 4294901760
        %v6350 = vsub.f32 %v5803, %v6349
        %6351 = vmatmul.mubr.f32.gmra.mxu0 %v6350
        %v6352 = vpop.f32.mrf.mxu0
        %v6353 = vadd.f32 %v6179, %v6352
        %v6354 = vpop.f32.mrf.mxu0
        %6355 = vmatprep.mubr.f32.mxu0 0.0
        %v6356 = vand.u32 %v5806, 4294901760
        %v6357 = vsub.f32 %v5806, %v6356
        %6358 = vmatmul.mubr.f32.gmra.mxu0 %v6357
        %v6359 = vpop.f32.mrf.mxu0
        %v6360 = vadd.f32 %v6185, %v6359
        %v6361 = vpop.f32.mrf.mxu0
        %6362 = vmatprep.mubr.f32.mxu0 0.0
        %v6363 = vand.u32 %v5809, 4294901760
        %v6364 = vsub.f32 %v5809, %v6363
        %6365 = vmatmul.mubr.f32.gmra.mxu0 %v6364
        %v6366 = vpop.f32.mrf.mxu0
        %v6367 = vadd.f32 %v6191, %v6366
        %v6368 = vpop.f32.mrf.mxu0
        %6369 = vmatprep.mubr.f32.mxu0 0.0
        %v6370 = vand.u32 %v5812, 4294901760
        %v6371 = vsub.f32 %v5812, %v6370
        %6372 = vmatmul.mubr.f32.gmra.mxu0 %v6371
        %v6373 = vpop.f32.mrf.mxu0
        %v6374 = vadd.f32 %v6197, %v6373
        %v6375 = vpop.f32.mrf.mxu0
        %6376 = vmatprep.mubr.f32.mxu0 0.0
        %v6377 = vand.u32 %v5815, 4294901760
        %v6378 = vsub.f32 %v5815, %v6377
        %6379 = vmatmul.mubr.f32.gmra.mxu0 %v6378
        %v6380 = vpop.f32.mrf.mxu0
        %v6381 = vadd.f32 %v6203, %v6380
        %v6382 = vpop.f32.mrf.mxu0
        %6383 = vmatprep.mubr.f32.mxu0 0.0
        %v6384 = vand.u32 %v5818, 4294901760
        %v6385 = vsub.f32 %v5818, %v6384
        %6386 = vmatmul.mubr.f32.gmra.mxu0 %v6385
        %v6387 = vpop.f32.mrf.mxu0
        %v6388 = vadd.f32 %v6209, %v6387
        %v6389 = vpop.f32.mrf.mxu0
        %6390 = vdwg.mxu0
        %6391 = vmatprep.subr.mxu0 0.0
        %6392 = vmatpush1.msra.mxu0 0.0
        %6393 = vmatprep.subr.mxu0 0.0
        %6394 = vmatpush1.msra.mxu0 0.0
        %6395 = vmatprep.subr.mxu0 0.0
        %6396 = vmatpush1.msra.mxu0 0.0
        %6397 = vmatprep.subr.mxu0 0.0
        %6398 = vmatpush1.msra.mxu0 0.0
        %6399 = vmatprep.subr.mxu0 0.0
        %6400 = vmatpush1.msra.mxu0 0.0
        %6401 = vmatprep.subr.mxu0 0.0
        %6402 = vmatpush1.msra.mxu0 0.0
        %6403 = vmatprep.subr.mxu0 0.0
        %6404 = vmatpush1.msra.mxu0 0.0
        %6405 = vmatprep.subr.mxu0 0.0
        %6406 = vmatpush1.msra.mxu0 0.0
        %6407 = vmatprep.subr.mxu0 0.0
        %6408 = vmatpush1.msra.mxu0 0.0
        %6409 = vmatprep.subr.mxu0 0.0
        %6410 = vmatpush1.msra.mxu0 0.0
        %6411 = vmatprep.subr.mxu0 0.0
        %6412 = vmatpush1.msra.mxu0 0.0
        %6413 = vmatprep.subr.mxu0 0.0
        %6414 = vmatpush1.msra.mxu0 0.0
        %6415 = vmatprep.subr.mxu0 0.0
        %6416 = vmatpush1.msra.mxu0 0.0
        %6417 = vmatprep.subr.mxu0 0.0
        %6418 = vmatpush1.msra.mxu0 0.0
        %6419 = vmatprep.subr.mxu0 0.0
        %6420 = vmatpush1.msra.mxu0 0.0
        %6421 = vmatprep.subr.mxu0 0.0
        %v6422 = vand.u32 %v4471, 4294901760
        %6423 = vmatpush1.msra.mxu0 %v6422
        %6424 = vmatprep.subr.mxu0 0.0
        %6425 = vmatpush2.msra.mxu0 0.0
        %6426 = vmatprep.subr.mxu0 0.0
        %6427 = vmatpush2.msra.mxu0 0.0
        %6428 = vmatprep.subr.mxu0 0.0
        %6429 = vmatpush2.msra.mxu0 0.0
        %6430 = vmatprep.subr.mxu0 0.0
        %6431 = vmatpush2.msra.mxu0 0.0
        %6432 = vmatprep.subr.mxu0 0.0
        %6433 = vmatpush2.msra.mxu0 0.0
        %6434 = vmatprep.subr.mxu0 0.0
        %6435 = vmatpush2.msra.mxu0 0.0
        %6436 = vmatprep.subr.mxu0 0.0
        %6437 = vmatpush2.msra.mxu0 0.0
        %6438 = vmatprep.subr.mxu0 0.0
        %6439 = vmatpush2.msra.mxu0 0.0
        %6440 = vmatprep.subr.mxu0 0.0
        %6441 = vmatpush2.msra.mxu0 0.0
        %6442 = vmatprep.subr.mxu0 0.0
        %6443 = vmatpush2.msra.mxu0 0.0
        %6444 = vmatprep.subr.mxu0 0.0
        %6445 = vmatpush2.msra.mxu0 0.0
        %6446 = vmatprep.subr.mxu0 0.0
        %6447 = vmatpush2.msra.mxu0 0.0
        %6448 = vmatprep.subr.mxu0 0.0
        %6449 = vmatpush2.msra.mxu0 0.0
        %6450 = vmatprep.subr.mxu0 0.0
        %6451 = vmatpush2.msra.mxu0 0.0
        %6452 = vmatprep.subr.mxu0 0.0
        %6453 = vmatpush2.msra.mxu0 0.0
        %6454 = vmatprep.subr.mxu0 0.0
        %6455 = vmatpush2.msra.mxu0 0.0
        %6456 = vmatprep.mubr.f32.mxu0 0.0
        %v6457 = vand.u32 %v5773, 4294901760
        %v6458 = vsub.f32 %v5773, %v6457
        %v6459 = vand.u32 %v6458, 4294901760
        %6460 = vmatmul.mubr.f32.gmra.mxu0 %v6459
        %v6461 = vpop.f32.mrf.mxu0
        %v6462 = vadd.f32 %v6283, %v6461
        %v6463 = vpop.f32.mrf.mxu0
        %6464 = vmatprep.mubr.f32.mxu0 0.0
        %v6465 = vand.u32 %v5776, 4294901760
        %v6466 = vsub.f32 %v5776, %v6465
        %v6467 = vand.u32 %v6466, 4294901760
        %6468 = vmatmul.mubr.f32.gmra.mxu0 %v6467
        %v6469 = vpop.f32.mrf.mxu0
        %v6470 = vadd.f32 %v6290, %v6469
        %v6471 = vpop.f32.mrf.mxu0
        %6472 = vmatprep.mubr.f32.mxu0 0.0
        %v6473 = vand.u32 %v5779, 4294901760
        %v6474 = vsub.f32 %v5779, %v6473
        %v6475 = vand.u32 %v6474, 4294901760
        %6476 = vmatmul.mubr.f32.gmra.mxu0 %v6475
        %v6477 = vpop.f32.mrf.mxu0
        %v6478 = vadd.f32 %v6297, %v6477
        %v6479 = vpop.f32.mrf.mxu0
        %6480 = vmatprep.mubr.f32.mxu0 0.0
        %v6481 = vand.u32 %v5782, 4294901760
        %v6482 = vsub.f32 %v5782, %v6481
        %v6483 = vand.u32 %v6482, 4294901760
        %6484 = vmatmul.mubr.f32.gmra.mxu0 %v6483
        %v6485 = vpop.f32.mrf.mxu0
        %v6486 = vadd.f32 %v6304, %v6485
        %v6487 = vpop.f32.mrf.mxu0
        %6488 = vmatprep.mubr.f32.mxu0 0.0
        %v6489 = vand.u32 %v5785, 4294901760
        %v6490 = vsub.f32 %v5785, %v6489
        %v6491 = vand.u32 %v6490, 4294901760
        %6492 = vmatmul.mubr.f32.gmra.mxu0 %v6491
        %v6493 = vpop.f32.mrf.mxu0
        %v6494 = vadd.f32 %v6311, %v6493
        %v6495 = vpop.f32.mrf.mxu0
        %6496 = vmatprep.mubr.f32.mxu0 0.0
        %v6497 = vand.u32 %v5788, 4294901760
        %v6498 = vsub.f32 %v5788, %v6497
        %v6499 = vand.u32 %v6498, 4294901760
        %6500 = vmatmul.mubr.f32.gmra.mxu0 %v6499
        %v6501 = vpop.f32.mrf.mxu0
        %v6502 = vadd.f32 %v6318, %v6501
        %v6503 = vpop.f32.mrf.mxu0
        %6504 = vmatprep.mubr.f32.mxu0 0.0
        %v6505 = vand.u32 %v5791, 4294901760
        %v6506 = vsub.f32 %v5791, %v6505
        %v6507 = vand.u32 %v6506, 4294901760
        %6508 = vmatmul.mubr.f32.gmra.mxu0 %v6507
        %v6509 = vpop.f32.mrf.mxu0
        %v6510 = vadd.f32 %v6325, %v6509
        %v6511 = vpop.f32.mrf.mxu0
        %6512 = vmatprep.mubr.f32.mxu0 0.0
        %v6513 = vand.u32 %v5794, 4294901760
        %v6514 = vsub.f32 %v5794, %v6513
        %v6515 = vand.u32 %v6514, 4294901760
        %6516 = vmatmul.mubr.f32.gmra.mxu0 %v6515
        %v6517 = vpop.f32.mrf.mxu0
        %v6518 = vadd.f32 %v6332, %v6517
        %v6519 = vpop.f32.mrf.mxu0
        %6520 = vmatprep.mubr.f32.mxu0 0.0
        %v6521 = vand.u32 %v5797, 4294901760
        %v6522 = vsub.f32 %v5797, %v6521
        %v6523 = vand.u32 %v6522, 4294901760
        %6524 = vmatmul.mubr.f32.gmra.mxu0 %v6523
        %v6525 = vpop.f32.mrf.mxu0
        %v6526 = vadd.f32 %v6339, %v6525
        %v6527 = vpop.f32.mrf.mxu0
        %6528 = vmatprep.mubr.f32.mxu0 0.0
        %v6529 = vand.u32 %v5800, 4294901760
        %v6530 = vsub.f32 %v5800, %v6529
        %v6531 = vand.u32 %v6530, 4294901760
        %6532 = vmatmul.mubr.f32.gmra.mxu0 %v6531
        %v6533 = vpop.f32.mrf.mxu0
        %v6534 = vadd.f32 %v6346, %v6533
        %v6535 = vpop.f32.mrf.mxu0
        %6536 = vmatprep.mubr.f32.mxu0 0.0
        %v6537 = vand.u32 %v5803, 4294901760
        %v6538 = vsub.f32 %v5803, %v6537
        %v6539 = vand.u32 %v6538, 4294901760
        %6540 = vmatmul.mubr.f32.gmra.mxu0 %v6539
        %v6541 = vpop.f32.mrf.mxu0
        %v6542 = vadd.f32 %v6353, %v6541
        %v6543 = vpop.f32.mrf.mxu0
        %6544 = vmatprep.mubr.f32.mxu0 0.0
        %v6545 = vand.u32 %v5806, 4294901760
        %v6546 = vsub.f32 %v5806, %v6545
        %v6547 = vand.u32 %v6546, 4294901760
        %6548 = vmatmul.mubr.f32.gmra.mxu0 %v6547
        %v6549 = vpop.f32.mrf.mxu0
        %v6550 = vadd.f32 %v6360, %v6549
        %v6551 = vpop.f32.mrf.mxu0
        %6552 = vmatprep.mubr.f32.mxu0 0.0
        %v6553 = vand.u32 %v5809, 4294901760
        %v6554 = vsub.f32 %v5809, %v6553
        %v6555 = vand.u32 %v6554, 4294901760
        %6556 = vmatmul.mubr.f32.gmra.mxu0 %v6555
        %v6557 = vpop.f32.mrf.mxu0
        %v6558 = vadd.f32 %v6367, %v6557
        %v6559 = vpop.f32.mrf.mxu0
        %6560 = vmatprep.mubr.f32.mxu0 0.0
        %v6561 = vand.u32 %v5812, 4294901760
        %v6562 = vsub.f32 %v5812, %v6561
        %v6563 = vand.u32 %v6562, 4294901760
        %6564 = vmatmul.mubr.f32.gmra.mxu0 %v6563
        %v6565 = vpop.f32.mrf.mxu0
        %v6566 = vadd.f32 %v6374, %v6565
        %v6567 = vpop.f32.mrf.mxu0
        %6568 = vmatprep.mubr.f32.mxu0 0.0
        %v6569 = vand.u32 %v5815, 4294901760
        %v6570 = vsub.f32 %v5815, %v6569
        %v6571 = vand.u32 %v6570, 4294901760
        %6572 = vmatmul.mubr.f32.gmra.mxu0 %v6571
        %v6573 = vpop.f32.mrf.mxu0
        %v6574 = vadd.f32 %v6381, %v6573
        %v6575 = vpop.f32.mrf.mxu0
        %6576 = vmatprep.mubr.f32.mxu0 0.0
        %v6577 = vand.u32 %v5818, 4294901760
        %v6578 = vsub.f32 %v5818, %v6577
        %v6579 = vand.u32 %v6578, 4294901760
        %6580 = vmatmul.mubr.f32.gmra.mxu0 %v6579
        %v6581 = vpop.f32.mrf.mxu0
        %v6582 = vadd.f32 %v6388, %v6581
        %v6583 = vpop.f32.mrf.mxu0
        %6584 = vdwg.mxu0
        %6585 = vmatprep.subr.mxu0 0.0
        %6586 = vmatpush1.msra.mxu0 0.0
        %6587 = vmatprep.subr.mxu0 0.0
        %6588 = vmatpush1.msra.mxu0 0.0
        %6589 = vmatprep.subr.mxu0 0.0
        %6590 = vmatpush1.msra.mxu0 0.0
        %6591 = vmatprep.subr.mxu0 0.0
        %6592 = vmatpush1.msra.mxu0 0.0
        %6593 = vmatprep.subr.mxu0 0.0
        %6594 = vmatpush1.msra.mxu0 0.0
        %6595 = vmatprep.subr.mxu0 0.0
        %6596 = vmatpush1.msra.mxu0 0.0
        %6597 = vmatprep.subr.mxu0 0.0
        %6598 = vmatpush1.msra.mxu0 0.0
        %6599 = vmatprep.subr.mxu0 0.0
        %6600 = vmatpush1.msra.mxu0 0.0
        %6601 = vmatprep.subr.mxu0 0.0
        %6602 = vmatpush1.msra.mxu0 0.0
        %6603 = vmatprep.subr.mxu0 0.0
        %6604 = vmatpush1.msra.mxu0 0.0
        %6605 = vmatprep.subr.mxu0 0.0
        %6606 = vmatpush1.msra.mxu0 0.0
        %6607 = vmatprep.subr.mxu0 0.0
        %6608 = vmatpush1.msra.mxu0 0.0
        %6609 = vmatprep.subr.mxu0 0.0
        %6610 = vmatpush1.msra.mxu0 0.0
        %6611 = vmatprep.subr.mxu0 0.0
        %6612 = vmatpush1.msra.mxu0 0.0
        %6613 = vmatprep.subr.mxu0 0.0
        %6614 = vmatpush1.msra.mxu0 0.0
        %6615 = vmatprep.subr.mxu0 0.0
        %v6616 = vand.u32 %v4471, 4294901760
        %v6617 = vsub.f32 %v4471, %v6616
        %v6618 = vand.u32 %v6617, 4294901760
        %6619 = vmatpush1.msra.mxu0 %v6618
        %6620 = vmatprep.subr.mxu0 0.0
        %6621 = vmatpush2.msra.mxu0 0.0
        %6622 = vmatprep.subr.mxu0 0.0
        %6623 = vmatpush2.msra.mxu0 0.0
        %6624 = vmatprep.subr.mxu0 0.0
        %6625 = vmatpush2.msra.mxu0 0.0
        %6626 = vmatprep.subr.mxu0 0.0
        %6627 = vmatpush2.msra.mxu0 0.0
        %6628 = vmatprep.subr.mxu0 0.0
        %6629 = vmatpush2.msra.mxu0 0.0
        %6630 = vmatprep.subr.mxu0 0.0
        %6631 = vmatpush2.msra.mxu0 0.0
        %6632 = vmatprep.subr.mxu0 0.0
        %6633 = vmatpush2.msra.mxu0 0.0
        %6634 = vmatprep.subr.mxu0 0.0
        %6635 = vmatpush2.msra.mxu0 0.0
        %6636 = vmatprep.subr.mxu0 0.0
        %6637 = vmatpush2.msra.mxu0 0.0
        %6638 = vmatprep.subr.mxu0 0.0
        %6639 = vmatpush2.msra.mxu0 0.0
        %6640 = vmatprep.subr.mxu0 0.0
        %6641 = vmatpush2.msra.mxu0 0.0
        %6642 = vmatprep.subr.mxu0 0.0
        %6643 = vmatpush2.msra.mxu0 0.0
        %6644 = vmatprep.subr.mxu0 0.0
        %6645 = vmatpush2.msra.mxu0 0.0
        %6646 = vmatprep.subr.mxu0 0.0
        %6647 = vmatpush2.msra.mxu0 0.0
        %6648 = vmatprep.subr.mxu0 0.0
        %6649 = vmatpush2.msra.mxu0 0.0
        %6650 = vmatprep.subr.mxu0 0.0
        %6651 = vmatpush2.msra.mxu0 0.0
        %6652 = vmatprep.mubr.f32.mxu0 0.0
        %v6653 = vand.u32 %v5773, 4294901760
        %6654 = vmatmul.mubr.f32.gmra.mxu0 %v6653
        %v6655 = vpop.f32.mrf.mxu0
        %v6656 = vadd.f32 %v6462, %v6655
        %v6657 = vpop.f32.mrf.mxu0
        %6658 = vmatprep.mubr.f32.mxu0 0.0
        %v6659 = vand.u32 %v5776, 4294901760
        %6660 = vmatmul.mubr.f32.gmra.mxu0 %v6659
        %v6661 = vpop.f32.mrf.mxu0
        %v6662 = vadd.f32 %v6470, %v6661
        %v6663 = vpop.f32.mrf.mxu0
        %6664 = vmatprep.mubr.f32.mxu0 0.0
        %v6665 = vand.u32 %v5779, 4294901760
        %6666 = vmatmul.mubr.f32.gmra.mxu0 %v6665
        %v6667 = vpop.f32.mrf.mxu0
        %v6668 = vadd.f32 %v6478, %v6667
        %v6669 = vpop.f32.mrf.mxu0
        %6670 = vmatprep.mubr.f32.mxu0 0.0
        %v6671 = vand.u32 %v5782, 4294901760
        %6672 = vmatmul.mubr.f32.gmra.mxu0 %v6671
        %v6673 = vpop.f32.mrf.mxu0
        %v6674 = vadd.f32 %v6486, %v6673
        %v6675 = vpop.f32.mrf.mxu0
        %6676 = vmatprep.mubr.f32.mxu0 0.0
        %v6677 = vand.u32 %v5785, 4294901760
        %6678 = vmatmul.mubr.f32.gmra.mxu0 %v6677
        %v6679 = vpop.f32.mrf.mxu0
        %v6680 = vadd.f32 %v6494, %v6679
        %v6681 = vpop.f32.mrf.mxu0
        %6682 = vmatprep.mubr.f32.mxu0 0.0
        %v6683 = vand.u32 %v5788, 4294901760
        %6684 = vmatmul.mubr.f32.gmra.mxu0 %v6683
        %v6685 = vpop.f32.mrf.mxu0
        %v6686 = vadd.f32 %v6502, %v6685
        %v6687 = vpop.f32.mrf.mxu0
        %6688 = vmatprep.mubr.f32.mxu0 0.0
        %v6689 = vand.u32 %v5791, 4294901760
        %6690 = vmatmul.mubr.f32.gmra.mxu0 %v6689
        %v6691 = vpop.f32.mrf.mxu0
        %v6692 = vadd.f32 %v6510, %v6691
        %v6693 = vpop.f32.mrf.mxu0
        %6694 = vmatprep.mubr.f32.mxu0 0.0
        %v6695 = vand.u32 %v5794, 4294901760
        %6696 = vmatmul.mubr.f32.gmra.mxu0 %v6695
        %v6697 = vpop.f32.mrf.mxu0
        %v6698 = vadd.f32 %v6518, %v6697
        %v6699 = vpop.f32.mrf.mxu0
        %6700 = vmatprep.mubr.f32.mxu0 0.0
        %v6701 = vand.u32 %v5797, 4294901760
        %6702 = vmatmul.mubr.f32.gmra.mxu0 %v6701
        %v6703 = vpop.f32.mrf.mxu0
        %v6704 = vadd.f32 %v6526, %v6703
        %v6705 = vpop.f32.mrf.mxu0
        %6706 = vmatprep.mubr.f32.mxu0 0.0
        %v6707 = vand.u32 %v5800, 4294901760
        %6708 = vmatmul.mubr.f32.gmra.mxu0 %v6707
        %v6709 = vpop.f32.mrf.mxu0
        %v6710 = vadd.f32 %v6534, %v6709
        %v6711 = vpop.f32.mrf.mxu0
        %6712 = vmatprep.mubr.f32.mxu0 0.0
        %v6713 = vand.u32 %v5803, 4294901760
        %6714 = vmatmul.mubr.f32.gmra.mxu0 %v6713
        %v6715 = vpop.f32.mrf.mxu0
        %v6716 = vadd.f32 %v6542, %v6715
        %v6717 = vpop.f32.mrf.mxu0
        %6718 = vmatprep.mubr.f32.mxu0 0.0
        %v6719 = vand.u32 %v5806, 4294901760
        %6720 = vmatmul.mubr.f32.gmra.mxu0 %v6719
        %v6721 = vpop.f32.mrf.mxu0
        %v6722 = vadd.f32 %v6550, %v6721
        %v6723 = vpop.f32.mrf.mxu0
        %6724 = vmatprep.mubr.f32.mxu0 0.0
        %v6725 = vand.u32 %v5809, 4294901760
        %6726 = vmatmul.mubr.f32.gmra.mxu0 %v6725
        %v6727 = vpop.f32.mrf.mxu0
        %v6728 = vadd.f32 %v6558, %v6727
        %v6729 = vpop.f32.mrf.mxu0
        %6730 = vmatprep.mubr.f32.mxu0 0.0
        %v6731 = vand.u32 %v5812, 4294901760
        %6732 = vmatmul.mubr.f32.gmra.mxu0 %v6731
        %v6733 = vpop.f32.mrf.mxu0
        %v6734 = vadd.f32 %v6566, %v6733
        %v6735 = vpop.f32.mrf.mxu0
        %6736 = vmatprep.mubr.f32.mxu0 0.0
        %v6737 = vand.u32 %v5815, 4294901760
        %6738 = vmatmul.mubr.f32.gmra.mxu0 %v6737
        %v6739 = vpop.f32.mrf.mxu0
        %v6740 = vadd.f32 %v6574, %v6739
        %v6741 = vpop.f32.mrf.mxu0
        %6742 = vmatprep.mubr.f32.mxu0 0.0
        %v6743 = vand.u32 %v5818, 4294901760
        %6744 = vmatmul.mubr.f32.gmra.mxu0 %v6743
        %v6745 = vpop.f32.mrf.mxu0
        %v6746 = vadd.f32 %v6582, %v6745
        %v6747 = vpop.f32.mrf.mxu0
        %6748 = vdwg.mxu0
        %6749 = vmatprep.subr.mxu0 0.0
        %6750 = vmatpush1.msra.mxu0 0.0
        %6751 = vmatprep.subr.mxu0 0.0
        %6752 = vmatpush1.msra.mxu0 0.0
        %6753 = vmatprep.subr.mxu0 0.0
        %6754 = vmatpush1.msra.mxu0 0.0
        %6755 = vmatprep.subr.mxu0 0.0
        %6756 = vmatpush1.msra.mxu0 0.0
        %6757 = vmatprep.subr.mxu0 0.0
        %6758 = vmatpush1.msra.mxu0 0.0
        %6759 = vmatprep.subr.mxu0 0.0
        %6760 = vmatpush1.msra.mxu0 0.0
        %6761 = vmatprep.subr.mxu0 0.0
        %6762 = vmatpush1.msra.mxu0 0.0
        %6763 = vmatprep.subr.mxu0 0.0
        %6764 = vmatpush1.msra.mxu0 0.0
        %6765 = vmatprep.subr.mxu0 0.0
        %6766 = vmatpush1.msra.mxu0 0.0
        %6767 = vmatprep.subr.mxu0 0.0
        %6768 = vmatpush1.msra.mxu0 0.0
        %6769 = vmatprep.subr.mxu0 0.0
        %6770 = vmatpush1.msra.mxu0 0.0
        %6771 = vmatprep.subr.mxu0 0.0
        %6772 = vmatpush1.msra.mxu0 0.0
        %6773 = vmatprep.subr.mxu0 0.0
        %6774 = vmatpush1.msra.mxu0 0.0
        %6775 = vmatprep.subr.mxu0 0.0
        %6776 = vmatpush1.msra.mxu0 0.0
        %6777 = vmatprep.subr.mxu0 0.0
        %6778 = vmatpush1.msra.mxu0 0.0
        %6779 = vmatprep.subr.mxu0 0.0
        %v6780 = vand.u32 %v4471, 4294901760
        %6781 = vmatpush1.msra.mxu0 %v6780
        %6782 = vmatprep.subr.mxu0 0.0
        %6783 = vmatpush2.msra.mxu0 0.0
        %6784 = vmatprep.subr.mxu0 0.0
        %6785 = vmatpush2.msra.mxu0 0.0
        %6786 = vmatprep.subr.mxu0 0.0
        %6787 = vmatpush2.msra.mxu0 0.0
        %6788 = vmatprep.subr.mxu0 0.0
        %6789 = vmatpush2.msra.mxu0 0.0
        %6790 = vmatprep.subr.mxu0 0.0
        %6791 = vmatpush2.msra.mxu0 0.0
        %6792 = vmatprep.subr.mxu0 0.0
        %6793 = vmatpush2.msra.mxu0 0.0
        %6794 = vmatprep.subr.mxu0 0.0
        %6795 = vmatpush2.msra.mxu0 0.0
        %6796 = vmatprep.subr.mxu0 0.0
        %6797 = vmatpush2.msra.mxu0 0.0
        %6798 = vmatprep.subr.mxu0 0.0
        %6799 = vmatpush2.msra.mxu0 0.0
        %6800 = vmatprep.subr.mxu0 0.0
        %6801 = vmatpush2.msra.mxu0 0.0
        %6802 = vmatprep.subr.mxu0 0.0
        %6803 = vmatpush2.msra.mxu0 0.0
        %6804 = vmatprep.subr.mxu0 0.0
        %6805 = vmatpush2.msra.mxu0 0.0
        %6806 = vmatprep.subr.mxu0 0.0
        %6807 = vmatpush2.msra.mxu0 0.0
        %6808 = vmatprep.subr.mxu0 0.0
        %6809 = vmatpush2.msra.mxu0 0.0
        %6810 = vmatprep.subr.mxu0 0.0
        %6811 = vmatpush2.msra.mxu0 0.0
        %6812 = vmatprep.subr.mxu0 0.0
        %6813 = vmatpush2.msra.mxu0 0.0
        %6814 = vmatprep.mubr.f32.mxu0 0.0
        %v6815 = vand.u32 %v5773, 4294901760
        %6816 = vmatmul.mubr.f32.gmra.mxu0 %v6815
        %v6817 = vpop.f32.mrf.mxu0
        %v6818 = vadd.f32 %v6656, %v6817
        %v6819 = vpop.f32.mrf.mxu0
        %6820 = vmatprep.mubr.f32.mxu0 0.0
        %v6821 = vand.u32 %v5776, 4294901760
        %6822 = vmatmul.mubr.f32.gmra.mxu0 %v6821
        %v6823 = vpop.f32.mrf.mxu0
        %v6824 = vadd.f32 %v6662, %v6823
        %v6825 = vpop.f32.mrf.mxu0
        %6826 = vmatprep.mubr.f32.mxu0 0.0
        %v6827 = vand.u32 %v5779, 4294901760
        %6828 = vmatmul.mubr.f32.gmra.mxu0 %v6827
        %v6829 = vpop.f32.mrf.mxu0
        %v6830 = vadd.f32 %v6668, %v6829
        %v6831 = vpop.f32.mrf.mxu0
        %6832 = vmatprep.mubr.f32.mxu0 0.0
        %v6833 = vand.u32 %v5782, 4294901760
        %6834 = vmatmul.mubr.f32.gmra.mxu0 %v6833
        %v6835 = vpop.f32.mrf.mxu0
        %v6836 = vadd.f32 %v6674, %v6835
        %v6837 = vpop.f32.mrf.mxu0
        %6838 = vmatprep.mubr.f32.mxu0 0.0
        %v6839 = vand.u32 %v5785, 4294901760
        %6840 = vmatmul.mubr.f32.gmra.mxu0 %v6839
        %v6841 = vpop.f32.mrf.mxu0
        %v6842 = vadd.f32 %v6680, %v6841
        %v6843 = vpop.f32.mrf.mxu0
        %6844 = vmatprep.mubr.f32.mxu0 0.0
        %v6845 = vand.u32 %v5788, 4294901760
        %6846 = vmatmul.mubr.f32.gmra.mxu0 %v6845
        %v6847 = vpop.f32.mrf.mxu0
        %v6848 = vadd.f32 %v6686, %v6847
        %v6849 = vpop.f32.mrf.mxu0
        %6850 = vmatprep.mubr.f32.mxu0 0.0
        %v6851 = vand.u32 %v5791, 4294901760
        %6852 = vmatmul.mubr.f32.gmra.mxu0 %v6851
        %v6853 = vpop.f32.mrf.mxu0
        %v6854 = vadd.f32 %v6692, %v6853
        %v6855 = vpop.f32.mrf.mxu0
        %6856 = vmatprep.mubr.f32.mxu0 0.0
        %v6857 = vand.u32 %v5794, 4294901760
        %6858 = vmatmul.mubr.f32.gmra.mxu0 %v6857
        %v6859 = vpop.f32.mrf.mxu0
        %v6860 = vadd.f32 %v6698, %v6859
        %v6861 = vpop.f32.mrf.mxu0
        %6862 = vmatprep.mubr.f32.mxu0 0.0
        %v6863 = vand.u32 %v5797, 4294901760
        %6864 = vmatmul.mubr.f32.gmra.mxu0 %v6863
        %v6865 = vpop.f32.mrf.mxu0
        %v6866 = vadd.f32 %v6704, %v6865
        %v6867 = vpop.f32.mrf.mxu0
        %6868 = vmatprep.mubr.f32.mxu0 0.0
        %v6869 = vand.u32 %v5800, 4294901760
        %6870 = vmatmul.mubr.f32.gmra.mxu0 %v6869
        %v6871 = vpop.f32.mrf.mxu0
        %v6872 = vadd.f32 %v6710, %v6871
        %v6873 = vpop.f32.mrf.mxu0
        %6874 = vmatprep.mubr.f32.mxu0 0.0
        %v6875 = vand.u32 %v5803, 4294901760
        %6876 = vmatmul.mubr.f32.gmra.mxu0 %v6875
        %v6877 = vpop.f32.mrf.mxu0
        %v6878 = vadd.f32 %v6716, %v6877
        %v6879 = vpop.f32.mrf.mxu0
        %6880 = vmatprep.mubr.f32.mxu0 0.0
        %v6881 = vand.u32 %v5806, 4294901760
        %6882 = vmatmul.mubr.f32.gmra.mxu0 %v6881
        %v6883 = vpop.f32.mrf.mxu0
        %v6884 = vadd.f32 %v6722, %v6883
        %v6885 = vpop.f32.mrf.mxu0
        %6886 = vmatprep.mubr.f32.mxu0 0.0
        %v6887 = vand.u32 %v5809, 4294901760
        %6888 = vmatmul.mubr.f32.gmra.mxu0 %v6887
        %v6889 = vpop.f32.mrf.mxu0
        %v6890 = vadd.f32 %v6728, %v6889
        %v6891 = vpop.f32.mrf.mxu0
        %6892 = vmatprep.mubr.f32.mxu0 0.0
        %v6893 = vand.u32 %v5812, 4294901760
        %6894 = vmatmul.mubr.f32.gmra.mxu0 %v6893
        %v6895 = vpop.f32.mrf.mxu0
        %v6896 = vadd.f32 %v6734, %v6895
        %v6897 = vpop.f32.mrf.mxu0
        %6898 = vmatprep.mubr.f32.mxu0 0.0
        %v6899 = vand.u32 %v5815, 4294901760
        %6900 = vmatmul.mubr.f32.gmra.mxu0 %v6899
        %v6901 = vpop.f32.mrf.mxu0
        %v6902 = vadd.f32 %v6740, %v6901
        %v6903 = vpop.f32.mrf.mxu0
        %6904 = vmatprep.mubr.f32.mxu0 0.0
        %v6905 = vand.u32 %v5818, 4294901760
        %6906 = vmatmul.mubr.f32.gmra.mxu0 %v6905
        %v6907 = vpop.f32.mrf.mxu0
        %v6908 = vadd.f32 %v6746, %v6907
        %v6909 = vpop.f32.mrf.mxu0
        %6910 = vdwg.mxu0
        %v6911 = vsub.f32 0.0, %v5599
        %v6912 = vsub.f32 0.0, %v5605
        %v6913 = vsub.f32 0.0, %v5611
        %v6914 = vsub.f32 0.0, %v5617
        %v6915 = vsub.f32 0.0, %v5623
        %v6916 = vsub.f32 0.0, %v5629
        %v6917 = vsub.f32 0.0, %v5635
        %v6918 = vsub.f32 0.0, %v5641
        %v6919 = vsub.f32 0.0, %v5647
        %v6920 = vsub.f32 0.0, %v5653
        %v6921 = vsub.f32 0.0, %v5659
        %v6922 = vsub.f32 0.0, %v5665
        %v6923 = vsub.f32 0.0, %v5671
        %v6924 = vsub.f32 0.0, %v5677
        %v6925 = vsub.f32 0.0, %v5683
        %v6926 = vsub.f32 0.0, %v5689
        %v6927 = vmul.f32 %v6911, 1.442695
        %v6928 = vpow.pop %v6927
        %v6929 = vmul.f32 %v6912, 1.442695
        %v6930 = vpow.pop %v6929
        %v6931 = vmul.f32 %v6913, 1.442695
        %v6932 = vpow.pop %v6931
        %v6933 = vmul.f32 %v6914, 1.442695
        %v6934 = vpow.pop %v6933
        %v6935 = vmul.f32 %v6915, 1.442695
        %v6936 = vpow.pop %v6935
        %v6937 = vmul.f32 %v6916, 1.442695
        %v6938 = vpow.pop %v6937
        %v6939 = vmul.f32 %v6917, 1.442695
        %v6940 = vpow.pop %v6939
        %v6941 = vmul.f32 %v6918, 1.442695
        %v6942 = vpow.pop %v6941
        %v6943 = vmul.f32 %v6919, 1.442695
        %v6944 = vpow.pop %v6943
        %v6945 = vmul.f32 %v6920, 1.442695
        %v6946 = vpow.pop %v6945
        %v6947 = vmul.f32 %v6921, 1.442695
        %v6948 = vpow.pop %v6947
        %v6949 = vmul.f32 %v6922, 1.442695
        %v6950 = vpow.pop %v6949
        %v6951 = vmul.f32 %v6923, 1.442695
        %v6952 = vpow.pop %v6951
        %v6953 = vmul.f32 %v6924, 1.442695
        %v6954 = vpow.pop %v6953
        %v6955 = vmul.f32 %v6925, 1.442695
        %v6956 = vpow.pop %v6955
        %v6957 = vmul.f32 %v6926, 1.442695
        %v6958 = vpow.pop %v6957
        %v6959 = vadd.f32 %v6928, 1.0
        %v6960 = vadd.f32 %v6930, 1.0
        %v6961 = vadd.f32 %v6932, 1.0
        %v6962 = vadd.f32 %v6934, 1.0
        %v6963 = vadd.f32 %v6936, 1.0
        %v6964 = vadd.f32 %v6938, 1.0
        %v6965 = vadd.f32 %v6940, 1.0
        %v6966 = vadd.f32 %v6942, 1.0
        %v6967 = vadd.f32 %v6944, 1.0
        %v6968 = vadd.f32 %v6946, 1.0
        %v6969 = vadd.f32 %v6948, 1.0
        %v6970 = vadd.f32 %v6950, 1.0
        %v6971 = vadd.f32 %v6952, 1.0
        %v6972 = vadd.f32 %v6954, 1.0
        %v6973 = vadd.f32 %v6956, 1.0
        %v6974 = vadd.f32 %v6958, 1.0
        %v6975 = vrcp.pop %v6959
        %v6976 = vmul.f32 1.0, %v6975
        %v6977 = vrcp.pop %v6960
        %v6978 = vmul.f32 1.0, %v6977
        %v6979 = vrcp.pop %v6961
        %v6980 = vmul.f32 1.0, %v6979
        %v6981 = vrcp.pop %v6962
        %v6982 = vmul.f32 1.0, %v6981
        %v6983 = vrcp.pop %v6963
        %v6984 = vmul.f32 1.0, %v6983
        %v6985 = vrcp.pop %v6964
        %v6986 = vmul.f32 1.0, %v6985
        %v6987 = vrcp.pop %v6965
        %v6988 = vmul.f32 1.0, %v6987
        %v6989 = vrcp.pop %v6966
        %v6990 = vmul.f32 1.0, %v6989
        %v6991 = vrcp.pop %v6967
        %v6992 = vmul.f32 1.0, %v6991
        %v6993 = vrcp.pop %v6968
        %v6994 = vmul.f32 1.0, %v6993
        %v6995 = vrcp.pop %v6969
        %v6996 = vmul.f32 1.0, %v6995
        %v6997 = vrcp.pop %v6970
        %v6998 = vmul.f32 1.0, %v6997
        %v6999 = vrcp.pop %v6971
        %v7000 = vmul.f32 1.0, %v6999
        %v7001 = vrcp.pop %v6972
        %v7002 = vmul.f32 1.0, %v7001
        %v7003 = vrcp.pop %v6973
        %v7004 = vmul.f32 1.0, %v7003
        %v7005 = vrcp.pop %v6974
        %v7006 = vmul.f32 1.0, %v7005
        %v7007 = vsub.f32 0.0, %v6818
        %v7008 = vsub.f32 0.0, %v6824
        %v7009 = vsub.f32 0.0, %v6830
        %v7010 = vsub.f32 0.0, %v6836
        %v7011 = vsub.f32 0.0, %v6842
        %v7012 = vsub.f32 0.0, %v6848
        %v7013 = vsub.f32 0.0, %v6854
        %v7014 = vsub.f32 0.0, %v6860
        %v7015 = vsub.f32 0.0, %v6866
        %v7016 = vsub.f32 0.0, %v6872
        %v7017 = vsub.f32 0.0, %v6878
        %v7018 = vsub.f32 0.0, %v6884
        %v7019 = vsub.f32 0.0, %v6890
        %v7020 = vsub.f32 0.0, %v6896
        %v7021 = vsub.f32 0.0, %v6902
        %v7022 = vsub.f32 0.0, %v6908
        %v7023 = vmul.f32 %v7007, 1.442695
        %v7024 = vpow.pop %v7023
        %v7025 = vmul.f32 %v7008, 1.442695
        %v7026 = vpow.pop %v7025
        %v7027 = vmul.f32 %v7009, 1.442695
        %v7028 = vpow.pop %v7027
        %v7029 = vmul.f32 %v7010, 1.442695
        %v7030 = vpow.pop %v7029
        %v7031 = vmul.f32 %v7011, 1.442695
        %v7032 = vpow.pop %v7031
        %v7033 = vmul.f32 %v7012, 1.442695
        %v7034 = vpow.pop %v7033
        %v7035 = vmul.f32 %v7013, 1.442695
        %v7036 = vpow.pop %v7035
        %v7037 = vmul.f32 %v7014, 1.442695
        %v7038 = vpow.pop %v7037
        %v7039 = vmul.f32 %v7015, 1.442695
        %v7040 = vpow.pop %v7039
        %v7041 = vmul.f32 %v7016, 1.442695
        %v7042 = vpow.pop %v7041
        %v7043 = vmul.f32 %v7017, 1.442695
        %v7044 = vpow.pop %v7043
        %v7045 = vmul.f32 %v7018, 1.442695
        %v7046 = vpow.pop %v7045
        %v7047 = vmul.f32 %v7019, 1.442695
        %v7048 = vpow.pop %v7047
        %v7049 = vmul.f32 %v7020, 1.442695
        %v7050 = vpow.pop %v7049
        %v7051 = vmul.f32 %v7021, 1.442695
        %v7052 = vpow.pop %v7051
        %v7053 = vmul.f32 %v7022, 1.442695
        %v7054 = vpow.pop %v7053
        %v7055 = vadd.f32 %v7024, 1.0
        %v7056 = vadd.f32 %v7026, 1.0
        %v7057 = vadd.f32 %v7028, 1.0
        %v7058 = vadd.f32 %v7030, 1.0
        %v7059 = vadd.f32 %v7032, 1.0
        %v7060 = vadd.f32 %v7034, 1.0
        %v7061 = vadd.f32 %v7036, 1.0
        %v7062 = vadd.f32 %v7038, 1.0
        %v7063 = vadd.f32 %v7040, 1.0
        %v7064 = vadd.f32 %v7042, 1.0
        %v7065 = vadd.f32 %v7044, 1.0
        %v7066 = vadd.f32 %v7046, 1.0
        %v7067 = vadd.f32 %v7048, 1.0
        %v7068 = vadd.f32 %v7050, 1.0
        %v7069 = vadd.f32 %v7052, 1.0
        %v7070 = vadd.f32 %v7054, 1.0
        %v7071 = vrcp.pop %v7055
        %v7072 = vmul.f32 1.0, %v7071
        %v7073 = vrcp.pop %v7056
        %v7074 = vmul.f32 1.0, %v7073
        %v7075 = vrcp.pop %v7057
        %v7076 = vmul.f32 1.0, %v7075
        %v7077 = vrcp.pop %v7058
        %v7078 = vmul.f32 1.0, %v7077
        %v7079 = vrcp.pop %v7059
        %v7080 = vmul.f32 1.0, %v7079
        %v7081 = vrcp.pop %v7060
        %v7082 = vmul.f32 1.0, %v7081
        %v7083 = vrcp.pop %v7061
        %v7084 = vmul.f32 1.0, %v7083
        %v7085 = vrcp.pop %v7062
        %v7086 = vmul.f32 1.0, %v7085
        %v7087 = vrcp.pop %v7063
        %v7088 = vmul.f32 1.0, %v7087
        %v7089 = vrcp.pop %v7064
        %v7090 = vmul.f32 1.0, %v7089
        %v7091 = vrcp.pop %v7065
        %v7092 = vmul.f32 1.0, %v7091
        %v7093 = vrcp.pop %v7066
        %v7094 = vmul.f32 1.0, %v7093
        %v7095 = vrcp.pop %v7067
        %v7096 = vmul.f32 1.0, %v7095
        %v7097 = vrcp.pop %v7068
        %v7098 = vmul.f32 1.0, %v7097
        %v7099 = vrcp.pop %v7069
        %v7100 = vmul.f32 1.0, %v7099
        %v7101 = vrcp.pop %v7070
        %v7102 = vmul.f32 1.0, %v7101
        %vm7103 = vcmask 130048
        %v7105 = vsel %vm7103, %v6976, 0
        %v7108 = vsel %vm7103, %v6978, 0
        %v7111 = vsel %vm7103, %v6980, 0
        %v7114 = vsel %vm7103, %v6982, 0
        %v7117 = vsel %vm7103, %v6984, 0
        %v7120 = vsel %vm7103, %v6986, 0
        %v7123 = vsel %vm7103, %v6988, 0
        %v7126 = vsel %vm7103, %v6990, 0
        %v7129 = vsel %vm7103, %v6992, 0
        %v7132 = vsel %vm7103, %v6994, 0
        %v7135 = vsel %vm7103, %v6996, 0
        %v7138 = vsel %vm7103, %v6998, 0
        %v7141 = vsel %vm7103, %v7000, 0
        %v7144 = vsel %vm7103, %v7002, 0
        %v7147 = vsel %vm7103, %v7004, 0
        %v7150 = vsel %vm7103, %v7006, 0
        %7152 = vmatprep.subr.mxu0 0.0
        %7153 = vmatpush1.msra.mxu0 0.0
        %7154 = vmatprep.subr.mxu0 0.0
        %7155 = vmatpush1.msra.mxu0 0.0
        %7156 = vmatprep.subr.mxu0 0.0
        %7157 = vmatpush1.msra.mxu0 0.0
        %7158 = vmatprep.subr.mxu0 0.0
        %7159 = vmatpush1.msra.mxu0 0.0
        %7160 = vmatprep.subr.mxu0 0.0
        %7161 = vmatpush1.msra.mxu0 0.0
        %7162 = vmatprep.subr.mxu0 0.0
        %7163 = vmatpush1.msra.mxu0 0.0
        %7164 = vmatprep.subr.mxu0 0.0
        %7165 = vmatpush1.msra.mxu0 0.0
        %7166 = vmatprep.subr.mxu0 0.0
        %7167 = vmatpush1.msra.mxu0 0.0
        %7168 = vmatprep.subr.mxu0 0.0
        %7169 = vmatpush1.msra.mxu0 0.0
        %7170 = vmatprep.subr.mxu0 0.0
        %7171 = vmatpush1.msra.mxu0 0.0
        %7172 = vmatprep.subr.mxu0 0.0
        %7173 = vmatpush1.msra.mxu0 0.0
        %7174 = vmatprep.subr.mxu0 0.0
        %7175 = vmatpush1.msra.mxu0 0.0
        %7176 = vmatprep.subr.mxu0 0.0
        %7177 = vmatpush1.msra.mxu0 0.0
        %7178 = vmatprep.subr.mxu0 0.0
        %7179 = vmatpush1.msra.mxu0 0.0
        %v7180 = vand.u32 %v364, 4294901760
        %7181 = vmatprep.subr.mxu0 %v7180
        %v7182 = vand.u32 %v363, 4294901760
        %7183 = vmatpush1.msra.mxu0 %v7182
        %v7184 = vand.u32 %v362, 4294901760
        %7185 = vmatprep.subr.mxu0 %v7184
        %v7186 = vand.u32 %v361, 4294901760
        %7187 = vmatpush1.msra.mxu0 %v7186
        %7188 = vmatprep.subr.mxu0 0.0
        %7189 = vmatpush2.msra.mxu0 0.0
        %7190 = vmatprep.subr.mxu0 0.0
        %7191 = vmatpush2.msra.mxu0 0.0
        %7192 = vmatprep.subr.mxu0 0.0
        %7193 = vmatpush2.msra.mxu0 0.0
        %7194 = vmatprep.subr.mxu0 0.0
        %7195 = vmatpush2.msra.mxu0 0.0
        %7196 = vmatprep.subr.mxu0 0.0
        %7197 = vmatpush2.msra.mxu0 0.0
        %7198 = vmatprep.subr.mxu0 0.0
        %7199 = vmatpush2.msra.mxu0 0.0
        %7200 = vmatprep.subr.mxu0 0.0
        %7201 = vmatpush2.msra.mxu0 0.0
        %7202 = vmatprep.subr.mxu0 0.0
        %7203 = vmatpush2.msra.mxu0 0.0
        %7204 = vmatprep.subr.mxu0 0.0
        %7205 = vmatpush2.msra.mxu0 0.0
        %7206 = vmatprep.subr.mxu0 0.0
        %7207 = vmatpush2.msra.mxu0 0.0
        %7208 = vmatprep.subr.mxu0 0.0
        %7209 = vmatpush2.msra.mxu0 0.0
        %7210 = vmatprep.subr.mxu0 0.0
        %7211 = vmatpush2.msra.mxu0 0.0
        %7212 = vmatprep.subr.mxu0 0.0
        %7213 = vmatpush2.msra.mxu0 0.0
        %7214 = vmatprep.subr.mxu0 0.0
        %7215 = vmatpush2.msra.mxu0 0.0
        %7216 = vmatprep.subr.mxu0 0.0
        %7217 = vmatpush2.msra.mxu0 0.0
        %7218 = vmatprep.subr.mxu0 0.0
        %7219 = vmatpush2.msra.mxu0 0.0
        %7220 = vmatprep.mubr.f32.mxu0 0.0
        %v7221 = vand.u32 %v7105, 4294901760
        %v7222 = vsub.f32 %v7105, %v7221
        %v7223 = vand.u32 %v7222, 4294901760
        %v7224 = vsub.f32 %v7222, %v7223
        %v7225 = vand.u32 %v7224, 4294901760
        %7226 = vmatmul.mubr.f32.gmra.mxu0 %v7225
        %v7227 = vpop.f32.mrf.mxu0
        %v7228 = vadd.f32 0.0, %v7227
        %v7229 = vpop.f32.mrf.mxu0
        %v7230 = vadd.f32 0.0, %v7229
        %7231 = vmatprep.mubr.f32.mxu0 0.0
        %v7232 = vand.u32 %v7108, 4294901760
        %v7233 = vsub.f32 %v7108, %v7232
        %v7234 = vand.u32 %v7233, 4294901760
        %v7235 = vsub.f32 %v7233, %v7234
        %v7236 = vand.u32 %v7235, 4294901760
        %7237 = vmatmul.mubr.f32.gmra.mxu0 %v7236
        %v7238 = vpop.f32.mrf.mxu0
        %v7239 = vadd.f32 0.0, %v7238
        %v7240 = vpop.f32.mrf.mxu0
        %v7241 = vadd.f32 0.0, %v7240
        %7242 = vmatprep.mubr.f32.mxu0 0.0
        %v7243 = vand.u32 %v7111, 4294901760
        %v7244 = vsub.f32 %v7111, %v7243
        %v7245 = vand.u32 %v7244, 4294901760
        %v7246 = vsub.f32 %v7244, %v7245
        %v7247 = vand.u32 %v7246, 4294901760
        %7248 = vmatmul.mubr.f32.gmra.mxu0 %v7247
        %v7249 = vpop.f32.mrf.mxu0
        %v7250 = vadd.f32 0.0, %v7249
        %v7251 = vpop.f32.mrf.mxu0
        %v7252 = vadd.f32 0.0, %v7251
        %7253 = vmatprep.mubr.f32.mxu0 0.0
        %v7254 = vand.u32 %v7114, 4294901760
        %v7255 = vsub.f32 %v7114, %v7254
        %v7256 = vand.u32 %v7255, 4294901760
        %v7257 = vsub.f32 %v7255, %v7256
        %v7258 = vand.u32 %v7257, 4294901760
        %7259 = vmatmul.mubr.f32.gmra.mxu0 %v7258
        %v7260 = vpop.f32.mrf.mxu0
        %v7261 = vadd.f32 0.0, %v7260
        %v7262 = vpop.f32.mrf.mxu0
        %v7263 = vadd.f32 0.0, %v7262
        %7264 = vmatprep.mubr.f32.mxu0 0.0
        %v7265 = vand.u32 %v7117, 4294901760
        %v7266 = vsub.f32 %v7117, %v7265
        %v7267 = vand.u32 %v7266, 4294901760
        %v7268 = vsub.f32 %v7266, %v7267
        %v7269 = vand.u32 %v7268, 4294901760
        %7270 = vmatmul.mubr.f32.gmra.mxu0 %v7269
        %v7271 = vpop.f32.mrf.mxu0
        %v7272 = vadd.f32 0.0, %v7271
        %v7273 = vpop.f32.mrf.mxu0
        %v7274 = vadd.f32 0.0, %v7273
        %7275 = vmatprep.mubr.f32.mxu0 0.0
        %v7276 = vand.u32 %v7120, 4294901760
        %v7277 = vsub.f32 %v7120, %v7276
        %v7278 = vand.u32 %v7277, 4294901760
        %v7279 = vsub.f32 %v7277, %v7278
        %v7280 = vand.u32 %v7279, 4294901760
        %7281 = vmatmul.mubr.f32.gmra.mxu0 %v7280
        %v7282 = vpop.f32.mrf.mxu0
        %v7283 = vadd.f32 0.0, %v7282
        %v7284 = vpop.f32.mrf.mxu0
        %v7285 = vadd.f32 0.0, %v7284
        %7286 = vmatprep.mubr.f32.mxu0 0.0
        %v7287 = vand.u32 %v7123, 4294901760
        %v7288 = vsub.f32 %v7123, %v7287
        %v7289 = vand.u32 %v7288, 4294901760
        %v7290 = vsub.f32 %v7288, %v7289
        %v7291 = vand.u32 %v7290, 4294901760
        %7292 = vmatmul.mubr.f32.gmra.mxu0 %v7291
        %v7293 = vpop.f32.mrf.mxu0
        %v7294 = vadd.f32 0.0, %v7293
        %v7295 = vpop.f32.mrf.mxu0
        %v7296 = vadd.f32 0.0, %v7295
        %7297 = vmatprep.mubr.f32.mxu0 0.0
        %v7298 = vand.u32 %v7126, 4294901760
        %v7299 = vsub.f32 %v7126, %v7298
        %v7300 = vand.u32 %v7299, 4294901760
        %v7301 = vsub.f32 %v7299, %v7300
        %v7302 = vand.u32 %v7301, 4294901760
        %7303 = vmatmul.mubr.f32.gmra.mxu0 %v7302
        %v7304 = vpop.f32.mrf.mxu0
        %v7305 = vadd.f32 0.0, %v7304
        %v7306 = vpop.f32.mrf.mxu0
        %v7307 = vadd.f32 0.0, %v7306
        %7308 = vmatprep.mubr.f32.mxu0 0.0
        %v7309 = vand.u32 %v7129, 4294901760
        %v7310 = vsub.f32 %v7129, %v7309
        %v7311 = vand.u32 %v7310, 4294901760
        %v7312 = vsub.f32 %v7310, %v7311
        %v7313 = vand.u32 %v7312, 4294901760
        %7314 = vmatmul.mubr.f32.gmra.mxu0 %v7313
        %v7315 = vpop.f32.mrf.mxu0
        %v7316 = vadd.f32 0.0, %v7315
        %v7317 = vpop.f32.mrf.mxu0
        %v7318 = vadd.f32 0.0, %v7317
        %7319 = vmatprep.mubr.f32.mxu0 0.0
        %v7320 = vand.u32 %v7132, 4294901760
        %v7321 = vsub.f32 %v7132, %v7320
        %v7322 = vand.u32 %v7321, 4294901760
        %v7323 = vsub.f32 %v7321, %v7322
        %v7324 = vand.u32 %v7323, 4294901760
        %7325 = vmatmul.mubr.f32.gmra.mxu0 %v7324
        %v7326 = vpop.f32.mrf.mxu0
        %v7327 = vadd.f32 0.0, %v7326
        %v7328 = vpop.f32.mrf.mxu0
        %v7329 = vadd.f32 0.0, %v7328
        %7330 = vmatprep.mubr.f32.mxu0 0.0
        %v7331 = vand.u32 %v7135, 4294901760
        %v7332 = vsub.f32 %v7135, %v7331
        %v7333 = vand.u32 %v7332, 4294901760
        %v7334 = vsub.f32 %v7332, %v7333
        %v7335 = vand.u32 %v7334, 4294901760
        %7336 = vmatmul.mubr.f32.gmra.mxu0 %v7335
        %v7337 = vpop.f32.mrf.mxu0
        %v7338 = vadd.f32 0.0, %v7337
        %v7339 = vpop.f32.mrf.mxu0
        %v7340 = vadd.f32 0.0, %v7339
        %7341 = vmatprep.mubr.f32.mxu0 0.0
        %v7342 = vand.u32 %v7138, 4294901760
        %v7343 = vsub.f32 %v7138, %v7342
        %v7344 = vand.u32 %v7343, 4294901760
        %v7345 = vsub.f32 %v7343, %v7344
        %v7346 = vand.u32 %v7345, 4294901760
        %7347 = vmatmul.mubr.f32.gmra.mxu0 %v7346
        %v7348 = vpop.f32.mrf.mxu0
        %v7349 = vadd.f32 0.0, %v7348
        %v7350 = vpop.f32.mrf.mxu0
        %v7351 = vadd.f32 0.0, %v7350
        %7352 = vmatprep.mubr.f32.mxu0 0.0
        %v7353 = vand.u32 %v7141, 4294901760
        %v7354 = vsub.f32 %v7141, %v7353
        %v7355 = vand.u32 %v7354, 4294901760
        %v7356 = vsub.f32 %v7354, %v7355
        %v7357 = vand.u32 %v7356, 4294901760
        %7358 = vmatmul.mubr.f32.gmra.mxu0 %v7357
        %v7359 = vpop.f32.mrf.mxu0
        %v7360 = vadd.f32 0.0, %v7359
        %v7361 = vpop.f32.mrf.mxu0
        %v7362 = vadd.f32 0.0, %v7361
        %7363 = vmatprep.mubr.f32.mxu0 0.0
        %v7364 = vand.u32 %v7144, 4294901760
        %v7365 = vsub.f32 %v7144, %v7364
        %v7366 = vand.u32 %v7365, 4294901760
        %v7367 = vsub.f32 %v7365, %v7366
        %v7368 = vand.u32 %v7367, 4294901760
        %7369 = vmatmul.mubr.f32.gmra.mxu0 %v7368
        %v7370 = vpop.f32.mrf.mxu0
        %v7371 = vadd.f32 0.0, %v7370
        %v7372 = vpop.f32.mrf.mxu0
        %v7373 = vadd.f32 0.0, %v7372
        %7374 = vmatprep.mubr.f32.mxu0 0.0
        %v7375 = vand.u32 %v7147, 4294901760
        %v7376 = vsub.f32 %v7147, %v7375
        %v7377 = vand.u32 %v7376, 4294901760
        %v7378 = vsub.f32 %v7376, %v7377
        %v7379 = vand.u32 %v7378, 4294901760
        %7380 = vmatmul.mubr.f32.gmra.mxu0 %v7379
        %v7381 = vpop.f32.mrf.mxu0
        %v7382 = vadd.f32 0.0, %v7381
        %v7383 = vpop.f32.mrf.mxu0
        %v7384 = vadd.f32 0.0, %v7383
        %7385 = vmatprep.mubr.f32.mxu0 0.0
        %v7386 = vand.u32 %v7150, 4294901760
        %v7387 = vsub.f32 %v7150, %v7386
        %v7388 = vand.u32 %v7387, 4294901760
        %v7389 = vsub.f32 %v7387, %v7388
        %v7390 = vand.u32 %v7389, 4294901760
        %7391 = vmatmul.mubr.f32.gmra.mxu0 %v7390
        %v7392 = vpop.f32.mrf.mxu0
        %v7393 = vadd.f32 0.0, %v7392
        %v7394 = vpop.f32.mrf.mxu0
        %v7395 = vadd.f32 0.0, %v7394
        %7396 = vdwg.mxu0
        %7397 = vmatprep.subr.mxu0 0.0
        %7398 = vmatpush1.msra.mxu0 0.0
        %7399 = vmatprep.subr.mxu0 0.0
        %7400 = vmatpush1.msra.mxu0 0.0
        %7401 = vmatprep.subr.mxu0 0.0
        %7402 = vmatpush1.msra.mxu0 0.0
        %7403 = vmatprep.subr.mxu0 0.0
        %7404 = vmatpush1.msra.mxu0 0.0
        %7405 = vmatprep.subr.mxu0 0.0
        %7406 = vmatpush1.msra.mxu0 0.0
        %7407 = vmatprep.subr.mxu0 0.0
        %7408 = vmatpush1.msra.mxu0 0.0
        %7409 = vmatprep.subr.mxu0 0.0
        %7410 = vmatpush1.msra.mxu0 0.0
        %7411 = vmatprep.subr.mxu0 0.0
        %7412 = vmatpush1.msra.mxu0 0.0
        %7413 = vmatprep.subr.mxu0 0.0
        %7414 = vmatpush1.msra.mxu0 0.0
        %7415 = vmatprep.subr.mxu0 0.0
        %7416 = vmatpush1.msra.mxu0 0.0
        %7417 = vmatprep.subr.mxu0 0.0
        %7418 = vmatpush1.msra.mxu0 0.0
        %7419 = vmatprep.subr.mxu0 0.0
        %7420 = vmatpush1.msra.mxu0 0.0
        %7421 = vmatprep.subr.mxu0 0.0
        %7422 = vmatpush1.msra.mxu0 0.0
        %7423 = vmatprep.subr.mxu0 0.0
        %7424 = vmatpush1.msra.mxu0 0.0
        %v7425 = vand.u32 %v364, 4294901760
        %v7426 = vsub.f32 %v364, %v7425
        %v7427 = vand.u32 %v7426, 4294901760
        %v7428 = vsub.f32 %v7426, %v7427
        %v7429 = vand.u32 %v7428, 4294901760
        %7430 = vmatprep.subr.mxu0 %v7429
        %v7431 = vand.u32 %v363, 4294901760
        %v7432 = vsub.f32 %v363, %v7431
        %v7433 = vand.u32 %v7432, 4294901760
        %v7434 = vsub.f32 %v7432, %v7433
        %v7435 = vand.u32 %v7434, 4294901760
        %7436 = vmatpush1.msra.mxu0 %v7435
        %v7437 = vand.u32 %v362, 4294901760
        %v7438 = vsub.f32 %v362, %v7437
        %v7439 = vand.u32 %v7438, 4294901760
        %v7440 = vsub.f32 %v7438, %v7439
        %v7441 = vand.u32 %v7440, 4294901760
        %7442 = vmatprep.subr.mxu0 %v7441
        %v7443 = vand.u32 %v361, 4294901760
        %v7444 = vsub.f32 %v361, %v7443
        %v7445 = vand.u32 %v7444, 4294901760
        %v7446 = vsub.f32 %v7444, %v7445
        %v7447 = vand.u32 %v7446, 4294901760
        %7448 = vmatpush1.msra.mxu0 %v7447
        %7449 = vmatprep.subr.mxu0 0.0
        %7450 = vmatpush2.msra.mxu0 0.0
        %7451 = vmatprep.subr.mxu0 0.0
        %7452 = vmatpush2.msra.mxu0 0.0
        %7453 = vmatprep.subr.mxu0 0.0
        %7454 = vmatpush2.msra.mxu0 0.0
        %7455 = vmatprep.subr.mxu0 0.0
        %7456 = vmatpush2.msra.mxu0 0.0
        %7457 = vmatprep.subr.mxu0 0.0
        %7458 = vmatpush2.msra.mxu0 0.0
        %7459 = vmatprep.subr.mxu0 0.0
        %7460 = vmatpush2.msra.mxu0 0.0
        %7461 = vmatprep.subr.mxu0 0.0
        %7462 = vmatpush2.msra.mxu0 0.0
        %7463 = vmatprep.subr.mxu0 0.0
        %7464 = vmatpush2.msra.mxu0 0.0
        %7465 = vmatprep.subr.mxu0 0.0
        %7466 = vmatpush2.msra.mxu0 0.0
        %7467 = vmatprep.subr.mxu0 0.0
        %7468 = vmatpush2.msra.mxu0 0.0
        %7469 = vmatprep.subr.mxu0 0.0
        %7470 = vmatpush2.msra.mxu0 0.0
        %7471 = vmatprep.subr.mxu0 0.0
        %7472 = vmatpush2.msra.mxu0 0.0
        %7473 = vmatprep.subr.mxu0 0.0
        %7474 = vmatpush2.msra.mxu0 0.0
        %7475 = vmatprep.subr.mxu0 0.0
        %7476 = vmatpush2.msra.mxu0 0.0
        %7477 = vmatprep.subr.mxu0 0.0
        %7478 = vmatpush2.msra.mxu0 0.0
        %7479 = vmatprep.subr.mxu0 0.0
        %7480 = vmatpush2.msra.mxu0 0.0
        %7481 = vmatprep.mubr.f32.mxu0 0.0
        %v7482 = vand.u32 %v7105, 4294901760
        %7483 = vmatmul.mubr.f32.gmra.mxu0 %v7482
        %v7484 = vpop.f32.mrf.mxu0
        %v7485 = vadd.f32 %v7228, %v7484
        %v7486 = vpop.f32.mrf.mxu0
        %v7487 = vadd.f32 %v7230, %v7486
        %7488 = vmatprep.mubr.f32.mxu0 0.0
        %v7489 = vand.u32 %v7108, 4294901760
        %7490 = vmatmul.mubr.f32.gmra.mxu0 %v7489
        %v7491 = vpop.f32.mrf.mxu0
        %v7492 = vadd.f32 %v7239, %v7491
        %v7493 = vpop.f32.mrf.mxu0
        %v7494 = vadd.f32 %v7241, %v7493
        %7495 = vmatprep.mubr.f32.mxu0 0.0
        %v7496 = vand.u32 %v7111, 4294901760
        %7497 = vmatmul.mubr.f32.gmra.mxu0 %v7496
        %v7498 = vpop.f32.mrf.mxu0
        %v7499 = vadd.f32 %v7250, %v7498
        %v7500 = vpop.f32.mrf.mxu0
        %v7501 = vadd.f32 %v7252, %v7500
        %7502 = vmatprep.mubr.f32.mxu0 0.0
        %v7503 = vand.u32 %v7114, 4294901760
        %7504 = vmatmul.mubr.f32.gmra.mxu0 %v7503
        %v7505 = vpop.f32.mrf.mxu0
        %v7506 = vadd.f32 %v7261, %v7505
        %v7507 = vpop.f32.mrf.mxu0
        %v7508 = vadd.f32 %v7263, %v7507
        %7509 = vmatprep.mubr.f32.mxu0 0.0
        %v7510 = vand.u32 %v7117, 4294901760
        %7511 = vmatmul.mubr.f32.gmra.mxu0 %v7510
        %v7512 = vpop.f32.mrf.mxu0
        %v7513 = vadd.f32 %v7272, %v7512
        %v7514 = vpop.f32.mrf.mxu0
        %v7515 = vadd.f32 %v7274, %v7514
        %7516 = vmatprep.mubr.f32.mxu0 0.0
        %v7517 = vand.u32 %v7120, 4294901760
        %7518 = vmatmul.mubr.f32.gmra.mxu0 %v7517
        %v7519 = vpop.f32.mrf.mxu0
        %v7520 = vadd.f32 %v7283, %v7519
        %v7521 = vpop.f32.mrf.mxu0
        %v7522 = vadd.f32 %v7285, %v7521
        %7523 = vmatprep.mubr.f32.mxu0 0.0
        %v7524 = vand.u32 %v7123, 4294901760
        %7525 = vmatmul.mubr.f32.gmra.mxu0 %v7524
        %v7526 = vpop.f32.mrf.mxu0
        %v7527 = vadd.f32 %v7294, %v7526
        %v7528 = vpop.f32.mrf.mxu0
        %v7529 = vadd.f32 %v7296, %v7528
        %7530 = vmatprep.mubr.f32.mxu0 0.0
        %v7531 = vand.u32 %v7126, 4294901760
        %7532 = vmatmul.mubr.f32.gmra.mxu0 %v7531
        %v7533 = vpop.f32.mrf.mxu0
        %v7534 = vadd.f32 %v7305, %v7533
        %v7535 = vpop.f32.mrf.mxu0
        %v7536 = vadd.f32 %v7307, %v7535
        %7537 = vmatprep.mubr.f32.mxu0 0.0
        %v7538 = vand.u32 %v7129, 4294901760
        %7539 = vmatmul.mubr.f32.gmra.mxu0 %v7538
        %v7540 = vpop.f32.mrf.mxu0
        %v7541 = vadd.f32 %v7316, %v7540
        %v7542 = vpop.f32.mrf.mxu0
        %v7543 = vadd.f32 %v7318, %v7542
        %7544 = vmatprep.mubr.f32.mxu0 0.0
        %v7545 = vand.u32 %v7132, 4294901760
        %7546 = vmatmul.mubr.f32.gmra.mxu0 %v7545
        %v7547 = vpop.f32.mrf.mxu0
        %v7548 = vadd.f32 %v7327, %v7547
        %v7549 = vpop.f32.mrf.mxu0
        %v7550 = vadd.f32 %v7329, %v7549
        %7551 = vmatprep.mubr.f32.mxu0 0.0
        %v7552 = vand.u32 %v7135, 4294901760
        %7553 = vmatmul.mubr.f32.gmra.mxu0 %v7552
        %v7554 = vpop.f32.mrf.mxu0
        %v7555 = vadd.f32 %v7338, %v7554
        %v7556 = vpop.f32.mrf.mxu0
        %v7557 = vadd.f32 %v7340, %v7556
        %7558 = vmatprep.mubr.f32.mxu0 0.0
        %v7559 = vand.u32 %v7138, 4294901760
        %7560 = vmatmul.mubr.f32.gmra.mxu0 %v7559
        %v7561 = vpop.f32.mrf.mxu0
        %v7562 = vadd.f32 %v7349, %v7561
        %v7563 = vpop.f32.mrf.mxu0
        %v7564 = vadd.f32 %v7351, %v7563
        %7565 = vmatprep.mubr.f32.mxu0 0.0
        %v7566 = vand.u32 %v7141, 4294901760
        %7567 = vmatmul.mubr.f32.gmra.mxu0 %v7566
        %v7568 = vpop.f32.mrf.mxu0
        %v7569 = vadd.f32 %v7360, %v7568
        %v7570 = vpop.f32.mrf.mxu0
        %v7571 = vadd.f32 %v7362, %v7570
        %7572 = vmatprep.mubr.f32.mxu0 0.0
        %v7573 = vand.u32 %v7144, 4294901760
        %7574 = vmatmul.mubr.f32.gmra.mxu0 %v7573
        %v7575 = vpop.f32.mrf.mxu0
        %v7576 = vadd.f32 %v7371, %v7575
        %v7577 = vpop.f32.mrf.mxu0
        %v7578 = vadd.f32 %v7373, %v7577
        %7579 = vmatprep.mubr.f32.mxu0 0.0
        %v7580 = vand.u32 %v7147, 4294901760
        %7581 = vmatmul.mubr.f32.gmra.mxu0 %v7580
        %v7582 = vpop.f32.mrf.mxu0
        %v7583 = vadd.f32 %v7382, %v7582
        %v7584 = vpop.f32.mrf.mxu0
        %v7585 = vadd.f32 %v7384, %v7584
        %7586 = vmatprep.mubr.f32.mxu0 0.0
        %v7587 = vand.u32 %v7150, 4294901760
        %7588 = vmatmul.mubr.f32.gmra.mxu0 %v7587
        %v7589 = vpop.f32.mrf.mxu0
        %v7590 = vadd.f32 %v7393, %v7589
        %v7591 = vpop.f32.mrf.mxu0
        %v7592 = vadd.f32 %v7395, %v7591
        %7593 = vdwg.mxu0
        %7594 = vmatprep.subr.mxu0 0.0
        %7595 = vmatpush1.msra.mxu0 0.0
        %7596 = vmatprep.subr.mxu0 0.0
        %7597 = vmatpush1.msra.mxu0 0.0
        %7598 = vmatprep.subr.mxu0 0.0
        %7599 = vmatpush1.msra.mxu0 0.0
        %7600 = vmatprep.subr.mxu0 0.0
        %7601 = vmatpush1.msra.mxu0 0.0
        %7602 = vmatprep.subr.mxu0 0.0
        %7603 = vmatpush1.msra.mxu0 0.0
        %7604 = vmatprep.subr.mxu0 0.0
        %7605 = vmatpush1.msra.mxu0 0.0
        %7606 = vmatprep.subr.mxu0 0.0
        %7607 = vmatpush1.msra.mxu0 0.0
        %7608 = vmatprep.subr.mxu0 0.0
        %7609 = vmatpush1.msra.mxu0 0.0
        %7610 = vmatprep.subr.mxu0 0.0
        %7611 = vmatpush1.msra.mxu0 0.0
        %7612 = vmatprep.subr.mxu0 0.0
        %7613 = vmatpush1.msra.mxu0 0.0
        %7614 = vmatprep.subr.mxu0 0.0
        %7615 = vmatpush1.msra.mxu0 0.0
        %7616 = vmatprep.subr.mxu0 0.0
        %7617 = vmatpush1.msra.mxu0 0.0
        %7618 = vmatprep.subr.mxu0 0.0
        %7619 = vmatpush1.msra.mxu0 0.0
        %7620 = vmatprep.subr.mxu0 0.0
        %7621 = vmatpush1.msra.mxu0 0.0
        %v7622 = vand.u32 %v364, 4294901760
        %v7623 = vsub.f32 %v364, %v7622
        %7624 = vmatprep.subr.mxu0 %v7623
        %v7625 = vand.u32 %v363, 4294901760
        %v7626 = vsub.f32 %v363, %v7625
        %7627 = vmatpush1.msra.mxu0 %v7626
        %v7628 = vand.u32 %v362, 4294901760
        %v7629 = vsub.f32 %v362, %v7628
        %7630 = vmatprep.subr.mxu0 %v7629
        %v7631 = vand.u32 %v361, 4294901760
        %v7632 = vsub.f32 %v361, %v7631
        %7633 = vmatpush1.msra.mxu0 %v7632
        %7634 = vmatprep.subr.mxu0 0.0
        %7635 = vmatpush2.msra.mxu0 0.0
        %7636 = vmatprep.subr.mxu0 0.0
        %7637 = vmatpush2.msra.mxu0 0.0
        %7638 = vmatprep.subr.mxu0 0.0
        %7639 = vmatpush2.msra.mxu0 0.0
        %7640 = vmatprep.subr.mxu0 0.0
        %7641 = vmatpush2.msra.mxu0 0.0
        %7642 = vmatprep.subr.mxu0 0.0
        %7643 = vmatpush2.msra.mxu0 0.0
        %7644 = vmatprep.subr.mxu0 0.0
        %7645 = vmatpush2.msra.mxu0 0.0
        %7646 = vmatprep.subr.mxu0 0.0
        %7647 = vmatpush2.msra.mxu0 0.0
        %7648 = vmatprep.subr.mxu0 0.0
        %7649 = vmatpush2.msra.mxu0 0.0
        %7650 = vmatprep.subr.mxu0 0.0
        %7651 = vmatpush2.msra.mxu0 0.0
        %7652 = vmatprep.subr.mxu0 0.0
        %7653 = vmatpush2.msra.mxu0 0.0
        %7654 = vmatprep.subr.mxu0 0.0
        %7655 = vmatpush2.msra.mxu0 0.0
        %7656 = vmatprep.subr.mxu0 0.0
        %7657 = vmatpush2.msra.mxu0 0.0
        %7658 = vmatprep.subr.mxu0 0.0
        %7659 = vmatpush2.msra.mxu0 0.0
        %7660 = vmatprep.subr.mxu0 0.0
        %7661 = vmatpush2.msra.mxu0 0.0
        %7662 = vmatprep.subr.mxu0 0.0
        %7663 = vmatpush2.msra.mxu0 0.0
        %7664 = vmatprep.subr.mxu0 0.0
        %7665 = vmatpush2.msra.mxu0 0.0
        %7666 = vmatprep.mubr.f32.mxu0 0.0
        %v7667 = vand.u32 %v7105, 4294901760
        %v7668 = vsub.f32 %v7105, %v7667
        %7669 = vmatmul.mubr.f32.gmra.mxu0 %v7668
        %v7670 = vpop.f32.mrf.mxu0
        %v7671 = vadd.f32 %v7485, %v7670
        %v7672 = vpop.f32.mrf.mxu0
        %v7673 = vadd.f32 %v7487, %v7672
        %7674 = vmatprep.mubr.f32.mxu0 0.0
        %v7675 = vand.u32 %v7108, 4294901760
        %v7676 = vsub.f32 %v7108, %v7675
        %7677 = vmatmul.mubr.f32.gmra.mxu0 %v7676
        %v7678 = vpop.f32.mrf.mxu0
        %v7679 = vadd.f32 %v7492, %v7678
        %v7680 = vpop.f32.mrf.mxu0
        %v7681 = vadd.f32 %v7494, %v7680
        %7682 = vmatprep.mubr.f32.mxu0 0.0
        %v7683 = vand.u32 %v7111, 4294901760
        %v7684 = vsub.f32 %v7111, %v7683
        %7685 = vmatmul.mubr.f32.gmra.mxu0 %v7684
        %v7686 = vpop.f32.mrf.mxu0
        %v7687 = vadd.f32 %v7499, %v7686
        %v7688 = vpop.f32.mrf.mxu0
        %v7689 = vadd.f32 %v7501, %v7688
        %7690 = vmatprep.mubr.f32.mxu0 0.0
        %v7691 = vand.u32 %v7114, 4294901760
        %v7692 = vsub.f32 %v7114, %v7691
        %7693 = vmatmul.mubr.f32.gmra.mxu0 %v7692
        %v7694 = vpop.f32.mrf.mxu0
        %v7695 = vadd.f32 %v7506, %v7694
        %v7696 = vpop.f32.mrf.mxu0
        %v7697 = vadd.f32 %v7508, %v7696
        %7698 = vmatprep.mubr.f32.mxu0 0.0
        %v7699 = vand.u32 %v7117, 4294901760
        %v7700 = vsub.f32 %v7117, %v7699
        %7701 = vmatmul.mubr.f32.gmra.mxu0 %v7700
        %v7702 = vpop.f32.mrf.mxu0
        %v7703 = vadd.f32 %v7513, %v7702
        %v7704 = vpop.f32.mrf.mxu0
        %v7705 = vadd.f32 %v7515, %v7704
        %7706 = vmatprep.mubr.f32.mxu0 0.0
        %v7707 = vand.u32 %v7120, 4294901760
        %v7708 = vsub.f32 %v7120, %v7707
        %7709 = vmatmul.mubr.f32.gmra.mxu0 %v7708
        %v7710 = vpop.f32.mrf.mxu0
        %v7711 = vadd.f32 %v7520, %v7710
        %v7712 = vpop.f32.mrf.mxu0
        %v7713 = vadd.f32 %v7522, %v7712
        %7714 = vmatprep.mubr.f32.mxu0 0.0
        %v7715 = vand.u32 %v7123, 4294901760
        %v7716 = vsub.f32 %v7123, %v7715
        %7717 = vmatmul.mubr.f32.gmra.mxu0 %v7716
        %v7718 = vpop.f32.mrf.mxu0
        %v7719 = vadd.f32 %v7527, %v7718
        %v7720 = vpop.f32.mrf.mxu0
        %v7721 = vadd.f32 %v7529, %v7720
        %7722 = vmatprep.mubr.f32.mxu0 0.0
        %v7723 = vand.u32 %v7126, 4294901760
        %v7724 = vsub.f32 %v7126, %v7723
        %7725 = vmatmul.mubr.f32.gmra.mxu0 %v7724
        %v7726 = vpop.f32.mrf.mxu0
        %v7727 = vadd.f32 %v7534, %v7726
        %v7728 = vpop.f32.mrf.mxu0
        %v7729 = vadd.f32 %v7536, %v7728
        %7730 = vmatprep.mubr.f32.mxu0 0.0
        %v7731 = vand.u32 %v7129, 4294901760
        %v7732 = vsub.f32 %v7129, %v7731
        %7733 = vmatmul.mubr.f32.gmra.mxu0 %v7732
        %v7734 = vpop.f32.mrf.mxu0
        %v7735 = vadd.f32 %v7541, %v7734
        %v7736 = vpop.f32.mrf.mxu0
        %v7737 = vadd.f32 %v7543, %v7736
        %7738 = vmatprep.mubr.f32.mxu0 0.0
        %v7739 = vand.u32 %v7132, 4294901760
        %v7740 = vsub.f32 %v7132, %v7739
        %7741 = vmatmul.mubr.f32.gmra.mxu0 %v7740
        %v7742 = vpop.f32.mrf.mxu0
        %v7743 = vadd.f32 %v7548, %v7742
        %v7744 = vpop.f32.mrf.mxu0
        %v7745 = vadd.f32 %v7550, %v7744
        %7746 = vmatprep.mubr.f32.mxu0 0.0
        %v7747 = vand.u32 %v7135, 4294901760
        %v7748 = vsub.f32 %v7135, %v7747
        %7749 = vmatmul.mubr.f32.gmra.mxu0 %v7748
        %v7750 = vpop.f32.mrf.mxu0
        %v7751 = vadd.f32 %v7555, %v7750
        %v7752 = vpop.f32.mrf.mxu0
        %v7753 = vadd.f32 %v7557, %v7752
        %7754 = vmatprep.mubr.f32.mxu0 0.0
        %v7755 = vand.u32 %v7138, 4294901760
        %v7756 = vsub.f32 %v7138, %v7755
        %7757 = vmatmul.mubr.f32.gmra.mxu0 %v7756
        %v7758 = vpop.f32.mrf.mxu0
        %v7759 = vadd.f32 %v7562, %v7758
        %v7760 = vpop.f32.mrf.mxu0
        %v7761 = vadd.f32 %v7564, %v7760
        %7762 = vmatprep.mubr.f32.mxu0 0.0
        %v7763 = vand.u32 %v7141, 4294901760
        %v7764 = vsub.f32 %v7141, %v7763
        %7765 = vmatmul.mubr.f32.gmra.mxu0 %v7764
        %v7766 = vpop.f32.mrf.mxu0
        %v7767 = vadd.f32 %v7569, %v7766
        %v7768 = vpop.f32.mrf.mxu0
        %v7769 = vadd.f32 %v7571, %v7768
        %7770 = vmatprep.mubr.f32.mxu0 0.0
        %v7771 = vand.u32 %v7144, 4294901760
        %v7772 = vsub.f32 %v7144, %v7771
        %7773 = vmatmul.mubr.f32.gmra.mxu0 %v7772
        %v7774 = vpop.f32.mrf.mxu0
        %v7775 = vadd.f32 %v7576, %v7774
        %v7776 = vpop.f32.mrf.mxu0
        %v7777 = vadd.f32 %v7578, %v7776
        %7778 = vmatprep.mubr.f32.mxu0 0.0
        %v7779 = vand.u32 %v7147, 4294901760
        %v7780 = vsub.f32 %v7147, %v7779
        %7781 = vmatmul.mubr.f32.gmra.mxu0 %v7780
        %v7782 = vpop.f32.mrf.mxu0
        %v7783 = vadd.f32 %v7583, %v7782
        %v7784 = vpop.f32.mrf.mxu0
        %v7785 = vadd.f32 %v7585, %v7784
        %7786 = vmatprep.mubr.f32.mxu0 0.0
        %v7787 = vand.u32 %v7150, 4294901760
        %v7788 = vsub.f32 %v7150, %v7787
        %7789 = vmatmul.mubr.f32.gmra.mxu0 %v7788
        %v7790 = vpop.f32.mrf.mxu0
        %v7791 = vadd.f32 %v7590, %v7790
        %v7792 = vpop.f32.mrf.mxu0
        %v7793 = vadd.f32 %v7592, %v7792
        %7794 = vdwg.mxu0
        %7795 = vmatprep.subr.mxu0 0.0
        %7796 = vmatpush1.msra.mxu0 0.0
        %7797 = vmatprep.subr.mxu0 0.0
        %7798 = vmatpush1.msra.mxu0 0.0
        %7799 = vmatprep.subr.mxu0 0.0
        %7800 = vmatpush1.msra.mxu0 0.0
        %7801 = vmatprep.subr.mxu0 0.0
        %7802 = vmatpush1.msra.mxu0 0.0
        %7803 = vmatprep.subr.mxu0 0.0
        %7804 = vmatpush1.msra.mxu0 0.0
        %7805 = vmatprep.subr.mxu0 0.0
        %7806 = vmatpush1.msra.mxu0 0.0
        %7807 = vmatprep.subr.mxu0 0.0
        %7808 = vmatpush1.msra.mxu0 0.0
        %7809 = vmatprep.subr.mxu0 0.0
        %7810 = vmatpush1.msra.mxu0 0.0
        %7811 = vmatprep.subr.mxu0 0.0
        %7812 = vmatpush1.msra.mxu0 0.0
        %7813 = vmatprep.subr.mxu0 0.0
        %7814 = vmatpush1.msra.mxu0 0.0
        %7815 = vmatprep.subr.mxu0 0.0
        %7816 = vmatpush1.msra.mxu0 0.0
        %7817 = vmatprep.subr.mxu0 0.0
        %7818 = vmatpush1.msra.mxu0 0.0
        %7819 = vmatprep.subr.mxu0 0.0
        %7820 = vmatpush1.msra.mxu0 0.0
        %7821 = vmatprep.subr.mxu0 0.0
        %7822 = vmatpush1.msra.mxu0 0.0
        %v7823 = vand.u32 %v364, 4294901760
        %7824 = vmatprep.subr.mxu0 %v7823
        %v7825 = vand.u32 %v363, 4294901760
        %7826 = vmatpush1.msra.mxu0 %v7825
        %v7827 = vand.u32 %v362, 4294901760
        %7828 = vmatprep.subr.mxu0 %v7827
        %v7829 = vand.u32 %v361, 4294901760
        %7830 = vmatpush1.msra.mxu0 %v7829
        %7831 = vmatprep.subr.mxu0 0.0
        %7832 = vmatpush2.msra.mxu0 0.0
        %7833 = vmatprep.subr.mxu0 0.0
        %7834 = vmatpush2.msra.mxu0 0.0
        %7835 = vmatprep.subr.mxu0 0.0
        %7836 = vmatpush2.msra.mxu0 0.0
        %7837 = vmatprep.subr.mxu0 0.0
        %7838 = vmatpush2.msra.mxu0 0.0
        %7839 = vmatprep.subr.mxu0 0.0
        %7840 = vmatpush2.msra.mxu0 0.0
        %7841 = vmatprep.subr.mxu0 0.0
        %7842 = vmatpush2.msra.mxu0 0.0
        %7843 = vmatprep.subr.mxu0 0.0
        %7844 = vmatpush2.msra.mxu0 0.0
        %7845 = vmatprep.subr.mxu0 0.0
        %7846 = vmatpush2.msra.mxu0 0.0
        %7847 = vmatprep.subr.mxu0 0.0
        %7848 = vmatpush2.msra.mxu0 0.0
        %7849 = vmatprep.subr.mxu0 0.0
        %7850 = vmatpush2.msra.mxu0 0.0
        %7851 = vmatprep.subr.mxu0 0.0
        %7852 = vmatpush2.msra.mxu0 0.0
        %7853 = vmatprep.subr.mxu0 0.0
        %7854 = vmatpush2.msra.mxu0 0.0
        %7855 = vmatprep.subr.mxu0 0.0
        %7856 = vmatpush2.msra.mxu0 0.0
        %7857 = vmatprep.subr.mxu0 0.0
        %7858 = vmatpush2.msra.mxu0 0.0
        %7859 = vmatprep.subr.mxu0 0.0
        %7860 = vmatpush2.msra.mxu0 0.0
        %7861 = vmatprep.subr.mxu0 0.0
        %7862 = vmatpush2.msra.mxu0 0.0
        %7863 = vmatprep.mubr.f32.mxu0 0.0
        %v7864 = vand.u32 %v7105, 4294901760
        %v7865 = vsub.f32 %v7105, %v7864
        %v7866 = vand.u32 %v7865, 4294901760
        %7867 = vmatmul.mubr.f32.gmra.mxu0 %v7866
        %v7868 = vpop.f32.mrf.mxu0
        %v7869 = vadd.f32 %v7671, %v7868
        %v7870 = vpop.f32.mrf.mxu0
        %v7871 = vadd.f32 %v7673, %v7870
        %7872 = vmatprep.mubr.f32.mxu0 0.0
        %v7873 = vand.u32 %v7108, 4294901760
        %v7874 = vsub.f32 %v7108, %v7873
        %v7875 = vand.u32 %v7874, 4294901760
        %7876 = vmatmul.mubr.f32.gmra.mxu0 %v7875
        %v7877 = vpop.f32.mrf.mxu0
        %v7878 = vadd.f32 %v7679, %v7877
        %v7879 = vpop.f32.mrf.mxu0
        %v7880 = vadd.f32 %v7681, %v7879
        %7881 = vmatprep.mubr.f32.mxu0 0.0
        %v7882 = vand.u32 %v7111, 4294901760
        %v7883 = vsub.f32 %v7111, %v7882
        %v7884 = vand.u32 %v7883, 4294901760
        %7885 = vmatmul.mubr.f32.gmra.mxu0 %v7884
        %v7886 = vpop.f32.mrf.mxu0
        %v7887 = vadd.f32 %v7687, %v7886
        %v7888 = vpop.f32.mrf.mxu0
        %v7889 = vadd.f32 %v7689, %v7888
        %7890 = vmatprep.mubr.f32.mxu0 0.0
        %v7891 = vand.u32 %v7114, 4294901760
        %v7892 = vsub.f32 %v7114, %v7891
        %v7893 = vand.u32 %v7892, 4294901760
        %7894 = vmatmul.mubr.f32.gmra.mxu0 %v7893
        %v7895 = vpop.f32.mrf.mxu0
        %v7896 = vadd.f32 %v7695, %v7895
        %v7897 = vpop.f32.mrf.mxu0
        %v7898 = vadd.f32 %v7697, %v7897
        %7899 = vmatprep.mubr.f32.mxu0 0.0
        %v7900 = vand.u32 %v7117, 4294901760
        %v7901 = vsub.f32 %v7117, %v7900
        %v7902 = vand.u32 %v7901, 4294901760
        %7903 = vmatmul.mubr.f32.gmra.mxu0 %v7902
        %v7904 = vpop.f32.mrf.mxu0
        %v7905 = vadd.f32 %v7703, %v7904
        %v7906 = vpop.f32.mrf.mxu0
        %v7907 = vadd.f32 %v7705, %v7906
        %7908 = vmatprep.mubr.f32.mxu0 0.0
        %v7909 = vand.u32 %v7120, 4294901760
        %v7910 = vsub.f32 %v7120, %v7909
        %v7911 = vand.u32 %v7910, 4294901760
        %7912 = vmatmul.mubr.f32.gmra.mxu0 %v7911
        %v7913 = vpop.f32.mrf.mxu0
        %v7914 = vadd.f32 %v7711, %v7913
        %v7915 = vpop.f32.mrf.mxu0
        %v7916 = vadd.f32 %v7713, %v7915
        %7917 = vmatprep.mubr.f32.mxu0 0.0
        %v7918 = vand.u32 %v7123, 4294901760
        %v7919 = vsub.f32 %v7123, %v7918
        %v7920 = vand.u32 %v7919, 4294901760
        %7921 = vmatmul.mubr.f32.gmra.mxu0 %v7920
        %v7922 = vpop.f32.mrf.mxu0
        %v7923 = vadd.f32 %v7719, %v7922
        %v7924 = vpop.f32.mrf.mxu0
        %v7925 = vadd.f32 %v7721, %v7924
        %7926 = vmatprep.mubr.f32.mxu0 0.0
        %v7927 = vand.u32 %v7126, 4294901760
        %v7928 = vsub.f32 %v7126, %v7927
        %v7929 = vand.u32 %v7928, 4294901760
        %7930 = vmatmul.mubr.f32.gmra.mxu0 %v7929
        %v7931 = vpop.f32.mrf.mxu0
        %v7932 = vadd.f32 %v7727, %v7931
        %v7933 = vpop.f32.mrf.mxu0
        %v7934 = vadd.f32 %v7729, %v7933
        %7935 = vmatprep.mubr.f32.mxu0 0.0
        %v7936 = vand.u32 %v7129, 4294901760
        %v7937 = vsub.f32 %v7129, %v7936
        %v7938 = vand.u32 %v7937, 4294901760
        %7939 = vmatmul.mubr.f32.gmra.mxu0 %v7938
        %v7940 = vpop.f32.mrf.mxu0
        %v7941 = vadd.f32 %v7735, %v7940
        %v7942 = vpop.f32.mrf.mxu0
        %v7943 = vadd.f32 %v7737, %v7942
        %7944 = vmatprep.mubr.f32.mxu0 0.0
        %v7945 = vand.u32 %v7132, 4294901760
        %v7946 = vsub.f32 %v7132, %v7945
        %v7947 = vand.u32 %v7946, 4294901760
        %7948 = vmatmul.mubr.f32.gmra.mxu0 %v7947
        %v7949 = vpop.f32.mrf.mxu0
        %v7950 = vadd.f32 %v7743, %v7949
        %v7951 = vpop.f32.mrf.mxu0
        %v7952 = vadd.f32 %v7745, %v7951
        %7953 = vmatprep.mubr.f32.mxu0 0.0
        %v7954 = vand.u32 %v7135, 4294901760
        %v7955 = vsub.f32 %v7135, %v7954
        %v7956 = vand.u32 %v7955, 4294901760
        %7957 = vmatmul.mubr.f32.gmra.mxu0 %v7956
        %v7958 = vpop.f32.mrf.mxu0
        %v7959 = vadd.f32 %v7751, %v7958
        %v7960 = vpop.f32.mrf.mxu0
        %v7961 = vadd.f32 %v7753, %v7960
        %7962 = vmatprep.mubr.f32.mxu0 0.0
        %v7963 = vand.u32 %v7138, 4294901760
        %v7964 = vsub.f32 %v7138, %v7963
        %v7965 = vand.u32 %v7964, 4294901760
        %7966 = vmatmul.mubr.f32.gmra.mxu0 %v7965
        %v7967 = vpop.f32.mrf.mxu0
        %v7968 = vadd.f32 %v7759, %v7967
        %v7969 = vpop.f32.mrf.mxu0
        %v7970 = vadd.f32 %v7761, %v7969
        %7971 = vmatprep.mubr.f32.mxu0 0.0
        %v7972 = vand.u32 %v7141, 4294901760
        %v7973 = vsub.f32 %v7141, %v7972
        %v7974 = vand.u32 %v7973, 4294901760
        %7975 = vmatmul.mubr.f32.gmra.mxu0 %v7974
        %v7976 = vpop.f32.mrf.mxu0
        %v7977 = vadd.f32 %v7767, %v7976
        %v7978 = vpop.f32.mrf.mxu0
        %v7979 = vadd.f32 %v7769, %v7978
        %7980 = vmatprep.mubr.f32.mxu0 0.0
        %v7981 = vand.u32 %v7144, 4294901760
        %v7982 = vsub.f32 %v7144, %v7981
        %v7983 = vand.u32 %v7982, 4294901760
        %7984 = vmatmul.mubr.f32.gmra.mxu0 %v7983
        %v7985 = vpop.f32.mrf.mxu0
        %v7986 = vadd.f32 %v7775, %v7985
        %v7987 = vpop.f32.mrf.mxu0
        %v7988 = vadd.f32 %v7777, %v7987
        %7989 = vmatprep.mubr.f32.mxu0 0.0
        %v7990 = vand.u32 %v7147, 4294901760
        %v7991 = vsub.f32 %v7147, %v7990
        %v7992 = vand.u32 %v7991, 4294901760
        %7993 = vmatmul.mubr.f32.gmra.mxu0 %v7992
        %v7994 = vpop.f32.mrf.mxu0
        %v7995 = vadd.f32 %v7783, %v7994
        %v7996 = vpop.f32.mrf.mxu0
        %v7997 = vadd.f32 %v7785, %v7996
        %7998 = vmatprep.mubr.f32.mxu0 0.0
        %v7999 = vand.u32 %v7150, 4294901760
        %v8000 = vsub.f32 %v7150, %v7999
        %v8001 = vand.u32 %v8000, 4294901760
        %8002 = vmatmul.mubr.f32.gmra.mxu0 %v8001
        %v8003 = vpop.f32.mrf.mxu0
        %v8004 = vadd.f32 %v7791, %v8003
        %v8005 = vpop.f32.mrf.mxu0
        %v8006 = vadd.f32 %v7793, %v8005
        %8007 = vdwg.mxu0
        %8008 = vmatprep.subr.mxu0 0.0
        %8009 = vmatpush1.msra.mxu0 0.0
        %8010 = vmatprep.subr.mxu0 0.0
        %8011 = vmatpush1.msra.mxu0 0.0
        %8012 = vmatprep.subr.mxu0 0.0
        %8013 = vmatpush1.msra.mxu0 0.0
        %8014 = vmatprep.subr.mxu0 0.0
        %8015 = vmatpush1.msra.mxu0 0.0
        %8016 = vmatprep.subr.mxu0 0.0
        %8017 = vmatpush1.msra.mxu0 0.0
        %8018 = vmatprep.subr.mxu0 0.0
        %8019 = vmatpush1.msra.mxu0 0.0
        %8020 = vmatprep.subr.mxu0 0.0
        %8021 = vmatpush1.msra.mxu0 0.0
        %8022 = vmatprep.subr.mxu0 0.0
        %8023 = vmatpush1.msra.mxu0 0.0
        %8024 = vmatprep.subr.mxu0 0.0
        %8025 = vmatpush1.msra.mxu0 0.0
        %8026 = vmatprep.subr.mxu0 0.0
        %8027 = vmatpush1.msra.mxu0 0.0
        %8028 = vmatprep.subr.mxu0 0.0
        %8029 = vmatpush1.msra.mxu0 0.0
        %8030 = vmatprep.subr.mxu0 0.0
        %8031 = vmatpush1.msra.mxu0 0.0
        %8032 = vmatprep.subr.mxu0 0.0
        %8033 = vmatpush1.msra.mxu0 0.0
        %8034 = vmatprep.subr.mxu0 0.0
        %8035 = vmatpush1.msra.mxu0 0.0
        %v8036 = vand.u32 %v364, 4294901760
        %v8037 = vsub.f32 %v364, %v8036
        %v8038 = vand.u32 %v8037, 4294901760
        %8039 = vmatprep.subr.mxu0 %v8038
        %v8040 = vand.u32 %v363, 4294901760
        %v8041 = vsub.f32 %v363, %v8040
        %v8042 = vand.u32 %v8041, 4294901760
        %8043 = vmatpush1.msra.mxu0 %v8042
        %v8044 = vand.u32 %v362, 4294901760
        %v8045 = vsub.f32 %v362, %v8044
        %v8046 = vand.u32 %v8045, 4294901760
        %8047 = vmatprep.subr.mxu0 %v8046
        %v8048 = vand.u32 %v361, 4294901760
        %v8049 = vsub.f32 %v361, %v8048
        %v8050 = vand.u32 %v8049, 4294901760
        %8051 = vmatpush1.msra.mxu0 %v8050
        %8052 = vmatprep.subr.mxu0 0.0
        %8053 = vmatpush2.msra.mxu0 0.0
        %8054 = vmatprep.subr.mxu0 0.0
        %8055 = vmatpush2.msra.mxu0 0.0
        %8056 = vmatprep.subr.mxu0 0.0
        %8057 = vmatpush2.msra.mxu0 0.0
        %8058 = vmatprep.subr.mxu0 0.0
        %8059 = vmatpush2.msra.mxu0 0.0
        %8060 = vmatprep.subr.mxu0 0.0
        %8061 = vmatpush2.msra.mxu0 0.0
        %8062 = vmatprep.subr.mxu0 0.0
        %8063 = vmatpush2.msra.mxu0 0.0
        %8064 = vmatprep.subr.mxu0 0.0
        %8065 = vmatpush2.msra.mxu0 0.0
        %8066 = vmatprep.subr.mxu0 0.0
        %8067 = vmatpush2.msra.mxu0 0.0
        %8068 = vmatprep.subr.mxu0 0.0
        %8069 = vmatpush2.msra.mxu0 0.0
        %8070 = vmatprep.subr.mxu0 0.0
        %8071 = vmatpush2.msra.mxu0 0.0
        %8072 = vmatprep.subr.mxu0 0.0
        %8073 = vmatpush2.msra.mxu0 0.0
        %8074 = vmatprep.subr.mxu0 0.0
        %8075 = vmatpush2.msra.mxu0 0.0
        %8076 = vmatprep.subr.mxu0 0.0
        %8077 = vmatpush2.msra.mxu0 0.0
        %8078 = vmatprep.subr.mxu0 0.0
        %8079 = vmatpush2.msra.mxu0 0.0
        %8080 = vmatprep.subr.mxu0 0.0
        %8081 = vmatpush2.msra.mxu0 0.0
        %8082 = vmatprep.subr.mxu0 0.0
        %8083 = vmatpush2.msra.mxu0 0.0
        %8084 = vmatprep.mubr.f32.mxu0 0.0
        %v8085 = vand.u32 %v7105, 4294901760
        %8086 = vmatmul.mubr.f32.gmra.mxu0 %v8085
        %v8087 = vpop.f32.mrf.mxu0
        %v8088 = vadd.f32 %v7869, %v8087
        %v8089 = vpop.f32.mrf.mxu0
        %v8090 = vadd.f32 %v7871, %v8089
        %8091 = vmatprep.mubr.f32.mxu0 0.0
        %v8092 = vand.u32 %v7108, 4294901760
        %8093 = vmatmul.mubr.f32.gmra.mxu0 %v8092
        %v8094 = vpop.f32.mrf.mxu0
        %v8095 = vadd.f32 %v7878, %v8094
        %v8096 = vpop.f32.mrf.mxu0
        %v8097 = vadd.f32 %v7880, %v8096
        %8098 = vmatprep.mubr.f32.mxu0 0.0
        %v8099 = vand.u32 %v7111, 4294901760
        %8100 = vmatmul.mubr.f32.gmra.mxu0 %v8099
        %v8101 = vpop.f32.mrf.mxu0
        %v8102 = vadd.f32 %v7887, %v8101
        %v8103 = vpop.f32.mrf.mxu0
        %v8104 = vadd.f32 %v7889, %v8103
        %8105 = vmatprep.mubr.f32.mxu0 0.0
        %v8106 = vand.u32 %v7114, 4294901760
        %8107 = vmatmul.mubr.f32.gmra.mxu0 %v8106
        %v8108 = vpop.f32.mrf.mxu0
        %v8109 = vadd.f32 %v7896, %v8108
        %v8110 = vpop.f32.mrf.mxu0
        %v8111 = vadd.f32 %v7898, %v8110
        %8112 = vmatprep.mubr.f32.mxu0 0.0
        %v8113 = vand.u32 %v7117, 4294901760
        %8114 = vmatmul.mubr.f32.gmra.mxu0 %v8113
        %v8115 = vpop.f32.mrf.mxu0
        %v8116 = vadd.f32 %v7905, %v8115
        %v8117 = vpop.f32.mrf.mxu0
        %v8118 = vadd.f32 %v7907, %v8117
        %8119 = vmatprep.mubr.f32.mxu0 0.0
        %v8120 = vand.u32 %v7120, 4294901760
        %8121 = vmatmul.mubr.f32.gmra.mxu0 %v8120
        %v8122 = vpop.f32.mrf.mxu0
        %v8123 = vadd.f32 %v7914, %v8122
        %v8124 = vpop.f32.mrf.mxu0
        %v8125 = vadd.f32 %v7916, %v8124
        %8126 = vmatprep.mubr.f32.mxu0 0.0
        %v8127 = vand.u32 %v7123, 4294901760
        %8128 = vmatmul.mubr.f32.gmra.mxu0 %v8127
        %v8129 = vpop.f32.mrf.mxu0
        %v8130 = vadd.f32 %v7923, %v8129
        %v8131 = vpop.f32.mrf.mxu0
        %v8132 = vadd.f32 %v7925, %v8131
        %8133 = vmatprep.mubr.f32.mxu0 0.0
        %v8134 = vand.u32 %v7126, 4294901760
        %8135 = vmatmul.mubr.f32.gmra.mxu0 %v8134
        %v8136 = vpop.f32.mrf.mxu0
        %v8137 = vadd.f32 %v7932, %v8136
        %v8138 = vpop.f32.mrf.mxu0
        %v8139 = vadd.f32 %v7934, %v8138
        %8140 = vmatprep.mubr.f32.mxu0 0.0
        %v8141 = vand.u32 %v7129, 4294901760
        %8142 = vmatmul.mubr.f32.gmra.mxu0 %v8141
        %v8143 = vpop.f32.mrf.mxu0
        %v8144 = vadd.f32 %v7941, %v8143
        %v8145 = vpop.f32.mrf.mxu0
        %v8146 = vadd.f32 %v7943, %v8145
        %8147 = vmatprep.mubr.f32.mxu0 0.0
        %v8148 = vand.u32 %v7132, 4294901760
        %8149 = vmatmul.mubr.f32.gmra.mxu0 %v8148
        %v8150 = vpop.f32.mrf.mxu0
        %v8151 = vadd.f32 %v7950, %v8150
        %v8152 = vpop.f32.mrf.mxu0
        %v8153 = vadd.f32 %v7952, %v8152
        %8154 = vmatprep.mubr.f32.mxu0 0.0
        %v8155 = vand.u32 %v7135, 4294901760
        %8156 = vmatmul.mubr.f32.gmra.mxu0 %v8155
        %v8157 = vpop.f32.mrf.mxu0
        %v8158 = vadd.f32 %v7959, %v8157
        %v8159 = vpop.f32.mrf.mxu0
        %v8160 = vadd.f32 %v7961, %v8159
        %8161 = vmatprep.mubr.f32.mxu0 0.0
        %v8162 = vand.u32 %v7138, 4294901760
        %8163 = vmatmul.mubr.f32.gmra.mxu0 %v8162
        %v8164 = vpop.f32.mrf.mxu0
        %v8165 = vadd.f32 %v7968, %v8164
        %v8166 = vpop.f32.mrf.mxu0
        %v8167 = vadd.f32 %v7970, %v8166
        %8168 = vmatprep.mubr.f32.mxu0 0.0
        %v8169 = vand.u32 %v7141, 4294901760
        %8170 = vmatmul.mubr.f32.gmra.mxu0 %v8169
        %v8171 = vpop.f32.mrf.mxu0
        %v8172 = vadd.f32 %v7977, %v8171
        %v8173 = vpop.f32.mrf.mxu0
        %v8174 = vadd.f32 %v7979, %v8173
        %8175 = vmatprep.mubr.f32.mxu0 0.0
        %v8176 = vand.u32 %v7144, 4294901760
        %8177 = vmatmul.mubr.f32.gmra.mxu0 %v8176
        %v8178 = vpop.f32.mrf.mxu0
        %v8179 = vadd.f32 %v7986, %v8178
        %v8180 = vpop.f32.mrf.mxu0
        %v8181 = vadd.f32 %v7988, %v8180
        %8182 = vmatprep.mubr.f32.mxu0 0.0
        %v8183 = vand.u32 %v7147, 4294901760
        %8184 = vmatmul.mubr.f32.gmra.mxu0 %v8183
        %v8185 = vpop.f32.mrf.mxu0
        %v8186 = vadd.f32 %v7995, %v8185
        %v8187 = vpop.f32.mrf.mxu0
        %v8188 = vadd.f32 %v7997, %v8187
        %8189 = vmatprep.mubr.f32.mxu0 0.0
        %v8190 = vand.u32 %v7150, 4294901760
        %8191 = vmatmul.mubr.f32.gmra.mxu0 %v8190
        %v8192 = vpop.f32.mrf.mxu0
        %v8193 = vadd.f32 %v8004, %v8192
        %v8194 = vpop.f32.mrf.mxu0
        %v8195 = vadd.f32 %v8006, %v8194
        %8196 = vdwg.mxu0
        %8197 = vmatprep.subr.mxu0 0.0
        %8198 = vmatpush1.msra.mxu0 0.0
        %8199 = vmatprep.subr.mxu0 0.0
        %8200 = vmatpush1.msra.mxu0 0.0
        %8201 = vmatprep.subr.mxu0 0.0
        %8202 = vmatpush1.msra.mxu0 0.0
        %8203 = vmatprep.subr.mxu0 0.0
        %8204 = vmatpush1.msra.mxu0 0.0
        %8205 = vmatprep.subr.mxu0 0.0
        %8206 = vmatpush1.msra.mxu0 0.0
        %8207 = vmatprep.subr.mxu0 0.0
        %8208 = vmatpush1.msra.mxu0 0.0
        %8209 = vmatprep.subr.mxu0 0.0
        %8210 = vmatpush1.msra.mxu0 0.0
        %8211 = vmatprep.subr.mxu0 0.0
        %8212 = vmatpush1.msra.mxu0 0.0
        %8213 = vmatprep.subr.mxu0 0.0
        %8214 = vmatpush1.msra.mxu0 0.0
        %8215 = vmatprep.subr.mxu0 0.0
        %8216 = vmatpush1.msra.mxu0 0.0
        %8217 = vmatprep.subr.mxu0 0.0
        %8218 = vmatpush1.msra.mxu0 0.0
        %8219 = vmatprep.subr.mxu0 0.0
        %8220 = vmatpush1.msra.mxu0 0.0
        %8221 = vmatprep.subr.mxu0 0.0
        %8222 = vmatpush1.msra.mxu0 0.0
        %8223 = vmatprep.subr.mxu0 0.0
        %8224 = vmatpush1.msra.mxu0 0.0
        %v8225 = vand.u32 %v364, 4294901760
        %8226 = vmatprep.subr.mxu0 %v8225
        %v8227 = vand.u32 %v363, 4294901760
        %8228 = vmatpush1.msra.mxu0 %v8227
        %v8229 = vand.u32 %v362, 4294901760
        %8230 = vmatprep.subr.mxu0 %v8229
        %v8231 = vand.u32 %v361, 4294901760
        %8232 = vmatpush1.msra.mxu0 %v8231
        %8233 = vmatprep.subr.mxu0 0.0
        %8234 = vmatpush2.msra.mxu0 0.0
        %8235 = vmatprep.subr.mxu0 0.0
        %8236 = vmatpush2.msra.mxu0 0.0
        %8237 = vmatprep.subr.mxu0 0.0
        %8238 = vmatpush2.msra.mxu0 0.0
        %8239 = vmatprep.subr.mxu0 0.0
        %8240 = vmatpush2.msra.mxu0 0.0
        %8241 = vmatprep.subr.mxu0 0.0
        %8242 = vmatpush2.msra.mxu0 0.0
        %8243 = vmatprep.subr.mxu0 0.0
        %8244 = vmatpush2.msra.mxu0 0.0
        %8245 = vmatprep.subr.mxu0 0.0
        %8246 = vmatpush2.msra.mxu0 0.0
        %8247 = vmatprep.subr.mxu0 0.0
        %8248 = vmatpush2.msra.mxu0 0.0
        %8249 = vmatprep.subr.mxu0 0.0
        %8250 = vmatpush2.msra.mxu0 0.0
        %8251 = vmatprep.subr.mxu0 0.0
        %8252 = vmatpush2.msra.mxu0 0.0
        %8253 = vmatprep.subr.mxu0 0.0
        %8254 = vmatpush2.msra.mxu0 0.0
        %8255 = vmatprep.subr.mxu0 0.0
        %8256 = vmatpush2.msra.mxu0 0.0
        %8257 = vmatprep.subr.mxu0 0.0
        %8258 = vmatpush2.msra.mxu0 0.0
        %8259 = vmatprep.subr.mxu0 0.0
        %8260 = vmatpush2.msra.mxu0 0.0
        %8261 = vmatprep.subr.mxu0 0.0
        %8262 = vmatpush2.msra.mxu0 0.0
        %8263 = vmatprep.subr.mxu0 0.0
        %8264 = vmatpush2.msra.mxu0 0.0
        %8265 = vmatprep.mubr.f32.mxu0 0.0
        %v8266 = vand.u32 %v7105, 4294901760
        %8267 = vmatmul.mubr.f32.gmra.mxu0 %v8266
        %v8268 = vpop.f32.mrf.mxu0
        %v8269 = vadd.f32 %v8088, %v8268
        %v8270 = vpop.f32.mrf.mxu0
        %v8271 = vadd.f32 %v8090, %v8270
        %8272 = vmatprep.mubr.f32.mxu0 0.0
        %v8273 = vand.u32 %v7108, 4294901760
        %8274 = vmatmul.mubr.f32.gmra.mxu0 %v8273
        %v8275 = vpop.f32.mrf.mxu0
        %v8276 = vadd.f32 %v8095, %v8275
        %v8277 = vpop.f32.mrf.mxu0
        %v8278 = vadd.f32 %v8097, %v8277
        %8279 = vmatprep.mubr.f32.mxu0 0.0
        %v8280 = vand.u32 %v7111, 4294901760
        %8281 = vmatmul.mubr.f32.gmra.mxu0 %v8280
        %v8282 = vpop.f32.mrf.mxu0
        %v8283 = vadd.f32 %v8102, %v8282
        %v8284 = vpop.f32.mrf.mxu0
        %v8285 = vadd.f32 %v8104, %v8284
        %8286 = vmatprep.mubr.f32.mxu0 0.0
        %v8287 = vand.u32 %v7114, 4294901760
        %8288 = vmatmul.mubr.f32.gmra.mxu0 %v8287
        %v8289 = vpop.f32.mrf.mxu0
        %v8290 = vadd.f32 %v8109, %v8289
        %v8291 = vpop.f32.mrf.mxu0
        %v8292 = vadd.f32 %v8111, %v8291
        %8293 = vmatprep.mubr.f32.mxu0 0.0
        %v8294 = vand.u32 %v7117, 4294901760
        %8295 = vmatmul.mubr.f32.gmra.mxu0 %v8294
        %v8296 = vpop.f32.mrf.mxu0
        %v8297 = vadd.f32 %v8116, %v8296
        %v8298 = vpop.f32.mrf.mxu0
        %v8299 = vadd.f32 %v8118, %v8298
        %8300 = vmatprep.mubr.f32.mxu0 0.0
        %v8301 = vand.u32 %v7120, 4294901760
        %8302 = vmatmul.mubr.f32.gmra.mxu0 %v8301
        %v8303 = vpop.f32.mrf.mxu0
        %v8304 = vadd.f32 %v8123, %v8303
        %v8305 = vpop.f32.mrf.mxu0
        %v8306 = vadd.f32 %v8125, %v8305
        %8307 = vmatprep.mubr.f32.mxu0 0.0
        %v8308 = vand.u32 %v7123, 4294901760
        %8309 = vmatmul.mubr.f32.gmra.mxu0 %v8308
        %v8310 = vpop.f32.mrf.mxu0
        %v8311 = vadd.f32 %v8130, %v8310
        %v8312 = vpop.f32.mrf.mxu0
        %v8313 = vadd.f32 %v8132, %v8312
        %8314 = vmatprep.mubr.f32.mxu0 0.0
        %v8315 = vand.u32 %v7126, 4294901760
        %8316 = vmatmul.mubr.f32.gmra.mxu0 %v8315
        %v8317 = vpop.f32.mrf.mxu0
        %v8318 = vadd.f32 %v8137, %v8317
        %v8319 = vpop.f32.mrf.mxu0
        %v8320 = vadd.f32 %v8139, %v8319
        %8321 = vmatprep.mubr.f32.mxu0 0.0
        %v8322 = vand.u32 %v7129, 4294901760
        %8323 = vmatmul.mubr.f32.gmra.mxu0 %v8322
        %v8324 = vpop.f32.mrf.mxu0
        %v8325 = vadd.f32 %v8144, %v8324
        %v8326 = vpop.f32.mrf.mxu0
        %v8327 = vadd.f32 %v8146, %v8326
        %8328 = vmatprep.mubr.f32.mxu0 0.0
        %v8329 = vand.u32 %v7132, 4294901760
        %8330 = vmatmul.mubr.f32.gmra.mxu0 %v8329
        %v8331 = vpop.f32.mrf.mxu0
        %v8332 = vadd.f32 %v8151, %v8331
        %v8333 = vpop.f32.mrf.mxu0
        %v8334 = vadd.f32 %v8153, %v8333
        %8335 = vmatprep.mubr.f32.mxu0 0.0
        %v8336 = vand.u32 %v7135, 4294901760
        %8337 = vmatmul.mubr.f32.gmra.mxu0 %v8336
        %v8338 = vpop.f32.mrf.mxu0
        %v8339 = vadd.f32 %v8158, %v8338
        %v8340 = vpop.f32.mrf.mxu0
        %v8341 = vadd.f32 %v8160, %v8340
        %8342 = vmatprep.mubr.f32.mxu0 0.0
        %v8343 = vand.u32 %v7138, 4294901760
        %8344 = vmatmul.mubr.f32.gmra.mxu0 %v8343
        %v8345 = vpop.f32.mrf.mxu0
        %v8346 = vadd.f32 %v8165, %v8345
        %v8347 = vpop.f32.mrf.mxu0
        %v8348 = vadd.f32 %v8167, %v8347
        %8349 = vmatprep.mubr.f32.mxu0 0.0
        %v8350 = vand.u32 %v7141, 4294901760
        %8351 = vmatmul.mubr.f32.gmra.mxu0 %v8350
        %v8352 = vpop.f32.mrf.mxu0
        %v8353 = vadd.f32 %v8172, %v8352
        %v8354 = vpop.f32.mrf.mxu0
        %v8355 = vadd.f32 %v8174, %v8354
        %8356 = vmatprep.mubr.f32.mxu0 0.0
        %v8357 = vand.u32 %v7144, 4294901760
        %8358 = vmatmul.mubr.f32.gmra.mxu0 %v8357
        %v8359 = vpop.f32.mrf.mxu0
        %v8360 = vadd.f32 %v8179, %v8359
        %v8361 = vpop.f32.mrf.mxu0
        %v8362 = vadd.f32 %v8181, %v8361
        %8363 = vmatprep.mubr.f32.mxu0 0.0
        %v8364 = vand.u32 %v7147, 4294901760
        %8365 = vmatmul.mubr.f32.gmra.mxu0 %v8364
        %v8366 = vpop.f32.mrf.mxu0
        %v8367 = vadd.f32 %v8186, %v8366
        %v8368 = vpop.f32.mrf.mxu0
        %v8369 = vadd.f32 %v8188, %v8368
        %8370 = vmatprep.mubr.f32.mxu0 0.0
        %v8371 = vand.u32 %v7150, 4294901760
        %8372 = vmatmul.mubr.f32.gmra.mxu0 %v8371
        %v8373 = vpop.f32.mrf.mxu0
        %v8374 = vadd.f32 %v8193, %v8373
        %v8375 = vpop.f32.mrf.mxu0
        %v8376 = vadd.f32 %v8195, %v8375
        %8377 = vdwg.mxu0
        %v8379 = vsel %vm7103, %v7072, 0
        %v8382 = vsel %vm7103, %v7074, 0
        %v8385 = vsel %vm7103, %v7076, 0
        %v8388 = vsel %vm7103, %v7078, 0
        %v8391 = vsel %vm7103, %v7080, 0
        %v8394 = vsel %vm7103, %v7082, 0
        %v8397 = vsel %vm7103, %v7084, 0
        %v8400 = vsel %vm7103, %v7086, 0
        %v8403 = vsel %vm7103, %v7088, 0
        %v8406 = vsel %vm7103, %v7090, 0
        %v8409 = vsel %vm7103, %v7092, 0
        %v8412 = vsel %vm7103, %v7094, 0
        %v8415 = vsel %vm7103, %v7096, 0
        %v8418 = vsel %vm7103, %v7098, 0
        %v8421 = vsel %vm7103, %v7100, 0
        %v8424 = vsel %vm7103, %v7102, 0
        %8426 = vmatprep.subr.mxu0 0.0
        %8427 = vmatpush1.msra.mxu0 0.0
        %8428 = vmatprep.subr.mxu0 0.0
        %8429 = vmatpush1.msra.mxu0 0.0
        %8430 = vmatprep.subr.mxu0 0.0
        %8431 = vmatpush1.msra.mxu0 0.0
        %8432 = vmatprep.subr.mxu0 0.0
        %8433 = vmatpush1.msra.mxu0 0.0
        %8434 = vmatprep.subr.mxu0 0.0
        %8435 = vmatpush1.msra.mxu0 0.0
        %8436 = vmatprep.subr.mxu0 0.0
        %8437 = vmatpush1.msra.mxu0 0.0
        %8438 = vmatprep.subr.mxu0 0.0
        %8439 = vmatpush1.msra.mxu0 0.0
        %8440 = vmatprep.subr.mxu0 0.0
        %8441 = vmatpush1.msra.mxu0 0.0
        %8442 = vmatprep.subr.mxu0 0.0
        %8443 = vmatpush1.msra.mxu0 0.0
        %8444 = vmatprep.subr.mxu0 0.0
        %8445 = vmatpush1.msra.mxu0 0.0
        %8446 = vmatprep.subr.mxu0 0.0
        %8447 = vmatpush1.msra.mxu0 0.0
        %8448 = vmatprep.subr.mxu0 0.0
        %8449 = vmatpush1.msra.mxu0 0.0
        %8450 = vmatprep.subr.mxu0 0.0
        %8451 = vmatpush1.msra.mxu0 0.0
        %8452 = vmatprep.subr.mxu0 0.0
        %8453 = vmatpush1.msra.mxu0 0.0
        %v8454 = vand.u32 %v368, 4294901760
        %8455 = vmatprep.subr.mxu0 %v8454
        %v8456 = vand.u32 %v367, 4294901760
        %8457 = vmatpush1.msra.mxu0 %v8456
        %v8458 = vand.u32 %v366, 4294901760
        %8459 = vmatprep.subr.mxu0 %v8458
        %v8460 = vand.u32 %v365, 4294901760
        %8461 = vmatpush1.msra.mxu0 %v8460
        %8462 = vmatprep.subr.mxu0 0.0
        %8463 = vmatpush2.msra.mxu0 0.0
        %8464 = vmatprep.subr.mxu0 0.0
        %8465 = vmatpush2.msra.mxu0 0.0
        %8466 = vmatprep.subr.mxu0 0.0
        %8467 = vmatpush2.msra.mxu0 0.0
        %8468 = vmatprep.subr.mxu0 0.0
        %8469 = vmatpush2.msra.mxu0 0.0
        %8470 = vmatprep.subr.mxu0 0.0
        %8471 = vmatpush2.msra.mxu0 0.0
        %8472 = vmatprep.subr.mxu0 0.0
        %8473 = vmatpush2.msra.mxu0 0.0
        %8474 = vmatprep.subr.mxu0 0.0
        %8475 = vmatpush2.msra.mxu0 0.0
        %8476 = vmatprep.subr.mxu0 0.0
        %8477 = vmatpush2.msra.mxu0 0.0
        %8478 = vmatprep.subr.mxu0 0.0
        %8479 = vmatpush2.msra.mxu0 0.0
        %8480 = vmatprep.subr.mxu0 0.0
        %8481 = vmatpush2.msra.mxu0 0.0
        %8482 = vmatprep.subr.mxu0 0.0
        %8483 = vmatpush2.msra.mxu0 0.0
        %8484 = vmatprep.subr.mxu0 0.0
        %8485 = vmatpush2.msra.mxu0 0.0
        %8486 = vmatprep.subr.mxu0 0.0
        %8487 = vmatpush2.msra.mxu0 0.0
        %8488 = vmatprep.subr.mxu0 0.0
        %8489 = vmatpush2.msra.mxu0 0.0
        %8490 = vmatprep.subr.mxu0 0.0
        %8491 = vmatpush2.msra.mxu0 0.0
        %8492 = vmatprep.subr.mxu0 0.0
        %8493 = vmatpush2.msra.mxu0 0.0
        %8494 = vmatprep.mubr.f32.mxu0 0.0
        %v8495 = vand.u32 %v8379, 4294901760
        %v8496 = vsub.f32 %v8379, %v8495
        %v8497 = vand.u32 %v8496, 4294901760
        %v8498 = vsub.f32 %v8496, %v8497
        %v8499 = vand.u32 %v8498, 4294901760
        %8500 = vmatmul.mubr.f32.gmra.mxu0 %v8499
        %v8501 = vpop.f32.mrf.mxu0
        %v8502 = vadd.f32 0.0, %v8501
        %v8503 = vpop.f32.mrf.mxu0
        %v8504 = vadd.f32 0.0, %v8503
        %8505 = vmatprep.mubr.f32.mxu0 0.0
        %v8506 = vand.u32 %v8382, 4294901760
        %v8507 = vsub.f32 %v8382, %v8506
        %v8508 = vand.u32 %v8507, 4294901760
        %v8509 = vsub.f32 %v8507, %v8508
        %v8510 = vand.u32 %v8509, 4294901760
        %8511 = vmatmul.mubr.f32.gmra.mxu0 %v8510
        %v8512 = vpop.f32.mrf.mxu0
        %v8513 = vadd.f32 0.0, %v8512
        %v8514 = vpop.f32.mrf.mxu0
        %v8515 = vadd.f32 0.0, %v8514
        %8516 = vmatprep.mubr.f32.mxu0 0.0
        %v8517 = vand.u32 %v8385, 4294901760
        %v8518 = vsub.f32 %v8385, %v8517
        %v8519 = vand.u32 %v8518, 4294901760
        %v8520 = vsub.f32 %v8518, %v8519
        %v8521 = vand.u32 %v8520, 4294901760
        %8522 = vmatmul.mubr.f32.gmra.mxu0 %v8521
        %v8523 = vpop.f32.mrf.mxu0
        %v8524 = vadd.f32 0.0, %v8523
        %v8525 = vpop.f32.mrf.mxu0
        %v8526 = vadd.f32 0.0, %v8525
        %8527 = vmatprep.mubr.f32.mxu0 0.0
        %v8528 = vand.u32 %v8388, 4294901760
        %v8529 = vsub.f32 %v8388, %v8528
        %v8530 = vand.u32 %v8529, 4294901760
        %v8531 = vsub.f32 %v8529, %v8530
        %v8532 = vand.u32 %v8531, 4294901760
        %8533 = vmatmul.mubr.f32.gmra.mxu0 %v8532
        %v8534 = vpop.f32.mrf.mxu0
        %v8535 = vadd.f32 0.0, %v8534
        %v8536 = vpop.f32.mrf.mxu0
        %v8537 = vadd.f32 0.0, %v8536
        %8538 = vmatprep.mubr.f32.mxu0 0.0
        %v8539 = vand.u32 %v8391, 4294901760
        %v8540 = vsub.f32 %v8391, %v8539
        %v8541 = vand.u32 %v8540, 4294901760
        %v8542 = vsub.f32 %v8540, %v8541
        %v8543 = vand.u32 %v8542, 4294901760
        %8544 = vmatmul.mubr.f32.gmra.mxu0 %v8543
        %v8545 = vpop.f32.mrf.mxu0
        %v8546 = vadd.f32 0.0, %v8545
        %v8547 = vpop.f32.mrf.mxu0
        %v8548 = vadd.f32 0.0, %v8547
        %8549 = vmatprep.mubr.f32.mxu0 0.0
        %v8550 = vand.u32 %v8394, 4294901760
        %v8551 = vsub.f32 %v8394, %v8550
        %v8552 = vand.u32 %v8551, 4294901760
        %v8553 = vsub.f32 %v8551, %v8552
        %v8554 = vand.u32 %v8553, 4294901760
        %8555 = vmatmul.mubr.f32.gmra.mxu0 %v8554
        %v8556 = vpop.f32.mrf.mxu0
        %v8557 = vadd.f32 0.0, %v8556
        %v8558 = vpop.f32.mrf.mxu0
        %v8559 = vadd.f32 0.0, %v8558
        %8560 = vmatprep.mubr.f32.mxu0 0.0
        %v8561 = vand.u32 %v8397, 4294901760
        %v8562 = vsub.f32 %v8397, %v8561
        %v8563 = vand.u32 %v8562, 4294901760
        %v8564 = vsub.f32 %v8562, %v8563
        %v8565 = vand.u32 %v8564, 4294901760
        %8566 = vmatmul.mubr.f32.gmra.mxu0 %v8565
        %v8567 = vpop.f32.mrf.mxu0
        %v8568 = vadd.f32 0.0, %v8567
        %v8569 = vpop.f32.mrf.mxu0
        %v8570 = vadd.f32 0.0, %v8569
        %8571 = vmatprep.mubr.f32.mxu0 0.0
        %v8572 = vand.u32 %v8400, 4294901760
        %v8573 = vsub.f32 %v8400, %v8572
        %v8574 = vand.u32 %v8573, 4294901760
        %v8575 = vsub.f32 %v8573, %v8574
        %v8576 = vand.u32 %v8575, 4294901760
        %8577 = vmatmul.mubr.f32.gmra.mxu0 %v8576
        %v8578 = vpop.f32.mrf.mxu0
        %v8579 = vadd.f32 0.0, %v8578
        %v8580 = vpop.f32.mrf.mxu0
        %v8581 = vadd.f32 0.0, %v8580
        %8582 = vmatprep.mubr.f32.mxu0 0.0
        %v8583 = vand.u32 %v8403, 4294901760
        %v8584 = vsub.f32 %v8403, %v8583
        %v8585 = vand.u32 %v8584, 4294901760
        %v8586 = vsub.f32 %v8584, %v8585
        %v8587 = vand.u32 %v8586, 4294901760
        %8588 = vmatmul.mubr.f32.gmra.mxu0 %v8587
        %v8589 = vpop.f32.mrf.mxu0
        %v8590 = vadd.f32 0.0, %v8589
        %v8591 = vpop.f32.mrf.mxu0
        %v8592 = vadd.f32 0.0, %v8591
        %8593 = vmatprep.mubr.f32.mxu0 0.0
        %v8594 = vand.u32 %v8406, 4294901760
        %v8595 = vsub.f32 %v8406, %v8594
        %v8596 = vand.u32 %v8595, 4294901760
        %v8597 = vsub.f32 %v8595, %v8596
        %v8598 = vand.u32 %v8597, 4294901760
        %8599 = vmatmul.mubr.f32.gmra.mxu0 %v8598
        %v8600 = vpop.f32.mrf.mxu0
        %v8601 = vadd.f32 0.0, %v8600
        %v8602 = vpop.f32.mrf.mxu0
        %v8603 = vadd.f32 0.0, %v8602
        %8604 = vmatprep.mubr.f32.mxu0 0.0
        %v8605 = vand.u32 %v8409, 4294901760
        %v8606 = vsub.f32 %v8409, %v8605
        %v8607 = vand.u32 %v8606, 4294901760
        %v8608 = vsub.f32 %v8606, %v8607
        %v8609 = vand.u32 %v8608, 4294901760
        %8610 = vmatmul.mubr.f32.gmra.mxu0 %v8609
        %v8611 = vpop.f32.mrf.mxu0
        %v8612 = vadd.f32 0.0, %v8611
        %v8613 = vpop.f32.mrf.mxu0
        %v8614 = vadd.f32 0.0, %v8613
        %8615 = vmatprep.mubr.f32.mxu0 0.0
        %v8616 = vand.u32 %v8412, 4294901760
        %v8617 = vsub.f32 %v8412, %v8616
        %v8618 = vand.u32 %v8617, 4294901760
        %v8619 = vsub.f32 %v8617, %v8618
        %v8620 = vand.u32 %v8619, 4294901760
        %8621 = vmatmul.mubr.f32.gmra.mxu0 %v8620
        %v8622 = vpop.f32.mrf.mxu0
        %v8623 = vadd.f32 0.0, %v8622
        %v8624 = vpop.f32.mrf.mxu0
        %v8625 = vadd.f32 0.0, %v8624
        %8626 = vmatprep.mubr.f32.mxu0 0.0
        %v8627 = vand.u32 %v8415, 4294901760
        %v8628 = vsub.f32 %v8415, %v8627
        %v8629 = vand.u32 %v8628, 4294901760
        %v8630 = vsub.f32 %v8628, %v8629
        %v8631 = vand.u32 %v8630, 4294901760
        %8632 = vmatmul.mubr.f32.gmra.mxu0 %v8631
        %v8633 = vpop.f32.mrf.mxu0
        %v8634 = vadd.f32 0.0, %v8633
        %v8635 = vpop.f32.mrf.mxu0
        %v8636 = vadd.f32 0.0, %v8635
        %8637 = vmatprep.mubr.f32.mxu0 0.0
        %v8638 = vand.u32 %v8418, 4294901760
        %v8639 = vsub.f32 %v8418, %v8638
        %v8640 = vand.u32 %v8639, 4294901760
        %v8641 = vsub.f32 %v8639, %v8640
        %v8642 = vand.u32 %v8641, 4294901760
        %8643 = vmatmul.mubr.f32.gmra.mxu0 %v8642
        %v8644 = vpop.f32.mrf.mxu0
        %v8645 = vadd.f32 0.0, %v8644
        %v8646 = vpop.f32.mrf.mxu0
        %v8647 = vadd.f32 0.0, %v8646
        %8648 = vmatprep.mubr.f32.mxu0 0.0
        %v8649 = vand.u32 %v8421, 4294901760
        %v8650 = vsub.f32 %v8421, %v8649
        %v8651 = vand.u32 %v8650, 4294901760
        %v8652 = vsub.f32 %v8650, %v8651
        %v8653 = vand.u32 %v8652, 4294901760
        %8654 = vmatmul.mubr.f32.gmra.mxu0 %v8653
        %v8655 = vpop.f32.mrf.mxu0
        %v8656 = vadd.f32 0.0, %v8655
        %v8657 = vpop.f32.mrf.mxu0
        %v8658 = vadd.f32 0.0, %v8657
        %8659 = vmatprep.mubr.f32.mxu0 0.0
        %v8660 = vand.u32 %v8424, 4294901760
        %v8661 = vsub.f32 %v8424, %v8660
        %v8662 = vand.u32 %v8661, 4294901760
        %v8663 = vsub.f32 %v8661, %v8662
        %v8664 = vand.u32 %v8663, 4294901760
        %8665 = vmatmul.mubr.f32.gmra.mxu0 %v8664
        %v8666 = vpop.f32.mrf.mxu0
        %v8667 = vadd.f32 0.0, %v8666
        %v8668 = vpop.f32.mrf.mxu0
        %v8669 = vadd.f32 0.0, %v8668
        %8670 = vdwg.mxu0
        %8671 = vmatprep.subr.mxu0 0.0
        %8672 = vmatpush1.msra.mxu0 0.0
        %8673 = vmatprep.subr.mxu0 0.0
        %8674 = vmatpush1.msra.mxu0 0.0
        %8675 = vmatprep.subr.mxu0 0.0
        %8676 = vmatpush1.msra.mxu0 0.0
        %8677 = vmatprep.subr.mxu0 0.0
        %8678 = vmatpush1.msra.mxu0 0.0
        %8679 = vmatprep.subr.mxu0 0.0
        %8680 = vmatpush1.msra.mxu0 0.0
        %8681 = vmatprep.subr.mxu0 0.0
        %8682 = vmatpush1.msra.mxu0 0.0
        %8683 = vmatprep.subr.mxu0 0.0
        %8684 = vmatpush1.msra.mxu0 0.0
        %8685 = vmatprep.subr.mxu0 0.0
        %8686 = vmatpush1.msra.mxu0 0.0
        %8687 = vmatprep.subr.mxu0 0.0
        %8688 = vmatpush1.msra.mxu0 0.0
        %8689 = vmatprep.subr.mxu0 0.0
        %8690 = vmatpush1.msra.mxu0 0.0
        %8691 = vmatprep.subr.mxu0 0.0
        %8692 = vmatpush1.msra.mxu0 0.0
        %8693 = vmatprep.subr.mxu0 0.0
        %8694 = vmatpush1.msra.mxu0 0.0
        %8695 = vmatprep.subr.mxu0 0.0
        %8696 = vmatpush1.msra.mxu0 0.0
        %8697 = vmatprep.subr.mxu0 0.0
        %8698 = vmatpush1.msra.mxu0 0.0
        %v8699 = vand.u32 %v368, 4294901760
        %v8700 = vsub.f32 %v368, %v8699
        %v8701 = vand.u32 %v8700, 4294901760
        %v8702 = vsub.f32 %v8700, %v8701
        %v8703 = vand.u32 %v8702, 4294901760
        %8704 = vmatprep.subr.mxu0 %v8703
        %v8705 = vand.u32 %v367, 4294901760
        %v8706 = vsub.f32 %v367, %v8705
        %v8707 = vand.u32 %v8706, 4294901760
        %v8708 = vsub.f32 %v8706, %v8707
        %v8709 = vand.u32 %v8708, 4294901760
        %8710 = vmatpush1.msra.mxu0 %v8709
        %v8711 = vand.u32 %v366, 4294901760
        %v8712 = vsub.f32 %v366, %v8711
        %v8713 = vand.u32 %v8712, 4294901760
        %v8714 = vsub.f32 %v8712, %v8713
        %v8715 = vand.u32 %v8714, 4294901760
        %8716 = vmatprep.subr.mxu0 %v8715
        %v8717 = vand.u32 %v365, 4294901760
        %v8718 = vsub.f32 %v365, %v8717
        %v8719 = vand.u32 %v8718, 4294901760
        %v8720 = vsub.f32 %v8718, %v8719
        %v8721 = vand.u32 %v8720, 4294901760
        %8722 = vmatpush1.msra.mxu0 %v8721
        %8723 = vmatprep.subr.mxu0 0.0
        %8724 = vmatpush2.msra.mxu0 0.0
        %8725 = vmatprep.subr.mxu0 0.0
        %8726 = vmatpush2.msra.mxu0 0.0
        %8727 = vmatprep.subr.mxu0 0.0
        %8728 = vmatpush2.msra.mxu0 0.0
        %8729 = vmatprep.subr.mxu0 0.0
        %8730 = vmatpush2.msra.mxu0 0.0
        %8731 = vmatprep.subr.mxu0 0.0
        %8732 = vmatpush2.msra.mxu0 0.0
        %8733 = vmatprep.subr.mxu0 0.0
        %8734 = vmatpush2.msra.mxu0 0.0
        %8735 = vmatprep.subr.mxu0 0.0
        %8736 = vmatpush2.msra.mxu0 0.0
        %8737 = vmatprep.subr.mxu0 0.0
        %8738 = vmatpush2.msra.mxu0 0.0
        %8739 = vmatprep.subr.mxu0 0.0
        %8740 = vmatpush2.msra.mxu0 0.0
        %8741 = vmatprep.subr.mxu0 0.0
        %8742 = vmatpush2.msra.mxu0 0.0
        %8743 = vmatprep.subr.mxu0 0.0
        %8744 = vmatpush2.msra.mxu0 0.0
        %8745 = vmatprep.subr.mxu0 0.0
        %8746 = vmatpush2.msra.mxu0 0.0
        %8747 = vmatprep.subr.mxu0 0.0
        %8748 = vmatpush2.msra.mxu0 0.0
        %8749 = vmatprep.subr.mxu0 0.0
        %8750 = vmatpush2.msra.mxu0 0.0
        %8751 = vmatprep.subr.mxu0 0.0
        %8752 = vmatpush2.msra.mxu0 0.0
        %8753 = vmatprep.subr.mxu0 0.0
        %8754 = vmatpush2.msra.mxu0 0.0
        %8755 = vmatprep.mubr.f32.mxu0 0.0
        %v8756 = vand.u32 %v8379, 4294901760
        %8757 = vmatmul.mubr.f32.gmra.mxu0 %v8756
        %v8758 = vpop.f32.mrf.mxu0
        %v8759 = vadd.f32 %v8502, %v8758
        %v8760 = vpop.f32.mrf.mxu0
        %v8761 = vadd.f32 %v8504, %v8760
        %8762 = vmatprep.mubr.f32.mxu0 0.0
        %v8763 = vand.u32 %v8382, 4294901760
        %8764 = vmatmul.mubr.f32.gmra.mxu0 %v8763
        %v8765 = vpop.f32.mrf.mxu0
        %v8766 = vadd.f32 %v8513, %v8765
        %v8767 = vpop.f32.mrf.mxu0
        %v8768 = vadd.f32 %v8515, %v8767
        %8769 = vmatprep.mubr.f32.mxu0 0.0
        %v8770 = vand.u32 %v8385, 4294901760
        %8771 = vmatmul.mubr.f32.gmra.mxu0 %v8770
        %v8772 = vpop.f32.mrf.mxu0
        %v8773 = vadd.f32 %v8524, %v8772
        %v8774 = vpop.f32.mrf.mxu0
        %v8775 = vadd.f32 %v8526, %v8774
        %8776 = vmatprep.mubr.f32.mxu0 0.0
        %v8777 = vand.u32 %v8388, 4294901760
        %8778 = vmatmul.mubr.f32.gmra.mxu0 %v8777
        %v8779 = vpop.f32.mrf.mxu0
        %v8780 = vadd.f32 %v8535, %v8779
        %v8781 = vpop.f32.mrf.mxu0
        %v8782 = vadd.f32 %v8537, %v8781
        %8783 = vmatprep.mubr.f32.mxu0 0.0
        %v8784 = vand.u32 %v8391, 4294901760
        %8785 = vmatmul.mubr.f32.gmra.mxu0 %v8784
        %v8786 = vpop.f32.mrf.mxu0
        %v8787 = vadd.f32 %v8546, %v8786
        %v8788 = vpop.f32.mrf.mxu0
        %v8789 = vadd.f32 %v8548, %v8788
        %8790 = vmatprep.mubr.f32.mxu0 0.0
        %v8791 = vand.u32 %v8394, 4294901760
        %8792 = vmatmul.mubr.f32.gmra.mxu0 %v8791
        %v8793 = vpop.f32.mrf.mxu0
        %v8794 = vadd.f32 %v8557, %v8793
        %v8795 = vpop.f32.mrf.mxu0
        %v8796 = vadd.f32 %v8559, %v8795
        %8797 = vmatprep.mubr.f32.mxu0 0.0
        %v8798 = vand.u32 %v8397, 4294901760
        %8799 = vmatmul.mubr.f32.gmra.mxu0 %v8798
        %v8800 = vpop.f32.mrf.mxu0
        %v8801 = vadd.f32 %v8568, %v8800
        %v8802 = vpop.f32.mrf.mxu0
        %v8803 = vadd.f32 %v8570, %v8802
        %8804 = vmatprep.mubr.f32.mxu0 0.0
        %v8805 = vand.u32 %v8400, 4294901760
        %8806 = vmatmul.mubr.f32.gmra.mxu0 %v8805
        %v8807 = vpop.f32.mrf.mxu0
        %v8808 = vadd.f32 %v8579, %v8807
        %v8809 = vpop.f32.mrf.mxu0
        %v8810 = vadd.f32 %v8581, %v8809
        %8811 = vmatprep.mubr.f32.mxu0 0.0
        %v8812 = vand.u32 %v8403, 4294901760
        %8813 = vmatmul.mubr.f32.gmra.mxu0 %v8812
        %v8814 = vpop.f32.mrf.mxu0
        %v8815 = vadd.f32 %v8590, %v8814
        %v8816 = vpop.f32.mrf.mxu0
        %v8817 = vadd.f32 %v8592, %v8816
        %8818 = vmatprep.mubr.f32.mxu0 0.0
        %v8819 = vand.u32 %v8406, 4294901760
        %8820 = vmatmul.mubr.f32.gmra.mxu0 %v8819
        %v8821 = vpop.f32.mrf.mxu0
        %v8822 = vadd.f32 %v8601, %v8821
        %v8823 = vpop.f32.mrf.mxu0
        %v8824 = vadd.f32 %v8603, %v8823
        %8825 = vmatprep.mubr.f32.mxu0 0.0
        %v8826 = vand.u32 %v8409, 4294901760
        %8827 = vmatmul.mubr.f32.gmra.mxu0 %v8826
        %v8828 = vpop.f32.mrf.mxu0
        %v8829 = vadd.f32 %v8612, %v8828
        %v8830 = vpop.f32.mrf.mxu0
        %v8831 = vadd.f32 %v8614, %v8830
        %8832 = vmatprep.mubr.f32.mxu0 0.0
        %v8833 = vand.u32 %v8412, 4294901760
        %8834 = vmatmul.mubr.f32.gmra.mxu0 %v8833
        %v8835 = vpop.f32.mrf.mxu0
        %v8836 = vadd.f32 %v8623, %v8835
        %v8837 = vpop.f32.mrf.mxu0
        %v8838 = vadd.f32 %v8625, %v8837
        %8839 = vmatprep.mubr.f32.mxu0 0.0
        %v8840 = vand.u32 %v8415, 4294901760
        %8841 = vmatmul.mubr.f32.gmra.mxu0 %v8840
        %v8842 = vpop.f32.mrf.mxu0
        %v8843 = vadd.f32 %v8634, %v8842
        %v8844 = vpop.f32.mrf.mxu0
        %v8845 = vadd.f32 %v8636, %v8844
        %8846 = vmatprep.mubr.f32.mxu0 0.0
        %v8847 = vand.u32 %v8418, 4294901760
        %8848 = vmatmul.mubr.f32.gmra.mxu0 %v8847
        %v8849 = vpop.f32.mrf.mxu0
        %v8850 = vadd.f32 %v8645, %v8849
        %v8851 = vpop.f32.mrf.mxu0
        %v8852 = vadd.f32 %v8647, %v8851
        %8853 = vmatprep.mubr.f32.mxu0 0.0
        %v8854 = vand.u32 %v8421, 4294901760
        %8855 = vmatmul.mubr.f32.gmra.mxu0 %v8854
        %v8856 = vpop.f32.mrf.mxu0
        %v8857 = vadd.f32 %v8656, %v8856
        %v8858 = vpop.f32.mrf.mxu0
        %v8859 = vadd.f32 %v8658, %v8858
        %8860 = vmatprep.mubr.f32.mxu0 0.0
        %v8861 = vand.u32 %v8424, 4294901760
        %8862 = vmatmul.mubr.f32.gmra.mxu0 %v8861
        %v8863 = vpop.f32.mrf.mxu0
        %v8864 = vadd.f32 %v8667, %v8863
        %v8865 = vpop.f32.mrf.mxu0
        %v8866 = vadd.f32 %v8669, %v8865
        %8867 = vdwg.mxu0
        %8868 = vmatprep.subr.mxu0 0.0
        %8869 = vmatpush1.msra.mxu0 0.0
        %8870 = vmatprep.subr.mxu0 0.0
        %8871 = vmatpush1.msra.mxu0 0.0
        %8872 = vmatprep.subr.mxu0 0.0
        %8873 = vmatpush1.msra.mxu0 0.0
        %8874 = vmatprep.subr.mxu0 0.0
        %8875 = vmatpush1.msra.mxu0 0.0
        %8876 = vmatprep.subr.mxu0 0.0
        %8877 = vmatpush1.msra.mxu0 0.0
        %8878 = vmatprep.subr.mxu0 0.0
        %8879 = vmatpush1.msra.mxu0 0.0
        %8880 = vmatprep.subr.mxu0 0.0
        %8881 = vmatpush1.msra.mxu0 0.0
        %8882 = vmatprep.subr.mxu0 0.0
        %8883 = vmatpush1.msra.mxu0 0.0
        %8884 = vmatprep.subr.mxu0 0.0
        %8885 = vmatpush1.msra.mxu0 0.0
        %8886 = vmatprep.subr.mxu0 0.0
        %8887 = vmatpush1.msra.mxu0 0.0
        %8888 = vmatprep.subr.mxu0 0.0
        %8889 = vmatpush1.msra.mxu0 0.0
        %8890 = vmatprep.subr.mxu0 0.0
        %8891 = vmatpush1.msra.mxu0 0.0
        %8892 = vmatprep.subr.mxu0 0.0
        %8893 = vmatpush1.msra.mxu0 0.0
        %8894 = vmatprep.subr.mxu0 0.0
        %8895 = vmatpush1.msra.mxu0 0.0
        %v8896 = vand.u32 %v368, 4294901760
        %v8897 = vsub.f32 %v368, %v8896
        %8898 = vmatprep.subr.mxu0 %v8897
        %v8899 = vand.u32 %v367, 4294901760
        %v8900 = vsub.f32 %v367, %v8899
        %8901 = vmatpush1.msra.mxu0 %v8900
        %v8902 = vand.u32 %v366, 4294901760
        %v8903 = vsub.f32 %v366, %v8902
        %8904 = vmatprep.subr.mxu0 %v8903
        %v8905 = vand.u32 %v365, 4294901760
        %v8906 = vsub.f32 %v365, %v8905
        %8907 = vmatpush1.msra.mxu0 %v8906
        %8908 = vmatprep.subr.mxu0 0.0
        %8909 = vmatpush2.msra.mxu0 0.0
        %8910 = vmatprep.subr.mxu0 0.0
        %8911 = vmatpush2.msra.mxu0 0.0
        %8912 = vmatprep.subr.mxu0 0.0
        %8913 = vmatpush2.msra.mxu0 0.0
        %8914 = vmatprep.subr.mxu0 0.0
        %8915 = vmatpush2.msra.mxu0 0.0
        %8916 = vmatprep.subr.mxu0 0.0
        %8917 = vmatpush2.msra.mxu0 0.0
        %8918 = vmatprep.subr.mxu0 0.0
        %8919 = vmatpush2.msra.mxu0 0.0
        %8920 = vmatprep.subr.mxu0 0.0
        %8921 = vmatpush2.msra.mxu0 0.0
        %8922 = vmatprep.subr.mxu0 0.0
        %8923 = vmatpush2.msra.mxu0 0.0
        %8924 = vmatprep.subr.mxu0 0.0
        %8925 = vmatpush2.msra.mxu0 0.0
        %8926 = vmatprep.subr.mxu0 0.0
        %8927 = vmatpush2.msra.mxu0 0.0
        %8928 = vmatprep.subr.mxu0 0.0
        %8929 = vmatpush2.msra.mxu0 0.0
        %8930 = vmatprep.subr.mxu0 0.0
        %8931 = vmatpush2.msra.mxu0 0.0
        %8932 = vmatprep.subr.mxu0 0.0
        %8933 = vmatpush2.msra.mxu0 0.0
        %8934 = vmatprep.subr.mxu0 0.0
        %8935 = vmatpush2.msra.mxu0 0.0
        %8936 = vmatprep.subr.mxu0 0.0
        %8937 = vmatpush2.msra.mxu0 0.0
        %8938 = vmatprep.subr.mxu0 0.0
        %8939 = vmatpush2.msra.mxu0 0.0
        %8940 = vmatprep.mubr.f32.mxu0 0.0
        %v8941 = vand.u32 %v8379, 4294901760
        %v8942 = vsub.f32 %v8379, %v8941
        %8943 = vmatmul.mubr.f32.gmra.mxu0 %v8942
        %v8944 = vpop.f32.mrf.mxu0
        %v8945 = vadd.f32 %v8759, %v8944
        %v8946 = vpop.f32.mrf.mxu0
        %v8947 = vadd.f32 %v8761, %v8946
        %8948 = vmatprep.mubr.f32.mxu0 0.0
        %v8949 = vand.u32 %v8382, 4294901760
        %v8950 = vsub.f32 %v8382, %v8949
        %8951 = vmatmul.mubr.f32.gmra.mxu0 %v8950
        %v8952 = vpop.f32.mrf.mxu0
        %v8953 = vadd.f32 %v8766, %v8952
        %v8954 = vpop.f32.mrf.mxu0
        %v8955 = vadd.f32 %v8768, %v8954
        %8956 = vmatprep.mubr.f32.mxu0 0.0
        %v8957 = vand.u32 %v8385, 4294901760
        %v8958 = vsub.f32 %v8385, %v8957
        %8959 = vmatmul.mubr.f32.gmra.mxu0 %v8958
        %v8960 = vpop.f32.mrf.mxu0
        %v8961 = vadd.f32 %v8773, %v8960
        %v8962 = vpop.f32.mrf.mxu0
        %v8963 = vadd.f32 %v8775, %v8962
        %8964 = vmatprep.mubr.f32.mxu0 0.0
        %v8965 = vand.u32 %v8388, 4294901760
        %v8966 = vsub.f32 %v8388, %v8965
        %8967 = vmatmul.mubr.f32.gmra.mxu0 %v8966
        %v8968 = vpop.f32.mrf.mxu0
        %v8969 = vadd.f32 %v8780, %v8968
        %v8970 = vpop.f32.mrf.mxu0
        %v8971 = vadd.f32 %v8782, %v8970
        %8972 = vmatprep.mubr.f32.mxu0 0.0
        %v8973 = vand.u32 %v8391, 4294901760
        %v8974 = vsub.f32 %v8391, %v8973
        %8975 = vmatmul.mubr.f32.gmra.mxu0 %v8974
        %v8976 = vpop.f32.mrf.mxu0
        %v8977 = vadd.f32 %v8787, %v8976
        %v8978 = vpop.f32.mrf.mxu0
        %v8979 = vadd.f32 %v8789, %v8978
        %8980 = vmatprep.mubr.f32.mxu0 0.0
        %v8981 = vand.u32 %v8394, 4294901760
        %v8982 = vsub.f32 %v8394, %v8981
        %8983 = vmatmul.mubr.f32.gmra.mxu0 %v8982
        %v8984 = vpop.f32.mrf.mxu0
        %v8985 = vadd.f32 %v8794, %v8984
        %v8986 = vpop.f32.mrf.mxu0
        %v8987 = vadd.f32 %v8796, %v8986
        %8988 = vmatprep.mubr.f32.mxu0 0.0
        %v8989 = vand.u32 %v8397, 4294901760
        %v8990 = vsub.f32 %v8397, %v8989
        %8991 = vmatmul.mubr.f32.gmra.mxu0 %v8990
        %v8992 = vpop.f32.mrf.mxu0
        %v8993 = vadd.f32 %v8801, %v8992
        %v8994 = vpop.f32.mrf.mxu0
        %v8995 = vadd.f32 %v8803, %v8994
        %8996 = vmatprep.mubr.f32.mxu0 0.0
        %v8997 = vand.u32 %v8400, 4294901760
        %v8998 = vsub.f32 %v8400, %v8997
        %8999 = vmatmul.mubr.f32.gmra.mxu0 %v8998
        %v9000 = vpop.f32.mrf.mxu0
        %v9001 = vadd.f32 %v8808, %v9000
        %v9002 = vpop.f32.mrf.mxu0
        %v9003 = vadd.f32 %v8810, %v9002
        %9004 = vmatprep.mubr.f32.mxu0 0.0
        %v9005 = vand.u32 %v8403, 4294901760
        %v9006 = vsub.f32 %v8403, %v9005
        %9007 = vmatmul.mubr.f32.gmra.mxu0 %v9006
        %v9008 = vpop.f32.mrf.mxu0
        %v9009 = vadd.f32 %v8815, %v9008
        %v9010 = vpop.f32.mrf.mxu0
        %v9011 = vadd.f32 %v8817, %v9010
        %9012 = vmatprep.mubr.f32.mxu0 0.0
        %v9013 = vand.u32 %v8406, 4294901760
        %v9014 = vsub.f32 %v8406, %v9013
        %9015 = vmatmul.mubr.f32.gmra.mxu0 %v9014
        %v9016 = vpop.f32.mrf.mxu0
        %v9017 = vadd.f32 %v8822, %v9016
        %v9018 = vpop.f32.mrf.mxu0
        %v9019 = vadd.f32 %v8824, %v9018
        %9020 = vmatprep.mubr.f32.mxu0 0.0
        %v9021 = vand.u32 %v8409, 4294901760
        %v9022 = vsub.f32 %v8409, %v9021
        %9023 = vmatmul.mubr.f32.gmra.mxu0 %v9022
        %v9024 = vpop.f32.mrf.mxu0
        %v9025 = vadd.f32 %v8829, %v9024
        %v9026 = vpop.f32.mrf.mxu0
        %v9027 = vadd.f32 %v8831, %v9026
        %9028 = vmatprep.mubr.f32.mxu0 0.0
        %v9029 = vand.u32 %v8412, 4294901760
        %v9030 = vsub.f32 %v8412, %v9029
        %9031 = vmatmul.mubr.f32.gmra.mxu0 %v9030
        %v9032 = vpop.f32.mrf.mxu0
        %v9033 = vadd.f32 %v8836, %v9032
        %v9034 = vpop.f32.mrf.mxu0
        %v9035 = vadd.f32 %v8838, %v9034
        %9036 = vmatprep.mubr.f32.mxu0 0.0
        %v9037 = vand.u32 %v8415, 4294901760
        %v9038 = vsub.f32 %v8415, %v9037
        %9039 = vmatmul.mubr.f32.gmra.mxu0 %v9038
        %v9040 = vpop.f32.mrf.mxu0
        %v9041 = vadd.f32 %v8843, %v9040
        %v9042 = vpop.f32.mrf.mxu0
        %v9043 = vadd.f32 %v8845, %v9042
        %9044 = vmatprep.mubr.f32.mxu0 0.0
        %v9045 = vand.u32 %v8418, 4294901760
        %v9046 = vsub.f32 %v8418, %v9045
        %9047 = vmatmul.mubr.f32.gmra.mxu0 %v9046
        %v9048 = vpop.f32.mrf.mxu0
        %v9049 = vadd.f32 %v8850, %v9048
        %v9050 = vpop.f32.mrf.mxu0
        %v9051 = vadd.f32 %v8852, %v9050
        %9052 = vmatprep.mubr.f32.mxu0 0.0
        %v9053 = vand.u32 %v8421, 4294901760
        %v9054 = vsub.f32 %v8421, %v9053
        %9055 = vmatmul.mubr.f32.gmra.mxu0 %v9054
        %v9056 = vpop.f32.mrf.mxu0
        %v9057 = vadd.f32 %v8857, %v9056
        %v9058 = vpop.f32.mrf.mxu0
        %v9059 = vadd.f32 %v8859, %v9058
        %9060 = vmatprep.mubr.f32.mxu0 0.0
        %v9061 = vand.u32 %v8424, 4294901760
        %v9062 = vsub.f32 %v8424, %v9061
        %9063 = vmatmul.mubr.f32.gmra.mxu0 %v9062
        %v9064 = vpop.f32.mrf.mxu0
        %v9065 = vadd.f32 %v8864, %v9064
        %v9066 = vpop.f32.mrf.mxu0
        %v9067 = vadd.f32 %v8866, %v9066
        %9068 = vdwg.mxu0
        %9069 = vmatprep.subr.mxu0 0.0
        %9070 = vmatpush1.msra.mxu0 0.0
        %9071 = vmatprep.subr.mxu0 0.0
        %9072 = vmatpush1.msra.mxu0 0.0
        %9073 = vmatprep.subr.mxu0 0.0
        %9074 = vmatpush1.msra.mxu0 0.0
        %9075 = vmatprep.subr.mxu0 0.0
        %9076 = vmatpush1.msra.mxu0 0.0
        %9077 = vmatprep.subr.mxu0 0.0
        %9078 = vmatpush1.msra.mxu0 0.0
        %9079 = vmatprep.subr.mxu0 0.0
        %9080 = vmatpush1.msra.mxu0 0.0
        %9081 = vmatprep.subr.mxu0 0.0
        %9082 = vmatpush1.msra.mxu0 0.0
        %9083 = vmatprep.subr.mxu0 0.0
        %9084 = vmatpush1.msra.mxu0 0.0
        %9085 = vmatprep.subr.mxu0 0.0
        %9086 = vmatpush1.msra.mxu0 0.0
        %9087 = vmatprep.subr.mxu0 0.0
        %9088 = vmatpush1.msra.mxu0 0.0
        %9089 = vmatprep.subr.mxu0 0.0
        %9090 = vmatpush1.msra.mxu0 0.0
        %9091 = vmatprep.subr.mxu0 0.0
        %9092 = vmatpush1.msra.mxu0 0.0
        %9093 = vmatprep.subr.mxu0 0.0
        %9094 = vmatpush1.msra.mxu0 0.0
        %9095 = vmatprep.subr.mxu0 0.0
        %9096 = vmatpush1.msra.mxu0 0.0
        %v9097 = vand.u32 %v368, 4294901760
        %9098 = vmatprep.subr.mxu0 %v9097
        %v9099 = vand.u32 %v367, 4294901760
        %9100 = vmatpush1.msra.mxu0 %v9099
        %v9101 = vand.u32 %v366, 4294901760
        %9102 = vmatprep.subr.mxu0 %v9101
        %v9103 = vand.u32 %v365, 4294901760
        %9104 = vmatpush1.msra.mxu0 %v9103
        %9105 = vmatprep.subr.mxu0 0.0
        %9106 = vmatpush2.msra.mxu0 0.0
        %9107 = vmatprep.subr.mxu0 0.0
        %9108 = vmatpush2.msra.mxu0 0.0
        %9109 = vmatprep.subr.mxu0 0.0
        %9110 = vmatpush2.msra.mxu0 0.0
        %9111 = vmatprep.subr.mxu0 0.0
        %9112 = vmatpush2.msra.mxu0 0.0
        %9113 = vmatprep.subr.mxu0 0.0
        %9114 = vmatpush2.msra.mxu0 0.0
        %9115 = vmatprep.subr.mxu0 0.0
        %9116 = vmatpush2.msra.mxu0 0.0
        %9117 = vmatprep.subr.mxu0 0.0
        %9118 = vmatpush2.msra.mxu0 0.0
        %9119 = vmatprep.subr.mxu0 0.0
        %9120 = vmatpush2.msra.mxu0 0.0
        %9121 = vmatprep.subr.mxu0 0.0
        %9122 = vmatpush2.msra.mxu0 0.0
        %9123 = vmatprep.subr.mxu0 0.0
        %9124 = vmatpush2.msra.mxu0 0.0
        %9125 = vmatprep.subr.mxu0 0.0
        %9126 = vmatpush2.msra.mxu0 0.0
        %9127 = vmatprep.subr.mxu0 0.0
        %9128 = vmatpush2.msra.mxu0 0.0
        %9129 = vmatprep.subr.mxu0 0.0
        %9130 = vmatpush2.msra.mxu0 0.0
        %9131 = vmatprep.subr.mxu0 0.0
        %9132 = vmatpush2.msra.mxu0 0.0
        %9133 = vmatprep.subr.mxu0 0.0
        %9134 = vmatpush2.msra.mxu0 0.0
        %9135 = vmatprep.subr.mxu0 0.0
        %9136 = vmatpush2.msra.mxu0 0.0
        %9137 = vmatprep.mubr.f32.mxu0 0.0
        %v9138 = vand.u32 %v8379, 4294901760
        %v9139 = vsub.f32 %v8379, %v9138
        %v9140 = vand.u32 %v9139, 4294901760
        %9141 = vmatmul.mubr.f32.gmra.mxu0 %v9140
        %v9142 = vpop.f32.mrf.mxu0
        %v9143 = vadd.f32 %v8945, %v9142
        %v9144 = vpop.f32.mrf.mxu0
        %v9145 = vadd.f32 %v8947, %v9144
        %9146 = vmatprep.mubr.f32.mxu0 0.0
        %v9147 = vand.u32 %v8382, 4294901760
        %v9148 = vsub.f32 %v8382, %v9147
        %v9149 = vand.u32 %v9148, 4294901760
        %9150 = vmatmul.mubr.f32.gmra.mxu0 %v9149
        %v9151 = vpop.f32.mrf.mxu0
        %v9152 = vadd.f32 %v8953, %v9151
        %v9153 = vpop.f32.mrf.mxu0
        %v9154 = vadd.f32 %v8955, %v9153
        %9155 = vmatprep.mubr.f32.mxu0 0.0
        %v9156 = vand.u32 %v8385, 4294901760
        %v9157 = vsub.f32 %v8385, %v9156
        %v9158 = vand.u32 %v9157, 4294901760
        %9159 = vmatmul.mubr.f32.gmra.mxu0 %v9158
        %v9160 = vpop.f32.mrf.mxu0
        %v9161 = vadd.f32 %v8961, %v9160
        %v9162 = vpop.f32.mrf.mxu0
        %v9163 = vadd.f32 %v8963, %v9162
        %9164 = vmatprep.mubr.f32.mxu0 0.0
        %v9165 = vand.u32 %v8388, 4294901760
        %v9166 = vsub.f32 %v8388, %v9165
        %v9167 = vand.u32 %v9166, 4294901760
        %9168 = vmatmul.mubr.f32.gmra.mxu0 %v9167
        %v9169 = vpop.f32.mrf.mxu0
        %v9170 = vadd.f32 %v8969, %v9169
        %v9171 = vpop.f32.mrf.mxu0
        %v9172 = vadd.f32 %v8971, %v9171
        %9173 = vmatprep.mubr.f32.mxu0 0.0
        %v9174 = vand.u32 %v8391, 4294901760
        %v9175 = vsub.f32 %v8391, %v9174
        %v9176 = vand.u32 %v9175, 4294901760
        %9177 = vmatmul.mubr.f32.gmra.mxu0 %v9176
        %v9178 = vpop.f32.mrf.mxu0
        %v9179 = vadd.f32 %v8977, %v9178
        %v9180 = vpop.f32.mrf.mxu0
        %v9181 = vadd.f32 %v8979, %v9180
        %9182 = vmatprep.mubr.f32.mxu0 0.0
        %v9183 = vand.u32 %v8394, 4294901760
        %v9184 = vsub.f32 %v8394, %v9183
        %v9185 = vand.u32 %v9184, 4294901760
        %9186 = vmatmul.mubr.f32.gmra.mxu0 %v9185
        %v9187 = vpop.f32.mrf.mxu0
        %v9188 = vadd.f32 %v8985, %v9187
        %v9189 = vpop.f32.mrf.mxu0
        %v9190 = vadd.f32 %v8987, %v9189
        %9191 = vmatprep.mubr.f32.mxu0 0.0
        %v9192 = vand.u32 %v8397, 4294901760
        %v9193 = vsub.f32 %v8397, %v9192
        %v9194 = vand.u32 %v9193, 4294901760
        %9195 = vmatmul.mubr.f32.gmra.mxu0 %v9194
        %v9196 = vpop.f32.mrf.mxu0
        %v9197 = vadd.f32 %v8993, %v9196
        %v9198 = vpop.f32.mrf.mxu0
        %v9199 = vadd.f32 %v8995, %v9198
        %9200 = vmatprep.mubr.f32.mxu0 0.0
        %v9201 = vand.u32 %v8400, 4294901760
        %v9202 = vsub.f32 %v8400, %v9201
        %v9203 = vand.u32 %v9202, 4294901760
        %9204 = vmatmul.mubr.f32.gmra.mxu0 %v9203
        %v9205 = vpop.f32.mrf.mxu0
        %v9206 = vadd.f32 %v9001, %v9205
        %v9207 = vpop.f32.mrf.mxu0
        %v9208 = vadd.f32 %v9003, %v9207
        %9209 = vmatprep.mubr.f32.mxu0 0.0
        %v9210 = vand.u32 %v8403, 4294901760
        %v9211 = vsub.f32 %v8403, %v9210
        %v9212 = vand.u32 %v9211, 4294901760
        %9213 = vmatmul.mubr.f32.gmra.mxu0 %v9212
        %v9214 = vpop.f32.mrf.mxu0
        %v9215 = vadd.f32 %v9009, %v9214
        %v9216 = vpop.f32.mrf.mxu0
        %v9217 = vadd.f32 %v9011, %v9216
        %9218 = vmatprep.mubr.f32.mxu0 0.0
        %v9219 = vand.u32 %v8406, 4294901760
        %v9220 = vsub.f32 %v8406, %v9219
        %v9221 = vand.u32 %v9220, 4294901760
        %9222 = vmatmul.mubr.f32.gmra.mxu0 %v9221
        %v9223 = vpop.f32.mrf.mxu0
        %v9224 = vadd.f32 %v9017, %v9223
        %v9225 = vpop.f32.mrf.mxu0
        %v9226 = vadd.f32 %v9019, %v9225
        %9227 = vmatprep.mubr.f32.mxu0 0.0
        %v9228 = vand.u32 %v8409, 4294901760
        %v9229 = vsub.f32 %v8409, %v9228
        %v9230 = vand.u32 %v9229, 4294901760
        %9231 = vmatmul.mubr.f32.gmra.mxu0 %v9230
        %v9232 = vpop.f32.mrf.mxu0
        %v9233 = vadd.f32 %v9025, %v9232
        %v9234 = vpop.f32.mrf.mxu0
        %v9235 = vadd.f32 %v9027, %v9234
        %9236 = vmatprep.mubr.f32.mxu0 0.0
        %v9237 = vand.u32 %v8412, 4294901760
        %v9238 = vsub.f32 %v8412, %v9237
        %v9239 = vand.u32 %v9238, 4294901760
        %9240 = vmatmul.mubr.f32.gmra.mxu0 %v9239
        %v9241 = vpop.f32.mrf.mxu0
        %v9242 = vadd.f32 %v9033, %v9241
        %v9243 = vpop.f32.mrf.mxu0
        %v9244 = vadd.f32 %v9035, %v9243
        %9245 = vmatprep.mubr.f32.mxu0 0.0
        %v9246 = vand.u32 %v8415, 4294901760
        %v9247 = vsub.f32 %v8415, %v9246
        %v9248 = vand.u32 %v9247, 4294901760
        %9249 = vmatmul.mubr.f32.gmra.mxu0 %v9248
        %v9250 = vpop.f32.mrf.mxu0
        %v9251 = vadd.f32 %v9041, %v9250
        %v9252 = vpop.f32.mrf.mxu0
        %v9253 = vadd.f32 %v9043, %v9252
        %9254 = vmatprep.mubr.f32.mxu0 0.0
        %v9255 = vand.u32 %v8418, 4294901760
        %v9256 = vsub.f32 %v8418, %v9255
        %v9257 = vand.u32 %v9256, 4294901760
        %9258 = vmatmul.mubr.f32.gmra.mxu0 %v9257
        %v9259 = vpop.f32.mrf.mxu0
        %v9260 = vadd.f32 %v9049, %v9259
        %v9261 = vpop.f32.mrf.mxu0
        %v9262 = vadd.f32 %v9051, %v9261
        %9263 = vmatprep.mubr.f32.mxu0 0.0
        %v9264 = vand.u32 %v8421, 4294901760
        %v9265 = vsub.f32 %v8421, %v9264
        %v9266 = vand.u32 %v9265, 4294901760
        %9267 = vmatmul.mubr.f32.gmra.mxu0 %v9266
        %v9268 = vpop.f32.mrf.mxu0
        %v9269 = vadd.f32 %v9057, %v9268
        %v9270 = vpop.f32.mrf.mxu0
        %v9271 = vadd.f32 %v9059, %v9270
        %9272 = vmatprep.mubr.f32.mxu0 0.0
        %v9273 = vand.u32 %v8424, 4294901760
        %v9274 = vsub.f32 %v8424, %v9273
        %v9275 = vand.u32 %v9274, 4294901760
        %9276 = vmatmul.mubr.f32.gmra.mxu0 %v9275
        %v9277 = vpop.f32.mrf.mxu0
        %v9278 = vadd.f32 %v9065, %v9277
        %v9279 = vpop.f32.mrf.mxu0
        %v9280 = vadd.f32 %v9067, %v9279
        %9281 = vdwg.mxu0
        %9282 = vmatprep.subr.mxu0 0.0
        %9283 = vmatpush1.msra.mxu0 0.0
        %9284 = vmatprep.subr.mxu0 0.0
        %9285 = vmatpush1.msra.mxu0 0.0
        %9286 = vmatprep.subr.mxu0 0.0
        %9287 = vmatpush1.msra.mxu0 0.0
        %9288 = vmatprep.subr.mxu0 0.0
        %9289 = vmatpush1.msra.mxu0 0.0
        %9290 = vmatprep.subr.mxu0 0.0
        %9291 = vmatpush1.msra.mxu0 0.0
        %9292 = vmatprep.subr.mxu0 0.0
        %9293 = vmatpush1.msra.mxu0 0.0
        %9294 = vmatprep.subr.mxu0 0.0
        %9295 = vmatpush1.msra.mxu0 0.0
        %9296 = vmatprep.subr.mxu0 0.0
        %9297 = vmatpush1.msra.mxu0 0.0
        %9298 = vmatprep.subr.mxu0 0.0
        %9299 = vmatpush1.msra.mxu0 0.0
        %9300 = vmatprep.subr.mxu0 0.0
        %9301 = vmatpush1.msra.mxu0 0.0
        %9302 = vmatprep.subr.mxu0 0.0
        %9303 = vmatpush1.msra.mxu0 0.0
        %9304 = vmatprep.subr.mxu0 0.0
        %9305 = vmatpush1.msra.mxu0 0.0
        %9306 = vmatprep.subr.mxu0 0.0
        %9307 = vmatpush1.msra.mxu0 0.0
        %9308 = vmatprep.subr.mxu0 0.0
        %9309 = vmatpush1.msra.mxu0 0.0
        %v9310 = vand.u32 %v368, 4294901760
        %v9311 = vsub.f32 %v368, %v9310
        %v9312 = vand.u32 %v9311, 4294901760
        %9313 = vmatprep.subr.mxu0 %v9312
        %v9314 = vand.u32 %v367, 4294901760
        %v9315 = vsub.f32 %v367, %v9314
        %v9316 = vand.u32 %v9315, 4294901760
        %9317 = vmatpush1.msra.mxu0 %v9316
        %v9318 = vand.u32 %v366, 4294901760
        %v9319 = vsub.f32 %v366, %v9318
        %v9320 = vand.u32 %v9319, 4294901760
        %9321 = vmatprep.subr.mxu0 %v9320
        %v9322 = vand.u32 %v365, 4294901760
        %v9323 = vsub.f32 %v365, %v9322
        %v9324 = vand.u32 %v9323, 4294901760
        %9325 = vmatpush1.msra.mxu0 %v9324
        %9326 = vmatprep.subr.mxu0 0.0
        %9327 = vmatpush2.msra.mxu0 0.0
        %9328 = vmatprep.subr.mxu0 0.0
        %9329 = vmatpush2.msra.mxu0 0.0
        %9330 = vmatprep.subr.mxu0 0.0
        %9331 = vmatpush2.msra.mxu0 0.0
        %9332 = vmatprep.subr.mxu0 0.0
        %9333 = vmatpush2.msra.mxu0 0.0
        %9334 = vmatprep.subr.mxu0 0.0
        %9335 = vmatpush2.msra.mxu0 0.0
        %9336 = vmatprep.subr.mxu0 0.0
        %9337 = vmatpush2.msra.mxu0 0.0
        %9338 = vmatprep.subr.mxu0 0.0
        %9339 = vmatpush2.msra.mxu0 0.0
        %9340 = vmatprep.subr.mxu0 0.0
        %9341 = vmatpush2.msra.mxu0 0.0
        %9342 = vmatprep.subr.mxu0 0.0
        %9343 = vmatpush2.msra.mxu0 0.0
        %9344 = vmatprep.subr.mxu0 0.0
        %9345 = vmatpush2.msra.mxu0 0.0
        %9346 = vmatprep.subr.mxu0 0.0
        %9347 = vmatpush2.msra.mxu0 0.0
        %9348 = vmatprep.subr.mxu0 0.0
        %9349 = vmatpush2.msra.mxu0 0.0
        %9350 = vmatprep.subr.mxu0 0.0
        %9351 = vmatpush2.msra.mxu0 0.0
        %9352 = vmatprep.subr.mxu0 0.0
        %9353 = vmatpush2.msra.mxu0 0.0
        %9354 = vmatprep.subr.mxu0 0.0
        %9355 = vmatpush2.msra.mxu0 0.0
        %9356 = vmatprep.subr.mxu0 0.0
        %9357 = vmatpush2.msra.mxu0 0.0
        %9358 = vmatprep.mubr.f32.mxu0 0.0
        %v9359 = vand.u32 %v8379, 4294901760
        %9360 = vmatmul.mubr.f32.gmra.mxu0 %v9359
        %v9361 = vpop.f32.mrf.mxu0
        %v9362 = vadd.f32 %v9143, %v9361
        %v9363 = vpop.f32.mrf.mxu0
        %v9364 = vadd.f32 %v9145, %v9363
        %9365 = vmatprep.mubr.f32.mxu0 0.0
        %v9366 = vand.u32 %v8382, 4294901760
        %9367 = vmatmul.mubr.f32.gmra.mxu0 %v9366
        %v9368 = vpop.f32.mrf.mxu0
        %v9369 = vadd.f32 %v9152, %v9368
        %v9370 = vpop.f32.mrf.mxu0
        %v9371 = vadd.f32 %v9154, %v9370
        %9372 = vmatprep.mubr.f32.mxu0 0.0
        %v9373 = vand.u32 %v8385, 4294901760
        %9374 = vmatmul.mubr.f32.gmra.mxu0 %v9373
        %v9375 = vpop.f32.mrf.mxu0
        %v9376 = vadd.f32 %v9161, %v9375
        %v9377 = vpop.f32.mrf.mxu0
        %v9378 = vadd.f32 %v9163, %v9377
        %9379 = vmatprep.mubr.f32.mxu0 0.0
        %v9380 = vand.u32 %v8388, 4294901760
        %9381 = vmatmul.mubr.f32.gmra.mxu0 %v9380
        %v9382 = vpop.f32.mrf.mxu0
        %v9383 = vadd.f32 %v9170, %v9382
        %v9384 = vpop.f32.mrf.mxu0
        %v9385 = vadd.f32 %v9172, %v9384
        %9386 = vmatprep.mubr.f32.mxu0 0.0
        %v9387 = vand.u32 %v8391, 4294901760
        %9388 = vmatmul.mubr.f32.gmra.mxu0 %v9387
        %v9389 = vpop.f32.mrf.mxu0
        %v9390 = vadd.f32 %v9179, %v9389
        %v9391 = vpop.f32.mrf.mxu0
        %v9392 = vadd.f32 %v9181, %v9391
        %9393 = vmatprep.mubr.f32.mxu0 0.0
        %v9394 = vand.u32 %v8394, 4294901760
        %9395 = vmatmul.mubr.f32.gmra.mxu0 %v9394
        %v9396 = vpop.f32.mrf.mxu0
        %v9397 = vadd.f32 %v9188, %v9396
        %v9398 = vpop.f32.mrf.mxu0
        %v9399 = vadd.f32 %v9190, %v9398
        %9400 = vmatprep.mubr.f32.mxu0 0.0
        %v9401 = vand.u32 %v8397, 4294901760
        %9402 = vmatmul.mubr.f32.gmra.mxu0 %v9401
        %v9403 = vpop.f32.mrf.mxu0
        %v9404 = vadd.f32 %v9197, %v9403
        %v9405 = vpop.f32.mrf.mxu0
        %v9406 = vadd.f32 %v9199, %v9405
        %9407 = vmatprep.mubr.f32.mxu0 0.0
        %v9408 = vand.u32 %v8400, 4294901760
        %9409 = vmatmul.mubr.f32.gmra.mxu0 %v9408
        %v9410 = vpop.f32.mrf.mxu0
        %v9411 = vadd.f32 %v9206, %v9410
        %v9412 = vpop.f32.mrf.mxu0
        %v9413 = vadd.f32 %v9208, %v9412
        %9414 = vmatprep.mubr.f32.mxu0 0.0
        %v9415 = vand.u32 %v8403, 4294901760
        %9416 = vmatmul.mubr.f32.gmra.mxu0 %v9415
        %v9417 = vpop.f32.mrf.mxu0
        %v9418 = vadd.f32 %v9215, %v9417
        %v9419 = vpop.f32.mrf.mxu0
        %v9420 = vadd.f32 %v9217, %v9419
        %9421 = vmatprep.mubr.f32.mxu0 0.0
        %v9422 = vand.u32 %v8406, 4294901760
        %9423 = vmatmul.mubr.f32.gmra.mxu0 %v9422
        %v9424 = vpop.f32.mrf.mxu0
        %v9425 = vadd.f32 %v9224, %v9424
        %v9426 = vpop.f32.mrf.mxu0
        %v9427 = vadd.f32 %v9226, %v9426
        %9428 = vmatprep.mubr.f32.mxu0 0.0
        %v9429 = vand.u32 %v8409, 4294901760
        %9430 = vmatmul.mubr.f32.gmra.mxu0 %v9429
        %v9431 = vpop.f32.mrf.mxu0
        %v9432 = vadd.f32 %v9233, %v9431
        %v9433 = vpop.f32.mrf.mxu0
        %v9434 = vadd.f32 %v9235, %v9433
        %9435 = vmatprep.mubr.f32.mxu0 0.0
        %v9436 = vand.u32 %v8412, 4294901760
        %9437 = vmatmul.mubr.f32.gmra.mxu0 %v9436
        %v9438 = vpop.f32.mrf.mxu0
        %v9439 = vadd.f32 %v9242, %v9438
        %v9440 = vpop.f32.mrf.mxu0
        %v9441 = vadd.f32 %v9244, %v9440
        %9442 = vmatprep.mubr.f32.mxu0 0.0
        %v9443 = vand.u32 %v8415, 4294901760
        %9444 = vmatmul.mubr.f32.gmra.mxu0 %v9443
        %v9445 = vpop.f32.mrf.mxu0
        %v9446 = vadd.f32 %v9251, %v9445
        %v9447 = vpop.f32.mrf.mxu0
        %v9448 = vadd.f32 %v9253, %v9447
        %9449 = vmatprep.mubr.f32.mxu0 0.0
        %v9450 = vand.u32 %v8418, 4294901760
        %9451 = vmatmul.mubr.f32.gmra.mxu0 %v9450
        %v9452 = vpop.f32.mrf.mxu0
        %v9453 = vadd.f32 %v9260, %v9452
        %v9454 = vpop.f32.mrf.mxu0
        %v9455 = vadd.f32 %v9262, %v9454
        %9456 = vmatprep.mubr.f32.mxu0 0.0
        %v9457 = vand.u32 %v8421, 4294901760
        %9458 = vmatmul.mubr.f32.gmra.mxu0 %v9457
        %v9459 = vpop.f32.mrf.mxu0
        %v9460 = vadd.f32 %v9269, %v9459
        %v9461 = vpop.f32.mrf.mxu0
        %v9462 = vadd.f32 %v9271, %v9461
        %9463 = vmatprep.mubr.f32.mxu0 0.0
        %v9464 = vand.u32 %v8424, 4294901760
        %9465 = vmatmul.mubr.f32.gmra.mxu0 %v9464
        %v9466 = vpop.f32.mrf.mxu0
        %v9467 = vadd.f32 %v9278, %v9466
        %v9468 = vpop.f32.mrf.mxu0
        %v9469 = vadd.f32 %v9280, %v9468
        %9470 = vdwg.mxu0
        %9471 = vmatprep.subr.mxu0 0.0
        %9472 = vmatpush1.msra.mxu0 0.0
        %9473 = vmatprep.subr.mxu0 0.0
        %9474 = vmatpush1.msra.mxu0 0.0
        %9475 = vmatprep.subr.mxu0 0.0
        %9476 = vmatpush1.msra.mxu0 0.0
        %9477 = vmatprep.subr.mxu0 0.0
        %9478 = vmatpush1.msra.mxu0 0.0
        %9479 = vmatprep.subr.mxu0 0.0
        %9480 = vmatpush1.msra.mxu0 0.0
        %9481 = vmatprep.subr.mxu0 0.0
        %9482 = vmatpush1.msra.mxu0 0.0
        %9483 = vmatprep.subr.mxu0 0.0
        %9484 = vmatpush1.msra.mxu0 0.0
        %9485 = vmatprep.subr.mxu0 0.0
        %9486 = vmatpush1.msra.mxu0 0.0
        %9487 = vmatprep.subr.mxu0 0.0
        %9488 = vmatpush1.msra.mxu0 0.0
        %9489 = vmatprep.subr.mxu0 0.0
        %9490 = vmatpush1.msra.mxu0 0.0
        %9491 = vmatprep.subr.mxu0 0.0
        %9492 = vmatpush1.msra.mxu0 0.0
        %9493 = vmatprep.subr.mxu0 0.0
        %9494 = vmatpush1.msra.mxu0 0.0
        %9495 = vmatprep.subr.mxu0 0.0
        %9496 = vmatpush1.msra.mxu0 0.0
        %9497 = vmatprep.subr.mxu0 0.0
        %9498 = vmatpush1.msra.mxu0 0.0
        %v9499 = vand.u32 %v368, 4294901760
        %9500 = vmatprep.subr.mxu0 %v9499
        %v9501 = vand.u32 %v367, 4294901760
        %9502 = vmatpush1.msra.mxu0 %v9501
        %v9503 = vand.u32 %v366, 4294901760
        %9504 = vmatprep.subr.mxu0 %v9503
        %v9505 = vand.u32 %v365, 4294901760
        %9506 = vmatpush1.msra.mxu0 %v9505
        %9507 = vmatprep.subr.mxu0 0.0
        %9508 = vmatpush2.msra.mxu0 0.0
        %9509 = vmatprep.subr.mxu0 0.0
        %9510 = vmatpush2.msra.mxu0 0.0
        %9511 = vmatprep.subr.mxu0 0.0
        %9512 = vmatpush2.msra.mxu0 0.0
        %9513 = vmatprep.subr.mxu0 0.0
        %9514 = vmatpush2.msra.mxu0 0.0
        %9515 = vmatprep.subr.mxu0 0.0
        %9516 = vmatpush2.msra.mxu0 0.0
        %9517 = vmatprep.subr.mxu0 0.0
        %9518 = vmatpush2.msra.mxu0 0.0
        %9519 = vmatprep.subr.mxu0 0.0
        %9520 = vmatpush2.msra.mxu0 0.0
        %9521 = vmatprep.subr.mxu0 0.0
        %9522 = vmatpush2.msra.mxu0 0.0
        %9523 = vmatprep.subr.mxu0 0.0
        %9524 = vmatpush2.msra.mxu0 0.0
        %9525 = vmatprep.subr.mxu0 0.0
        %9526 = vmatpush2.msra.mxu0 0.0
        %9527 = vmatprep.subr.mxu0 0.0
        %9528 = vmatpush2.msra.mxu0 0.0
        %9529 = vmatprep.subr.mxu0 0.0
        %9530 = vmatpush2.msra.mxu0 0.0
        %9531 = vmatprep.subr.mxu0 0.0
        %9532 = vmatpush2.msra.mxu0 0.0
        %9533 = vmatprep.subr.mxu0 0.0
        %9534 = vmatpush2.msra.mxu0 0.0
        %9535 = vmatprep.subr.mxu0 0.0
        %9536 = vmatpush2.msra.mxu0 0.0
        %9537 = vmatprep.subr.mxu0 0.0
        %9538 = vmatpush2.msra.mxu0 0.0
        %9539 = vmatprep.mubr.f32.mxu0 0.0
        %v9540 = vand.u32 %v8379, 4294901760
        %9541 = vmatmul.mubr.f32.gmra.mxu0 %v9540
        %v9542 = vpop.f32.mrf.mxu0
        %v9543 = vadd.f32 %v9362, %v9542
        %v9544 = vpop.f32.mrf.mxu0
        %v9545 = vadd.f32 %v9364, %v9544
        %9546 = vmatprep.mubr.f32.mxu0 0.0
        %v9547 = vand.u32 %v8382, 4294901760
        %9548 = vmatmul.mubr.f32.gmra.mxu0 %v9547
        %v9549 = vpop.f32.mrf.mxu0
        %v9550 = vadd.f32 %v9369, %v9549
        %v9551 = vpop.f32.mrf.mxu0
        %v9552 = vadd.f32 %v9371, %v9551
        %9553 = vmatprep.mubr.f32.mxu0 0.0
        %v9554 = vand.u32 %v8385, 4294901760
        %9555 = vmatmul.mubr.f32.gmra.mxu0 %v9554
        %v9556 = vpop.f32.mrf.mxu0
        %v9557 = vadd.f32 %v9376, %v9556
        %v9558 = vpop.f32.mrf.mxu0
        %v9559 = vadd.f32 %v9378, %v9558
        %9560 = vmatprep.mubr.f32.mxu0 0.0
        %v9561 = vand.u32 %v8388, 4294901760
        %9562 = vmatmul.mubr.f32.gmra.mxu0 %v9561
        %v9563 = vpop.f32.mrf.mxu0
        %v9564 = vadd.f32 %v9383, %v9563
        %v9565 = vpop.f32.mrf.mxu0
        %v9566 = vadd.f32 %v9385, %v9565
        %9567 = vmatprep.mubr.f32.mxu0 0.0
        %v9568 = vand.u32 %v8391, 4294901760
        %9569 = vmatmul.mubr.f32.gmra.mxu0 %v9568
        %v9570 = vpop.f32.mrf.mxu0
        %v9571 = vadd.f32 %v9390, %v9570
        %v9572 = vpop.f32.mrf.mxu0
        %v9573 = vadd.f32 %v9392, %v9572
        %9574 = vmatprep.mubr.f32.mxu0 0.0
        %v9575 = vand.u32 %v8394, 4294901760
        %9576 = vmatmul.mubr.f32.gmra.mxu0 %v9575
        %v9577 = vpop.f32.mrf.mxu0
        %v9578 = vadd.f32 %v9397, %v9577
        %v9579 = vpop.f32.mrf.mxu0
        %v9580 = vadd.f32 %v9399, %v9579
        %9581 = vmatprep.mubr.f32.mxu0 0.0
        %v9582 = vand.u32 %v8397, 4294901760
        %9583 = vmatmul.mubr.f32.gmra.mxu0 %v9582
        %v9584 = vpop.f32.mrf.mxu0
        %v9585 = vadd.f32 %v9404, %v9584
        %v9586 = vpop.f32.mrf.mxu0
        %v9587 = vadd.f32 %v9406, %v9586
        %9588 = vmatprep.mubr.f32.mxu0 0.0
        %v9589 = vand.u32 %v8400, 4294901760
        %9590 = vmatmul.mubr.f32.gmra.mxu0 %v9589
        %v9591 = vpop.f32.mrf.mxu0
        %v9592 = vadd.f32 %v9411, %v9591
        %v9593 = vpop.f32.mrf.mxu0
        %v9594 = vadd.f32 %v9413, %v9593
        %9595 = vmatprep.mubr.f32.mxu0 0.0
        %v9596 = vand.u32 %v8403, 4294901760
        %9597 = vmatmul.mubr.f32.gmra.mxu0 %v9596
        %v9598 = vpop.f32.mrf.mxu0
        %v9599 = vadd.f32 %v9418, %v9598
        %v9600 = vpop.f32.mrf.mxu0
        %v9601 = vadd.f32 %v9420, %v9600
        %9602 = vmatprep.mubr.f32.mxu0 0.0
        %v9603 = vand.u32 %v8406, 4294901760
        %9604 = vmatmul.mubr.f32.gmra.mxu0 %v9603
        %v9605 = vpop.f32.mrf.mxu0
        %v9606 = vadd.f32 %v9425, %v9605
        %v9607 = vpop.f32.mrf.mxu0
        %v9608 = vadd.f32 %v9427, %v9607
        %9609 = vmatprep.mubr.f32.mxu0 0.0
        %v9610 = vand.u32 %v8409, 4294901760
        %9611 = vmatmul.mubr.f32.gmra.mxu0 %v9610
        %v9612 = vpop.f32.mrf.mxu0
        %v9613 = vadd.f32 %v9432, %v9612
        %v9614 = vpop.f32.mrf.mxu0
        %v9615 = vadd.f32 %v9434, %v9614
        %9616 = vmatprep.mubr.f32.mxu0 0.0
        %v9617 = vand.u32 %v8412, 4294901760
        %9618 = vmatmul.mubr.f32.gmra.mxu0 %v9617
        %v9619 = vpop.f32.mrf.mxu0
        %v9620 = vadd.f32 %v9439, %v9619
        %v9621 = vpop.f32.mrf.mxu0
        %v9622 = vadd.f32 %v9441, %v9621
        %9623 = vmatprep.mubr.f32.mxu0 0.0
        %v9624 = vand.u32 %v8415, 4294901760
        %9625 = vmatmul.mubr.f32.gmra.mxu0 %v9624
        %v9626 = vpop.f32.mrf.mxu0
        %v9627 = vadd.f32 %v9446, %v9626
        %v9628 = vpop.f32.mrf.mxu0
        %v9629 = vadd.f32 %v9448, %v9628
        %9630 = vmatprep.mubr.f32.mxu0 0.0
        %v9631 = vand.u32 %v8418, 4294901760
        %9632 = vmatmul.mubr.f32.gmra.mxu0 %v9631
        %v9633 = vpop.f32.mrf.mxu0
        %v9634 = vadd.f32 %v9453, %v9633
        %v9635 = vpop.f32.mrf.mxu0
        %v9636 = vadd.f32 %v9455, %v9635
        %9637 = vmatprep.mubr.f32.mxu0 0.0
        %v9638 = vand.u32 %v8421, 4294901760
        %9639 = vmatmul.mubr.f32.gmra.mxu0 %v9638
        %v9640 = vpop.f32.mrf.mxu0
        %v9641 = vadd.f32 %v9460, %v9640
        %v9642 = vpop.f32.mrf.mxu0
        %v9643 = vadd.f32 %v9462, %v9642
        %9644 = vmatprep.mubr.f32.mxu0 0.0
        %v9645 = vand.u32 %v8424, 4294901760
        %9646 = vmatmul.mubr.f32.gmra.mxu0 %v9645
        %v9647 = vpop.f32.mrf.mxu0
        %v9648 = vadd.f32 %v9467, %v9647
        %v9649 = vpop.f32.mrf.mxu0
        %v9650 = vadd.f32 %v9469, %v9649
        %9651 = vdwg.mxu0
        %v9652 = vmul.f32 %v8269, %v9543
        %v9653 = vmul.f32 %v8271, %v9545
        %v9654 = vmul.f32 %v8276, %v9550
        %v9655 = vmul.f32 %v8278, %v9552
        %v9656 = vmul.f32 %v8283, %v9557
        %v9657 = vmul.f32 %v8285, %v9559
        %v9658 = vmul.f32 %v8290, %v9564
        %v9659 = vmul.f32 %v8292, %v9566
        %v9660 = vmul.f32 %v8297, %v9571
        %v9661 = vmul.f32 %v8299, %v9573
        %v9662 = vmul.f32 %v8304, %v9578
        %v9663 = vmul.f32 %v8306, %v9580
        %v9664 = vmul.f32 %v8311, %v9585
        %v9665 = vmul.f32 %v8313, %v9587
        %v9666 = vmul.f32 %v8318, %v9592
        %v9667 = vmul.f32 %v8320, %v9594
        %v9668 = vmul.f32 %v8325, %v9599
        %v9669 = vmul.f32 %v8327, %v9601
        %v9670 = vmul.f32 %v8332, %v9606
        %v9671 = vmul.f32 %v8334, %v9608
        %v9672 = vmul.f32 %v8339, %v9613
        %v9673 = vmul.f32 %v8341, %v9615
        %v9674 = vmul.f32 %v8346, %v9620
        %v9675 = vmul.f32 %v8348, %v9622
        %v9676 = vmul.f32 %v8353, %v9627
        %v9677 = vmul.f32 %v8355, %v9629
        %v9678 = vmul.f32 %v8360, %v9634
        %v9679 = vmul.f32 %v8362, %v9636
        %v9680 = vmul.f32 %v8367, %v9641
        %v9681 = vmul.f32 %v8369, %v9643
        %v9682 = vmul.f32 %v8374, %v9648
        %v9683 = vmul.f32 %v8376, %v9650
        %v9684 = vmul.f32 %v435, %v9652
        %v9685 = vmul.f32 %v436, %v9653
        %v9686 = vmul.f32 %v437, %v9654
        %v9687 = vmul.f32 %v438, %v9655
        %v9688 = vmul.f32 %v439, %v9656
        %v9689 = vmul.f32 %v440, %v9657
        %v9690 = vmul.f32 %v441, %v9658
        %v9691 = vmul.f32 %v442, %v9659
        %v9692 = vmul.f32 %v443, %v9660
        %v9693 = vmul.f32 %v444, %v9661
        %v9694 = vmul.f32 %v445, %v9662
        %v9695 = vmul.f32 %v446, %v9663
        %v9696 = vmul.f32 %v447, %v9664
        %v9697 = vmul.f32 %v448, %v9665
        %v9698 = vmul.f32 %v449, %v9666
        %v9699 = vmul.f32 %v450, %v9667
        %v9700 = vmul.f32 %v451, %v9668
        %v9701 = vmul.f32 %v452, %v9669
        %v9702 = vmul.f32 %v453, %v9670
        %v9703 = vmul.f32 %v454, %v9671
        %v9704 = vmul.f32 %v455, %v9672
        %v9705 = vmul.f32 %v456, %v9673
        %v9706 = vmul.f32 %v457, %v9674
        %v9707 = vmul.f32 %v458, %v9675
        %v9708 = vmul.f32 %v459, %v9676
        %v9709 = vmul.f32 %v460, %v9677
        %v9710 = vmul.f32 %v461, %v9678
        %v9711 = vmul.f32 %v462, %v9679
        %v9712 = vmul.f32 %v463, %v9680
        %v9713 = vmul.f32 %v464, %v9681
        %v9714 = vmul.f32 %v465, %v9682
        %v9715 = vmul.f32 %v466, %v9683
        %9716 = vst [vmem:[%s355] sm:$0xff] %v9684
        %9717 = vst [vmem:[%s355 + $0x8] sm:$0xff] %v9685
        %9718 = vst [vmem:[%s355 + $0x10] sm:$0xff] %v9686
        %9719 = vst [vmem:[%s355 + $0x18] sm:$0xff] %v9687
        %9720 = vst [vmem:[%s355 + $0x20] sm:$0xff] %v9688
        %9721 = vst [vmem:[%s355 + $0x28] sm:$0xff] %v9689
        %9722 = vst [vmem:[%s355 + $0x30] sm:$0xff] %v9690
        %9723 = vst [vmem:[%s355 + $0x38] sm:$0xff] %v9691
        %9724 = vst [vmem:[%s355 + $0x40] sm:$0xff] %v9692
        %9725 = vst [vmem:[%s355 + $0x48] sm:$0xff] %v9693
        %9726 = vst [vmem:[%s355 + $0x50] sm:$0xff] %v9694
        %9727 = vst [vmem:[%s355 + $0x58] sm:$0xff] %v9695
        %9728 = vst [vmem:[%s355 + $0x60] sm:$0xff] %v9696
        %9729 = vst [vmem:[%s355 + $0x68] sm:$0xff] %v9697
        %9730 = vst [vmem:[%s355 + $0x70] sm:$0xff] %v9698
        %9731 = vst [vmem:[%s355 + $0x78] sm:$0xff] %v9699
        %9732 = vst [vmem:[%s355 + $0x80] sm:$0xff] %v9700
        %9733 = vst [vmem:[%s355 + $0x88] sm:$0xff] %v9701
        %9734 = vst [vmem:[%s355 + $0x90] sm:$0xff] %v9702
        %9735 = vst [vmem:[%s355 + $0x98] sm:$0xff] %v9703
        %9736 = vst [vmem:[%s355 + $0xa0] sm:$0xff] %v9704
        %9737 = vst [vmem:[%s355 + $0xa8] sm:$0xff] %v9705
        %9738 = vst [vmem:[%s355 + $0xb0] sm:$0xff] %v9706
        %9739 = vst [vmem:[%s355 + $0xb8] sm:$0xff] %v9707
        %9740 = vst [vmem:[%s355 + $0xc0] sm:$0xff] %v9708
        %9741 = vst [vmem:[%s355 + $0xc8] sm:$0xff] %v9709
        %9742 = vst [vmem:[%s355 + $0xd0] sm:$0xff] %v9710
        %9743 = vst [vmem:[%s355 + $0xd8] sm:$0xff] %v9711
        %9744 = vst [vmem:[%s355 + $0xe0] sm:$0xff] %v9712
        %9745 = vst [vmem:[%s355 + $0xe8] sm:$0xff] %v9713
        %9746 = vst [vmem:[%s355 + $0xf0] sm:$0xff] %v9714
        %9747 = vst [vmem:[%s355 + $0xf8] sm:$0xff] %v9715
        %s9748 = sand.u32 %s227, 1
        %s9749 = scalar_lea.sflag [#allocation4], %s9748
        %s9750 = sand.u32 %s227, 1
        %s9751 = smul.addr %s9750, 256
        %s9752 = scalar_lea.vmem [#allocation7], %s9751
        // Predicated region
        $region65: #{tpu_custom_call.1} parent=55 // pred_check
          %p9753 = pneg %p237
        $region66: #{tpu_custom_call.1} parent=55 // pred_check_branch
          %9755 = sbr.rel (%p9753) target = $region68
        $region67: #{tpu_custom_call.1} parent=55 // pred_region
          %s9757 = ssub.s32 4096, 4096
          %9758 = vsyncadd %s9749, %s9757
          %s9759 = smul.addr %s25, 32
          %s9760 = smul.addr %s9759, 128
          %s9761 = scalar_lea.hbm %s9, %s9760
          %s9762 = sshll.u32 %s9752, 4
          %s9763 = int_to_ptr.vmem [resolvable:$true] %s9762
          %9768 = dma.vmem_to_hbm [thread:$0]  %s9763, 4096, %s9761, %s9749, 256, 256, 16
        $region68: #{tpu_custom_call.1} parent=55 // pred_fallthru
          _
      $region56: #{tpu_custom_call.1} parent=5 // pred_fallthru
        _
      %p9769 = scmp.le.s32.totalorder 2, %s20
      // Predicated region
      $region69: #{tpu_custom_call.1} parent=5 // pred_check
        %p9770 = pneg %p9769
      $region70: #{tpu_custom_call.1} parent=5 // pred_check_branch
        %9772 = sbr.rel (%p9770) target = $region72
      $region71: #{tpu_custom_call.1} parent=5 // pred_region
        %s9773 = ssub.s32 %s20, 2
        // Predicated region
        $region73: #{tpu_custom_call.1} parent=71 // pred_check
          %p9774 = pneg %p243
        $region74: #{tpu_custom_call.1} parent=71 // pred_check_branch
          %9776 = sbr.rel (%p9774) target = $region76
        $region75: #{tpu_custom_call.1} parent=71 // pred_region
          %s9777 = sand.u32 %s228, 1
          %s9778 = scalar_lea.sflag [#allocation4], %s9777
          %s9779 = sand.u32 %s228, 1
          %s9780 = smul.addr %s9779, 256
          %s9781 = scalar_lea.vmem [#allocation7], %s9780
          %9782 = dma.done %s9778, 4096
        $region76: #{tpu_custom_call.1} parent=71 // pred_fallthru
          _
      $region72: #{tpu_custom_call.1} parent=5 // pred_fallthru
        _
    $region6: #{tpu_custom_call.1} parent=1 // loop_footer
      %s24 = sadd.s32 1, %s20
    $region7: #{tpu_custom_call.1} parent=1 // loop_footer_branch
      %19 = sbr.rel target = $region3
    $region8: #{tpu_custom_call.1} parent=1 // loop_exit
      _
    %9783 = vsyncpa [#allocation3], 1
    %s9784 = scalar_lea.sflag [#allocation3], 1
    %9785 = vsyncpa %s9784, 1
    %9786 = vsyncpa [#allocation6], 1
    %9787 = vsyncpa [#allocation4], 1
    %s9788 = scalar_lea.sflag [#allocation4], 1
    %9789 = vsyncpa %s9788, 1

</llo_original>
